<compile_context>
chip_gen: v6e
topology: v6e:2x2x1
jax: 0.10.0
libtpu: 0.0.40
codegen_flags: <defaults>
</compile_context>

<pallas_src>
import numpy as np
import jax
import jax.numpy as jnp
from jax.experimental import pallas as pl
from jax.experimental.pallas import tpu as pltpu

_PAD = 16  # zero rows on each side of the row-shift scratches (>= max shift of 10)


# ------------------------------ Pallas kernel ------------------------------- #

def _sudoku_kernel(x_ref, mask_ref, pvec_ref, w2_ref, w3_ref, g4_ref, headw_ref,
                   svec_ref, out_ref, xpad_ref, h1pad_ref, y2_ref, cols3_ref, y3_ref):
    f32 = jnp.float32
    n81 = x_ref.shape[0]          # N * 81 board cells, raster rows (n, h, w)
    n = mask_ref.shape[0]         # batch size

    # --- 3x3-tap boundary masks generated in-kernel (no HBM input).
    # h = (r // 9) % 9, w = r % 9; derived with +0.5-guarded float math so the
    # results are exact integers without relying on vector integer division.
    r = jax.lax.broadcasted_iota(jnp.int32, (n81, 1), 0).astype(f32)
    q9 = jnp.floor((r + 0.5) * (1.0 / 9.0))      # r // 9
    q81 = jnp.floor((r + 0.5) * (1.0 / 81.0))    # r // 81
    w_pos = r - 9.0 * q9
    h_pos = q9 - 9.0 * q81
    mh = {-1: jnp.where(h_pos > 0.5, 1.0, 0.0), 0: None,
          1: jnp.where(h_pos < 7.5, 1.0, 0.0)}
    mw = {-1: jnp.where(w_pos > 0.5, 1.0, 0.0), 0: None,
          1: jnp.where(w_pos < 7.5, 1.0, 0.0)}
    tap_mask = []
    for t in range(9):
        dh, dw = t // 3 - 1, t % 3 - 1
        parts = [m for m in (mh[dh], mw[dw]) if m is not None]
        if not parts:
            tap_mask.append(None)
        elif len(parts) == 1:
            tap_mask.append(parts[0])
        else:
            tap_mask.append(parts[0] * parts[1])

    # ---- conv1 (1->64, 3x3, pad 1) + bn1(batch stats) + relu -------------------
    # (conv1 bias is cancelled exactly by bn1's mean subtraction -> dropped)
    xpad_ref[pl.ds(0, _PAD), :] = jnp.zeros((_PAD, 1), f32)
    xpad_ref[pl.ds(_PAD + n81, _PAD), :] = jnp.zeros((_PAD, 1), f32)
    xpad_ref[pl.ds(_PAD, n81), :] = x_ref[...]

    y1 = jnp.zeros((n81, 64), f32)
    for t in range(9):
        dh, dw = t // 3 - 1, t % 3 - 1
        shifted = xpad_ref[pl.ds(_PAD + dh * 9 + dw, n81), :]        # (n81, 1)
        if tap_mask[t] is not None:
            shifted = shifted * tap_mask[t]
        y1 = y1 + shifted * pvec_ref[t:t + 1, 0:64]                  # -> (n81, 64)
    mu = jnp.mean(y1, axis=0, keepdims=True)
    var = jnp.mean(jnp.square(y1 - mu), axis=0, keepdims=True)
    s = pvec_ref[9:10, 0:64] * jax.lax.rsqrt(var + 1e-5)
    h1 = jnp.maximum(y1 * s + (pvec_ref[10:11, 0:64] - mu * s), 0.0)

    # ---- conv2 (64->128, 3x3, pad 1) + bn2 + relu ------------------------------
    h1pad_ref[pl.ds(0, _PAD), :] = jnp.zeros((_PAD, 64), f32)
    h1pad_ref[pl.ds(_PAD + n81, _PAD), :] = jnp.zeros((_PAD, 64), f32)
    h1pad_ref[pl.ds(_PAD, n81), :] = h1

    acc2 = jnp.zeros((n81, 128), f32)
    for t in range(9):
        dh, dw = t // 3 - 1, t % 3 - 1
        shifted = h1pad_ref[pl.ds(_PAD + dh * 9 + dw, n81), :]       # (n81, 64)
        if tap_mask[t] is not None:
            shifted = shifted * tap_mask[t]
        acc2 = acc2 + jnp.dot(shifted, w2_ref[t], preferred_element_type=f32)
    mu = jnp.mean(acc2, axis=0, keepdims=True)
    var = jnp.mean(jnp.square(acc2 - mu), axis=0, keepdims=True)
    s = pvec_ref[11:12, 0:128] * jax.lax.rsqrt(var + 1e-5)
    y2_ref[...] = jnp.maximum(acc2 * s + (pvec_ref[12:13, 0:128] - mu * s), 0.0)

    # ---- conv3 (3x3, stride 3) im2col: pure row permutation, done in VMEM ------
    # cols3 rows are (q = 3*bh + bw, n); column block j = 3*kh + kw (128-aligned),
    # so every copy is a plain (1,128) row move with no cross-lane relayout.
    for j in range(9):
        off = (j // 3) * 9 + (j % 3)
        for q in range(9):
            base = 27 * (q // 3) + 3 * (q % 3) + off
            for sidx in range(n):
                cols3_ref[pl.ds(q * n + sidx, 1), pl.ds(j * 128, 128)] = \
                    y2_ref[pl.ds(sidx * 81 + base, 1), :]

    # ---- conv3 (single K=1152 matmul) + bn3 + relu -----------------------------
    y3 = jnp.dot(cols3_ref[...], w3_ref[...], preferred_element_type=f32)
    mu = jnp.mean(y3, axis=0, keepdims=True)
    var = jnp.mean(jnp.square(y3 - mu), axis=0, keepdims=True)
    s = pvec_ref[13:14, 0:32] * jax.lax.rsqrt(var + 1e-5)
    y3_ref[...] = jnp.maximum(y3 * s + (pvec_ref[14:15, 0:32] - mu * s), 0.0)

    # ---- conv4 (32->1, 2x2 valid) + relu  ->  v4 == state.view(-1, 4) ----------
    acc4 = jnp.zeros((n, 4), f32)
    for rpos in range(9):
        acc4 = acc4 + jnp.dot(y3_ref[pl.ds(rpos * n, n), :], g4_ref[rpos],
                              preferred_element_type=f32)
    v4 = jnp.maximum(acc4 + svec_ref[0], 0.0)                         # (n, 4)

    # ---- fused heads: [conv5 scatter (81) | folded fc2∘fc1 (1)] in one affine --
    both = jnp.dot(v4, headw_ref[0:4, :], preferred_element_type=f32) + headw_ref[4:5, :]
    pi = jnp.maximum(both[:, 0:81], 0.0) * mask_ref[...]              # relu, then mask
    v = 1.0 / (1.0 + jnp.exp(-both[:, 81:82]))                        # sigmoid(value)

    # ---- conv6 (1x1 transposed, 9 ch) + relu + log_softmax over channels -------
    zs = [jnp.maximum(pi * svec_ref[1 + c] + svec_ref[10 + c], 0.0) for c in range(9)]
    m = zs[0]
    for c in range(1, 9):
        m = jnp.maximum(m, zs[c])
    ssum = jnp.zeros_like(pi)
    for c in range(9):
        ssum = ssum + jnp.exp(zs[c] - m)
    lse = jnp.log(ssum)
    for c in range(9):                                   # 128-aligned channel blocks
        out_ref[:, pl.ds(c * 128, 81)] = zs[c] - m - lse
    out_ref[:, pl.ds(9 * 128, 1)] = v


# ------------------------------- parameters --------------------------------- #

def init_params(seed=0):
    rng = np.random.default_rng(seed)

    def uni(shape, fan_in):
        s = 1.0 / np.sqrt(fan_in)
        return rng.uniform(-s, s, size=shape).astype(np.float32)

    conv1_w = uni((64, 1, 3, 3), 9);      _ = uni((64,), 9)      # bias cancels in bn1
    conv2_w = uni((128, 64, 3, 3), 576);  _ = uni((128,), 576)   # bias cancels in bn2
    conv3_w = uni((32, 128, 3, 3), 1152); _ = uni((32,), 1152)   # bias cancels in bn3
    conv4_w = uni((1, 32, 2, 2), 128);    conv4_b = uni((1,), 128)
    conv5_w = uni((1, 1, 8, 8), 64);      conv5_b = uni((1,), 64)
    conv6_w = uni((1, 9, 1, 1), 1);       conv6_b = uni((9,), 1)
    fc1_w = uni((4, 4), 4);               fc1_b = uni((4,), 4)
    fc2_w = uni((1, 4), 4);               fc2_b = uni((1,), 4)

    # Packed small-parameter slab: one DMA instead of ~10 tiny ones.
    pvec = np.zeros((16, 128), np.float32)
    pvec[0:9, 0:64] = conv1_w.reshape(64, 9).T     # row t = 3*kh + kw: conv1 tap
    pvec[9, 0:64] = 1.0                            # bn1 gamma
    pvec[10, 0:64] = 0.0                           # bn1 beta
    pvec[11, 0:128] = 1.0                          # bn2 gamma
    pvec[12, 0:128] = 0.0                          # bn2 beta
    pvec[13, 0:32] = 1.0                           # bn3 gamma
    pvec[14, 0:32] = 0.0                           # bn3 beta

    # conv2: per-tap (cin, cout) matrices, tap t = 3*kh + kw.
    w2 = conv2_w.transpose(2, 3, 1, 0).reshape(9, 64, 128)
    # conv3: im2col weight, rows ordered (kh, kw, cin) -> matches 128-lane blocks.
    w3 = conv3_w.transpose(2, 3, 1, 0).reshape(9 * 128, 32)

    # conv4 (2x2 valid over the 3x3 conv3 grid) as 9 per-position (32, 4) matrices.
    g4 = np.zeros((9, 32, 4), np.float32)
    for rpos in range(9):
        rh, rw = rpos // 3, rpos % 3
        for q in range(4):
            kh, kw = rh - q // 2, rw - q % 2
            if 0 <= kh < 2 and 0 <= kw < 2:
                g4[rpos, :, q] = conv4_w[0, :, kh, kw]

    # ConvTranspose2d(1,1,8) materialized as a (4, 81) scatter matrix.
    m5 = np.zeros((4, 81), np.float32)
    for y in range(2):
        for x in range(2):
            for oy in range(9):
                for ox in range(9):
                    ky, kx = oy - y, ox - x
                    if 0 <= ky < 8 and 0 <= kx < 8:
                        m5[y * 2 + x, oy * 9 + ox] = conv5_w[0, 0, ky, kx]

    # Value head: fc2(fc1(x)) has no nonlinearity in the reference -> one affine.
    a_vec = fc1_w.T @ fc2_w.T                      # (4, 1)
    c_val = fc1_b @ fc2_w.T + fc2_b                # (1,)

    # Fused head matrix: [policy scatter (81 cols) | value (1 col)] + bias row.
    headw = np.zeros((5, 82), np.float32)
    headw[0:4, 0:81] = m5
    headw[0:4, 81] = a_vec[:, 0]
    headw[4, 0:81] = conv5_b[0]
    headw[4, 81] = c_val[0]

    # Pure scalars -> SMEM: [conv4 bias, conv6 weight (9), conv6 bias (9)].
    svec = np.zeros((19,), np.float32)
    svec[0] = conv4_b[0]
    svec[1:10] = conv6_w[0, :, 0, 0]
    svec[10:19] = conv6_b

    return {
        "pvec": jnp.asarray(pvec),
        "w2": jnp.asarray(w2),
        "w3": jnp.asarray(w3),
        "g4": jnp.asarray(g4),
        "headw": jnp.asarray(headw),
        "svec": jnp.asarray(svec),
    }


# --------------------------------- forward ----------------------------------- #

def sudoku_nn_forward(params, state, mask):
    p = params
    n = state.shape[0]
    n81 = n * 81

    x_col = state.reshape(n81, 1).astype(jnp.float32)    # raster rows (n, h, w)
    mask2d = mask.reshape(n, 81).astype(jnp.float32)

    def vspec(shape):
        zeros = (0,) * len(shape)
        return pl.BlockSpec(shape, lambda i, z=zeros: z)

    out = pl.pallas_call(
        _sudoku_kernel,
        out_shape=jax.ShapeDtypeStruct((n, 10 * 128), jnp.float32),
        grid=(1,),
        in_specs=[
            vspec((n81, 1)),                                   # state column
            vspec((n, 81)),                                    # policy mask
            vspec((16, 128)),                                  # packed conv1/bn params
            vspec((9, 64, 128)),                               # conv2 per-tap weights
            vspec((1152, 32)),                                 # conv3 im2col weight
            vspec((9, 32, 4)),                                 # conv4 per-position weights
            vspec((5, 82)),                                    # fused policy/value head
            pl.BlockSpec(memory_space=pltpu.MemorySpace.SMEM),  # scalar params
        ],
        out_specs=vspec((n, 10 * 128)),
        scratch_shapes=[
            pltpu.VMEM((n81 + 2 * _PAD, 1), jnp.float32),      # padded input column
            pltpu.VMEM((n81 + 2 * _PAD, 64), jnp.float32),     # padded conv1 activations
            pltpu.VMEM((n81, 128), jnp.float32),               # conv2+bn2+relu output
            pltpu.VMEM((9 * n, 9 * 128), jnp.float32),         # conv3 im2col (lane-aligned)
            pltpu.VMEM((9 * n, 32), jnp.float32),              # conv3+bn3+relu output
        ],
        compiler_params=pltpu.CompilerParams(
            dimension_semantics=("arbitrary",),
            vmem_limit_bytes=32 * 1024 * 1024,
        ),
    )(x_col, mask2d, p["pvec"], p["w2"], p["w3"], p["g4"], p["headw"], p["svec"])

    # TODO(synk): BN uses training-mode batch statistics computed inside one grid
    # block; if the batch axis is ever tiled across grid steps / TensorCores, the
    # statistics must be made global (two-pass or cross-core reduction).
    log_pi = out[:, :9 * 128].reshape(n, 9, 128)[:, :, :81].reshape(n, 9, 9, 9)
    v = out[:, 9 * 128:9 * 128 + 1]
    return log_pi, v


# ----------------------------------- main ------------------------------------ #

if __name__ == "__main__":
    key = jax.random.PRNGKey(0)
    k1, k2 = jax.random.split(key)
    state = jax.random.normal(k1, (2, 1, 9, 9), dtype=jnp.float32)
    mask = (jax.random.uniform(k2, (2, 1, 9, 9)) > 0.5).astype(jnp.float32)

    params = init_params(0)
    fwd = jax.jit(sudoku_nn_forward)
    log_pi, v = fwd(params, state, mask)
    jax.block_until_ready((log_pi, v))

    assert log_pi.shape == (2, 9, 9, 9)
    assert v.shape == (2, 1)
    assert bool(jnp.all(jnp.isfinite(log_pi))) and bool(jnp.all(jnp.isfinite(v)))
    # log_softmax over the channel dim should exponentiate-sum to 1
    assert bool(jnp.allclose(jnp.sum(jnp.exp(log_pi), axis=1), 1.0, atol=1e-4))
    assert bool(jnp.all((v > 0.0) & (v < 1.0)))
    print("KERNEL_OK")
</pallas_src>

<mosaic_0001>
module attributes {stable_mosaic.version = 11 : i64} {
  func.func @_sudoku_kernel(%arg0: i32, %arg1: memref<162x1xf32, #tpu.memory_space<vmem>>, %arg2: memref<2x81xf32, #tpu.memory_space<vmem>>, %arg3: memref<16x128xf32, #tpu.memory_space<vmem>>, %arg4: memref<9x64x128xf32, #tpu.memory_space<vmem>>, %arg5: memref<1152x32xf32, #tpu.memory_space<vmem>>, %arg6: memref<9x32x4xf32, #tpu.memory_space<vmem>>, %arg7: memref<5x82xf32, #tpu.memory_space<vmem>>, %arg8: memref<19xf32, #tpu.memory_space<smem>>, %arg9: memref<2x1280xf32, #tpu.memory_space<vmem>>, %arg10: memref<194x1xf32, #tpu.memory_space<vmem>>, %arg11: memref<194x64xf32, #tpu.memory_space<vmem>>, %arg12: memref<162x128xf32, #tpu.memory_space<vmem>>, %arg13: memref<18x1152xf32, #tpu.memory_space<vmem>>, %arg14: memref<18x32xf32, #tpu.memory_space<vmem>>) attributes {dimension_semantics = [#tpu.dimension_semantics<arbitrary>], iteration_bounds = array<i64: 1>, scalar_prefetch = 0 : i64, scratch_operands = 5 : i64, tpu.core_type = #tpu.core_type<tc>, window_params = [{pipeline_mode = #tpu.pipeline_mode<synchronous>, transform_indices = @transform_0, window_bounds = array<i64: 162, 1>}, {pipeline_mode = #tpu.pipeline_mode<synchronous>, transform_indices = @transform_1, window_bounds = array<i64: 2, 81>}, {pipeline_mode = #tpu.pipeline_mode<synchronous>, transform_indices = @transform_2, window_bounds = array<i64: 16, 128>}, {pipeline_mode = #tpu.pipeline_mode<synchronous>, transform_indices = @transform_3, window_bounds = array<i64: 9, 64, 128>}, {pipeline_mode = #tpu.pipeline_mode<synchronous>, transform_indices = @transform_4, window_bounds = array<i64: 1152, 32>}, {pipeline_mode = #tpu.pipeline_mode<synchronous>, transform_indices = @transform_5, window_bounds = array<i64: 9, 32, 4>}, {pipeline_mode = #tpu.pipeline_mode<synchronous>, transform_indices = @transform_6, window_bounds = array<i64: 5, 82>}, {transform_indices = @transform_7, window_bounds = array<i64: 19>}, {pipeline_mode = #tpu.pipeline_mode<synchronous>, transform_indices = @transform_8, window_bounds = array<i64: 2, 1280>}]} {
    %0 = tpu.iota {dimensions = array<i32: 0>} : vector<162x1xi32>
    %1 = arith.sitofp %0 : vector<162x1xi32> to vector<162x1xf32>
    %cst = arith.constant 5.000000e-01 : f32
    %2 = vector.broadcast %cst : f32 to vector<162x1xf32>
    %3 = arith.addf %1, %2 : vector<162x1xf32>
    %cst_0 = arith.constant 0.111111112 : f32
    %4 = vector.broadcast %cst_0 : f32 to vector<162x1xf32>
    %5 = arith.mulf %3, %4 : vector<162x1xf32>
    %6 = math.floor %5 : vector<162x1xf32>
    %cst_1 = arith.constant 5.000000e-01 : f32
    %7 = vector.broadcast %cst_1 : f32 to vector<162x1xf32>
    %8 = arith.addf %1, %7 : vector<162x1xf32>
    %cst_2 = arith.constant 0.0123456791 : f32
    %9 = vector.broadcast %cst_2 : f32 to vector<162x1xf32>
    %10 = arith.mulf %8, %9 : vector<162x1xf32>
    %11 = math.floor %10 : vector<162x1xf32>
    %cst_3 = arith.constant 9.000000e+00 : f32
    %12 = vector.broadcast %cst_3 : f32 to vector<162x1xf32>
    %13 = arith.mulf %12, %6 : vector<162x1xf32>
    %14 = arith.subf %1, %13 : vector<162x1xf32>
    %cst_4 = arith.constant 9.000000e+00 : f32
    %15 = vector.broadcast %cst_4 : f32 to vector<162x1xf32>
    %16 = arith.mulf %15, %11 : vector<162x1xf32>
    %17 = arith.subf %6, %16 : vector<162x1xf32>
    %cst_5 = arith.constant 5.000000e-01 : f32
    %18 = vector.broadcast %cst_5 : f32 to vector<162x1xf32>
    %19 = arith.cmpf ogt, %17, %18 : vector<162x1xf32>
    %cst_6 = arith.constant 1.000000e+00 : f32
    %cst_7 = arith.constant 0.000000e+00 : f32
    %20 = vector.broadcast %cst_6 : f32 to vector<162x1xf32>
    %21 = vector.broadcast %cst_7 : f32 to vector<162x1xf32>
    %22 = arith.select %19, %20, %21 : vector<162x1xi1>, vector<162x1xf32>
    %cst_8 = arith.constant 7.500000e+00 : f32
    %23 = vector.broadcast %cst_8 : f32 to vector<162x1xf32>
    %24 = arith.cmpf olt, %17, %23 : vector<162x1xf32>
    %cst_9 = arith.constant 1.000000e+00 : f32
    %cst_10 = arith.constant 0.000000e+00 : f32
    %25 = vector.broadcast %cst_9 : f32 to vector<162x1xf32>
    %26 = vector.broadcast %cst_10 : f32 to vector<162x1xf32>
    %27 = arith.select %24, %25, %26 : vector<162x1xi1>, vector<162x1xf32>
    %cst_11 = arith.constant 5.000000e-01 : f32
    %28 = vector.broadcast %cst_11 : f32 to vector<162x1xf32>
    %29 = arith.cmpf ogt, %14, %28 : vector<162x1xf32>
    %cst_12 = arith.constant 1.000000e+00 : f32
    %cst_13 = arith.constant 0.000000e+00 : f32
    %30 = vector.broadcast %cst_12 : f32 to vector<162x1xf32>
    %31 = vector.broadcast %cst_13 : f32 to vector<162x1xf32>
    %32 = arith.select %29, %30, %31 : vector<162x1xi1>, vector<162x1xf32>
    %cst_14 = arith.constant 7.500000e+00 : f32
    %33 = vector.broadcast %cst_14 : f32 to vector<162x1xf32>
    %34 = arith.cmpf olt, %14, %33 : vector<162x1xf32>
    %cst_15 = arith.constant 1.000000e+00 : f32
    %cst_16 = arith.constant 0.000000e+00 : f32
    %35 = vector.broadcast %cst_15 : f32 to vector<162x1xf32>
    %36 = vector.broadcast %cst_16 : f32 to vector<162x1xf32>
    %37 = arith.select %34, %35, %36 : vector<162x1xi1>, vector<162x1xf32>
    %38 = arith.mulf %22, %32 : vector<162x1xf32>
    %39 = arith.mulf %22, %37 : vector<162x1xf32>
    %40 = arith.mulf %27, %32 : vector<162x1xf32>
    %41 = arith.mulf %27, %37 : vector<162x1xf32>
    %cst_17 = arith.constant 0.000000e+00 : f32
    %42 = vector.broadcast %cst_17 : f32 to vector<16x1xf32>
    %c0 = arith.constant 0 : index
    %c0_18 = arith.constant 0 : index
    %43 = vector.load %arg10[%c0, %c0_18] : memref<194x1xf32, #tpu.memory_space<vmem>>, vector<16x1xf32>
    tpu.vector_store %arg10[%c0, %c0_18], %42 {strides = array<i32>} : memref<194x1xf32, #tpu.memory_space<vmem>>, vector<16x1xf32>,
    %cst_19 = arith.constant 0.000000e+00 : f32
    %44 = vector.broadcast %cst_19 : f32 to vector<16x1xf32>
    %c178 = arith.constant 178 : index
    %c0_20 = arith.constant 0 : index
    %45 = vector.load %arg10[%c178, %c0_20] : memref<194x1xf32, #tpu.memory_space<vmem>>, vector<16x1xf32>
    tpu.vector_store %arg10[%c178, %c0_20], %44 {strides = array<i32>} : memref<194x1xf32, #tpu.memory_space<vmem>>, vector<16x1xf32>,
    %c0_21 = arith.constant 0 : index
    %c0_22 = arith.constant 0 : index
    %46 = vector.load %arg1[%c0_21, %c0_22] : memref<162x1xf32, #tpu.memory_space<vmem>>, vector<162x1xf32>
    %c16 = arith.constant 16 : index
    %c0_23 = arith.constant 0 : index
    %47 = vector.load %arg10[%c16, %c0_23] : memref<194x1xf32, #tpu.memory_space<vmem>>, vector<162x1xf32>
    tpu.vector_store %arg10[%c16, %c0_23], %46 {strides = array<i32>} : memref<194x1xf32, #tpu.memory_space<vmem>>, vector<162x1xf32>,
    %cst_24 = arith.constant 0.000000e+00 : f32
    %48 = vector.broadcast %cst_24 : f32 to vector<162x64xf32>
    %c6 = arith.constant 6 : index
    %c0_25 = arith.constant 0 : index
    %49 = vector.load %arg10[%c6, %c0_25] : memref<194x1xf32, #tpu.memory_space<vmem>>, vector<162x1xf32>
    %50 = arith.mulf %49, %38 : vector<162x1xf32>
    %c0_26 = arith.constant 0 : index
    %c0_27 = arith.constant 0 : index
    %51 = vector.load %arg3[%c0_26, %c0_27] : memref<16x128xf32, #tpu.memory_space<vmem>>, vector<1x64xf32>
    %52 = vector.broadcast %50 : vector<162x1xf32> to vector<162x64xf32>
    %53 = vector.broadcast %51 : vector<1x64xf32> to vector<162x64xf32>
    %54 = arith.mulf %52, %53 : vector<162x64xf32>
    %55 = arith.addf %48, %54 : vector<162x64xf32>
    %c7 = arith.constant 7 : index
    %c0_28 = arith.constant 0 : index
    %56 = vector.load %arg10[%c7, %c0_28] : memref<194x1xf32, #tpu.memory_space<vmem>>, vector<162x1xf32>
    %57 = arith.mulf %56, %22 : vector<162x1xf32>
    %c1 = arith.constant 1 : index
    %c0_29 = arith.constant 0 : index
    %58 = vector.load %arg3[%c1, %c0_29] : memref<16x128xf32, #tpu.memory_space<vmem>>, vector<1x64xf32>
    %59 = vector.broadcast %57 : vector<162x1xf32> to vector<162x64xf32>
    %60 = vector.broadcast %58 : vector<1x64xf32> to vector<162x64xf32>
    %61 = arith.mulf %59, %60 : vector<162x64xf32>
    %62 = arith.addf %55, %61 : vector<162x64xf32>
    %c8 = arith.constant 8 : index
    %c0_30 = arith.constant 0 : index
    %63 = vector.load %arg10[%c8, %c0_30] : memref<194x1xf32, #tpu.memory_space<vmem>>, vector<162x1xf32>
    %64 = arith.mulf %63, %39 : vector<162x1xf32>
    %c2 = arith.constant 2 : index
    %c0_31 = arith.constant 0 : index
    %65 = vector.load %arg3[%c2, %c0_31] : memref<16x128xf32, #tpu.memory_space<vmem>>, vector<1x64xf32>
    %66 = vector.broadcast %64 : vector<162x1xf32> to vector<162x64xf32>
    %67 = vector.broadcast %65 : vector<1x64xf32> to vector<162x64xf32>
    %68 = arith.mulf %66, %67 : vector<162x64xf32>
    %69 = arith.addf %62, %68 : vector<162x64xf32>
    %c15 = arith.constant 15 : index
    %c0_32 = arith.constant 0 : index
    %70 = vector.load %arg10[%c15, %c0_32] : memref<194x1xf32, #tpu.memory_space<vmem>>, vector<162x1xf32>
    %71 = arith.mulf %70, %32 : vector<162x1xf32>
    %c3 = arith.constant 3 : index
    %c0_33 = arith.constant 0 : index
    %72 = vector.load %arg3[%c3, %c0_33] : memref<16x128xf32, #tpu.memory_space<vmem>>, vector<1x64xf32>
    %73 = vector.broadcast %71 : vector<162x1xf32> to vector<162x64xf32>
    %74 = vector.broadcast %72 : vector<1x64xf32> to vector<162x64xf32>
    %75 = arith.mulf %73, %74 : vector<162x64xf32>
    %76 = arith.addf %69, %75 : vector<162x64xf32>
    %c16_34 = arith.constant 16 : index
    %c0_35 = arith.constant 0 : index
    %77 = vector.load %arg10[%c16_34, %c0_35] : memref<194x1xf32, #tpu.memory_space<vmem>>, vector<162x1xf32>
    %c4 = arith.constant 4 : index
    %c0_36 = arith.constant 0 : index
    %78 = vector.load %arg3[%c4, %c0_36] : memref<16x128xf32, #tpu.memory_space<vmem>>, vector<1x64xf32>
    %79 = vector.broadcast %77 : vector<162x1xf32> to vector<162x64xf32>
    %80 = vector.broadcast %78 : vector<1x64xf32> to vector<162x64xf32>
    %81 = arith.mulf %79, %80 : vector<162x64xf32>
    %82 = arith.addf %76, %81 : vector<162x64xf32>
    %c17 = arith.constant 17 : index
    %c0_37 = arith.constant 0 : index
    %83 = vector.load %arg10[%c17, %c0_37] : memref<194x1xf32, #tpu.memory_space<vmem>>, vector<162x1xf32>
    %84 = arith.mulf %83, %37 : vector<162x1xf32>
    %c5 = arith.constant 5 : index
    %c0_38 = arith.constant 0 : index
    %85 = vector.load %arg3[%c5, %c0_38] : memref<16x128xf32, #tpu.memory_space<vmem>>, vector<1x64xf32>
    %86 = vector.broadcast %84 : vector<162x1xf32> to vector<162x64xf32>
    %87 = vector.broadcast %85 : vector<1x64xf32> to vector<162x64xf32>
    %88 = arith.mulf %86, %87 : vector<162x64xf32>
    %89 = arith.addf %82, %88 : vector<162x64xf32>
    %c24 = arith.constant 24 : index
    %c0_39 = arith.constant 0 : index
    %90 = vector.load %arg10[%c24, %c0_39] : memref<194x1xf32, #tpu.memory_space<vmem>>, vector<162x1xf32>
    %91 = arith.mulf %90, %40 : vector<162x1xf32>
    %c6_40 = arith.constant 6 : index
    %c0_41 = arith.constant 0 : index
    %92 = vector.load %arg3[%c6_40, %c0_41] : memref<16x128xf32, #tpu.memory_space<vmem>>, vector<1x64xf32>
    %93 = vector.broadcast %91 : vector<162x1xf32> to vector<162x64xf32>
    %94 = vector.broadcast %92 : vector<1x64xf32> to vector<162x64xf32>
    %95 = arith.mulf %93, %94 : vector<162x64xf32>
    %96 = arith.addf %89, %95 : vector<162x64xf32>
    %c25 = arith.constant 25 : index
    %c0_42 = arith.constant 0 : index
    %97 = vector.load %arg10[%c25, %c0_42] : memref<194x1xf32, #tpu.memory_space<vmem>>, vector<162x1xf32>
    %98 = arith.mulf %97, %27 : vector<162x1xf32>
    %c7_43 = arith.constant 7 : index
    %c0_44 = arith.constant 0 : index
    %99 = vector.load %arg3[%c7_43, %c0_44] : memref<16x128xf32, #tpu.memory_space<vmem>>, vector<1x64xf32>
    %100 = vector.broadcast %98 : vector<162x1xf32> to vector<162x64xf32>
    %101 = vector.broadcast %99 : vector<1x64xf32> to vector<162x64xf32>
    %102 = arith.mulf %100, %101 : vector<162x64xf32>
    %103 = arith.addf %96, %102 : vector<162x64xf32>
    %c26 = arith.constant 26 : index
    %c0_45 = arith.constant 0 : index
    %104 = vector.load %arg10[%c26, %c0_45] : memref<194x1xf32, #tpu.memory_space<vmem>>, vector<162x1xf32>
    %105 = arith.mulf %104, %41 : vector<162x1xf32>
    %c8_46 = arith.constant 8 : index
    %c0_47 = arith.constant 0 : index
    %106 = vector.load %arg3[%c8_46, %c0_47] : memref<16x128xf32, #tpu.memory_space<vmem>>, vector<1x64xf32>
    %107 = vector.broadcast %105 : vector<162x1xf32> to vector<162x64xf32>
    %108 = vector.broadcast %106 : vector<1x64xf32> to vector<162x64xf32>
    %109 = arith.mulf %107, %108 : vector<162x64xf32>
    %110 = arith.addf %103, %109 : vector<162x64xf32>
    %cst_48 = arith.constant dense<0.000000e+00> : vector<64xf32>
    %111 = vector.multi_reduction <add>, %110, %cst_48 [0] : vector<162x64xf32> to vector<64xf32>
    %112 = vector.shape_cast %111 : vector<64xf32> to vector<1x64xf32>
    %cst_49 = arith.constant 1.620000e+02 : f32
    %113 = vector.broadcast %cst_49 : f32 to vector<1x64xf32>
    %114 = arith.divf %112, %113 : vector<1x64xf32>
    %115 = vector.broadcast %114 : vector<1x64xf32> to vector<162x64xf32>
    %116 = arith.subf %110, %115 : vector<162x64xf32>
    %117 = arith.mulf %116, %116 : vector<162x64xf32>
    %cst_50 = arith.constant dense<0.000000e+00> : vector<64xf32>
    %118 = vector.multi_reduction <add>, %117, %cst_50 [0] : vector<162x64xf32> to vector<64xf32>
    %119 = vector.shape_cast %118 : vector<64xf32> to vector<1x64xf32>
    %cst_51 = arith.constant 1.620000e+02 : f32
    %120 = vector.broadcast %cst_51 : f32 to vector<1x64xf32>
    %121 = arith.divf %119, %120 : vector<1x64xf32>
    %c9 = arith.constant 9 : index
    %c0_52 = arith.constant 0 : index
    %122 = vector.load %arg3[%c9, %c0_52] : memref<16x128xf32, #tpu.memory_space<vmem>>, vector<1x64xf32>
    %cst_53 = arith.constant 9.99999974E-6 : f32
    %123 = vector.broadcast %cst_53 : f32 to vector<1x64xf32>
    %124 = arith.addf %121, %123 : vector<1x64xf32>
    %125 = math.rsqrt %124 : vector<1x64xf32>
    %126 = arith.mulf %122, %125 : vector<1x64xf32>
    %127 = vector.broadcast %126 : vector<1x64xf32> to vector<162x64xf32>
    %128 = arith.mulf %110, %127 : vector<162x64xf32>
    %c10 = arith.constant 10 : index
    %c0_54 = arith.constant 0 : index
    %129 = vector.load %arg3[%c10, %c0_54] : memref<16x128xf32, #tpu.memory_space<vmem>>, vector<1x64xf32>
    %130 = arith.mulf %114, %126 : vector<1x64xf32>
    %131 = arith.subf %129, %130 : vector<1x64xf32>
    %132 = vector.broadcast %131 : vector<1x64xf32> to vector<162x64xf32>
    %133 = arith.addf %128, %132 : vector<162x64xf32>
    %cst_55 = arith.constant 0.000000e+00 : f32
    %134 = vector.broadcast %cst_55 : f32 to vector<162x64xf32>
    %135 = arith.maximumf %133, %134 : vector<162x64xf32>
    %cst_56 = arith.constant 0.000000e+00 : f32
    %136 = vector.broadcast %cst_56 : f32 to vector<16x64xf32>
    %c0_57 = arith.constant 0 : index
    %c0_58 = arith.constant 0 : index
    %137 = vector.load %arg11[%c0_57, %c0_58] : memref<194x64xf32, #tpu.memory_space<vmem>>, vector<16x64xf32>
    tpu.vector_store %arg11[%c0_57, %c0_58], %136 {strides = array<i32>} : memref<194x64xf32, #tpu.memory_space<vmem>>, vector<16x64xf32>,
    %cst_59 = arith.constant 0.000000e+00 : f32
    %138 = vector.broadcast %cst_59 : f32 to vector<16x64xf32>
    %c178_60 = arith.constant 178 : index
    %c0_61 = arith.constant 0 : index
    %139 = vector.load %arg11[%c178_60, %c0_61] : memref<194x64xf32, #tpu.memory_space<vmem>>, vector<16x64xf32>
    tpu.vector_store %arg11[%c178_60, %c0_61], %138 {strides = array<i32>} : memref<194x64xf32, #tpu.memory_space<vmem>>, vector<16x64xf32>,
    %c16_62 = arith.constant 16 : index
    %c0_63 = arith.constant 0 : index
    %140 = vector.load %arg11[%c16_62, %c0_63] : memref<194x64xf32, #tpu.memory_space<vmem>>, vector<162x64xf32>
    tpu.vector_store %arg11[%c16_62, %c0_63], %135 {strides = array<i32>} : memref<194x64xf32, #tpu.memory_space<vmem>>, vector<162x64xf32>,
    %cst_64 = arith.constant 0.000000e+00 : f32
    %141 = vector.broadcast %cst_64 : f32 to vector<162x128xf32>
    %c6_65 = arith.constant 6 : index
    %c0_66 = arith.constant 0 : index
    %142 = vector.load %arg11[%c6_65, %c0_66] : memref<194x64xf32, #tpu.memory_space<vmem>>, vector<162x64xf32>
    %143 = vector.broadcast %38 : vector<162x1xf32> to vector<162x64xf32>
    %144 = arith.mulf %142, %143 : vector<162x64xf32>
    %c0_67 = arith.constant 0 : index
    %c0_68 = arith.constant 0 : index
    %c0_69 = arith.constant 0 : index
    %145 = vector.load %arg4[%c0_67, %c0_68, %c0_69] : memref<9x64x128xf32, #tpu.memory_space<vmem>>, vector<1x64x128xf32>
    %146 = vector.shape_cast %145 : vector<1x64x128xf32> to vector<64x128xf32>
    %cst_70 = arith.constant dense<0.000000e+00> : vector<162x128xf32>
    %147 = tpu.matmul %144, %146, %cst_70 {dimension_numbers = #tpu.dot_dimension_numbers<[1], [0], [0], [1], [0, 0, 1, 1], [], []>} : vector<162x64xf32>, vector<64x128xf32>, vector<162x128xf32> -> vector<162x128xf32>
    %148 = arith.addf %141, %147 : vector<162x128xf32>
    %c7_71 = arith.constant 7 : index
    %c0_72 = arith.constant 0 : index
    %149 = vector.load %arg11[%c7_71, %c0_72] : memref<194x64xf32, #tpu.memory_space<vmem>>, vector<162x64xf32>
    %150 = vector.broadcast %22 : vector<162x1xf32> to vector<162x64xf32>
    %151 = arith.mulf %149, %150 : vector<162x64xf32>
    %c1_73 = arith.constant 1 : index
    %c0_74 = arith.constant 0 : index
    %c0_75 = arith.constant 0 : index
    %152 = vector.load %arg4[%c1_73, %c0_74, %c0_75] : memref<9x64x128xf32, #tpu.memory_space<vmem>>, vector<1x64x128xf32>
    %153 = vector.shape_cast %152 : vector<1x64x128xf32> to vector<64x128xf32>
    %cst_76 = arith.constant dense<0.000000e+00> : vector<162x128xf32>
    %154 = tpu.matmul %151, %153, %cst_76 {dimension_numbers = #tpu.dot_dimension_numbers<[1], [0], [0], [1], [0, 0, 1, 1], [], []>} : vector<162x64xf32>, vector<64x128xf32>, vector<162x128xf32> -> vector<162x128xf32>
    %155 = arith.addf %148, %154 : vector<162x128xf32>
    %c8_77 = arith.constant 8 : index
    %c0_78 = arith.constant 0 : index
    %156 = vector.load %arg11[%c8_77, %c0_78] : memref<194x64xf32, #tpu.memory_space<vmem>>, vector<162x64xf32>
    %157 = vector.broadcast %39 : vector<162x1xf32> to vector<162x64xf32>
    %158 = arith.mulf %156, %157 : vector<162x64xf32>
    %c2_79 = arith.constant 2 : index
    %c0_80 = arith.constant 0 : index
    %c0_81 = arith.constant 0 : index
    %159 = vector.load %arg4[%c2_79, %c0_80, %c0_81] : memref<9x64x128xf32, #tpu.memory_space<vmem>>, vector<1x64x128xf32>
    %160 = vector.shape_cast %159 : vector<1x64x128xf32> to vector<64x128xf32>
    %cst_82 = arith.constant dense<0.000000e+00> : vector<162x128xf32>
    %161 = tpu.matmul %158, %160, %cst_82 {dimension_numbers = #tpu.dot_dimension_numbers<[1], [0], [0], [1], [0, 0, 1, 1], [], []>} : vector<162x64xf32>, vector<64x128xf32>, vector<162x128xf32> -> vector<162x128xf32>
    %162 = arith.addf %155, %161 : vector<162x128xf32>
    %c15_83 = arith.constant 15 : index
    %c0_84 = arith.constant 0 : index
    %163 = vector.load %arg11[%c15_83, %c0_84] : memref<194x64xf32, #tpu.memory_space<vmem>>, vector<162x64xf32>
    %164 = vector.broadcast %32 : vector<162x1xf32> to vector<162x64xf32>
    %165 = arith.mulf %163, %164 : vector<162x64xf32>
    %c3_85 = arith.constant 3 : index
    %c0_86 = arith.constant 0 : index
    %c0_87 = arith.constant 0 : index
    %166 = vector.load %arg4[%c3_85, %c0_86, %c0_87] : memref<9x64x128xf32, #tpu.memory_space<vmem>>, vector<1x64x128xf32>
    %167 = vector.shape_cast %166 : vector<1x64x128xf32> to vector<64x128xf32>
    %cst_88 = arith.constant dense<0.000000e+00> : vector<162x128xf32>
    %168 = tpu.matmul %165, %167, %cst_88 {dimension_numbers = #tpu.dot_dimension_numbers<[1], [0], [0], [1], [0, 0, 1, 1], [], []>} : vector<162x64xf32>, vector<64x128xf32>, vector<162x128xf32> -> vector<162x128xf32>
    %169 = arith.addf %162, %168 : vector<162x128xf32>
    %c16_89 = arith.constant 16 : index
    %c0_90 = arith.constant 0 : index
    %170 = vector.load %arg11[%c16_89, %c0_90] : memref<194x64xf32, #tpu.memory_space<vmem>>, vector<162x64xf32>
    %c4_91 = arith.constant 4 : index
    %c0_92 = arith.constant 0 : index
    %c0_93 = arith.constant 0 : index
    %171 = vector.load %arg4[%c4_91, %c0_92, %c0_93] : memref<9x64x128xf32, #tpu.memory_space<vmem>>, vector<1x64x128xf32>
    %172 = vector.shape_cast %171 : vector<1x64x128xf32> to vector<64x128xf32>
    %cst_94 = arith.constant dense<0.000000e+00> : vector<162x128xf32>
    %173 = tpu.matmul %170, %172, %cst_94 {dimension_numbers = #tpu.dot_dimension_numbers<[1], [0], [0], [1], [0, 0, 1, 1], [], []>} : vector<162x64xf32>, vector<64x128xf32>, vector<162x128xf32> -> vector<162x128xf32>
    %174 = arith.addf %169, %173 : vector<162x128xf32>
    %c17_95 = arith.constant 17 : index
    %c0_96 = arith.constant 0 : index
    %175 = vector.load %arg11[%c17_95, %c0_96] : memref<194x64xf32, #tpu.memory_space<vmem>>, vector<162x64xf32>
    %176 = vector.broadcast %37 : vector<162x1xf32> to vector<162x64xf32>
    %177 = arith.mulf %175, %176 : vector<162x64xf32>
    %c5_97 = arith.constant 5 : index
    %c0_98 = arith.constant 0 : index
    %c0_99 = arith.constant 0 : index
    %178 = vector.load %arg4[%c5_97, %c0_98, %c0_99] : memref<9x64x128xf32, #tpu.memory_space<vmem>>, vector<1x64x128xf32>
    %179 = vector.shape_cast %178 : vector<1x64x128xf32> to vector<64x128xf32>
    %cst_100 = arith.constant dense<0.000000e+00> : vector<162x128xf32>
    %180 = tpu.matmul %177, %179, %cst_100 {dimension_numbers = #tpu.dot_dimension_numbers<[1], [0], [0], [1], [0, 0, 1, 1], [], []>} : vector<162x64xf32>, vector<64x128xf32>, vector<162x128xf32> -> vector<162x128xf32>
    %181 = arith.addf %174, %180 : vector<162x128xf32>
    %c24_101 = arith.constant 24 : index
    %c0_102 = arith.constant 0 : index
    %182 = vector.load %arg11[%c24_101, %c0_102] : memref<194x64xf32, #tpu.memory_space<vmem>>, vector<162x64xf32>
    %183 = vector.broadcast %40 : vector<162x1xf32> to vector<162x64xf32>
    %184 = arith.mulf %182, %183 : vector<162x64xf32>
    %c6_103 = arith.constant 6 : index
    %c0_104 = arith.constant 0 : index
    %c0_105 = arith.constant 0 : index
    %185 = vector.load %arg4[%c6_103, %c0_104, %c0_105] : memref<9x64x128xf32, #tpu.memory_space<vmem>>, vector<1x64x128xf32>
    %186 = vector.shape_cast %185 : vector<1x64x128xf32> to vector<64x128xf32>
    %cst_106 = arith.constant dense<0.000000e+00> : vector<162x128xf32>
    %187 = tpu.matmul %184, %186, %cst_106 {dimension_numbers = #tpu.dot_dimension_numbers<[1], [0], [0], [1], [0, 0, 1, 1], [], []>} : vector<162x64xf32>, vector<64x128xf32>, vector<162x128xf32> -> vector<162x128xf32>
    %188 = arith.addf %181, %187 : vector<162x128xf32>
    %c25_107 = arith.constant 25 : index
    %c0_108 = arith.constant 0 : index
    %189 = vector.load %arg11[%c25_107, %c0_108] : memref<194x64xf32, #tpu.memory_space<vmem>>, vector<162x64xf32>
    %190 = vector.broadcast %27 : vector<162x1xf32> to vector<162x64xf32>
    %191 = arith.mulf %189, %190 : vector<162x64xf32>
    %c7_109 = arith.constant 7 : index
    %c0_110 = arith.constant 0 : index
    %c0_111 = arith.constant 0 : index
    %192 = vector.load %arg4[%c7_109, %c0_110, %c0_111] : memref<9x64x128xf32, #tpu.memory_space<vmem>>, vector<1x64x128xf32>
    %193 = vector.shape_cast %192 : vector<1x64x128xf32> to vector<64x128xf32>
    %cst_112 = arith.constant dense<0.000000e+00> : vector<162x128xf32>
    %194 = tpu.matmul %191, %193, %cst_112 {dimension_numbers = #tpu.dot_dimension_numbers<[1], [0], [0], [1], [0, 0, 1, 1], [], []>} : vector<162x64xf32>, vector<64x128xf32>, vector<162x128xf32> -> vector<162x128xf32>
    %195 = arith.addf %188, %194 : vector<162x128xf32>
    %c26_113 = arith.constant 26 : index
    %c0_114 = arith.constant 0 : index
    %196 = vector.load %arg11[%c26_113, %c0_114] : memref<194x64xf32, #tpu.memory_space<vmem>>, vector<162x64xf32>
    %197 = vector.broadcast %41 : vector<162x1xf32> to vector<162x64xf32>
    %198 = arith.mulf %196, %197 : vector<162x64xf32>
    %c8_115 = arith.constant 8 : index
    %c0_116 = arith.constant 0 : index
    %c0_117 = arith.constant 0 : index
    %199 = vector.load %arg4[%c8_115, %c0_116, %c0_117] : memref<9x64x128xf32, #tpu.memory_space<vmem>>, vector<1x64x128xf32>
    %200 = vector.shape_cast %199 : vector<1x64x128xf32> to vector<64x128xf32>
    %cst_118 = arith.constant dense<0.000000e+00> : vector<162x128xf32>
    %201 = tpu.matmul %198, %200, %cst_118 {dimension_numbers = #tpu.dot_dimension_numbers<[1], [0], [0], [1], [0, 0, 1, 1], [], []>} : vector<162x64xf32>, vector<64x128xf32>, vector<162x128xf32> -> vector<162x128xf32>
    %202 = arith.addf %195, %201 : vector<162x128xf32>
    %cst_119 = arith.constant dense<0.000000e+00> : vector<128xf32>
    %203 = vector.multi_reduction <add>, %202, %cst_119 [0] : vector<162x128xf32> to vector<128xf32>
    %204 = vector.shape_cast %203 : vector<128xf32> to vector<1x128xf32>
    %cst_120 = arith.constant 1.620000e+02 : f32
    %205 = vector.broadcast %cst_120 : f32 to vector<1x128xf32>
    %206 = arith.divf %204, %205 : vector<1x128xf32>
    %207 = vector.broadcast %206 : vector<1x128xf32> to vector<162x128xf32>
    %208 = arith.subf %202, %207 : vector<162x128xf32>
    %209 = arith.mulf %208, %208 : vector<162x128xf32>
    %cst_121 = arith.constant dense<0.000000e+00> : vector<128xf32>
    %210 = vector.multi_reduction <add>, %209, %cst_121 [0] : vector<162x128xf32> to vector<128xf32>
    %211 = vector.shape_cast %210 : vector<128xf32> to vector<1x128xf32>
    %cst_122 = arith.constant 1.620000e+02 : f32
    %212 = vector.broadcast %cst_122 : f32 to vector<1x128xf32>
    %213 = arith.divf %211, %212 : vector<1x128xf32>
    %c11 = arith.constant 11 : index
    %c0_123 = arith.constant 0 : index
    %214 = vector.load %arg3[%c11, %c0_123] : memref<16x128xf32, #tpu.memory_space<vmem>>, vector<1x128xf32>
    %cst_124 = arith.constant 9.99999974E-6 : f32
    %215 = vector.broadcast %cst_124 : f32 to vector<1x128xf32>
    %216 = arith.addf %213, %215 : vector<1x128xf32>
    %217 = math.rsqrt %216 : vector<1x128xf32>
    %218 = arith.mulf %214, %217 : vector<1x128xf32>
    %219 = vector.broadcast %218 : vector<1x128xf32> to vector<162x128xf32>
    %220 = arith.mulf %202, %219 : vector<162x128xf32>
    %c12 = arith.constant 12 : index
    %c0_125 = arith.constant 0 : index
    %221 = vector.load %arg3[%c12, %c0_125] : memref<16x128xf32, #tpu.memory_space<vmem>>, vector<1x128xf32>
    %222 = arith.mulf %206, %218 : vector<1x128xf32>
    %223 = arith.subf %221, %222 : vector<1x128xf32>
    %224 = vector.broadcast %223 : vector<1x128xf32> to vector<162x128xf32>
    %225 = arith.addf %220, %224 : vector<162x128xf32>
    %cst_126 = arith.constant 0.000000e+00 : f32
    %226 = vector.broadcast %cst_126 : f32 to vector<162x128xf32>
    %227 = arith.maximumf %225, %226 : vector<162x128xf32>
    %c0_127 = arith.constant 0 : index
    %c0_128 = arith.constant 0 : index
    %228 = vector.load %arg12[%c0_127, %c0_128] : memref<162x128xf32, #tpu.memory_space<vmem>>, vector<162x128xf32>
    tpu.vector_store %arg12[%c0_127, %c0_128], %227 {strides = array<i32>} : memref<162x128xf32, #tpu.memory_space<vmem>>, vector<162x128xf32>,
    %c0_129 = arith.constant 0 : index
    %c0_130 = arith.constant 0 : index
    %229 = vector.load %arg12[%c0_129, %c0_130] : memref<162x128xf32, #tpu.memory_space<vmem>>, vector<1x128xf32>
    %c0_131 = arith.constant 0 : index
    %c0_132 = arith.constant 0 : index
    %230 = vector.load %arg13[%c0_131, %c0_132] : memref<18x1152xf32, #tpu.memory_space<vmem>>, vector<1x128xf32>
    tpu.vector_store %arg13[%c0_131, %c0_132], %229 {strides = array<i32>} : memref<18x1152xf32, #tpu.memory_space<vmem>>, vector<1x128xf32>,
    %c81 = arith.constant 81 : index
    %c0_133 = arith.constant 0 : index
    %231 = vector.load %arg12[%c81, %c0_133] : memref<162x128xf32, #tpu.memory_space<vmem>>, vector<1x128xf32>
    %c1_134 = arith.constant 1 : index
    %c0_135 = arith.constant 0 : index
    %232 = vector.load %arg13[%c1_134, %c0_135] : memref<18x1152xf32, #tpu.memory_space<vmem>>, vector<1x128xf32>
    tpu.vector_store %arg13[%c1_134, %c0_135], %231 {strides = array<i32>} : memref<18x1152xf32, #tpu.memory_space<vmem>>, vector<1x128xf32>,
    %c3_136 = arith.constant 3 : index
    %c0_137 = arith.constant 0 : index
    %233 = vector.load %arg12[%c3_136, %c0_137] : memref<162x128xf32, #tpu.memory_space<vmem>>, vector<1x128xf32>
    %c2_138 = arith.constant 2 : index
    %c0_139 = arith.constant 0 : index
    %234 = vector.load %arg13[%c2_138, %c0_139] : memref<18x1152xf32, #tpu.memory_space<vmem>>, vector<1x128xf32>
    tpu.vector_store %arg13[%c2_138, %c0_139], %233 {strides = array<i32>} : memref<18x1152xf32, #tpu.memory_space<vmem>>, vector<1x128xf32>,
    %c84 = arith.constant 84 : index
    %c0_140 = arith.constant 0 : index
    %235 = vector.load %arg12[%c84, %c0_140] : memref<162x128xf32, #tpu.memory_space<vmem>>, vector<1x128xf32>
    %c3_141 = arith.constant 3 : index
    %c0_142 = arith.constant 0 : index
    %236 = vector.load %arg13[%c3_141, %c0_142] : memref<18x1152xf32, #tpu.memory_space<vmem>>, vector<1x128xf32>
    tpu.vector_store %arg13[%c3_141, %c0_142], %235 {strides = array<i32>} : memref<18x1152xf32, #tpu.memory_space<vmem>>, vector<1x128xf32>,
    %c6_143 = arith.constant 6 : index
    %c0_144 = arith.constant 0 : index
    %237 = vector.load %arg12[%c6_143, %c0_144] : memref<162x128xf32, #tpu.memory_space<vmem>>, vector<1x128xf32>
    %c4_145 = arith.constant 4 : index
    %c0_146 = arith.constant 0 : index
    %238 = vector.load %arg13[%c4_145, %c0_146] : memref<18x1152xf32, #tpu.memory_space<vmem>>, vector<1x128xf32>
    tpu.vector_store %arg13[%c4_145, %c0_146], %237 {strides = array<i32>} : memref<18x1152xf32, #tpu.memory_space<vmem>>, vector<1x128xf32>,
    %c87 = arith.constant 87 : index
    %c0_147 = arith.constant 0 : index
    %239 = vector.load %arg12[%c87, %c0_147] : memref<162x128xf32, #tpu.memory_space<vmem>>, vector<1x128xf32>
    %c5_148 = arith.constant 5 : index
    %c0_149 = arith.constant 0 : index
    %240 = vector.load %arg13[%c5_148, %c0_149] : memref<18x1152xf32, #tpu.memory_space<vmem>>, vector<1x128xf32>
    tpu.vector_store %arg13[%c5_148, %c0_149], %239 {strides = array<i32>} : memref<18x1152xf32, #tpu.memory_space<vmem>>, vector<1x128xf32>,
    %c27 = arith.constant 27 : index
    %c0_150 = arith.constant 0 : index
    %241 = vector.load %arg12[%c27, %c0_150] : memref<162x128xf32, #tpu.memory_space<vmem>>, vector<1x128xf32>
    %c6_151 = arith.constant 6 : index
    %c0_152 = arith.constant 0 : index
    %242 = vector.load %arg13[%c6_151, %c0_152] : memref<18x1152xf32, #tpu.memory_space<vmem>>, vector<1x128xf32>
    tpu.vector_store %arg13[%c6_151, %c0_152], %241 {strides = array<i32>} : memref<18x1152xf32, #tpu.memory_space<vmem>>, vector<1x128xf32>,
    %c108 = arith.constant 108 : index
    %c0_153 = arith.constant 0 : index
    %243 = vector.load %arg12[%c108, %c0_153] : memref<162x128xf32, #tpu.memory_space<vmem>>, vector<1x128xf32>
    %c7_154 = arith.constant 7 : index
    %c0_155 = arith.constant 0 : index
    %244 = vector.load %arg13[%c7_154, %c0_155] : memref<18x1152xf32, #tpu.memory_space<vmem>>, vector<1x128xf32>
    tpu.vector_store %arg13[%c7_154, %c0_155], %243 {strides = array<i32>} : memref<18x1152xf32, #tpu.memory_space<vmem>>, vector<1x128xf32>,
    %c30 = arith.constant 30 : index
    %c0_156 = arith.constant 0 : index
    %245 = vector.load %arg12[%c30, %c0_156] : memref<162x128xf32, #tpu.memory_space<vmem>>, vector<1x128xf32>
    %c8_157 = arith.constant 8 : index
    %c0_158 = arith.constant 0 : index
    %246 = vector.load %arg13[%c8_157, %c0_158] : memref<18x1152xf32, #tpu.memory_space<vmem>>, vector<1x128xf32>
    tpu.vector_store %arg13[%c8_157, %c0_158], %245 {strides = array<i32>} : memref<18x1152xf32, #tpu.memory_space<vmem>>, vector<1x128xf32>,
    %c111 = arith.constant 111 : index
    %c0_159 = arith.constant 0 : index
    %247 = vector.load %arg12[%c111, %c0_159] : memref<162x128xf32, #tpu.memory_space<vmem>>, vector<1x128xf32>
    %c9_160 = arith.constant 9 : index
    %c0_161 = arith.constant 0 : index
    %248 = vector.load %arg13[%c9_160, %c0_161] : memref<18x1152xf32, #tpu.memory_space<vmem>>, vector<1x128xf32>
    tpu.vector_store %arg13[%c9_160, %c0_161], %247 {strides = array<i32>} : memref<18x1152xf32, #tpu.memory_space<vmem>>, vector<1x128xf32>,
    %c33 = arith.constant 33 : index
    %c0_162 = arith.constant 0 : index
    %249 = vector.load %arg12[%c33, %c0_162] : memref<162x128xf32, #tpu.memory_space<vmem>>, vector<1x128xf32>
    %c10_163 = arith.constant 10 : index
    %c0_164 = arith.constant 0 : index
    %250 = vector.load %arg13[%c10_163, %c0_164] : memref<18x1152xf32, #tpu.memory_space<vmem>>, vector<1x128xf32>
    tpu.vector_store %arg13[%c10_163, %c0_164], %249 {strides = array<i32>} : memref<18x1152xf32, #tpu.memory_space<vmem>>, vector<1x128xf32>,
    %c114 = arith.constant 114 : index
    %c0_165 = arith.constant 0 : index
    %251 = vector.load %arg12[%c114, %c0_165] : memref<162x128xf32, #tpu.memory_space<vmem>>, vector<1x128xf32>
    %c11_166 = arith.constant 11 : index
    %c0_167 = arith.constant 0 : index
    %252 = vector.load %arg13[%c11_166, %c0_167] : memref<18x1152xf32, #tpu.memory_space<vmem>>, vector<1x128xf32>
    tpu.vector_store %arg13[%c11_166, %c0_167], %251 {strides = array<i32>} : memref<18x1152xf32, #tpu.memory_space<vmem>>, vector<1x128xf32>,
    %c54 = arith.constant 54 : index
    %c0_168 = arith.constant 0 : index
    %253 = vector.load %arg12[%c54, %c0_168] : memref<162x128xf32, #tpu.memory_space<vmem>>, vector<1x128xf32>
    %c12_169 = arith.constant 12 : index
    %c0_170 = arith.constant 0 : index
    %254 = vector.load %arg13[%c12_169, %c0_170] : memref<18x1152xf32, #tpu.memory_space<vmem>>, vector<1x128xf32>
    tpu.vector_store %arg13[%c12_169, %c0_170], %253 {strides = array<i32>} : memref<18x1152xf32, #tpu.memory_space<vmem>>, vector<1x128xf32>,
    %c135 = arith.constant 135 : index
    %c0_171 = arith.constant 0 : index
    %255 = vector.load %arg12[%c135, %c0_171] : memref<162x128xf32, #tpu.memory_space<vmem>>, vector<1x128xf32>
    %c13 = arith.constant 13 : index
    %c0_172 = arith.constant 0 : index
    %256 = vector.load %arg13[%c13, %c0_172] : memref<18x1152xf32, #tpu.memory_space<vmem>>, vector<1x128xf32>
    tpu.vector_store %arg13[%c13, %c0_172], %255 {strides = array<i32>} : memref<18x1152xf32, #tpu.memory_space<vmem>>, vector<1x128xf32>,
    %c57 = arith.constant 57 : index
    %c0_173 = arith.constant 0 : index
    %257 = vector.load %arg12[%c57, %c0_173] : memref<162x128xf32, #tpu.memory_space<vmem>>, vector<1x128xf32>
    %c14 = arith.constant 14 : index
    %c0_174 = arith.constant 0 : index
    %258 = vector.load %arg13[%c14, %c0_174] : memref<18x1152xf32, #tpu.memory_space<vmem>>, vector<1x128xf32>
    tpu.vector_store %arg13[%c14, %c0_174], %257 {strides = array<i32>} : memref<18x1152xf32, #tpu.memory_space<vmem>>, vector<1x128xf32>,
    %c138 = arith.constant 138 : index
    %c0_175 = arith.constant 0 : index
    %259 = vector.load %arg12[%c138, %c0_175] : memref<162x128xf32, #tpu.memory_space<vmem>>, vector<1x128xf32>
    %c15_176 = arith.constant 15 : index
    %c0_177 = arith.constant 0 : index
    %260 = vector.load %arg13[%c15_176, %c0_177] : memref<18x1152xf32, #tpu.memory_space<vmem>>, vector<1x128xf32>
    tpu.vector_store %arg13[%c15_176, %c0_177], %259 {strides = array<i32>} : memref<18x1152xf32, #tpu.memory_space<vmem>>, vector<1x128xf32>,
    %c60 = arith.constant 60 : index
    %c0_178 = arith.constant 0 : index
    %261 = vector.load %arg12[%c60, %c0_178] : memref<162x128xf32, #tpu.memory_space<vmem>>, vector<1x128xf32>
    %c16_179 = arith.constant 16 : index
    %c0_180 = arith.constant 0 : index
    %262 = vector.load %arg13[%c16_179, %c0_180] : memref<18x1152xf32, #tpu.memory_space<vmem>>, vector<1x128xf32>
    tpu.vector_store %arg13[%c16_179, %c0_180], %261 {strides = array<i32>} : memref<18x1152xf32, #tpu.memory_space<vmem>>, vector<1x128xf32>,
    %c141 = arith.constant 141 : index
    %c0_181 = arith.constant 0 : index
    %263 = vector.load %arg12[%c141, %c0_181] : memref<162x128xf32, #tpu.memory_space<vmem>>, vector<1x128xf32>
    %c17_182 = arith.constant 17 : index
    %c0_183 = arith.constant 0 : index
    %264 = vector.load %arg13[%c17_182, %c0_183] : memref<18x1152xf32, #tpu.memory_space<vmem>>, vector<1x128xf32>
    tpu.vector_store %arg13[%c17_182, %c0_183], %263 {strides = array<i32>} : memref<18x1152xf32, #tpu.memory_space<vmem>>, vector<1x128xf32>,
    %c1_184 = arith.constant 1 : index
    %c0_185 = arith.constant 0 : index
    %265 = vector.load %arg12[%c1_184, %c0_185] : memref<162x128xf32, #tpu.memory_space<vmem>>, vector<1x128xf32>
    %c0_186 = arith.constant 0 : index
    %c128 = arith.constant 128 : index
    %266 = vector.load %arg13[%c0_186, %c128] : memref<18x1152xf32, #tpu.memory_space<vmem>>, vector<1x128xf32>
    tpu.vector_store %arg13[%c0_186, %c128], %265 {strides = array<i32>} : memref<18x1152xf32, #tpu.memory_space<vmem>>, vector<1x128xf32>,
    %c82 = arith.constant 82 : index
    %c0_187 = arith.constant 0 : index
    %267 = vector.load %arg12[%c82, %c0_187] : memref<162x128xf32, #tpu.memory_space<vmem>>, vector<1x128xf32>
    %c1_188 = arith.constant 1 : index
    %c128_189 = arith.constant 128 : index
    %268 = vector.load %arg13[%c1_188, %c128_189] : memref<18x1152xf32, #tpu.memory_space<vmem>>, vector<1x128xf32>
    tpu.vector_store %arg13[%c1_188, %c128_189], %267 {strides = array<i32>} : memref<18x1152xf32, #tpu.memory_space<vmem>>, vector<1x128xf32>,
    %c4_190 = arith.constant 4 : index
    %c0_191 = arith.constant 0 : index
    %269 = vector.load %arg12[%c4_190, %c0_191] : memref<162x128xf32, #tpu.memory_space<vmem>>, vector<1x128xf32>
    %c2_192 = arith.constant 2 : index
    %c128_193 = arith.constant 128 : index
    %270 = vector.load %arg13[%c2_192, %c128_193] : memref<18x1152xf32, #tpu.memory_space<vmem>>, vector<1x128xf32>
    tpu.vector_store %arg13[%c2_192, %c128_193], %269 {strides = array<i32>} : memref<18x1152xf32, #tpu.memory_space<vmem>>, vector<1x128xf32>,
    %c85 = arith.constant 85 : index
    %c0_194 = arith.constant 0 : index
    %271 = vector.load %arg12[%c85, %c0_194] : memref<162x128xf32, #tpu.memory_space<vmem>>, vector<1x128xf32>
    %c3_195 = arith.constant 3 : index
    %c128_196 = arith.constant 128 : index
    %272 = vector.load %arg13[%c3_195, %c128_196] : memref<18x1152xf32, #tpu.memory_space<vmem>>, vector<1x128xf32>
    tpu.vector_store %arg13[%c3_195, %c128_196], %271 {strides = array<i32>} : memref<18x1152xf32, #tpu.memory_space<vmem>>, vector<1x128xf32>,
    %c7_197 = arith.constant 7 : index
    %c0_198 = arith.constant 0 : index
    %273 = vector.load %arg12[%c7_197, %c0_198] : memref<162x128xf32, #tpu.memory_space<vmem>>, vector<1x128xf32>
    %c4_199 = arith.constant 4 : index
    %c128_200 = arith.constant 128 : index
    %274 = vector.load %arg13[%c4_199, %c128_200] : memref<18x1152xf32, #tpu.memory_space<vmem>>, vector<1x128xf32>
    tpu.vector_store %arg13[%c4_199, %c128_200], %273 {strides = array<i32>} : memref<18x1152xf32, #tpu.memory_space<vmem>>, vector<1x128xf32>,
    %c88 = arith.constant 88 : index
    %c0_201 = arith.constant 0 : index
    %275 = vector.load %arg12[%c88, %c0_201] : memref<162x128xf32, #tpu.memory_space<vmem>>, vector<1x128xf32>
    %c5_202 = arith.constant 5 : index
    %c128_203 = arith.constant 128 : index
    %276 = vector.load %arg13[%c5_202, %c128_203] : memref<18x1152xf32, #tpu.memory_space<vmem>>, vector<1x128xf32>
    tpu.vector_store %arg13[%c5_202, %c128_203], %275 {strides = array<i32>} : memref<18x1152xf32, #tpu.memory_space<vmem>>, vector<1x128xf32>,
    %c28 = arith.constant 28 : index
    %c0_204 = arith.constant 0 : index
    %277 = vector.load %arg12[%c28, %c0_204] : memref<162x128xf32, #tpu.memory_space<vmem>>, vector<1x128xf32>
    %c6_205 = arith.constant 6 : index
    %c128_206 = arith.constant 128 : index
    %278 = vector.load %arg13[%c6_205, %c128_206] : memref<18x1152xf32, #tpu.memory_space<vmem>>, vector<1x128xf32>
    tpu.vector_store %arg13[%c6_205, %c128_206], %277 {strides = array<i32>} : memref<18x1152xf32, #tpu.memory_space<vmem>>, vector<1x128xf32>,
    %c109 = arith.constant 109 : index
    %c0_207 = arith.constant 0 : index
    %279 = vector.load %arg12[%c109, %c0_207] : memref<162x128xf32, #tpu.memory_space<vmem>>, vector<1x128xf32>
    %c7_208 = arith.constant 7 : index
    %c128_209 = arith.constant 128 : index
    %280 = vector.load %arg13[%c7_208, %c128_209] : memref<18x1152xf32, #tpu.memory_space<vmem>>, vector<1x128xf32>
    tpu.vector_store %arg13[%c7_208, %c128_209], %279 {strides = array<i32>} : memref<18x1152xf32, #tpu.memory_space<vmem>>, vector<1x128xf32>,
    %c31 = arith.constant 31 : index
    %c0_210 = arith.constant 0 : index
    %281 = vector.load %arg12[%c31, %c0_210] : memref<162x128xf32, #tpu.memory_space<vmem>>, vector<1x128xf32>
    %c8_211 = arith.constant 8 : index
    %c128_212 = arith.constant 128 : index
    %282 = vector.load %arg13[%c8_211, %c128_212] : memref<18x1152xf32, #tpu.memory_space<vmem>>, vector<1x128xf32>
    tpu.vector_store %arg13[%c8_211, %c128_212], %281 {strides = array<i32>} : memref<18x1152xf32, #tpu.memory_space<vmem>>, vector<1x128xf32>,
    %c112 = arith.constant 112 : index
    %c0_213 = arith.constant 0 : index
    %283 = vector.load %arg12[%c112, %c0_213] : memref<162x128xf32, #tpu.memory_space<vmem>>, vector<1x128xf32>
    %c9_214 = arith.constant 9 : index
    %c128_215 = arith.constant 128 : index
    %284 = vector.load %arg13[%c9_214, %c128_215] : memref<18x1152xf32, #tpu.memory_space<vmem>>, vector<1x128xf32>
    tpu.vector_store %arg13[%c9_214, %c128_215], %283 {strides = array<i32>} : memref<18x1152xf32, #tpu.memory_space<vmem>>, vector<1x128xf32>,
    %c34 = arith.constant 34 : index
    %c0_216 = arith.constant 0 : index
    %285 = vector.load %arg12[%c34, %c0_216] : memref<162x128xf32, #tpu.memory_space<vmem>>, vector<1x128xf32>
    %c10_217 = arith.constant 10 : index
    %c128_218 = arith.constant 128 : index
    %286 = vector.load %arg13[%c10_217, %c128_218] : memref<18x1152xf32, #tpu.memory_space<vmem>>, vector<1x128xf32>
    tpu.vector_store %arg13[%c10_217, %c128_218], %285 {strides = array<i32>} : memref<18x1152xf32, #tpu.memory_space<vmem>>, vector<1x128xf32>,
    %c115 = arith.constant 115 : index
    %c0_219 = arith.constant 0 : index
    %287 = vector.load %arg12[%c115, %c0_219] : memref<162x128xf32, #tpu.memory_space<vmem>>, vector<1x128xf32>
    %c11_220 = arith.constant 11 : index
    %c128_221 = arith.constant 128 : index
    %288 = vector.load %arg13[%c11_220, %c128_221] : memref<18x1152xf32, #tpu.memory_space<vmem>>, vector<1x128xf32>
    tpu.vector_store %arg13[%c11_220, %c128_221], %287 {strides = array<i32>} : memref<18x1152xf32, #tpu.memory_space<vmem>>, vector<1x128xf32>,
    %c55 = arith.constant 55 : index
    %c0_222 = arith.constant 0 : index
    %289 = vector.load %arg12[%c55, %c0_222] : memref<162x128xf32, #tpu.memory_space<vmem>>, vector<1x128xf32>
    %c12_223 = arith.constant 12 : index
    %c128_224 = arith.constant 128 : index
    %290 = vector.load %arg13[%c12_223, %c128_224] : memref<18x1152xf32, #tpu.memory_space<vmem>>, vector<1x128xf32>
    tpu.vector_store %arg13[%c12_223, %c128_224], %289 {strides = array<i32>} : memref<18x1152xf32, #tpu.memory_space<vmem>>, vector<1x128xf32>,
    %c136 = arith.constant 136 : index
    %c0_225 = arith.constant 0 : index
    %291 = vector.load %arg12[%c136, %c0_225] : memref<162x128xf32, #tpu.memory_space<vmem>>, vector<1x128xf32>
    %c13_226 = arith.constant 13 : index
    %c128_227 = arith.constant 128 : index
    %292 = vector.load %arg13[%c13_226, %c128_227] : memref<18x1152xf32, #tpu.memory_space<vmem>>, vector<1x128xf32>
    tpu.vector_store %arg13[%c13_226, %c128_227], %291 {strides = array<i32>} : memref<18x1152xf32, #tpu.memory_space<vmem>>, vector<1x128xf32>,
    %c58 = arith.constant 58 : index
    %c0_228 = arith.constant 0 : index
    %293 = vector.load %arg12[%c58, %c0_228] : memref<162x128xf32, #tpu.memory_space<vmem>>, vector<1x128xf32>
    %c14_229 = arith.constant 14 : index
    %c128_230 = arith.constant 128 : index
    %294 = vector.load %arg13[%c14_229, %c128_230] : memref<18x1152xf32, #tpu.memory_space<vmem>>, vector<1x128xf32>
    tpu.vector_store %arg13[%c14_229, %c128_230], %293 {strides = array<i32>} : memref<18x1152xf32, #tpu.memory_space<vmem>>, vector<1x128xf32>,
    %c139 = arith.constant 139 : index
    %c0_231 = arith.constant 0 : index
    %295 = vector.load %arg12[%c139, %c0_231] : memref<162x128xf32, #tpu.memory_space<vmem>>, vector<1x128xf32>
    %c15_232 = arith.constant 15 : index
    %c128_233 = arith.constant 128 : index
    %296 = vector.load %arg13[%c15_232, %c128_233] : memref<18x1152xf32, #tpu.memory_space<vmem>>, vector<1x128xf32>
    tpu.vector_store %arg13[%c15_232, %c128_233], %295 {strides = array<i32>} : memref<18x1152xf32, #tpu.memory_space<vmem>>, vector<1x128xf32>,
    %c61 = arith.constant 61 : index
    %c0_234 = arith.constant 0 : index
    %297 = vector.load %arg12[%c61, %c0_234] : memref<162x128xf32, #tpu.memory_space<vmem>>, vector<1x128xf32>
    %c16_235 = arith.constant 16 : index
    %c128_236 = arith.constant 128 : index
    %298 = vector.load %arg13[%c16_235, %c128_236] : memref<18x1152xf32, #tpu.memory_space<vmem>>, vector<1x128xf32>
    tpu.vector_store %arg13[%c16_235, %c128_236], %297 {strides = array<i32>} : memref<18x1152xf32, #tpu.memory_space<vmem>>, vector<1x128xf32>,
    %c142 = arith.constant 142 : index
    %c0_237 = arith.constant 0 : index
    %299 = vector.load %arg12[%c142, %c0_237] : memref<162x128xf32, #tpu.memory_space<vmem>>, vector<1x128xf32>
    %c17_238 = arith.constant 17 : index
    %c128_239 = arith.constant 128 : index
    %300 = vector.load %arg13[%c17_238, %c128_239] : memref<18x1152xf32, #tpu.memory_space<vmem>>, vector<1x128xf32>
    tpu.vector_store %arg13[%c17_238, %c128_239], %299 {strides = array<i32>} : memref<18x1152xf32, #tpu.memory_space<vmem>>, vector<1x128xf32>,
    %c2_240 = arith.constant 2 : index
    %c0_241 = arith.constant 0 : index
    %301 = vector.load %arg12[%c2_240, %c0_241] : memref<162x128xf32, #tpu.memory_space<vmem>>, vector<1x128xf32>
    %c0_242 = arith.constant 0 : index
    %c256 = arith.constant 256 : index
    %302 = vector.load %arg13[%c0_242, %c256] : memref<18x1152xf32, #tpu.memory_space<vmem>>, vector<1x128xf32>
    tpu.vector_store %arg13[%c0_242, %c256], %301 {strides = array<i32>} : memref<18x1152xf32, #tpu.memory_space<vmem>>, vector<1x128xf32>,
    %c83 = arith.constant 83 : index
    %c0_243 = arith.constant 0 : index
    %303 = vector.load %arg12[%c83, %c0_243] : memref<162x128xf32, #tpu.memory_space<vmem>>, vector<1x128xf32>
    %c1_244 = arith.constant 1 : index
    %c256_245 = arith.constant 256 : index
    %304 = vector.load %arg13[%c1_244, %c256_245] : memref<18x1152xf32, #tpu.memory_space<vmem>>, vector<1x128xf32>
    tpu.vector_store %arg13[%c1_244, %c256_245], %303 {strides = array<i32>} : memref<18x1152xf32, #tpu.memory_space<vmem>>, vector<1x128xf32>,
    %c5_246 = arith.constant 5 : index
    %c0_247 = arith.constant 0 : index
    %305 = vector.load %arg12[%c5_246, %c0_247] : memref<162x128xf32, #tpu.memory_space<vmem>>, vector<1x128xf32>
    %c2_248 = arith.constant 2 : index
    %c256_249 = arith.constant 256 : index
    %306 = vector.load %arg13[%c2_248, %c256_249] : memref<18x1152xf32, #tpu.memory_space<vmem>>, vector<1x128xf32>
    tpu.vector_store %arg13[%c2_248, %c256_249], %305 {strides = array<i32>} : memref<18x1152xf32, #tpu.memory_space<vmem>>, vector<1x128xf32>,
    %c86 = arith.constant 86 : index
    %c0_250 = arith.constant 0 : index
    %307 = vector.load %arg12[%c86, %c0_250] : memref<162x128xf32, #tpu.memory_space<vmem>>, vector<1x128xf32>
    %c3_251 = arith.constant 3 : index
    %c256_252 = arith.constant 256 : index
    %308 = vector.load %arg13[%c3_251, %c256_252] : memref<18x1152xf32, #tpu.memory_space<vmem>>, vector<1x128xf32>
    tpu.vector_store %arg13[%c3_251, %c256_252], %307 {strides = array<i32>} : memref<18x1152xf32, #tpu.memory_space<vmem>>, vector<1x128xf32>,
    %c8_253 = arith.constant 8 : index
    %c0_254 = arith.constant 0 : index
    %309 = vector.load %arg12[%c8_253, %c0_254] : memref<162x128xf32, #tpu.memory_space<vmem>>, vector<1x128xf32>
    %c4_255 = arith.constant 4 : index
    %c256_256 = arith.constant 256 : index
    %310 = vector.load %arg13[%c4_255, %c256_256] : memref<18x1152xf32, #tpu.memory_space<vmem>>, vector<1x128xf32>
    tpu.vector_store %arg13[%c4_255, %c256_256], %309 {strides = array<i32>} : memref<18x1152xf32, #tpu.memory_space<vmem>>, vector<1x128xf32>,
    %c89 = arith.constant 89 : index
    %c0_257 = arith.constant 0 : index
    %311 = vector.load %arg12[%c89, %c0_257] : memref<162x128xf32, #tpu.memory_space<vmem>>, vector<1x128xf32>
    %c5_258 = arith.constant 5 : index
    %c256_259 = arith.constant 256 : index
    %312 = vector.load %arg13[%c5_258, %c256_259] : memref<18x1152xf32, #tpu.memory_space<vmem>>, vector<1x128xf32>
    tpu.vector_store %arg13[%c5_258, %c256_259], %311 {strides = array<i32>} : memref<18x1152xf32, #tpu.memory_space<vmem>>, vector<1x128xf32>,
    %c29 = arith.constant 29 : index
    %c0_260 = arith.constant 0 : index
    %313 = vector.load %arg12[%c29, %c0_260] : memref<162x128xf32, #tpu.memory_space<vmem>>, vector<1x128xf32>
    %c6_261 = arith.constant 6 : index
    %c256_262 = arith.constant 256 : index
    %314 = vector.load %arg13[%c6_261, %c256_262] : memref<18x1152xf32, #tpu.memory_space<vmem>>, vector<1x128xf32>
    tpu.vector_store %arg13[%c6_261, %c256_262], %313 {strides = array<i32>} : memref<18x1152xf32, #tpu.memory_space<vmem>>, vector<1x128xf32>,
    %c110 = arith.constant 110 : index
    %c0_263 = arith.constant 0 : index
    %315 = vector.load %arg12[%c110, %c0_263] : memref<162x128xf32, #tpu.memory_space<vmem>>, vector<1x128xf32>
    %c7_264 = arith.constant 7 : index
    %c256_265 = arith.constant 256 : index
    %316 = vector.load %arg13[%c7_264, %c256_265] : memref<18x1152xf32, #tpu.memory_space<vmem>>, vector<1x128xf32>
    tpu.vector_store %arg13[%c7_264, %c256_265], %315 {strides = array<i32>} : memref<18x1152xf32, #tpu.memory_space<vmem>>, vector<1x128xf32>,
    %c32 = arith.constant 32 : index
    %c0_266 = arith.constant 0 : index
    %317 = vector.load %arg12[%c32, %c0_266] : memref<162x128xf32, #tpu.memory_space<vmem>>, vector<1x128xf32>
    %c8_267 = arith.constant 8 : index
    %c256_268 = arith.constant 256 : index
    %318 = vector.load %arg13[%c8_267, %c256_268] : memref<18x1152xf32, #tpu.memory_space<vmem>>, vector<1x128xf32>
    tpu.vector_store %arg13[%c8_267, %c256_268], %317 {strides = array<i32>} : memref<18x1152xf32, #tpu.memory_space<vmem>>, vector<1x128xf32>,
    %c113 = arith.constant 113 : index
    %c0_269 = arith.constant 0 : index
    %319 = vector.load %arg12[%c113, %c0_269] : memref<162x128xf32, #tpu.memory_space<vmem>>, vector<1x128xf32>
    %c9_270 = arith.constant 9 : index
    %c256_271 = arith.constant 256 : index
    %320 = vector.load %arg13[%c9_270, %c256_271] : memref<18x1152xf32, #tpu.memory_space<vmem>>, vector<1x128xf32>
    tpu.vector_store %arg13[%c9_270, %c256_271], %319 {strides = array<i32>} : memref<18x1152xf32, #tpu.memory_space<vmem>>, vector<1x128xf32>,
    %c35 = arith.constant 35 : index
    %c0_272 = arith.constant 0 : index
    %321 = vector.load %arg12[%c35, %c0_272] : memref<162x128xf32, #tpu.memory_space<vmem>>, vector<1x128xf32>
    %c10_273 = arith.constant 10 : index
    %c256_274 = arith.constant 256 : index
    %322 = vector.load %arg13[%c10_273, %c256_274] : memref<18x1152xf32, #tpu.memory_space<vmem>>, vector<1x128xf32>
    tpu.vector_store %arg13[%c10_273, %c256_274], %321 {strides = array<i32>} : memref<18x1152xf32, #tpu.memory_space<vmem>>, vector<1x128xf32>,
    %c116 = arith.constant 116 : index
    %c0_275 = arith.constant 0 : index
    %323 = vector.load %arg12[%c116, %c0_275] : memref<162x128xf32, #tpu.memory_space<vmem>>, vector<1x128xf32>
    %c11_276 = arith.constant 11 : index
    %c256_277 = arith.constant 256 : index
    %324 = vector.load %arg13[%c11_276, %c256_277] : memref<18x1152xf32, #tpu.memory_space<vmem>>, vector<1x128xf32>
    tpu.vector_store %arg13[%c11_276, %c256_277], %323 {strides = array<i32>} : memref<18x1152xf32, #tpu.memory_space<vmem>>, vector<1x128xf32>,
    %c56 = arith.constant 56 : index
    %c0_278 = arith.constant 0 : index
    %325 = vector.load %arg12[%c56, %c0_278] : memref<162x128xf32, #tpu.memory_space<vmem>>, vector<1x128xf32>
    %c12_279 = arith.constant 12 : index
    %c256_280 = arith.constant 256 : index
    %326 = vector.load %arg13[%c12_279, %c256_280] : memref<18x1152xf32, #tpu.memory_space<vmem>>, vector<1x128xf32>
    tpu.vector_store %arg13[%c12_279, %c256_280], %325 {strides = array<i32>} : memref<18x1152xf32, #tpu.memory_space<vmem>>, vector<1x128xf32>,
    %c137 = arith.constant 137 : index
    %c0_281 = arith.constant 0 : index
    %327 = vector.load %arg12[%c137, %c0_281] : memref<162x128xf32, #tpu.memory_space<vmem>>, vector<1x128xf32>
    %c13_282 = arith.constant 13 : index
    %c256_283 = arith.constant 256 : index
    %328 = vector.load %arg13[%c13_282, %c256_283] : memref<18x1152xf32, #tpu.memory_space<vmem>>, vector<1x128xf32>
    tpu.vector_store %arg13[%c13_282, %c256_283], %327 {strides = array<i32>} : memref<18x1152xf32, #tpu.memory_space<vmem>>, vector<1x128xf32>,
    %c59 = arith.constant 59 : index
    %c0_284 = arith.constant 0 : index
    %329 = vector.load %arg12[%c59, %c0_284] : memref<162x128xf32, #tpu.memory_space<vmem>>, vector<1x128xf32>
    %c14_285 = arith.constant 14 : index
    %c256_286 = arith.constant 256 : index
    %330 = vector.load %arg13[%c14_285, %c256_286] : memref<18x1152xf32, #tpu.memory_space<vmem>>, vector<1x128xf32>
    tpu.vector_store %arg13[%c14_285, %c256_286], %329 {strides = array<i32>} : memref<18x1152xf32, #tpu.memory_space<vmem>>, vector<1x128xf32>,
    %c140 = arith.constant 140 : index
    %c0_287 = arith.constant 0 : index
    %331 = vector.load %arg12[%c140, %c0_287] : memref<162x128xf32, #tpu.memory_space<vmem>>, vector<1x128xf32>
    %c15_288 = arith.constant 15 : index
    %c256_289 = arith.constant 256 : index
    %332 = vector.load %arg13[%c15_288, %c256_289] : memref<18x1152xf32, #tpu.memory_space<vmem>>, vector<1x128xf32>
    tpu.vector_store %arg13[%c15_288, %c256_289], %331 {strides = array<i32>} : memref<18x1152xf32, #tpu.memory_space<vmem>>, vector<1x128xf32>,
    %c62 = arith.constant 62 : index
    %c0_290 = arith.constant 0 : index
    %333 = vector.load %arg12[%c62, %c0_290] : memref<162x128xf32, #tpu.memory_space<vmem>>, vector<1x128xf32>
    %c16_291 = arith.constant 16 : index
    %c256_292 = arith.constant 256 : index
    %334 = vector.load %arg13[%c16_291, %c256_292] : memref<18x1152xf32, #tpu.memory_space<vmem>>, vector<1x128xf32>
    tpu.vector_store %arg13[%c16_291, %c256_292], %333 {strides = array<i32>} : memref<18x1152xf32, #tpu.memory_space<vmem>>, vector<1x128xf32>,
    %c143 = arith.constant 143 : index
    %c0_293 = arith.constant 0 : index
    %335 = vector.load %arg12[%c143, %c0_293] : memref<162x128xf32, #tpu.memory_space<vmem>>, vector<1x128xf32>
    %c17_294 = arith.constant 17 : index
    %c256_295 = arith.constant 256 : index
    %336 = vector.load %arg13[%c17_294, %c256_295] : memref<18x1152xf32, #tpu.memory_space<vmem>>, vector<1x128xf32>
    tpu.vector_store %arg13[%c17_294, %c256_295], %335 {strides = array<i32>} : memref<18x1152xf32, #tpu.memory_space<vmem>>, vector<1x128xf32>,
    %c9_296 = arith.constant 9 : index
    %c0_297 = arith.constant 0 : index
    %337 = vector.load %arg12[%c9_296, %c0_297] : memref<162x128xf32, #tpu.memory_space<vmem>>, vector<1x128xf32>
    %c0_298 = arith.constant 0 : index
    %c384 = arith.constant 384 : index
    %338 = vector.load %arg13[%c0_298, %c384] : memref<18x1152xf32, #tpu.memory_space<vmem>>, vector<1x128xf32>
    tpu.vector_store %arg13[%c0_298, %c384], %337 {strides = array<i32>} : memref<18x1152xf32, #tpu.memory_space<vmem>>, vector<1x128xf32>,
    %c90 = arith.constant 90 : index
    %c0_299 = arith.constant 0 : index
    %339 = vector.load %arg12[%c90, %c0_299] : memref<162x128xf32, #tpu.memory_space<vmem>>, vector<1x128xf32>
    %c1_300 = arith.constant 1 : index
    %c384_301 = arith.constant 384 : index
    %340 = vector.load %arg13[%c1_300, %c384_301] : memref<18x1152xf32, #tpu.memory_space<vmem>>, vector<1x128xf32>
    tpu.vector_store %arg13[%c1_300, %c384_301], %339 {strides = array<i32>} : memref<18x1152xf32, #tpu.memory_space<vmem>>, vector<1x128xf32>,
    %c12_302 = arith.constant 12 : index
    %c0_303 = arith.constant 0 : index
    %341 = vector.load %arg12[%c12_302, %c0_303] : memref<162x128xf32, #tpu.memory_space<vmem>>, vector<1x128xf32>
    %c2_304 = arith.constant 2 : index
    %c384_305 = arith.constant 384 : index
    %342 = vector.load %arg13[%c2_304, %c384_305] : memref<18x1152xf32, #tpu.memory_space<vmem>>, vector<1x128xf32>
    tpu.vector_store %arg13[%c2_304, %c384_305], %341 {strides = array<i32>} : memref<18x1152xf32, #tpu.memory_space<vmem>>, vector<1x128xf32>,
    %c93 = arith.constant 93 : index
    %c0_306 = arith.constant 0 : index
    %343 = vector.load %arg12[%c93, %c0_306] : memref<162x128xf32, #tpu.memory_space<vmem>>, vector<1x128xf32>
    %c3_307 = arith.constant 3 : index
    %c384_308 = arith.constant 384 : index
    %344 = vector.load %arg13[%c3_307, %c384_308] : memref<18x1152xf32, #tpu.memory_space<vmem>>, vector<1x128xf32>
    tpu.vector_store %arg13[%c3_307, %c384_308], %343 {strides = array<i32>} : memref<18x1152xf32, #tpu.memory_space<vmem>>, vector<1x128xf32>,
    %c15_309 = arith.constant 15 : index
    %c0_310 = arith.constant 0 : index
    %345 = vector.load %arg12[%c15_309, %c0_310] : memref<162x128xf32, #tpu.memory_space<vmem>>, vector<1x128xf32>
    %c4_311 = arith.constant 4 : index
    %c384_312 = arith.constant 384 : index
    %346 = vector.load %arg13[%c4_311, %c384_312] : memref<18x1152xf32, #tpu.memory_space<vmem>>, vector<1x128xf32>
    tpu.vector_store %arg13[%c4_311, %c384_312], %345 {strides = array<i32>} : memref<18x1152xf32, #tpu.memory_space<vmem>>, vector<1x128xf32>,
    %c96 = arith.constant 96 : index
    %c0_313 = arith.constant 0 : index
    %347 = vector.load %arg12[%c96, %c0_313] : memref<162x128xf32, #tpu.memory_space<vmem>>, vector<1x128xf32>
    %c5_314 = arith.constant 5 : index
    %c384_315 = arith.constant 384 : index
    %348 = vector.load %arg13[%c5_314, %c384_315] : memref<18x1152xf32, #tpu.memory_space<vmem>>, vector<1x128xf32>
    tpu.vector_store %arg13[%c5_314, %c384_315], %347 {strides = array<i32>} : memref<18x1152xf32, #tpu.memory_space<vmem>>, vector<1x128xf32>,
    %c36 = arith.constant 36 : index
    %c0_316 = arith.constant 0 : index
    %349 = vector.load %arg12[%c36, %c0_316] : memref<162x128xf32, #tpu.memory_space<vmem>>, vector<1x128xf32>
    %c6_317 = arith.constant 6 : index
    %c384_318 = arith.constant 384 : index
    %350 = vector.load %arg13[%c6_317, %c384_318] : memref<18x1152xf32, #tpu.memory_space<vmem>>, vector<1x128xf32>
    tpu.vector_store %arg13[%c6_317, %c384_318], %349 {strides = array<i32>} : memref<18x1152xf32, #tpu.memory_space<vmem>>, vector<1x128xf32>,
    %c117 = arith.constant 117 : index
    %c0_319 = arith.constant 0 : index
    %351 = vector.load %arg12[%c117, %c0_319] : memref<162x128xf32, #tpu.memory_space<vmem>>, vector<1x128xf32>
    %c7_320 = arith.constant 7 : index
    %c384_321 = arith.constant 384 : index
    %352 = vector.load %arg13[%c7_320, %c384_321] : memref<18x1152xf32, #tpu.memory_space<vmem>>, vector<1x128xf32>
    tpu.vector_store %arg13[%c7_320, %c384_321], %351 {strides = array<i32>} : memref<18x1152xf32, #tpu.memory_space<vmem>>, vector<1x128xf32>,
    %c39 = arith.constant 39 : index
    %c0_322 = arith.constant 0 : index
    %353 = vector.load %arg12[%c39, %c0_322] : memref<162x128xf32, #tpu.memory_space<vmem>>, vector<1x128xf32>
    %c8_323 = arith.constant 8 : index
    %c384_324 = arith.constant 384 : index
    %354 = vector.load %arg13[%c8_323, %c384_324] : memref<18x1152xf32, #tpu.memory_space<vmem>>, vector<1x128xf32>
    tpu.vector_store %arg13[%c8_323, %c384_324], %353 {strides = array<i32>} : memref<18x1152xf32, #tpu.memory_space<vmem>>, vector<1x128xf32>,
    %c120 = arith.constant 120 : index
    %c0_325 = arith.constant 0 : index
    %355 = vector.load %arg12[%c120, %c0_325] : memref<162x128xf32, #tpu.memory_space<vmem>>, vector<1x128xf32>
    %c9_326 = arith.constant 9 : index
    %c384_327 = arith.constant 384 : index
    %356 = vector.load %arg13[%c9_326, %c384_327] : memref<18x1152xf32, #tpu.memory_space<vmem>>, vector<1x128xf32>
    tpu.vector_store %arg13[%c9_326, %c384_327], %355 {strides = array<i32>} : memref<18x1152xf32, #tpu.memory_space<vmem>>, vector<1x128xf32>,
    %c42 = arith.constant 42 : index
    %c0_328 = arith.constant 0 : index
    %357 = vector.load %arg12[%c42, %c0_328] : memref<162x128xf32, #tpu.memory_space<vmem>>, vector<1x128xf32>
    %c10_329 = arith.constant 10 : index
    %c384_330 = arith.constant 384 : index
    %358 = vector.load %arg13[%c10_329, %c384_330] : memref<18x1152xf32, #tpu.memory_space<vmem>>, vector<1x128xf32>
    tpu.vector_store %arg13[%c10_329, %c384_330], %357 {strides = array<i32>} : memref<18x1152xf32, #tpu.memory_space<vmem>>, vector<1x128xf32>,
    %c123 = arith.constant 123 : index
    %c0_331 = arith.constant 0 : index
    %359 = vector.load %arg12[%c123, %c0_331] : memref<162x128xf32, #tpu.memory_space<vmem>>, vector<1x128xf32>
    %c11_332 = arith.constant 11 : index
    %c384_333 = arith.constant 384 : index
    %360 = vector.load %arg13[%c11_332, %c384_333] : memref<18x1152xf32, #tpu.memory_space<vmem>>, vector<1x128xf32>
    tpu.vector_store %arg13[%c11_332, %c384_333], %359 {strides = array<i32>} : memref<18x1152xf32, #tpu.memory_space<vmem>>, vector<1x128xf32>,
    %c63 = arith.constant 63 : index
    %c0_334 = arith.constant 0 : index
    %361 = vector.load %arg12[%c63, %c0_334] : memref<162x128xf32, #tpu.memory_space<vmem>>, vector<1x128xf32>
    %c12_335 = arith.constant 12 : index
    %c384_336 = arith.constant 384 : index
    %362 = vector.load %arg13[%c12_335, %c384_336] : memref<18x1152xf32, #tpu.memory_space<vmem>>, vector<1x128xf32>
    tpu.vector_store %arg13[%c12_335, %c384_336], %361 {strides = array<i32>} : memref<18x1152xf32, #tpu.memory_space<vmem>>, vector<1x128xf32>,
    %c144 = arith.constant 144 : index
    %c0_337 = arith.constant 0 : index
    %363 = vector.load %arg12[%c144, %c0_337] : memref<162x128xf32, #tpu.memory_space<vmem>>, vector<1x128xf32>
    %c13_338 = arith.constant 13 : index
    %c384_339 = arith.constant 384 : index
    %364 = vector.load %arg13[%c13_338, %c384_339] : memref<18x1152xf32, #tpu.memory_space<vmem>>, vector<1x128xf32>
    tpu.vector_store %arg13[%c13_338, %c384_339], %363 {strides = array<i32>} : memref<18x1152xf32, #tpu.memory_space<vmem>>, vector<1x128xf32>,
    %c66 = arith.constant 66 : index
    %c0_340 = arith.constant 0 : index
    %365 = vector.load %arg12[%c66, %c0_340] : memref<162x128xf32, #tpu.memory_space<vmem>>, vector<1x128xf32>
    %c14_341 = arith.constant 14 : index
    %c384_342 = arith.constant 384 : index
    %366 = vector.load %arg13[%c14_341, %c384_342] : memref<18x1152xf32, #tpu.memory_space<vmem>>, vector<1x128xf32>
    tpu.vector_store %arg13[%c14_341, %c384_342], %365 {strides = array<i32>} : memref<18x1152xf32, #tpu.memory_space<vmem>>, vector<1x128xf32>,
    %c147 = arith.constant 147 : index
    %c0_343 = arith.constant 0 : index
    %367 = vector.load %arg12[%c147, %c0_343] : memref<162x128xf32, #tpu.memory_space<vmem>>, vector<1x128xf32>
    %c15_344 = arith.constant 15 : index
    %c384_345 = arith.constant 384 : index
    %368 = vector.load %arg13[%c15_344, %c384_345] : memref<18x1152xf32, #tpu.memory_space<vmem>>, vector<1x128xf32>
    tpu.vector_store %arg13[%c15_344, %c384_345], %367 {strides = array<i32>} : memref<18x1152xf32, #tpu.memory_space<vmem>>, vector<1x128xf32>,
    %c69 = arith.constant 69 : index
    %c0_346 = arith.constant 0 : index
    %369 = vector.load %arg12[%c69, %c0_346] : memref<162x128xf32, #tpu.memory_space<vmem>>, vector<1x128xf32>
    %c16_347 = arith.constant 16 : index
    %c384_348 = arith.constant 384 : index
    %370 = vector.load %arg13[%c16_347, %c384_348] : memref<18x1152xf32, #tpu.memory_space<vmem>>, vector<1x128xf32>
    tpu.vector_store %arg13[%c16_347, %c384_348], %369 {strides = array<i32>} : memref<18x1152xf32, #tpu.memory_space<vmem>>, vector<1x128xf32>,
    %c150 = arith.constant 150 : index
    %c0_349 = arith.constant 0 : index
    %371 = vector.load %arg12[%c150, %c0_349] : memref<162x128xf32, #tpu.memory_space<vmem>>, vector<1x128xf32>
    %c17_350 = arith.constant 17 : index
    %c384_351 = arith.constant 384 : index
    %372 = vector.load %arg13[%c17_350, %c384_351] : memref<18x1152xf32, #tpu.memory_space<vmem>>, vector<1x128xf32>
    tpu.vector_store %arg13[%c17_350, %c384_351], %371 {strides = array<i32>} : memref<18x1152xf32, #tpu.memory_space<vmem>>, vector<1x128xf32>,
    %c10_352 = arith.constant 10 : index
    %c0_353 = arith.constant 0 : index
    %373 = vector.load %arg12[%c10_352, %c0_353] : memref<162x128xf32, #tpu.memory_space<vmem>>, vector<1x128xf32>
    %c0_354 = arith.constant 0 : index
    %c512 = arith.constant 512 : index
    %374 = vector.load %arg13[%c0_354, %c512] : memref<18x1152xf32, #tpu.memory_space<vmem>>, vector<1x128xf32>
    tpu.vector_store %arg13[%c0_354, %c512], %373 {strides = array<i32>} : memref<18x1152xf32, #tpu.memory_space<vmem>>, vector<1x128xf32>,
    %c91 = arith.constant 91 : index
    %c0_355 = arith.constant 0 : index
    %375 = vector.load %arg12[%c91, %c0_355] : memref<162x128xf32, #tpu.memory_space<vmem>>, vector<1x128xf32>
    %c1_356 = arith.constant 1 : index
    %c512_357 = arith.constant 512 : index
    %376 = vector.load %arg13[%c1_356, %c512_357] : memref<18x1152xf32, #tpu.memory_space<vmem>>, vector<1x128xf32>
    tpu.vector_store %arg13[%c1_356, %c512_357], %375 {strides = array<i32>} : memref<18x1152xf32, #tpu.memory_space<vmem>>, vector<1x128xf32>,
    %c13_358 = arith.constant 13 : index
    %c0_359 = arith.constant 0 : index
    %377 = vector.load %arg12[%c13_358, %c0_359] : memref<162x128xf32, #tpu.memory_space<vmem>>, vector<1x128xf32>
    %c2_360 = arith.constant 2 : index
    %c512_361 = arith.constant 512 : index
    %378 = vector.load %arg13[%c2_360, %c512_361] : memref<18x1152xf32, #tpu.memory_space<vmem>>, vector<1x128xf32>
    tpu.vector_store %arg13[%c2_360, %c512_361], %377 {strides = array<i32>} : memref<18x1152xf32, #tpu.memory_space<vmem>>, vector<1x128xf32>,
    %c94 = arith.constant 94 : index
    %c0_362 = arith.constant 0 : index
    %379 = vector.load %arg12[%c94, %c0_362] : memref<162x128xf32, #tpu.memory_space<vmem>>, vector<1x128xf32>
    %c3_363 = arith.constant 3 : index
    %c512_364 = arith.constant 512 : index
    %380 = vector.load %arg13[%c3_363, %c512_364] : memref<18x1152xf32, #tpu.memory_space<vmem>>, vector<1x128xf32>
    tpu.vector_store %arg13[%c3_363, %c512_364], %379 {strides = array<i32>} : memref<18x1152xf32, #tpu.memory_space<vmem>>, vector<1x128xf32>,
    %c16_365 = arith.constant 16 : index
    %c0_366 = arith.constant 0 : index
    %381 = vector.load %arg12[%c16_365, %c0_366] : memref<162x128xf32, #tpu.memory_space<vmem>>, vector<1x128xf32>
    %c4_367 = arith.constant 4 : index
    %c512_368 = arith.constant 512 : index
    %382 = vector.load %arg13[%c4_367, %c512_368] : memref<18x1152xf32, #tpu.memory_space<vmem>>, vector<1x128xf32>
    tpu.vector_store %arg13[%c4_367, %c512_368], %381 {strides = array<i32>} : memref<18x1152xf32, #tpu.memory_space<vmem>>, vector<1x128xf32>,
    %c97 = arith.constant 97 : index
    %c0_369 = arith.constant 0 : index
    %383 = vector.load %arg12[%c97, %c0_369] : memref<162x128xf32, #tpu.memory_space<vmem>>, vector<1x128xf32>
    %c5_370 = arith.constant 5 : index
    %c512_371 = arith.constant 512 : index
    %384 = vector.load %arg13[%c5_370, %c512_371] : memref<18x1152xf32, #tpu.memory_space<vmem>>, vector<1x128xf32>
    tpu.vector_store %arg13[%c5_370, %c512_371], %383 {strides = array<i32>} : memref<18x1152xf32, #tpu.memory_space<vmem>>, vector<1x128xf32>,
    %c37 = arith.constant 37 : index
    %c0_372 = arith.constant 0 : index
    %385 = vector.load %arg12[%c37, %c0_372] : memref<162x128xf32, #tpu.memory_space<vmem>>, vector<1x128xf32>
    %c6_373 = arith.constant 6 : index
    %c512_374 = arith.constant 512 : index
    %386 = vector.load %arg13[%c6_373, %c512_374] : memref<18x1152xf32, #tpu.memory_space<vmem>>, vector<1x128xf32>
    tpu.vector_store %arg13[%c6_373, %c512_374], %385 {strides = array<i32>} : memref<18x1152xf32, #tpu.memory_space<vmem>>, vector<1x128xf32>,
    %c118 = arith.constant 118 : index
    %c0_375 = arith.constant 0 : index
    %387 = vector.load %arg12[%c118, %c0_375] : memref<162x128xf32, #tpu.memory_space<vmem>>, vector<1x128xf32>
    %c7_376 = arith.constant 7 : index
    %c512_377 = arith.constant 512 : index
    %388 = vector.load %arg13[%c7_376, %c512_377] : memref<18x1152xf32, #tpu.memory_space<vmem>>, vector<1x128xf32>
    tpu.vector_store %arg13[%c7_376, %c512_377], %387 {strides = array<i32>} : memref<18x1152xf32, #tpu.memory_space<vmem>>, vector<1x128xf32>,
    %c40 = arith.constant 40 : index
    %c0_378 = arith.constant 0 : index
    %389 = vector.load %arg12[%c40, %c0_378] : memref<162x128xf32, #tpu.memory_space<vmem>>, vector<1x128xf32>
    %c8_379 = arith.constant 8 : index
    %c512_380 = arith.constant 512 : index
    %390 = vector.load %arg13[%c8_379, %c512_380] : memref<18x1152xf32, #tpu.memory_space<vmem>>, vector<1x128xf32>
    tpu.vector_store %arg13[%c8_379, %c512_380], %389 {strides = array<i32>} : memref<18x1152xf32, #tpu.memory_space<vmem>>, vector<1x128xf32>,
    %c121 = arith.constant 121 : index
    %c0_381 = arith.constant 0 : index
    %391 = vector.load %arg12[%c121, %c0_381] : memref<162x128xf32, #tpu.memory_space<vmem>>, vector<1x128xf32>
    %c9_382 = arith.constant 9 : index
    %c512_383 = arith.constant 512 : index
    %392 = vector.load %arg13[%c9_382, %c512_383] : memref<18x1152xf32, #tpu.memory_space<vmem>>, vector<1x128xf32>
    tpu.vector_store %arg13[%c9_382, %c512_383], %391 {strides = array<i32>} : memref<18x1152xf32, #tpu.memory_space<vmem>>, vector<1x128xf32>,
    %c43 = arith.constant 43 : index
    %c0_384 = arith.constant 0 : index
    %393 = vector.load %arg12[%c43, %c0_384] : memref<162x128xf32, #tpu.memory_space<vmem>>, vector<1x128xf32>
    %c10_385 = arith.constant 10 : index
    %c512_386 = arith.constant 512 : index
    %394 = vector.load %arg13[%c10_385, %c512_386] : memref<18x1152xf32, #tpu.memory_space<vmem>>, vector<1x128xf32>
    tpu.vector_store %arg13[%c10_385, %c512_386], %393 {strides = array<i32>} : memref<18x1152xf32, #tpu.memory_space<vmem>>, vector<1x128xf32>,
    %c124 = arith.constant 124 : index
    %c0_387 = arith.constant 0 : index
    %395 = vector.load %arg12[%c124, %c0_387] : memref<162x128xf32, #tpu.memory_space<vmem>>, vector<1x128xf32>
    %c11_388 = arith.constant 11 : index
    %c512_389 = arith.constant 512 : index
    %396 = vector.load %arg13[%c11_388, %c512_389] : memref<18x1152xf32, #tpu.memory_space<vmem>>, vector<1x128xf32>
    tpu.vector_store %arg13[%c11_388, %c512_389], %395 {strides = array<i32>} : memref<18x1152xf32, #tpu.memory_space<vmem>>, vector<1x128xf32>,
    %c64 = arith.constant 64 : index
    %c0_390 = arith.constant 0 : index
    %397 = vector.load %arg12[%c64, %c0_390] : memref<162x128xf32, #tpu.memory_space<vmem>>, vector<1x128xf32>
    %c12_391 = arith.constant 12 : index
    %c512_392 = arith.constant 512 : index
    %398 = vector.load %arg13[%c12_391, %c512_392] : memref<18x1152xf32, #tpu.memory_space<vmem>>, vector<1x128xf32>
    tpu.vector_store %arg13[%c12_391, %c512_392], %397 {strides = array<i32>} : memref<18x1152xf32, #tpu.memory_space<vmem>>, vector<1x128xf32>,
    %c145 = arith.constant 145 : index
    %c0_393 = arith.constant 0 : index
    %399 = vector.load %arg12[%c145, %c0_393] : memref<162x128xf32, #tpu.memory_space<vmem>>, vector<1x128xf32>
    %c13_394 = arith.constant 13 : index
    %c512_395 = arith.constant 512 : index
    %400 = vector.load %arg13[%c13_394, %c512_395] : memref<18x1152xf32, #tpu.memory_space<vmem>>, vector<1x128xf32>
    tpu.vector_store %arg13[%c13_394, %c512_395], %399 {strides = array<i32>} : memref<18x1152xf32, #tpu.memory_space<vmem>>, vector<1x128xf32>,
    %c67 = arith.constant 67 : index
    %c0_396 = arith.constant 0 : index
    %401 = vector.load %arg12[%c67, %c0_396] : memref<162x128xf32, #tpu.memory_space<vmem>>, vector<1x128xf32>
    %c14_397 = arith.constant 14 : index
    %c512_398 = arith.constant 512 : index
    %402 = vector.load %arg13[%c14_397, %c512_398] : memref<18x1152xf32, #tpu.memory_space<vmem>>, vector<1x128xf32>
    tpu.vector_store %arg13[%c14_397, %c512_398], %401 {strides = array<i32>} : memref<18x1152xf32, #tpu.memory_space<vmem>>, vector<1x128xf32>,
    %c148 = arith.constant 148 : index
    %c0_399 = arith.constant 0 : index
    %403 = vector.load %arg12[%c148, %c0_399] : memref<162x128xf32, #tpu.memory_space<vmem>>, vector<1x128xf32>
    %c15_400 = arith.constant 15 : index
    %c512_401 = arith.constant 512 : index
    %404 = vector.load %arg13[%c15_400, %c512_401] : memref<18x1152xf32, #tpu.memory_space<vmem>>, vector<1x128xf32>
    tpu.vector_store %arg13[%c15_400, %c512_401], %403 {strides = array<i32>} : memref<18x1152xf32, #tpu.memory_space<vmem>>, vector<1x128xf32>,
    %c70 = arith.constant 70 : index
    %c0_402 = arith.constant 0 : index
    %405 = vector.load %arg12[%c70, %c0_402] : memref<162x128xf32, #tpu.memory_space<vmem>>, vector<1x128xf32>
    %c16_403 = arith.constant 16 : index
    %c512_404 = arith.constant 512 : index
    %406 = vector.load %arg13[%c16_403, %c512_404] : memref<18x1152xf32, #tpu.memory_space<vmem>>, vector<1x128xf32>
    tpu.vector_store %arg13[%c16_403, %c512_404], %405 {strides = array<i32>} : memref<18x1152xf32, #tpu.memory_space<vmem>>, vector<1x128xf32>,
    %c151 = arith.constant 151 : index
    %c0_405 = arith.constant 0 : index
    %407 = vector.load %arg12[%c151, %c0_405] : memref<162x128xf32, #tpu.memory_space<vmem>>, vector<1x128xf32>
    %c17_406 = arith.constant 17 : index
    %c512_407 = arith.constant 512 : index
    %408 = vector.load %arg13[%c17_406, %c512_407] : memref<18x1152xf32, #tpu.memory_space<vmem>>, vector<1x128xf32>
    tpu.vector_store %arg13[%c17_406, %c512_407], %407 {strides = array<i32>} : memref<18x1152xf32, #tpu.memory_space<vmem>>, vector<1x128xf32>,
    %c11_408 = arith.constant 11 : index
    %c0_409 = arith.constant 0 : index
    %409 = vector.load %arg12[%c11_408, %c0_409] : memref<162x128xf32, #tpu.memory_space<vmem>>, vector<1x128xf32>
    %c0_410 = arith.constant 0 : index
    %c640 = arith.constant 640 : index
    %410 = vector.load %arg13[%c0_410, %c640] : memref<18x1152xf32, #tpu.memory_space<vmem>>, vector<1x128xf32>
    tpu.vector_store %arg13[%c0_410, %c640], %409 {strides = array<i32>} : memref<18x1152xf32, #tpu.memory_space<vmem>>, vector<1x128xf32>,
    %c92 = arith.constant 92 : index
    %c0_411 = arith.constant 0 : index
    %411 = vector.load %arg12[%c92, %c0_411] : memref<162x128xf32, #tpu.memory_space<vmem>>, vector<1x128xf32>
    %c1_412 = arith.constant 1 : index
    %c640_413 = arith.constant 640 : index
    %412 = vector.load %arg13[%c1_412, %c640_413] : memref<18x1152xf32, #tpu.memory_space<vmem>>, vector<1x128xf32>
    tpu.vector_store %arg13[%c1_412, %c640_413], %411 {strides = array<i32>} : memref<18x1152xf32, #tpu.memory_space<vmem>>, vector<1x128xf32>,
    %c14_414 = arith.constant 14 : index
    %c0_415 = arith.constant 0 : index
    %413 = vector.load %arg12[%c14_414, %c0_415] : memref<162x128xf32, #tpu.memory_space<vmem>>, vector<1x128xf32>
    %c2_416 = arith.constant 2 : index
    %c640_417 = arith.constant 640 : index
    %414 = vector.load %arg13[%c2_416, %c640_417] : memref<18x1152xf32, #tpu.memory_space<vmem>>, vector<1x128xf32>
    tpu.vector_store %arg13[%c2_416, %c640_417], %413 {strides = array<i32>} : memref<18x1152xf32, #tpu.memory_space<vmem>>, vector<1x128xf32>,
    %c95 = arith.constant 95 : index
    %c0_418 = arith.constant 0 : index
    %415 = vector.load %arg12[%c95, %c0_418] : memref<162x128xf32, #tpu.memory_space<vmem>>, vector<1x128xf32>
    %c3_419 = arith.constant 3 : index
    %c640_420 = arith.constant 640 : index
    %416 = vector.load %arg13[%c3_419, %c640_420] : memref<18x1152xf32, #tpu.memory_space<vmem>>, vector<1x128xf32>
    tpu.vector_store %arg13[%c3_419, %c640_420], %415 {strides = array<i32>} : memref<18x1152xf32, #tpu.memory_space<vmem>>, vector<1x128xf32>,
    %c17_421 = arith.constant 17 : index
    %c0_422 = arith.constant 0 : index
    %417 = vector.load %arg12[%c17_421, %c0_422] : memref<162x128xf32, #tpu.memory_space<vmem>>, vector<1x128xf32>
    %c4_423 = arith.constant 4 : index
    %c640_424 = arith.constant 640 : index
    %418 = vector.load %arg13[%c4_423, %c640_424] : memref<18x1152xf32, #tpu.memory_space<vmem>>, vector<1x128xf32>
    tpu.vector_store %arg13[%c4_423, %c640_424], %417 {strides = array<i32>} : memref<18x1152xf32, #tpu.memory_space<vmem>>, vector<1x128xf32>,
    %c98 = arith.constant 98 : index
    %c0_425 = arith.constant 0 : index
    %419 = vector.load %arg12[%c98, %c0_425] : memref<162x128xf32, #tpu.memory_space<vmem>>, vector<1x128xf32>
    %c5_426 = arith.constant 5 : index
    %c640_427 = arith.constant 640 : index
    %420 = vector.load %arg13[%c5_426, %c640_427] : memref<18x1152xf32, #tpu.memory_space<vmem>>, vector<1x128xf32>
    tpu.vector_store %arg13[%c5_426, %c640_427], %419 {strides = array<i32>} : memref<18x1152xf32, #tpu.memory_space<vmem>>, vector<1x128xf32>,
    %c38 = arith.constant 38 : index
    %c0_428 = arith.constant 0 : index
    %421 = vector.load %arg12[%c38, %c0_428] : memref<162x128xf32, #tpu.memory_space<vmem>>, vector<1x128xf32>
    %c6_429 = arith.constant 6 : index
    %c640_430 = arith.constant 640 : index
    %422 = vector.load %arg13[%c6_429, %c640_430] : memref<18x1152xf32, #tpu.memory_space<vmem>>, vector<1x128xf32>
    tpu.vector_store %arg13[%c6_429, %c640_430], %421 {strides = array<i32>} : memref<18x1152xf32, #tpu.memory_space<vmem>>, vector<1x128xf32>,
    %c119 = arith.constant 119 : index
    %c0_431 = arith.constant 0 : index
    %423 = vector.load %arg12[%c119, %c0_431] : memref<162x128xf32, #tpu.memory_space<vmem>>, vector<1x128xf32>
    %c7_432 = arith.constant 7 : index
    %c640_433 = arith.constant 640 : index
    %424 = vector.load %arg13[%c7_432, %c640_433] : memref<18x1152xf32, #tpu.memory_space<vmem>>, vector<1x128xf32>
    tpu.vector_store %arg13[%c7_432, %c640_433], %423 {strides = array<i32>} : memref<18x1152xf32, #tpu.memory_space<vmem>>, vector<1x128xf32>,
    %c41 = arith.constant 41 : index
    %c0_434 = arith.constant 0 : index
    %425 = vector.load %arg12[%c41, %c0_434] : memref<162x128xf32, #tpu.memory_space<vmem>>, vector<1x128xf32>
    %c8_435 = arith.constant 8 : index
    %c640_436 = arith.constant 640 : index
    %426 = vector.load %arg13[%c8_435, %c640_436] : memref<18x1152xf32, #tpu.memory_space<vmem>>, vector<1x128xf32>
    tpu.vector_store %arg13[%c8_435, %c640_436], %425 {strides = array<i32>} : memref<18x1152xf32, #tpu.memory_space<vmem>>, vector<1x128xf32>,
    %c122 = arith.constant 122 : index
    %c0_437 = arith.constant 0 : index
    %427 = vector.load %arg12[%c122, %c0_437] : memref<162x128xf32, #tpu.memory_space<vmem>>, vector<1x128xf32>
    %c9_438 = arith.constant 9 : index
    %c640_439 = arith.constant 640 : index
    %428 = vector.load %arg13[%c9_438, %c640_439] : memref<18x1152xf32, #tpu.memory_space<vmem>>, vector<1x128xf32>
    tpu.vector_store %arg13[%c9_438, %c640_439], %427 {strides = array<i32>} : memref<18x1152xf32, #tpu.memory_space<vmem>>, vector<1x128xf32>,
    %c44 = arith.constant 44 : index
    %c0_440 = arith.constant 0 : index
    %429 = vector.load %arg12[%c44, %c0_440] : memref<162x128xf32, #tpu.memory_space<vmem>>, vector<1x128xf32>
    %c10_441 = arith.constant 10 : index
    %c640_442 = arith.constant 640 : index
    %430 = vector.load %arg13[%c10_441, %c640_442] : memref<18x1152xf32, #tpu.memory_space<vmem>>, vector<1x128xf32>
    tpu.vector_store %arg13[%c10_441, %c640_442], %429 {strides = array<i32>} : memref<18x1152xf32, #tpu.memory_space<vmem>>, vector<1x128xf32>,
    %c125 = arith.constant 125 : index
    %c0_443 = arith.constant 0 : index
    %431 = vector.load %arg12[%c125, %c0_443] : memref<162x128xf32, #tpu.memory_space<vmem>>, vector<1x128xf32>
    %c11_444 = arith.constant 11 : index
    %c640_445 = arith.constant 640 : index
    %432 = vector.load %arg13[%c11_444, %c640_445] : memref<18x1152xf32, #tpu.memory_space<vmem>>, vector<1x128xf32>
    tpu.vector_store %arg13[%c11_444, %c640_445], %431 {strides = array<i32>} : memref<18x1152xf32, #tpu.memory_space<vmem>>, vector<1x128xf32>,
    %c65 = arith.constant 65 : index
    %c0_446 = arith.constant 0 : index
    %433 = vector.load %arg12[%c65, %c0_446] : memref<162x128xf32, #tpu.memory_space<vmem>>, vector<1x128xf32>
    %c12_447 = arith.constant 12 : index
    %c640_448 = arith.constant 640 : index
    %434 = vector.load %arg13[%c12_447, %c640_448] : memref<18x1152xf32, #tpu.memory_space<vmem>>, vector<1x128xf32>
    tpu.vector_store %arg13[%c12_447, %c640_448], %433 {strides = array<i32>} : memref<18x1152xf32, #tpu.memory_space<vmem>>, vector<1x128xf32>,
    %c146 = arith.constant 146 : index
    %c0_449 = arith.constant 0 : index
    %435 = vector.load %arg12[%c146, %c0_449] : memref<162x128xf32, #tpu.memory_space<vmem>>, vector<1x128xf32>
    %c13_450 = arith.constant 13 : index
    %c640_451 = arith.constant 640 : index
    %436 = vector.load %arg13[%c13_450, %c640_451] : memref<18x1152xf32, #tpu.memory_space<vmem>>, vector<1x128xf32>
    tpu.vector_store %arg13[%c13_450, %c640_451], %435 {strides = array<i32>} : memref<18x1152xf32, #tpu.memory_space<vmem>>, vector<1x128xf32>,
    %c68 = arith.constant 68 : index
    %c0_452 = arith.constant 0 : index
    %437 = vector.load %arg12[%c68, %c0_452] : memref<162x128xf32, #tpu.memory_space<vmem>>, vector<1x128xf32>
    %c14_453 = arith.constant 14 : index
    %c640_454 = arith.constant 640 : index
    %438 = vector.load %arg13[%c14_453, %c640_454] : memref<18x1152xf32, #tpu.memory_space<vmem>>, vector<1x128xf32>
    tpu.vector_store %arg13[%c14_453, %c640_454], %437 {strides = array<i32>} : memref<18x1152xf32, #tpu.memory_space<vmem>>, vector<1x128xf32>,
    %c149 = arith.constant 149 : index
    %c0_455 = arith.constant 0 : index
    %439 = vector.load %arg12[%c149, %c0_455] : memref<162x128xf32, #tpu.memory_space<vmem>>, vector<1x128xf32>
    %c15_456 = arith.constant 15 : index
    %c640_457 = arith.constant 640 : index
    %440 = vector.load %arg13[%c15_456, %c640_457] : memref<18x1152xf32, #tpu.memory_space<vmem>>, vector<1x128xf32>
    tpu.vector_store %arg13[%c15_456, %c640_457], %439 {strides = array<i32>} : memref<18x1152xf32, #tpu.memory_space<vmem>>, vector<1x128xf32>,
    %c71 = arith.constant 71 : index
    %c0_458 = arith.constant 0 : index
    %441 = vector.load %arg12[%c71, %c0_458] : memref<162x128xf32, #tpu.memory_space<vmem>>, vector<1x128xf32>
    %c16_459 = arith.constant 16 : index
    %c640_460 = arith.constant 640 : index
    %442 = vector.load %arg13[%c16_459, %c640_460] : memref<18x1152xf32, #tpu.memory_space<vmem>>, vector<1x128xf32>
    tpu.vector_store %arg13[%c16_459, %c640_460], %441 {strides = array<i32>} : memref<18x1152xf32, #tpu.memory_space<vmem>>, vector<1x128xf32>,
    %c152 = arith.constant 152 : index
    %c0_461 = arith.constant 0 : index
    %443 = vector.load %arg12[%c152, %c0_461] : memref<162x128xf32, #tpu.memory_space<vmem>>, vector<1x128xf32>
    %c17_462 = arith.constant 17 : index
    %c640_463 = arith.constant 640 : index
    %444 = vector.load %arg13[%c17_462, %c640_463] : memref<18x1152xf32, #tpu.memory_space<vmem>>, vector<1x128xf32>
    tpu.vector_store %arg13[%c17_462, %c640_463], %443 {strides = array<i32>} : memref<18x1152xf32, #tpu.memory_space<vmem>>, vector<1x128xf32>,
    %c18 = arith.constant 18 : index
    %c0_464 = arith.constant 0 : index
    %445 = vector.load %arg12[%c18, %c0_464] : memref<162x128xf32, #tpu.memory_space<vmem>>, vector<1x128xf32>
    %c0_465 = arith.constant 0 : index
    %c768 = arith.constant 768 : index
    %446 = vector.load %arg13[%c0_465, %c768] : memref<18x1152xf32, #tpu.memory_space<vmem>>, vector<1x128xf32>
    tpu.vector_store %arg13[%c0_465, %c768], %445 {strides = array<i32>} : memref<18x1152xf32, #tpu.memory_space<vmem>>, vector<1x128xf32>,
    %c99 = arith.constant 99 : index
    %c0_466 = arith.constant 0 : index
    %447 = vector.load %arg12[%c99, %c0_466] : memref<162x128xf32, #tpu.memory_space<vmem>>, vector<1x128xf32>
    %c1_467 = arith.constant 1 : index
    %c768_468 = arith.constant 768 : index
    %448 = vector.load %arg13[%c1_467, %c768_468] : memref<18x1152xf32, #tpu.memory_space<vmem>>, vector<1x128xf32>
    tpu.vector_store %arg13[%c1_467, %c768_468], %447 {strides = array<i32>} : memref<18x1152xf32, #tpu.memory_space<vmem>>, vector<1x128xf32>,
    %c21 = arith.constant 21 : index
    %c0_469 = arith.constant 0 : index
    %449 = vector.load %arg12[%c21, %c0_469] : memref<162x128xf32, #tpu.memory_space<vmem>>, vector<1x128xf32>
    %c2_470 = arith.constant 2 : index
    %c768_471 = arith.constant 768 : index
    %450 = vector.load %arg13[%c2_470, %c768_471] : memref<18x1152xf32, #tpu.memory_space<vmem>>, vector<1x128xf32>
    tpu.vector_store %arg13[%c2_470, %c768_471], %449 {strides = array<i32>} : memref<18x1152xf32, #tpu.memory_space<vmem>>, vector<1x128xf32>,
    %c102 = arith.constant 102 : index
    %c0_472 = arith.constant 0 : index
    %451 = vector.load %arg12[%c102, %c0_472] : memref<162x128xf32, #tpu.memory_space<vmem>>, vector<1x128xf32>
    %c3_473 = arith.constant 3 : index
    %c768_474 = arith.constant 768 : index
    %452 = vector.load %arg13[%c3_473, %c768_474] : memref<18x1152xf32, #tpu.memory_space<vmem>>, vector<1x128xf32>
    tpu.vector_store %arg13[%c3_473, %c768_474], %451 {strides = array<i32>} : memref<18x1152xf32, #tpu.memory_space<vmem>>, vector<1x128xf32>,
    %c24_475 = arith.constant 24 : index
    %c0_476 = arith.constant 0 : index
    %453 = vector.load %arg12[%c24_475, %c0_476] : memref<162x128xf32, #tpu.memory_space<vmem>>, vector<1x128xf32>
    %c4_477 = arith.constant 4 : index
    %c768_478 = arith.constant 768 : index
    %454 = vector.load %arg13[%c4_477, %c768_478] : memref<18x1152xf32, #tpu.memory_space<vmem>>, vector<1x128xf32>
    tpu.vector_store %arg13[%c4_477, %c768_478], %453 {strides = array<i32>} : memref<18x1152xf32, #tpu.memory_space<vmem>>, vector<1x128xf32>,
    %c105 = arith.constant 105 : index
    %c0_479 = arith.constant 0 : index
    %455 = vector.load %arg12[%c105, %c0_479] : memref<162x128xf32, #tpu.memory_space<vmem>>, vector<1x128xf32>
    %c5_480 = arith.constant 5 : index
    %c768_481 = arith.constant 768 : index
    %456 = vector.load %arg13[%c5_480, %c768_481] : memref<18x1152xf32, #tpu.memory_space<vmem>>, vector<1x128xf32>
    tpu.vector_store %arg13[%c5_480, %c768_481], %455 {strides = array<i32>} : memref<18x1152xf32, #tpu.memory_space<vmem>>, vector<1x128xf32>,
    %c45 = arith.constant 45 : index
    %c0_482 = arith.constant 0 : index
    %457 = vector.load %arg12[%c45, %c0_482] : memref<162x128xf32, #tpu.memory_space<vmem>>, vector<1x128xf32>
    %c6_483 = arith.constant 6 : index
    %c768_484 = arith.constant 768 : index
    %458 = vector.load %arg13[%c6_483, %c768_484] : memref<18x1152xf32, #tpu.memory_space<vmem>>, vector<1x128xf32>
    tpu.vector_store %arg13[%c6_483, %c768_484], %457 {strides = array<i32>} : memref<18x1152xf32, #tpu.memory_space<vmem>>, vector<1x128xf32>,
    %c126 = arith.constant 126 : index
    %c0_485 = arith.constant 0 : index
    %459 = vector.load %arg12[%c126, %c0_485] : memref<162x128xf32, #tpu.memory_space<vmem>>, vector<1x128xf32>
    %c7_486 = arith.constant 7 : index
    %c768_487 = arith.constant 768 : index
    %460 = vector.load %arg13[%c7_486, %c768_487] : memref<18x1152xf32, #tpu.memory_space<vmem>>, vector<1x128xf32>
    tpu.vector_store %arg13[%c7_486, %c768_487], %459 {strides = array<i32>} : memref<18x1152xf32, #tpu.memory_space<vmem>>, vector<1x128xf32>,
    %c48 = arith.constant 48 : index
    %c0_488 = arith.constant 0 : index
    %461 = vector.load %arg12[%c48, %c0_488] : memref<162x128xf32, #tpu.memory_space<vmem>>, vector<1x128xf32>
    %c8_489 = arith.constant 8 : index
    %c768_490 = arith.constant 768 : index
    %462 = vector.load %arg13[%c8_489, %c768_490] : memref<18x1152xf32, #tpu.memory_space<vmem>>, vector<1x128xf32>
    tpu.vector_store %arg13[%c8_489, %c768_490], %461 {strides = array<i32>} : memref<18x1152xf32, #tpu.memory_space<vmem>>, vector<1x128xf32>,
    %c129 = arith.constant 129 : index
    %c0_491 = arith.constant 0 : index
    %463 = vector.load %arg12[%c129, %c0_491] : memref<162x128xf32, #tpu.memory_space<vmem>>, vector<1x128xf32>
    %c9_492 = arith.constant 9 : index
    %c768_493 = arith.constant 768 : index
    %464 = vector.load %arg13[%c9_492, %c768_493] : memref<18x1152xf32, #tpu.memory_space<vmem>>, vector<1x128xf32>
    tpu.vector_store %arg13[%c9_492, %c768_493], %463 {strides = array<i32>} : memref<18x1152xf32, #tpu.memory_space<vmem>>, vector<1x128xf32>,
    %c51 = arith.constant 51 : index
    %c0_494 = arith.constant 0 : index
    %465 = vector.load %arg12[%c51, %c0_494] : memref<162x128xf32, #tpu.memory_space<vmem>>, vector<1x128xf32>
    %c10_495 = arith.constant 10 : index
    %c768_496 = arith.constant 768 : index
    %466 = vector.load %arg13[%c10_495, %c768_496] : memref<18x1152xf32, #tpu.memory_space<vmem>>, vector<1x128xf32>
    tpu.vector_store %arg13[%c10_495, %c768_496], %465 {strides = array<i32>} : memref<18x1152xf32, #tpu.memory_space<vmem>>, vector<1x128xf32>,
    %c132 = arith.constant 132 : index
    %c0_497 = arith.constant 0 : index
    %467 = vector.load %arg12[%c132, %c0_497] : memref<162x128xf32, #tpu.memory_space<vmem>>, vector<1x128xf32>
    %c11_498 = arith.constant 11 : index
    %c768_499 = arith.constant 768 : index
    %468 = vector.load %arg13[%c11_498, %c768_499] : memref<18x1152xf32, #tpu.memory_space<vmem>>, vector<1x128xf32>
    tpu.vector_store %arg13[%c11_498, %c768_499], %467 {strides = array<i32>} : memref<18x1152xf32, #tpu.memory_space<vmem>>, vector<1x128xf32>,
    %c72 = arith.constant 72 : index
    %c0_500 = arith.constant 0 : index
    %469 = vector.load %arg12[%c72, %c0_500] : memref<162x128xf32, #tpu.memory_space<vmem>>, vector<1x128xf32>
    %c12_501 = arith.constant 12 : index
    %c768_502 = arith.constant 768 : index
    %470 = vector.load %arg13[%c12_501, %c768_502] : memref<18x1152xf32, #tpu.memory_space<vmem>>, vector<1x128xf32>
    tpu.vector_store %arg13[%c12_501, %c768_502], %469 {strides = array<i32>} : memref<18x1152xf32, #tpu.memory_space<vmem>>, vector<1x128xf32>,
    %c153 = arith.constant 153 : index
    %c0_503 = arith.constant 0 : index
    %471 = vector.load %arg12[%c153, %c0_503] : memref<162x128xf32, #tpu.memory_space<vmem>>, vector<1x128xf32>
    %c13_504 = arith.constant 13 : index
    %c768_505 = arith.constant 768 : index
    %472 = vector.load %arg13[%c13_504, %c768_505] : memref<18x1152xf32, #tpu.memory_space<vmem>>, vector<1x128xf32>
    tpu.vector_store %arg13[%c13_504, %c768_505], %471 {strides = array<i32>} : memref<18x1152xf32, #tpu.memory_space<vmem>>, vector<1x128xf32>,
    %c75 = arith.constant 75 : index
    %c0_506 = arith.constant 0 : index
    %473 = vector.load %arg12[%c75, %c0_506] : memref<162x128xf32, #tpu.memory_space<vmem>>, vector<1x128xf32>
    %c14_507 = arith.constant 14 : index
    %c768_508 = arith.constant 768 : index
    %474 = vector.load %arg13[%c14_507, %c768_508] : memref<18x1152xf32, #tpu.memory_space<vmem>>, vector<1x128xf32>
    tpu.vector_store %arg13[%c14_507, %c768_508], %473 {strides = array<i32>} : memref<18x1152xf32, #tpu.memory_space<vmem>>, vector<1x128xf32>,
    %c156 = arith.constant 156 : index
    %c0_509 = arith.constant 0 : index
    %475 = vector.load %arg12[%c156, %c0_509] : memref<162x128xf32, #tpu.memory_space<vmem>>, vector<1x128xf32>
    %c15_510 = arith.constant 15 : index
    %c768_511 = arith.constant 768 : index
    %476 = vector.load %arg13[%c15_510, %c768_511] : memref<18x1152xf32, #tpu.memory_space<vmem>>, vector<1x128xf32>
    tpu.vector_store %arg13[%c15_510, %c768_511], %475 {strides = array<i32>} : memref<18x1152xf32, #tpu.memory_space<vmem>>, vector<1x128xf32>,
    %c78 = arith.constant 78 : index
    %c0_512 = arith.constant 0 : index
    %477 = vector.load %arg12[%c78, %c0_512] : memref<162x128xf32, #tpu.memory_space<vmem>>, vector<1x128xf32>
    %c16_513 = arith.constant 16 : index
    %c768_514 = arith.constant 768 : index
    %478 = vector.load %arg13[%c16_513, %c768_514] : memref<18x1152xf32, #tpu.memory_space<vmem>>, vector<1x128xf32>
    tpu.vector_store %arg13[%c16_513, %c768_514], %477 {strides = array<i32>} : memref<18x1152xf32, #tpu.memory_space<vmem>>, vector<1x128xf32>,
    %c159 = arith.constant 159 : index
    %c0_515 = arith.constant 0 : index
    %479 = vector.load %arg12[%c159, %c0_515] : memref<162x128xf32, #tpu.memory_space<vmem>>, vector<1x128xf32>
    %c17_516 = arith.constant 17 : index
    %c768_517 = arith.constant 768 : index
    %480 = vector.load %arg13[%c17_516, %c768_517] : memref<18x1152xf32, #tpu.memory_space<vmem>>, vector<1x128xf32>
    tpu.vector_store %arg13[%c17_516, %c768_517], %479 {strides = array<i32>} : memref<18x1152xf32, #tpu.memory_space<vmem>>, vector<1x128xf32>,
    %c19 = arith.constant 19 : index
    %c0_518 = arith.constant 0 : index
    %481 = vector.load %arg12[%c19, %c0_518] : memref<162x128xf32, #tpu.memory_space<vmem>>, vector<1x128xf32>
    %c0_519 = arith.constant 0 : index
    %c896 = arith.constant 896 : index
    %482 = vector.load %arg13[%c0_519, %c896] : memref<18x1152xf32, #tpu.memory_space<vmem>>, vector<1x128xf32>
    tpu.vector_store %arg13[%c0_519, %c896], %481 {strides = array<i32>} : memref<18x1152xf32, #tpu.memory_space<vmem>>, vector<1x128xf32>,
    %c100 = arith.constant 100 : index
    %c0_520 = arith.constant 0 : index
    %483 = vector.load %arg12[%c100, %c0_520] : memref<162x128xf32, #tpu.memory_space<vmem>>, vector<1x128xf32>
    %c1_521 = arith.constant 1 : index
    %c896_522 = arith.constant 896 : index
    %484 = vector.load %arg13[%c1_521, %c896_522] : memref<18x1152xf32, #tpu.memory_space<vmem>>, vector<1x128xf32>
    tpu.vector_store %arg13[%c1_521, %c896_522], %483 {strides = array<i32>} : memref<18x1152xf32, #tpu.memory_space<vmem>>, vector<1x128xf32>,
    %c22 = arith.constant 22 : index
    %c0_523 = arith.constant 0 : index
    %485 = vector.load %arg12[%c22, %c0_523] : memref<162x128xf32, #tpu.memory_space<vmem>>, vector<1x128xf32>
    %c2_524 = arith.constant 2 : index
    %c896_525 = arith.constant 896 : index
    %486 = vector.load %arg13[%c2_524, %c896_525] : memref<18x1152xf32, #tpu.memory_space<vmem>>, vector<1x128xf32>
    tpu.vector_store %arg13[%c2_524, %c896_525], %485 {strides = array<i32>} : memref<18x1152xf32, #tpu.memory_space<vmem>>, vector<1x128xf32>,
    %c103 = arith.constant 103 : index
    %c0_526 = arith.constant 0 : index
    %487 = vector.load %arg12[%c103, %c0_526] : memref<162x128xf32, #tpu.memory_space<vmem>>, vector<1x128xf32>
    %c3_527 = arith.constant 3 : index
    %c896_528 = arith.constant 896 : index
    %488 = vector.load %arg13[%c3_527, %c896_528] : memref<18x1152xf32, #tpu.memory_space<vmem>>, vector<1x128xf32>
    tpu.vector_store %arg13[%c3_527, %c896_528], %487 {strides = array<i32>} : memref<18x1152xf32, #tpu.memory_space<vmem>>, vector<1x128xf32>,
    %c25_529 = arith.constant 25 : index
    %c0_530 = arith.constant 0 : index
    %489 = vector.load %arg12[%c25_529, %c0_530] : memref<162x128xf32, #tpu.memory_space<vmem>>, vector<1x128xf32>
    %c4_531 = arith.constant 4 : index
    %c896_532 = arith.constant 896 : index
    %490 = vector.load %arg13[%c4_531, %c896_532] : memref<18x1152xf32, #tpu.memory_space<vmem>>, vector<1x128xf32>
    tpu.vector_store %arg13[%c4_531, %c896_532], %489 {strides = array<i32>} : memref<18x1152xf32, #tpu.memory_space<vmem>>, vector<1x128xf32>,
    %c106 = arith.constant 106 : index
    %c0_533 = arith.constant 0 : index
    %491 = vector.load %arg12[%c106, %c0_533] : memref<162x128xf32, #tpu.memory_space<vmem>>, vector<1x128xf32>
    %c5_534 = arith.constant 5 : index
    %c896_535 = arith.constant 896 : index
    %492 = vector.load %arg13[%c5_534, %c896_535] : memref<18x1152xf32, #tpu.memory_space<vmem>>, vector<1x128xf32>
    tpu.vector_store %arg13[%c5_534, %c896_535], %491 {strides = array<i32>} : memref<18x1152xf32, #tpu.memory_space<vmem>>, vector<1x128xf32>,
    %c46 = arith.constant 46 : index
    %c0_536 = arith.constant 0 : index
    %493 = vector.load %arg12[%c46, %c0_536] : memref<162x128xf32, #tpu.memory_space<vmem>>, vector<1x128xf32>
    %c6_537 = arith.constant 6 : index
    %c896_538 = arith.constant 896 : index
    %494 = vector.load %arg13[%c6_537, %c896_538] : memref<18x1152xf32, #tpu.memory_space<vmem>>, vector<1x128xf32>
    tpu.vector_store %arg13[%c6_537, %c896_538], %493 {strides = array<i32>} : memref<18x1152xf32, #tpu.memory_space<vmem>>, vector<1x128xf32>,
    %c127 = arith.constant 127 : index
    %c0_539 = arith.constant 0 : index
    %495 = vector.load %arg12[%c127, %c0_539] : memref<162x128xf32, #tpu.memory_space<vmem>>, vector<1x128xf32>
    %c7_540 = arith.constant 7 : index
    %c896_541 = arith.constant 896 : index
    %496 = vector.load %arg13[%c7_540, %c896_541] : memref<18x1152xf32, #tpu.memory_space<vmem>>, vector<1x128xf32>
    tpu.vector_store %arg13[%c7_540, %c896_541], %495 {strides = array<i32>} : memref<18x1152xf32, #tpu.memory_space<vmem>>, vector<1x128xf32>,
    %c49 = arith.constant 49 : index
    %c0_542 = arith.constant 0 : index
    %497 = vector.load %arg12[%c49, %c0_542] : memref<162x128xf32, #tpu.memory_space<vmem>>, vector<1x128xf32>
    %c8_543 = arith.constant 8 : index
    %c896_544 = arith.constant 896 : index
    %498 = vector.load %arg13[%c8_543, %c896_544] : memref<18x1152xf32, #tpu.memory_space<vmem>>, vector<1x128xf32>
    tpu.vector_store %arg13[%c8_543, %c896_544], %497 {strides = array<i32>} : memref<18x1152xf32, #tpu.memory_space<vmem>>, vector<1x128xf32>,
    %c130 = arith.constant 130 : index
    %c0_545 = arith.constant 0 : index
    %499 = vector.load %arg12[%c130, %c0_545] : memref<162x128xf32, #tpu.memory_space<vmem>>, vector<1x128xf32>
    %c9_546 = arith.constant 9 : index
    %c896_547 = arith.constant 896 : index
    %500 = vector.load %arg13[%c9_546, %c896_547] : memref<18x1152xf32, #tpu.memory_space<vmem>>, vector<1x128xf32>
    tpu.vector_store %arg13[%c9_546, %c896_547], %499 {strides = array<i32>} : memref<18x1152xf32, #tpu.memory_space<vmem>>, vector<1x128xf32>,
    %c52 = arith.constant 52 : index
    %c0_548 = arith.constant 0 : index
    %501 = vector.load %arg12[%c52, %c0_548] : memref<162x128xf32, #tpu.memory_space<vmem>>, vector<1x128xf32>
    %c10_549 = arith.constant 10 : index
    %c896_550 = arith.constant 896 : index
    %502 = vector.load %arg13[%c10_549, %c896_550] : memref<18x1152xf32, #tpu.memory_space<vmem>>, vector<1x128xf32>
    tpu.vector_store %arg13[%c10_549, %c896_550], %501 {strides = array<i32>} : memref<18x1152xf32, #tpu.memory_space<vmem>>, vector<1x128xf32>,
    %c133 = arith.constant 133 : index
    %c0_551 = arith.constant 0 : index
    %503 = vector.load %arg12[%c133, %c0_551] : memref<162x128xf32, #tpu.memory_space<vmem>>, vector<1x128xf32>
    %c11_552 = arith.constant 11 : index
    %c896_553 = arith.constant 896 : index
    %504 = vector.load %arg13[%c11_552, %c896_553] : memref<18x1152xf32, #tpu.memory_space<vmem>>, vector<1x128xf32>
    tpu.vector_store %arg13[%c11_552, %c896_553], %503 {strides = array<i32>} : memref<18x1152xf32, #tpu.memory_space<vmem>>, vector<1x128xf32>,
    %c73 = arith.constant 73 : index
    %c0_554 = arith.constant 0 : index
    %505 = vector.load %arg12[%c73, %c0_554] : memref<162x128xf32, #tpu.memory_space<vmem>>, vector<1x128xf32>
    %c12_555 = arith.constant 12 : index
    %c896_556 = arith.constant 896 : index
    %506 = vector.load %arg13[%c12_555, %c896_556] : memref<18x1152xf32, #tpu.memory_space<vmem>>, vector<1x128xf32>
    tpu.vector_store %arg13[%c12_555, %c896_556], %505 {strides = array<i32>} : memref<18x1152xf32, #tpu.memory_space<vmem>>, vector<1x128xf32>,
    %c154 = arith.constant 154 : index
    %c0_557 = arith.constant 0 : index
    %507 = vector.load %arg12[%c154, %c0_557] : memref<162x128xf32, #tpu.memory_space<vmem>>, vector<1x128xf32>
    %c13_558 = arith.constant 13 : index
    %c896_559 = arith.constant 896 : index
    %508 = vector.load %arg13[%c13_558, %c896_559] : memref<18x1152xf32, #tpu.memory_space<vmem>>, vector<1x128xf32>
    tpu.vector_store %arg13[%c13_558, %c896_559], %507 {strides = array<i32>} : memref<18x1152xf32, #tpu.memory_space<vmem>>, vector<1x128xf32>,
    %c76 = arith.constant 76 : index
    %c0_560 = arith.constant 0 : index
    %509 = vector.load %arg12[%c76, %c0_560] : memref<162x128xf32, #tpu.memory_space<vmem>>, vector<1x128xf32>
    %c14_561 = arith.constant 14 : index
    %c896_562 = arith.constant 896 : index
    %510 = vector.load %arg13[%c14_561, %c896_562] : memref<18x1152xf32, #tpu.memory_space<vmem>>, vector<1x128xf32>
    tpu.vector_store %arg13[%c14_561, %c896_562], %509 {strides = array<i32>} : memref<18x1152xf32, #tpu.memory_space<vmem>>, vector<1x128xf32>,
    %c157 = arith.constant 157 : index
    %c0_563 = arith.constant 0 : index
    %511 = vector.load %arg12[%c157, %c0_563] : memref<162x128xf32, #tpu.memory_space<vmem>>, vector<1x128xf32>
    %c15_564 = arith.constant 15 : index
    %c896_565 = arith.constant 896 : index
    %512 = vector.load %arg13[%c15_564, %c896_565] : memref<18x1152xf32, #tpu.memory_space<vmem>>, vector<1x128xf32>
    tpu.vector_store %arg13[%c15_564, %c896_565], %511 {strides = array<i32>} : memref<18x1152xf32, #tpu.memory_space<vmem>>, vector<1x128xf32>,
    %c79 = arith.constant 79 : index
    %c0_566 = arith.constant 0 : index
    %513 = vector.load %arg12[%c79, %c0_566] : memref<162x128xf32, #tpu.memory_space<vmem>>, vector<1x128xf32>
    %c16_567 = arith.constant 16 : index
    %c896_568 = arith.constant 896 : index
    %514 = vector.load %arg13[%c16_567, %c896_568] : memref<18x1152xf32, #tpu.memory_space<vmem>>, vector<1x128xf32>
    tpu.vector_store %arg13[%c16_567, %c896_568], %513 {strides = array<i32>} : memref<18x1152xf32, #tpu.memory_space<vmem>>, vector<1x128xf32>,
    %c160 = arith.constant 160 : index
    %c0_569 = arith.constant 0 : index
    %515 = vector.load %arg12[%c160, %c0_569] : memref<162x128xf32, #tpu.memory_space<vmem>>, vector<1x128xf32>
    %c17_570 = arith.constant 17 : index
    %c896_571 = arith.constant 896 : index
    %516 = vector.load %arg13[%c17_570, %c896_571] : memref<18x1152xf32, #tpu.memory_space<vmem>>, vector<1x128xf32>
    tpu.vector_store %arg13[%c17_570, %c896_571], %515 {strides = array<i32>} : memref<18x1152xf32, #tpu.memory_space<vmem>>, vector<1x128xf32>,
    %c20 = arith.constant 20 : index
    %c0_572 = arith.constant 0 : index
    %517 = vector.load %arg12[%c20, %c0_572] : memref<162x128xf32, #tpu.memory_space<vmem>>, vector<1x128xf32>
    %c0_573 = arith.constant 0 : index
    %c1024 = arith.constant 1024 : index
    %518 = vector.load %arg13[%c0_573, %c1024] : memref<18x1152xf32, #tpu.memory_space<vmem>>, vector<1x128xf32>
    tpu.vector_store %arg13[%c0_573, %c1024], %517 {strides = array<i32>} : memref<18x1152xf32, #tpu.memory_space<vmem>>, vector<1x128xf32>,
    %c101 = arith.constant 101 : index
    %c0_574 = arith.constant 0 : index
    %519 = vector.load %arg12[%c101, %c0_574] : memref<162x128xf32, #tpu.memory_space<vmem>>, vector<1x128xf32>
    %c1_575 = arith.constant 1 : index
    %c1024_576 = arith.constant 1024 : index
    %520 = vector.load %arg13[%c1_575, %c1024_576] : memref<18x1152xf32, #tpu.memory_space<vmem>>, vector<1x128xf32>
    tpu.vector_store %arg13[%c1_575, %c1024_576], %519 {strides = array<i32>} : memref<18x1152xf32, #tpu.memory_space<vmem>>, vector<1x128xf32>,
    %c23 = arith.constant 23 : index
    %c0_577 = arith.constant 0 : index
    %521 = vector.load %arg12[%c23, %c0_577] : memref<162x128xf32, #tpu.memory_space<vmem>>, vector<1x128xf32>
    %c2_578 = arith.constant 2 : index
    %c1024_579 = arith.constant 1024 : index
    %522 = vector.load %arg13[%c2_578, %c1024_579] : memref<18x1152xf32, #tpu.memory_space<vmem>>, vector<1x128xf32>
    tpu.vector_store %arg13[%c2_578, %c1024_579], %521 {strides = array<i32>} : memref<18x1152xf32, #tpu.memory_space<vmem>>, vector<1x128xf32>,
    %c104 = arith.constant 104 : index
    %c0_580 = arith.constant 0 : index
    %523 = vector.load %arg12[%c104, %c0_580] : memref<162x128xf32, #tpu.memory_space<vmem>>, vector<1x128xf32>
    %c3_581 = arith.constant 3 : index
    %c1024_582 = arith.constant 1024 : index
    %524 = vector.load %arg13[%c3_581, %c1024_582] : memref<18x1152xf32, #tpu.memory_space<vmem>>, vector<1x128xf32>
    tpu.vector_store %arg13[%c3_581, %c1024_582], %523 {strides = array<i32>} : memref<18x1152xf32, #tpu.memory_space<vmem>>, vector<1x128xf32>,
    %c26_583 = arith.constant 26 : index
    %c0_584 = arith.constant 0 : index
    %525 = vector.load %arg12[%c26_583, %c0_584] : memref<162x128xf32, #tpu.memory_space<vmem>>, vector<1x128xf32>
    %c4_585 = arith.constant 4 : index
    %c1024_586 = arith.constant 1024 : index
    %526 = vector.load %arg13[%c4_585, %c1024_586] : memref<18x1152xf32, #tpu.memory_space<vmem>>, vector<1x128xf32>
    tpu.vector_store %arg13[%c4_585, %c1024_586], %525 {strides = array<i32>} : memref<18x1152xf32, #tpu.memory_space<vmem>>, vector<1x128xf32>,
    %c107 = arith.constant 107 : index
    %c0_587 = arith.constant 0 : index
    %527 = vector.load %arg12[%c107, %c0_587] : memref<162x128xf32, #tpu.memory_space<vmem>>, vector<1x128xf32>
    %c5_588 = arith.constant 5 : index
    %c1024_589 = arith.constant 1024 : index
    %528 = vector.load %arg13[%c5_588, %c1024_589] : memref<18x1152xf32, #tpu.memory_space<vmem>>, vector<1x128xf32>
    tpu.vector_store %arg13[%c5_588, %c1024_589], %527 {strides = array<i32>} : memref<18x1152xf32, #tpu.memory_space<vmem>>, vector<1x128xf32>,
    %c47 = arith.constant 47 : index
    %c0_590 = arith.constant 0 : index
    %529 = vector.load %arg12[%c47, %c0_590] : memref<162x128xf32, #tpu.memory_space<vmem>>, vector<1x128xf32>
    %c6_591 = arith.constant 6 : index
    %c1024_592 = arith.constant 1024 : index
    %530 = vector.load %arg13[%c6_591, %c1024_592] : memref<18x1152xf32, #tpu.memory_space<vmem>>, vector<1x128xf32>
    tpu.vector_store %arg13[%c6_591, %c1024_592], %529 {strides = array<i32>} : memref<18x1152xf32, #tpu.memory_space<vmem>>, vector<1x128xf32>,
    %c128_593 = arith.constant 128 : index
    %c0_594 = arith.constant 0 : index
    %531 = vector.load %arg12[%c128_593, %c0_594] : memref<162x128xf32, #tpu.memory_space<vmem>>, vector<1x128xf32>
    %c7_595 = arith.constant 7 : index
    %c1024_596 = arith.constant 1024 : index
    %532 = vector.load %arg13[%c7_595, %c1024_596] : memref<18x1152xf32, #tpu.memory_space<vmem>>, vector<1x128xf32>
    tpu.vector_store %arg13[%c7_595, %c1024_596], %531 {strides = array<i32>} : memref<18x1152xf32, #tpu.memory_space<vmem>>, vector<1x128xf32>,
    %c50 = arith.constant 50 : index
    %c0_597 = arith.constant 0 : index
    %533 = vector.load %arg12[%c50, %c0_597] : memref<162x128xf32, #tpu.memory_space<vmem>>, vector<1x128xf32>
    %c8_598 = arith.constant 8 : index
    %c1024_599 = arith.constant 1024 : index
    %534 = vector.load %arg13[%c8_598, %c1024_599] : memref<18x1152xf32, #tpu.memory_space<vmem>>, vector<1x128xf32>
    tpu.vector_store %arg13[%c8_598, %c1024_599], %533 {strides = array<i32>} : memref<18x1152xf32, #tpu.memory_space<vmem>>, vector<1x128xf32>,
    %c131 = arith.constant 131 : index
    %c0_600 = arith.constant 0 : index
    %535 = vector.load %arg12[%c131, %c0_600] : memref<162x128xf32, #tpu.memory_space<vmem>>, vector<1x128xf32>
    %c9_601 = arith.constant 9 : index
    %c1024_602 = arith.constant 1024 : index
    %536 = vector.load %arg13[%c9_601, %c1024_602] : memref<18x1152xf32, #tpu.memory_space<vmem>>, vector<1x128xf32>
    tpu.vector_store %arg13[%c9_601, %c1024_602], %535 {strides = array<i32>} : memref<18x1152xf32, #tpu.memory_space<vmem>>, vector<1x128xf32>,
    %c53 = arith.constant 53 : index
    %c0_603 = arith.constant 0 : index
    %537 = vector.load %arg12[%c53, %c0_603] : memref<162x128xf32, #tpu.memory_space<vmem>>, vector<1x128xf32>
    %c10_604 = arith.constant 10 : index
    %c1024_605 = arith.constant 1024 : index
    %538 = vector.load %arg13[%c10_604, %c1024_605] : memref<18x1152xf32, #tpu.memory_space<vmem>>, vector<1x128xf32>
    tpu.vector_store %arg13[%c10_604, %c1024_605], %537 {strides = array<i32>} : memref<18x1152xf32, #tpu.memory_space<vmem>>, vector<1x128xf32>,
    %c134 = arith.constant 134 : index
    %c0_606 = arith.constant 0 : index
    %539 = vector.load %arg12[%c134, %c0_606] : memref<162x128xf32, #tpu.memory_space<vmem>>, vector<1x128xf32>
    %c11_607 = arith.constant 11 : index
    %c1024_608 = arith.constant 1024 : index
    %540 = vector.load %arg13[%c11_607, %c1024_608] : memref<18x1152xf32, #tpu.memory_space<vmem>>, vector<1x128xf32>
    tpu.vector_store %arg13[%c11_607, %c1024_608], %539 {strides = array<i32>} : memref<18x1152xf32, #tpu.memory_space<vmem>>, vector<1x128xf32>,
    %c74 = arith.constant 74 : index
    %c0_609 = arith.constant 0 : index
    %541 = vector.load %arg12[%c74, %c0_609] : memref<162x128xf32, #tpu.memory_space<vmem>>, vector<1x128xf32>
    %c12_610 = arith.constant 12 : index
    %c1024_611 = arith.constant 1024 : index
    %542 = vector.load %arg13[%c12_610, %c1024_611] : memref<18x1152xf32, #tpu.memory_space<vmem>>, vector<1x128xf32>
    tpu.vector_store %arg13[%c12_610, %c1024_611], %541 {strides = array<i32>} : memref<18x1152xf32, #tpu.memory_space<vmem>>, vector<1x128xf32>,
    %c155 = arith.constant 155 : index
    %c0_612 = arith.constant 0 : index
    %543 = vector.load %arg12[%c155, %c0_612] : memref<162x128xf32, #tpu.memory_space<vmem>>, vector<1x128xf32>
    %c13_613 = arith.constant 13 : index
    %c1024_614 = arith.constant 1024 : index
    %544 = vector.load %arg13[%c13_613, %c1024_614] : memref<18x1152xf32, #tpu.memory_space<vmem>>, vector<1x128xf32>
    tpu.vector_store %arg13[%c13_613, %c1024_614], %543 {strides = array<i32>} : memref<18x1152xf32, #tpu.memory_space<vmem>>, vector<1x128xf32>,
    %c77 = arith.constant 77 : index
    %c0_615 = arith.constant 0 : index
    %545 = vector.load %arg12[%c77, %c0_615] : memref<162x128xf32, #tpu.memory_space<vmem>>, vector<1x128xf32>
    %c14_616 = arith.constant 14 : index
    %c1024_617 = arith.constant 1024 : index
    %546 = vector.load %arg13[%c14_616, %c1024_617] : memref<18x1152xf32, #tpu.memory_space<vmem>>, vector<1x128xf32>
    tpu.vector_store %arg13[%c14_616, %c1024_617], %545 {strides = array<i32>} : memref<18x1152xf32, #tpu.memory_space<vmem>>, vector<1x128xf32>,
    %c158 = arith.constant 158 : index
    %c0_618 = arith.constant 0 : index
    %547 = vector.load %arg12[%c158, %c0_618] : memref<162x128xf32, #tpu.memory_space<vmem>>, vector<1x128xf32>
    %c15_619 = arith.constant 15 : index
    %c1024_620 = arith.constant 1024 : index
    %548 = vector.load %arg13[%c15_619, %c1024_620] : memref<18x1152xf32, #tpu.memory_space<vmem>>, vector<1x128xf32>
    tpu.vector_store %arg13[%c15_619, %c1024_620], %547 {strides = array<i32>} : memref<18x1152xf32, #tpu.memory_space<vmem>>, vector<1x128xf32>,
    %c80 = arith.constant 80 : index
    %c0_621 = arith.constant 0 : index
    %549 = vector.load %arg12[%c80, %c0_621] : memref<162x128xf32, #tpu.memory_space<vmem>>, vector<1x128xf32>
    %c16_622 = arith.constant 16 : index
    %c1024_623 = arith.constant 1024 : index
    %550 = vector.load %arg13[%c16_622, %c1024_623] : memref<18x1152xf32, #tpu.memory_space<vmem>>, vector<1x128xf32>
    tpu.vector_store %arg13[%c16_622, %c1024_623], %549 {strides = array<i32>} : memref<18x1152xf32, #tpu.memory_space<vmem>>, vector<1x128xf32>,
    %c161 = arith.constant 161 : index
    %c0_624 = arith.constant 0 : index
    %551 = vector.load %arg12[%c161, %c0_624] : memref<162x128xf32, #tpu.memory_space<vmem>>, vector<1x128xf32>
    %c17_625 = arith.constant 17 : index
    %c1024_626 = arith.constant 1024 : index
    %552 = vector.load %arg13[%c17_625, %c1024_626] : memref<18x1152xf32, #tpu.memory_space<vmem>>, vector<1x128xf32>
    tpu.vector_store %arg13[%c17_625, %c1024_626], %551 {strides = array<i32>} : memref<18x1152xf32, #tpu.memory_space<vmem>>, vector<1x128xf32>,
    %c0_627 = arith.constant 0 : index
    %c0_628 = arith.constant 0 : index
    %553 = vector.load %arg13[%c0_627, %c0_628] : memref<18x1152xf32, #tpu.memory_space<vmem>>, vector<18x1152xf32>
    %c0_629 = arith.constant 0 : index
    %c0_630 = arith.constant 0 : index
    %554 = vector.load %arg5[%c0_629, %c0_630] : memref<1152x32xf32, #tpu.memory_space<vmem>>, vector<1152x32xf32>
    %cst_631 = arith.constant dense<0.000000e+00> : vector<18x32xf32>
    %555 = tpu.matmul %553, %554, %cst_631 {dimension_numbers = #tpu.dot_dimension_numbers<[1], [0], [0], [1], [0, 0, 1, 1], [], []>} : vector<18x1152xf32>, vector<1152x32xf32>, vector<18x32xf32> -> vector<18x32xf32>
    %cst_632 = arith.constant dense<0.000000e+00> : vector<32xf32>
    %556 = vector.multi_reduction <add>, %555, %cst_632 [0] : vector<18x32xf32> to vector<32xf32>
    %557 = vector.shape_cast %556 : vector<32xf32> to vector<1x32xf32>
    %cst_633 = arith.constant 1.800000e+01 : f32
    %558 = vector.broadcast %cst_633 : f32 to vector<1x32xf32>
    %559 = arith.divf %557, %558 : vector<1x32xf32>
    %560 = vector.broadcast %559 : vector<1x32xf32> to vector<18x32xf32>
    %561 = arith.subf %555, %560 : vector<18x32xf32>
    %562 = arith.mulf %561, %561 : vector<18x32xf32>
    %cst_634 = arith.constant dense<0.000000e+00> : vector<32xf32>
    %563 = vector.multi_reduction <add>, %562, %cst_634 [0] : vector<18x32xf32> to vector<32xf32>
    %564 = vector.shape_cast %563 : vector<32xf32> to vector<1x32xf32>
    %cst_635 = arith.constant 1.800000e+01 : f32
    %565 = vector.broadcast %cst_635 : f32 to vector<1x32xf32>
    %566 = arith.divf %564, %565 : vector<1x32xf32>
    %c13_636 = arith.constant 13 : index
    %c0_637 = arith.constant 0 : index
    %567 = vector.load %arg3[%c13_636, %c0_637] : memref<16x128xf32, #tpu.memory_space<vmem>>, vector<1x32xf32>
    %cst_638 = arith.constant 9.99999974E-6 : f32
    %568 = vector.broadcast %cst_638 : f32 to vector<1x32xf32>
    %569 = arith.addf %566, %568 : vector<1x32xf32>
    %570 = math.rsqrt %569 : vector<1x32xf32>
    %571 = arith.mulf %567, %570 : vector<1x32xf32>
    %572 = vector.broadcast %571 : vector<1x32xf32> to vector<18x32xf32>
    %573 = arith.mulf %555, %572 : vector<18x32xf32>
    %c14_639 = arith.constant 14 : index
    %c0_640 = arith.constant 0 : index
    %574 = vector.load %arg3[%c14_639, %c0_640] : memref<16x128xf32, #tpu.memory_space<vmem>>, vector<1x32xf32>
    %575 = arith.mulf %559, %571 : vector<1x32xf32>
    %576 = arith.subf %574, %575 : vector<1x32xf32>
    %577 = vector.broadcast %576 : vector<1x32xf32> to vector<18x32xf32>
    %578 = arith.addf %573, %577 : vector<18x32xf32>
    %cst_641 = arith.constant 0.000000e+00 : f32
    %579 = vector.broadcast %cst_641 : f32 to vector<18x32xf32>
    %580 = arith.maximumf %578, %579 : vector<18x32xf32>
    %c0_642 = arith.constant 0 : index
    %c0_643 = arith.constant 0 : index
    %581 = vector.load %arg14[%c0_642, %c0_643] : memref<18x32xf32, #tpu.memory_space<vmem>>, vector<18x32xf32>
    tpu.vector_store %arg14[%c0_642, %c0_643], %580 {strides = array<i32>} : memref<18x32xf32, #tpu.memory_space<vmem>>, vector<18x32xf32>,
    %cst_644 = arith.constant 0.000000e+00 : f32
    %582 = vector.broadcast %cst_644 : f32 to vector<2x4xf32>
    %c0_645 = arith.constant 0 : index
    %c0_646 = arith.constant 0 : index
    %583 = vector.load %arg14[%c0_645, %c0_646] : memref<18x32xf32, #tpu.memory_space<vmem>>, vector<2x32xf32>
    %c0_647 = arith.constant 0 : index
    %c0_648 = arith.constant 0 : index
    %c0_649 = arith.constant 0 : index
    %584 = vector.load %arg6[%c0_647, %c0_648, %c0_649] : memref<9x32x4xf32, #tpu.memory_space<vmem>>, vector<1x32x4xf32>
    %585 = vector.shape_cast %584 : vector<1x32x4xf32> to vector<32x4xf32>
    %cst_650 = arith.constant dense<0.000000e+00> : vector<2x4xf32>
    %586 = tpu.matmul %583, %585, %cst_650 {dimension_numbers = #tpu.dot_dimension_numbers<[1], [0], [0], [1], [0, 0, 1, 1], [], []>} : vector<2x32xf32>, vector<32x4xf32>, vector<2x4xf32> -> vector<2x4xf32>
    %587 = arith.addf %582, %586 : vector<2x4xf32>
    %c2_651 = arith.constant 2 : index
    %c0_652 = arith.constant 0 : index
    %588 = vector.load %arg14[%c2_651, %c0_652] : memref<18x32xf32, #tpu.memory_space<vmem>>, vector<2x32xf32>
    %c1_653 = arith.constant 1 : index
    %c0_654 = arith.constant 0 : index
    %c0_655 = arith.constant 0 : index
    %589 = vector.load %arg6[%c1_653, %c0_654, %c0_655] : memref<9x32x4xf32, #tpu.memory_space<vmem>>, vector<1x32x4xf32>
    %590 = vector.shape_cast %589 : vector<1x32x4xf32> to vector<32x4xf32>
    %cst_656 = arith.constant dense<0.000000e+00> : vector<2x4xf32>
    %591 = tpu.matmul %588, %590, %cst_656 {dimension_numbers = #tpu.dot_dimension_numbers<[1], [0], [0], [1], [0, 0, 1, 1], [], []>} : vector<2x32xf32>, vector<32x4xf32>, vector<2x4xf32> -> vector<2x4xf32>
    %592 = arith.addf %587, %591 : vector<2x4xf32>
    %c4_657 = arith.constant 4 : index
    %c0_658 = arith.constant 0 : index
    %593 = vector.load %arg14[%c4_657, %c0_658] : memref<18x32xf32, #tpu.memory_space<vmem>>, vector<2x32xf32>
    %c2_659 = arith.constant 2 : index
    %c0_660 = arith.constant 0 : index
    %c0_661 = arith.constant 0 : index
    %594 = vector.load %arg6[%c2_659, %c0_660, %c0_661] : memref<9x32x4xf32, #tpu.memory_space<vmem>>, vector<1x32x4xf32>
    %595 = vector.shape_cast %594 : vector<1x32x4xf32> to vector<32x4xf32>
    %cst_662 = arith.constant dense<0.000000e+00> : vector<2x4xf32>
    %596 = tpu.matmul %593, %595, %cst_662 {dimension_numbers = #tpu.dot_dimension_numbers<[1], [0], [0], [1], [0, 0, 1, 1], [], []>} : vector<2x32xf32>, vector<32x4xf32>, vector<2x4xf32> -> vector<2x4xf32>
    %597 = arith.addf %592, %596 : vector<2x4xf32>
    %c6_663 = arith.constant 6 : index
    %c0_664 = arith.constant 0 : index
    %598 = vector.load %arg14[%c6_663, %c0_664] : memref<18x32xf32, #tpu.memory_space<vmem>>, vector<2x32xf32>
    %c3_665 = arith.constant 3 : index
    %c0_666 = arith.constant 0 : index
    %c0_667 = arith.constant 0 : index
    %599 = vector.load %arg6[%c3_665, %c0_666, %c0_667] : memref<9x32x4xf32, #tpu.memory_space<vmem>>, vector<1x32x4xf32>
    %600 = vector.shape_cast %599 : vector<1x32x4xf32> to vector<32x4xf32>
    %cst_668 = arith.constant dense<0.000000e+00> : vector<2x4xf32>
    %601 = tpu.matmul %598, %600, %cst_668 {dimension_numbers = #tpu.dot_dimension_numbers<[1], [0], [0], [1], [0, 0, 1, 1], [], []>} : vector<2x32xf32>, vector<32x4xf32>, vector<2x4xf32> -> vector<2x4xf32>
    %602 = arith.addf %597, %601 : vector<2x4xf32>
    %c8_669 = arith.constant 8 : index
    %c0_670 = arith.constant 0 : index
    %603 = vector.load %arg14[%c8_669, %c0_670] : memref<18x32xf32, #tpu.memory_space<vmem>>, vector<2x32xf32>
    %c4_671 = arith.constant 4 : index
    %c0_672 = arith.constant 0 : index
    %c0_673 = arith.constant 0 : index
    %604 = vector.load %arg6[%c4_671, %c0_672, %c0_673] : memref<9x32x4xf32, #tpu.memory_space<vmem>>, vector<1x32x4xf32>
    %605 = vector.shape_cast %604 : vector<1x32x4xf32> to vector<32x4xf32>
    %cst_674 = arith.constant dense<0.000000e+00> : vector<2x4xf32>
    %606 = tpu.matmul %603, %605, %cst_674 {dimension_numbers = #tpu.dot_dimension_numbers<[1], [0], [0], [1], [0, 0, 1, 1], [], []>} : vector<2x32xf32>, vector<32x4xf32>, vector<2x4xf32> -> vector<2x4xf32>
    %607 = arith.addf %602, %606 : vector<2x4xf32>
    %c10_675 = arith.constant 10 : index
    %c0_676 = arith.constant 0 : index
    %608 = vector.load %arg14[%c10_675, %c0_676] : memref<18x32xf32, #tpu.memory_space<vmem>>, vector<2x32xf32>
    %c5_677 = arith.constant 5 : index
    %c0_678 = arith.constant 0 : index
    %c0_679 = arith.constant 0 : index
    %609 = vector.load %arg6[%c5_677, %c0_678, %c0_679] : memref<9x32x4xf32, #tpu.memory_space<vmem>>, vector<1x32x4xf32>
    %610 = vector.shape_cast %609 : vector<1x32x4xf32> to vector<32x4xf32>
    %cst_680 = arith.constant dense<0.000000e+00> : vector<2x4xf32>
    %611 = tpu.matmul %608, %610, %cst_680 {dimension_numbers = #tpu.dot_dimension_numbers<[1], [0], [0], [1], [0, 0, 1, 1], [], []>} : vector<2x32xf32>, vector<32x4xf32>, vector<2x4xf32> -> vector<2x4xf32>
    %612 = arith.addf %607, %611 : vector<2x4xf32>
    %c12_681 = arith.constant 12 : index
    %c0_682 = arith.constant 0 : index
    %613 = vector.load %arg14[%c12_681, %c0_682] : memref<18x32xf32, #tpu.memory_space<vmem>>, vector<2x32xf32>
    %c6_683 = arith.constant 6 : index
    %c0_684 = arith.constant 0 : index
    %c0_685 = arith.constant 0 : index
    %614 = vector.load %arg6[%c6_683, %c0_684, %c0_685] : memref<9x32x4xf32, #tpu.memory_space<vmem>>, vector<1x32x4xf32>
    %615 = vector.shape_cast %614 : vector<1x32x4xf32> to vector<32x4xf32>
    %cst_686 = arith.constant dense<0.000000e+00> : vector<2x4xf32>
    %616 = tpu.matmul %613, %615, %cst_686 {dimension_numbers = #tpu.dot_dimension_numbers<[1], [0], [0], [1], [0, 0, 1, 1], [], []>} : vector<2x32xf32>, vector<32x4xf32>, vector<2x4xf32> -> vector<2x4xf32>
    %617 = arith.addf %612, %616 : vector<2x4xf32>
    %c14_687 = arith.constant 14 : index
    %c0_688 = arith.constant 0 : index
    %618 = vector.load %arg14[%c14_687, %c0_688] : memref<18x32xf32, #tpu.memory_space<vmem>>, vector<2x32xf32>
    %c7_689 = arith.constant 7 : index
    %c0_690 = arith.constant 0 : index
    %c0_691 = arith.constant 0 : index
    %619 = vector.load %arg6[%c7_689, %c0_690, %c0_691] : memref<9x32x4xf32, #tpu.memory_space<vmem>>, vector<1x32x4xf32>
    %620 = vector.shape_cast %619 : vector<1x32x4xf32> to vector<32x4xf32>
    %cst_692 = arith.constant dense<0.000000e+00> : vector<2x4xf32>
    %621 = tpu.matmul %618, %620, %cst_692 {dimension_numbers = #tpu.dot_dimension_numbers<[1], [0], [0], [1], [0, 0, 1, 1], [], []>} : vector<2x32xf32>, vector<32x4xf32>, vector<2x4xf32> -> vector<2x4xf32>
    %622 = arith.addf %617, %621 : vector<2x4xf32>
    %c16_693 = arith.constant 16 : index
    %c0_694 = arith.constant 0 : index
    %623 = vector.load %arg14[%c16_693, %c0_694] : memref<18x32xf32, #tpu.memory_space<vmem>>, vector<2x32xf32>
    %c8_695 = arith.constant 8 : index
    %c0_696 = arith.constant 0 : index
    %c0_697 = arith.constant 0 : index
    %624 = vector.load %arg6[%c8_695, %c0_696, %c0_697] : memref<9x32x4xf32, #tpu.memory_space<vmem>>, vector<1x32x4xf32>
    %625 = vector.shape_cast %624 : vector<1x32x4xf32> to vector<32x4xf32>
    %cst_698 = arith.constant dense<0.000000e+00> : vector<2x4xf32>
    %626 = tpu.matmul %623, %625, %cst_698 {dimension_numbers = #tpu.dot_dimension_numbers<[1], [0], [0], [1], [0, 0, 1, 1], [], []>} : vector<2x32xf32>, vector<32x4xf32>, vector<2x4xf32> -> vector<2x4xf32>
    %627 = arith.addf %622, %626 : vector<2x4xf32>
    %c0_699 = arith.constant 0 : index
    %628 = memref.load %arg8[%c0_699] : memref<19xf32, #tpu.memory_space<smem>>
    %629 = vector.broadcast %628 : f32 to vector<2x4xf32>
    %630 = arith.addf %627, %629 : vector<2x4xf32>
    %cst_700 = arith.constant 0.000000e+00 : f32
    %631 = vector.broadcast %cst_700 : f32 to vector<2x4xf32>
    %632 = arith.maximumf %630, %631 : vector<2x4xf32>
    %c0_701 = arith.constant 0 : index
    %c0_702 = arith.constant 0 : index
    %633 = vector.load %arg7[%c0_701, %c0_702] : memref<5x82xf32, #tpu.memory_space<vmem>>, vector<4x82xf32>
    %cst_703 = arith.constant dense<0.000000e+00> : vector<2x82xf32>
    %634 = tpu.matmul %632, %633, %cst_703 {dimension_numbers = #tpu.dot_dimension_numbers<[1], [0], [0], [1], [0, 0, 1, 1], [], []>} : vector<2x4xf32>, vector<4x82xf32>, vector<2x82xf32> -> vector<2x82xf32>
    %c4_704 = arith.constant 4 : index
    %c0_705 = arith.constant 0 : index
    %635 = vector.load %arg7[%c4_704, %c0_705] : memref<5x82xf32, #tpu.memory_space<vmem>>, vector<1x82xf32>
    %636 = vector.broadcast %635 : vector<1x82xf32> to vector<2x82xf32>
    %637 = arith.addf %634, %636 : vector<2x82xf32>
    %638 = vector.extract_strided_slice %637 {offsets = [0, 0], sizes = [2, 81], strides = [1, 1]} : vector<2x82xf32> to vector<2x81xf32>
    %cst_706 = arith.constant 0.000000e+00 : f32
    %639 = vector.broadcast %cst_706 : f32 to vector<2x81xf32>
    %640 = arith.maximumf %638, %639 : vector<2x81xf32>
    %c0_707 = arith.constant 0 : index
    %c0_708 = arith.constant 0 : index
    %641 = vector.load %arg2[%c0_707, %c0_708] : memref<2x81xf32, #tpu.memory_space<vmem>>, vector<2x81xf32>
    %642 = arith.mulf %640, %641 : vector<2x81xf32>
    %643 = vector.extract_strided_slice %637 {offsets = [0, 81], sizes = [2, 1], strides = [1, 1]} : vector<2x82xf32> to vector<2x1xf32>
    %cst_709 = arith.constant 0.000000e+00 : f32
    %644 = vector.broadcast %cst_709 : f32 to vector<2x1xf32>
    %645 = arith.subf %644, %643 : vector<2x1xf32>
    %646 = math.exp %645 : vector<2x1xf32>
    %cst_710 = arith.constant 1.000000e+00 : f32
    %647 = vector.broadcast %cst_710 : f32 to vector<2x1xf32>
    %648 = arith.addf %647, %646 : vector<2x1xf32>
    %cst_711 = arith.constant 1.000000e+00 : f32
    %649 = vector.broadcast %cst_711 : f32 to vector<2x1xf32>
    %650 = arith.divf %649, %648 : vector<2x1xf32>
    %c1_712 = arith.constant 1 : index
    %651 = memref.load %arg8[%c1_712] : memref<19xf32, #tpu.memory_space<smem>>
    %652 = vector.broadcast %651 : f32 to vector<2x81xf32>
    %653 = arith.mulf %642, %652 : vector<2x81xf32>
    %c10_713 = arith.constant 10 : index
    %654 = memref.load %arg8[%c10_713] : memref<19xf32, #tpu.memory_space<smem>>
    %655 = vector.broadcast %654 : f32 to vector<2x81xf32>
    %656 = arith.addf %653, %655 : vector<2x81xf32>
    %cst_714 = arith.constant 0.000000e+00 : f32
    %657 = vector.broadcast %cst_714 : f32 to vector<2x81xf32>
    %658 = arith.maximumf %656, %657 : vector<2x81xf32>
    %c2_715 = arith.constant 2 : index
    %659 = memref.load %arg8[%c2_715] : memref<19xf32, #tpu.memory_space<smem>>
    %660 = vector.broadcast %659 : f32 to vector<2x81xf32>
    %661 = arith.mulf %642, %660 : vector<2x81xf32>
    %c11_716 = arith.constant 11 : index
    %662 = memref.load %arg8[%c11_716] : memref<19xf32, #tpu.memory_space<smem>>
    %663 = vector.broadcast %662 : f32 to vector<2x81xf32>
    %664 = arith.addf %661, %663 : vector<2x81xf32>
    %cst_717 = arith.constant 0.000000e+00 : f32
    %665 = vector.broadcast %cst_717 : f32 to vector<2x81xf32>
    %666 = arith.maximumf %664, %665 : vector<2x81xf32>
    %c3_718 = arith.constant 3 : index
    %667 = memref.load %arg8[%c3_718] : memref<19xf32, #tpu.memory_space<smem>>
    %668 = vector.broadcast %667 : f32 to vector<2x81xf32>
    %669 = arith.mulf %642, %668 : vector<2x81xf32>
    %c12_719 = arith.constant 12 : index
    %670 = memref.load %arg8[%c12_719] : memref<19xf32, #tpu.memory_space<smem>>
    %671 = vector.broadcast %670 : f32 to vector<2x81xf32>
    %672 = arith.addf %669, %671 : vector<2x81xf32>
    %cst_720 = arith.constant 0.000000e+00 : f32
    %673 = vector.broadcast %cst_720 : f32 to vector<2x81xf32>
    %674 = arith.maximumf %672, %673 : vector<2x81xf32>
    %c4_721 = arith.constant 4 : index
    %675 = memref.load %arg8[%c4_721] : memref<19xf32, #tpu.memory_space<smem>>
    %676 = vector.broadcast %675 : f32 to vector<2x81xf32>
    %677 = arith.mulf %642, %676 : vector<2x81xf32>
    %c13_722 = arith.constant 13 : index
    %678 = memref.load %arg8[%c13_722] : memref<19xf32, #tpu.memory_space<smem>>
    %679 = vector.broadcast %678 : f32 to vector<2x81xf32>
    %680 = arith.addf %677, %679 : vector<2x81xf32>
    %cst_723 = arith.constant 0.000000e+00 : f32
    %681 = vector.broadcast %cst_723 : f32 to vector<2x81xf32>
    %682 = arith.maximumf %680, %681 : vector<2x81xf32>
    %c5_724 = arith.constant 5 : index
    %683 = memref.load %arg8[%c5_724] : memref<19xf32, #tpu.memory_space<smem>>
    %684 = vector.broadcast %683 : f32 to vector<2x81xf32>
    %685 = arith.mulf %642, %684 : vector<2x81xf32>
    %c14_725 = arith.constant 14 : index
    %686 = memref.load %arg8[%c14_725] : memref<19xf32, #tpu.memory_space<smem>>
    %687 = vector.broadcast %686 : f32 to vector<2x81xf32>
    %688 = arith.addf %685, %687 : vector<2x81xf32>
    %cst_726 = arith.constant 0.000000e+00 : f32
    %689 = vector.broadcast %cst_726 : f32 to vector<2x81xf32>
    %690 = arith.maximumf %688, %689 : vector<2x81xf32>
    %c6_727 = arith.constant 6 : index
    %691 = memref.load %arg8[%c6_727] : memref<19xf32, #tpu.memory_space<smem>>
    %692 = vector.broadcast %691 : f32 to vector<2x81xf32>
    %693 = arith.mulf %642, %692 : vector<2x81xf32>
    %c15_728 = arith.constant 15 : index
    %694 = memref.load %arg8[%c15_728] : memref<19xf32, #tpu.memory_space<smem>>
    %695 = vector.broadcast %694 : f32 to vector<2x81xf32>
    %696 = arith.addf %693, %695 : vector<2x81xf32>
    %cst_729 = arith.constant 0.000000e+00 : f32
    %697 = vector.broadcast %cst_729 : f32 to vector<2x81xf32>
    %698 = arith.maximumf %696, %697 : vector<2x81xf32>
    %c7_730 = arith.constant 7 : index
    %699 = memref.load %arg8[%c7_730] : memref<19xf32, #tpu.memory_space<smem>>
    %700 = vector.broadcast %699 : f32 to vector<2x81xf32>
    %701 = arith.mulf %642, %700 : vector<2x81xf32>
    %c16_731 = arith.constant 16 : index
    %702 = memref.load %arg8[%c16_731] : memref<19xf32, #tpu.memory_space<smem>>
    %703 = vector.broadcast %702 : f32 to vector<2x81xf32>
    %704 = arith.addf %701, %703 : vector<2x81xf32>
    %cst_732 = arith.constant 0.000000e+00 : f32
    %705 = vector.broadcast %cst_732 : f32 to vector<2x81xf32>
    %706 = arith.maximumf %704, %705 : vector<2x81xf32>
    %c8_733 = arith.constant 8 : index
    %707 = memref.load %arg8[%c8_733] : memref<19xf32, #tpu.memory_space<smem>>
    %708 = vector.broadcast %707 : f32 to vector<2x81xf32>
    %709 = arith.mulf %642, %708 : vector<2x81xf32>
    %c17_734 = arith.constant 17 : index
    %710 = memref.load %arg8[%c17_734] : memref<19xf32, #tpu.memory_space<smem>>
    %711 = vector.broadcast %710 : f32 to vector<2x81xf32>
    %712 = arith.addf %709, %711 : vector<2x81xf32>
    %cst_735 = arith.constant 0.000000e+00 : f32
    %713 = vector.broadcast %cst_735 : f32 to vector<2x81xf32>
    %714 = arith.maximumf %712, %713 : vector<2x81xf32>
    %c9_736 = arith.constant 9 : index
    %715 = memref.load %arg8[%c9_736] : memref<19xf32, #tpu.memory_space<smem>>
    %716 = vector.broadcast %715 : f32 to vector<2x81xf32>
    %717 = arith.mulf %642, %716 : vector<2x81xf32>
    %c18_737 = arith.constant 18 : index
    %718 = memref.load %arg8[%c18_737] : memref<19xf32, #tpu.memory_space<smem>>
    %719 = vector.broadcast %718 : f32 to vector<2x81xf32>
    %720 = arith.addf %717, %719 : vector<2x81xf32>
    %cst_738 = arith.constant 0.000000e+00 : f32
    %721 = vector.broadcast %cst_738 : f32 to vector<2x81xf32>
    %722 = arith.maximumf %720, %721 : vector<2x81xf32>
    %723 = arith.maximumf %658, %666 : vector<2x81xf32>
    %724 = arith.maximumf %723, %674 : vector<2x81xf32>
    %725 = arith.maximumf %724, %682 : vector<2x81xf32>
    %726 = arith.maximumf %725, %690 : vector<2x81xf32>
    %727 = arith.maximumf %726, %698 : vector<2x81xf32>
    %728 = arith.maximumf %727, %706 : vector<2x81xf32>
    %729 = arith.maximumf %728, %714 : vector<2x81xf32>
    %730 = arith.maximumf %729, %722 : vector<2x81xf32>
    %cst_739 = arith.constant 0.000000e+00 : f32
    %731 = vector.broadcast %cst_739 : f32 to vector<2x81xf32>
    %732 = arith.subf %658, %730 : vector<2x81xf32>
    %733 = math.exp %732 : vector<2x81xf32>
    %734 = arith.addf %731, %733 : vector<2x81xf32>
    %735 = arith.subf %666, %730 : vector<2x81xf32>
    %736 = math.exp %735 : vector<2x81xf32>
    %737 = arith.addf %734, %736 : vector<2x81xf32>
    %738 = arith.subf %674, %730 : vector<2x81xf32>
    %739 = math.exp %738 : vector<2x81xf32>
    %740 = arith.addf %737, %739 : vector<2x81xf32>
    %741 = arith.subf %682, %730 : vector<2x81xf32>
    %742 = math.exp %741 : vector<2x81xf32>
    %743 = arith.addf %740, %742 : vector<2x81xf32>
    %744 = arith.subf %690, %730 : vector<2x81xf32>
    %745 = math.exp %744 : vector<2x81xf32>
    %746 = arith.addf %743, %745 : vector<2x81xf32>
    %747 = arith.subf %698, %730 : vector<2x81xf32>
    %748 = math.exp %747 : vector<2x81xf32>
    %749 = arith.addf %746, %748 : vector<2x81xf32>
    %750 = arith.subf %706, %730 : vector<2x81xf32>
    %751 = math.exp %750 : vector<2x81xf32>
    %752 = arith.addf %749, %751 : vector<2x81xf32>
    %753 = arith.subf %714, %730 : vector<2x81xf32>
    %754 = math.exp %753 : vector<2x81xf32>
    %755 = arith.addf %752, %754 : vector<2x81xf32>
    %756 = arith.subf %722, %730 : vector<2x81xf32>
    %757 = math.exp %756 : vector<2x81xf32>
    %758 = arith.addf %755, %757 : vector<2x81xf32>
    %759 = math.log %758 : vector<2x81xf32>
    %760 = arith.subf %658, %730 : vector<2x81xf32>
    %761 = arith.subf %760, %759 : vector<2x81xf32>
    %c0_740 = arith.constant 0 : index
    %c0_741 = arith.constant 0 : index
    %762 = vector.load %arg9[%c0_740, %c0_741] : memref<2x1280xf32, #tpu.memory_space<vmem>>, vector<2x81xf32>
    tpu.vector_store %arg9[%c0_740, %c0_741], %761 {strides = array<i32>} : memref<2x1280xf32, #tpu.memory_space<vmem>>, vector<2x81xf32>,
    %763 = arith.subf %666, %730 : vector<2x81xf32>
    %764 = arith.subf %763, %759 : vector<2x81xf32>
    %c0_742 = arith.constant 0 : index
    %c128_743 = arith.constant 128 : index
    %765 = vector.load %arg9[%c0_742, %c128_743] : memref<2x1280xf32, #tpu.memory_space<vmem>>, vector<2x81xf32>
    tpu.vector_store %arg9[%c0_742, %c128_743], %764 {strides = array<i32>} : memref<2x1280xf32, #tpu.memory_space<vmem>>, vector<2x81xf32>,
    %766 = arith.subf %674, %730 : vector<2x81xf32>
    %767 = arith.subf %766, %759 : vector<2x81xf32>
    %c0_744 = arith.constant 0 : index
    %c256_745 = arith.constant 256 : index
    %768 = vector.load %arg9[%c0_744, %c256_745] : memref<2x1280xf32, #tpu.memory_space<vmem>>, vector<2x81xf32>
    tpu.vector_store %arg9[%c0_744, %c256_745], %767 {strides = array<i32>} : memref<2x1280xf32, #tpu.memory_space<vmem>>, vector<2x81xf32>,
    %769 = arith.subf %682, %730 : vector<2x81xf32>
    %770 = arith.subf %769, %759 : vector<2x81xf32>
    %c0_746 = arith.constant 0 : index
    %c384_747 = arith.constant 384 : index
    %771 = vector.load %arg9[%c0_746, %c384_747] : memref<2x1280xf32, #tpu.memory_space<vmem>>, vector<2x81xf32>
    tpu.vector_store %arg9[%c0_746, %c384_747], %770 {strides = array<i32>} : memref<2x1280xf32, #tpu.memory_space<vmem>>, vector<2x81xf32>,
    %772 = arith.subf %690, %730 : vector<2x81xf32>
    %773 = arith.subf %772, %759 : vector<2x81xf32>
    %c0_748 = arith.constant 0 : index
    %c512_749 = arith.constant 512 : index
    %774 = vector.load %arg9[%c0_748, %c512_749] : memref<2x1280xf32, #tpu.memory_space<vmem>>, vector<2x81xf32>
    tpu.vector_store %arg9[%c0_748, %c512_749], %773 {strides = array<i32>} : memref<2x1280xf32, #tpu.memory_space<vmem>>, vector<2x81xf32>,
    %775 = arith.subf %698, %730 : vector<2x81xf32>
    %776 = arith.subf %775, %759 : vector<2x81xf32>
    %c0_750 = arith.constant 0 : index
    %c640_751 = arith.constant 640 : index
    %777 = vector.load %arg9[%c0_750, %c640_751] : memref<2x1280xf32, #tpu.memory_space<vmem>>, vector<2x81xf32>
    tpu.vector_store %arg9[%c0_750, %c640_751], %776 {strides = array<i32>} : memref<2x1280xf32, #tpu.memory_space<vmem>>, vector<2x81xf32>,
    %778 = arith.subf %706, %730 : vector<2x81xf32>
    %779 = arith.subf %778, %759 : vector<2x81xf32>
    %c0_752 = arith.constant 0 : index
    %c768_753 = arith.constant 768 : index
    %780 = vector.load %arg9[%c0_752, %c768_753] : memref<2x1280xf32, #tpu.memory_space<vmem>>, vector<2x81xf32>
    tpu.vector_store %arg9[%c0_752, %c768_753], %779 {strides = array<i32>} : memref<2x1280xf32, #tpu.memory_space<vmem>>, vector<2x81xf32>,
    %781 = arith.subf %714, %730 : vector<2x81xf32>
    %782 = arith.subf %781, %759 : vector<2x81xf32>
    %c0_754 = arith.constant 0 : index
    %c896_755 = arith.constant 896 : index
    %783 = vector.load %arg9[%c0_754, %c896_755] : memref<2x1280xf32, #tpu.memory_space<vmem>>, vector<2x81xf32>
    tpu.vector_store %arg9[%c0_754, %c896_755], %782 {strides = array<i32>} : memref<2x1280xf32, #tpu.memory_space<vmem>>, vector<2x81xf32>,
    %784 = arith.subf %722, %730 : vector<2x81xf32>
    %785 = arith.subf %784, %759 : vector<2x81xf32>
    %c0_756 = arith.constant 0 : index
    %c1024_757 = arith.constant 1024 : index
    %786 = vector.load %arg9[%c0_756, %c1024_757] : memref<2x1280xf32, #tpu.memory_space<vmem>>, vector<2x81xf32>
    tpu.vector_store %arg9[%c0_756, %c1024_757], %785 {strides = array<i32>} : memref<2x1280xf32, #tpu.memory_space<vmem>>, vector<2x81xf32>,
    %c0_758 = arith.constant 0 : index
    %c1152 = arith.constant 1152 : index
    %787 = vector.load %arg9[%c0_758, %c1152] : memref<2x1280xf32, #tpu.memory_space<vmem>>, vector<2x1xf32>
    tpu.vector_store %arg9[%c0_758, %c1152], %650 {strides = array<i32>} : memref<2x1280xf32, #tpu.memory_space<vmem>>, vector<2x1xf32>,
    return
  }
  func.func @transform_0(%arg0: i32) -> (i32, i32) {
    %c0_i32 = arith.constant 0 : i32
    %c0_i32_0 = arith.constant 0 : i32
    %c0_i32_1 = arith.constant 0 : i32
    return %c0_i32, %c0_i32_0 : i32, i32
  }
  func.func @transform_1(%arg0: i32) -> (i32, i32) {
    %c0_i32 = arith.constant 0 : i32
    %c0_i32_0 = arith.constant 0 : i32
    %c0_i32_1 = arith.constant 0 : i32
    return %c0_i32, %c0_i32_0 : i32, i32
  }
  func.func @transform_2(%arg0: i32) -> (i32, i32) {
    %c0_i32 = arith.constant 0 : i32
    %c0_i32_0 = arith.constant 0 : i32
    %c0_i32_1 = arith.constant 0 : i32
    return %c0_i32, %c0_i32_0 : i32, i32
  }
  func.func @transform_3(%arg0: i32) -> (i32, i32, i32) {
    %c0_i32 = arith.constant 0 : i32
    %c0_i32_0 = arith.constant 0 : i32
    %c0_i32_1 = arith.constant 0 : i32
    %c0_i32_2 = arith.constant 0 : i32
    return %c0_i32, %c0_i32_0, %c0_i32_1 : i32, i32, i32
  }
  func.func @transform_4(%arg0: i32) -> (i32, i32) {
    %c0_i32 = arith.constant 0 : i32
    %c0_i32_0 = arith.constant 0 : i32
    %c0_i32_1 = arith.constant 0 : i32
    return %c0_i32, %c0_i32_0 : i32, i32
  }
  func.func @transform_5(%arg0: i32) -> (i32, i32, i32) {
    %c0_i32 = arith.constant 0 : i32
    %c0_i32_0 = arith.constant 0 : i32
    %c0_i32_1 = arith.constant 0 : i32
    %c0_i32_2 = arith.constant 0 : i32
    return %c0_i32, %c0_i32_0, %c0_i32_1 : i32, i32, i32
  }
  func.func @transform_6(%arg0: i32) -> (i32, i32) {
    %c0_i32 = arith.constant 0 : i32
    %c0_i32_0 = arith.constant 0 : i32
    %c0_i32_1 = arith.constant 0 : i32
    return %c0_i32, %c0_i32_0 : i32, i32
  }
  func.func @transform_7(%arg0: i32) -> i32 {
    %c0_i32 = arith.constant 0 : i32
    %c0_i32_0 = arith.constant 0 : i32
    return %c0_i32 : i32
  }
  func.func @transform_8(%arg0: i32) -> (i32, i32) {
    %c0_i32 = arith.constant 0 : i32
    %c0_i32_0 = arith.constant 0 : i32
    %c0_i32_1 = arith.constant 0 : i32
    return %c0_i32, %c0_i32_0 : i32, i32
  }
}

</mosaic_0001>

<llo_original>
// kernel: sudoku_nn_forward.1
$region0: #{sudoku_nn_forward.1}
  #allocation0 [shape = 'u32[]', space=smem, size = 0x4, offset = 0x4, fixed_abs, tag = 'smem constant byte address 0x4 - core index']
  #allocation1 [shape = 'u32[144,128]{1,0:T(1,128)}', space=vmem, size = 0x12000, scoped, tag = 'internal scratch']
  #allocation2 [shape = 'f32[194,1]{1,0:T(8,128)}', space=vmem, size = 0x19000, scoped, tag = 'scratch operand']
  #allocation3 [shape = 'f32[194,64]{1,0:T(8,128)}', space=vmem, size = 0x19000, scoped, tag = 'scratch operand']
  #allocation4 [shape = 'f32[162,128]{1,0:T(8,128)}', space=vmem, size = 0x15000, scoped, tag = 'scratch operand']
  #allocation5 [shape = 'f32[18,1152]{1,0:T(8,128)}', space=vmem, size = 0x1b000, scoped, tag = 'scratch operand']
  #allocation6 [shape = 'f32[18,32]{1,0:T(8,128)}', space=vmem, size = 0x3000, scoped, tag = 'scratch operand']
  %s0 = inlined_call_operand.vmem [shape: f32[162,1], index: 0, kind: input, shape index: {}]
  %s1 = inlined_call_operand.vmem [shape: f32[2,81], index: 1, kind: input, shape index: {}]
  %s2 = inlined_call_operand.vmem [shape: f32[16,128], index: 2, kind: input, shape index: {}]
  %s3 = inlined_call_operand.vmem [shape: f32[9,64,128], index: 3, kind: input, shape index: {}]
  %s4 = inlined_call_operand.vmem [shape: f32[1152,32], index: 4, kind: input, shape index: {}]
  %s5 = inlined_call_operand.vmem [shape: f32[9,32,4], index: 5, kind: input, shape index: {}]
  %s6 = inlined_call_operand.vmem [shape: f32[5,82], index: 6, kind: input, shape index: {}]
  %s7 = inlined_call_operand.vmem [shape: f32[19], index: 7, kind: input, shape index: {}]
  %s8 = inlined_call_operand.vmem [shape: f32[2,1280], index: 8, kind: output, shape index: {}]
  %s9 = sld [smem:[#allocation0]]
  $region46: #{sudoku_nn_forward.1} parent=0
    _
  %s11 = ssub.s32 1, %s9
  %s12 = scalar_select 0, %s11, %s9
  $region1: #{sudoku_nn_forward.1} parent=0
    #allocation7 [shape = 'u8[512]{0}', space=smem, size = 0x200, scoped, tag = 'input window, operand 7, single buffered']
    #allocation8 [shape = 's32[1]{0}', space=sflag, size = 0x4, scoped, tag = 'scoped memory for sudoku_nn_forward.1']
    %13 = vsyncpa [#allocation8], 0
    // Predicated region
    $region2: #{sudoku_nn_forward.1} parent=1 // pred_check
      _
    $region3: #{sudoku_nn_forward.1} parent=1 // pred_check_branch
      %15 = sbr.rel (0) target = $region5
    $region4: #{sudoku_nn_forward.1} parent=1 // pred_region
      _
    $region5: #{sudoku_nn_forward.1} parent=1 // pred_fallthru
      _
    // Predicated region
    $region6: #{sudoku_nn_forward.1} parent=1 // pred_check
      _
    $region7: #{sudoku_nn_forward.1} parent=1 // pred_check_branch
      %17 = sbr.rel (0) target = $region9
    $region8: #{sudoku_nn_forward.1} parent=1 // pred_region
      _
    $region9: #{sudoku_nn_forward.1} parent=1 // pred_fallthru
      _
    // Predicated region
    $region10: #{sudoku_nn_forward.1} parent=1 // pred_check
      _
    $region11: #{sudoku_nn_forward.1} parent=1 // pred_check_branch
      %19 = sbr.rel (0) target = $region13
    $region12: #{sudoku_nn_forward.1} parent=1 // pred_region
      _
    $region13: #{sudoku_nn_forward.1} parent=1 // pred_fallthru
      _
    // Predicated region
    $region14: #{sudoku_nn_forward.1} parent=1 // pred_check
      _
    $region15: #{sudoku_nn_forward.1} parent=1 // pred_check_branch
      %21 = sbr.rel (0) target = $region17
    $region16: #{sudoku_nn_forward.1} parent=1 // pred_region
      _
    $region17: #{sudoku_nn_forward.1} parent=1 // pred_fallthru
      _
    // Predicated region
    $region18: #{sudoku_nn_forward.1} parent=1 // pred_check
      _
    $region19: #{sudoku_nn_forward.1} parent=1 // pred_check_branch
      %23 = sbr.rel (0) target = $region21
    $region20: #{sudoku_nn_forward.1} parent=1 // pred_region
      _
    $region21: #{sudoku_nn_forward.1} parent=1 // pred_fallthru
      _
    // Predicated region
    $region22: #{sudoku_nn_forward.1} parent=1 // pred_check
      _
    $region23: #{sudoku_nn_forward.1} parent=1 // pred_check_branch
      %25 = sbr.rel (0) target = $region25
    $region24: #{sudoku_nn_forward.1} parent=1 // pred_region
      _
    $region25: #{sudoku_nn_forward.1} parent=1 // pred_fallthru
      _
    // Predicated region
    $region26: #{sudoku_nn_forward.1} parent=1 // pred_check
      _
    $region27: #{sudoku_nn_forward.1} parent=1 // pred_check_branch
      %27 = sbr.rel (0) target = $region29
    $region28: #{sudoku_nn_forward.1} parent=1 // pred_region
      _
    $region29: #{sudoku_nn_forward.1} parent=1 // pred_fallthru
      _
    // Predicated region
    $region30: #{sudoku_nn_forward.1} parent=1 // pred_check
      _
    $region31: #{sudoku_nn_forward.1} parent=1 // pred_check_branch
      %29 = sbr.rel (0) target = $region33
    $region32: #{sudoku_nn_forward.1} parent=1 // pred_region
      %s31 = ssub.s32 16, 16
      %32 = vsyncadd [#allocation8], %s31
      %s34 = sshll.u32 %s7, 4
      %s35 = int_to_ptr.vmem [resolvable:$true] %s34
      %37 = dma.vmem_to_smem %s35, 16, [#allocation7], [#allocation8]
    $region33: #{sudoku_nn_forward.1} parent=1 // pred_fallthru
      _
    // Predicated region
    $region34: #{sudoku_nn_forward.1} parent=1 // pred_check
      _
    $region35: #{sudoku_nn_forward.1} parent=1 // pred_check_branch
      %39 = sbr.rel (0) target = $region37
    $region36: #{sudoku_nn_forward.1} parent=1 // pred_region
      %40 = dma.done [#allocation8], 16
    $region37: #{sudoku_nn_forward.1} parent=1 // pred_fallthru
      _
    %41 = sfence
    %v42 = vlaneseq
    %v43 = vshrl.u32 %v42, 7
    %v44 = vadd.s32 %v43, 8
    %v45 = vadd.s32 %v43, 16
    %v46 = vadd.s32 %v43, 24
    %v47 = vadd.s32 %v43, 32
    %v48 = vadd.s32 %v43, 40
    %v49 = vadd.s32 %v43, 48
    %v50 = vadd.s32 %v43, 56
    %v51 = vadd.s32 %v43, 64
    %v52 = vadd.s32 %v43, 72
    %v53 = vadd.s32 %v43, 80
    %v54 = vadd.s32 %v43, 88
    %v55 = vadd.s32 %v43, 96
    %v56 = vadd.s32 %v43, 104
    %v57 = vadd.s32 %v43, 112
    %v58 = vadd.s32 %v43, 120
    %v59 = vadd.s32 %v43, 128
    %v60 = vadd.s32 %v43, 136
    %v61 = vadd.s32 %v43, 144
    %v62 = vadd.s32 %v43, 152
    %v63 = vadd.s32 %v43, 160
    %v64 = vcvt.s32.f32 %v43
    %v65 = vcvt.s32.f32 %v44
    %v66 = vcvt.s32.f32 %v45
    %v67 = vcvt.s32.f32 %v46
    %v68 = vcvt.s32.f32 %v47
    %v69 = vcvt.s32.f32 %v48
    %v70 = vcvt.s32.f32 %v49
    %v71 = vcvt.s32.f32 %v50
    %v72 = vcvt.s32.f32 %v51
    %v73 = vcvt.s32.f32 %v52
    %v74 = vcvt.s32.f32 %v53
    %v75 = vcvt.s32.f32 %v54
    %v76 = vcvt.s32.f32 %v55
    %v77 = vcvt.s32.f32 %v56
    %v78 = vcvt.s32.f32 %v57
    %v79 = vcvt.s32.f32 %v58
    %v80 = vcvt.s32.f32 %v59
    %v81 = vcvt.s32.f32 %v60
    %v82 = vcvt.s32.f32 %v61
    %v83 = vcvt.s32.f32 %v62
    %v84 = vcvt.s32.f32 %v63
    %v85 = vadd.f32 %v64, 0.5
    %v86 = vadd.f32 %v65, 0.5
    %v87 = vadd.f32 %v66, 0.5
    %v88 = vadd.f32 %v67, 0.5
    %v89 = vadd.f32 %v68, 0.5
    %v90 = vadd.f32 %v69, 0.5
    %v91 = vadd.f32 %v70, 0.5
    %v92 = vadd.f32 %v71, 0.5
    %v93 = vadd.f32 %v72, 0.5
    %v94 = vadd.f32 %v73, 0.5
    %v95 = vadd.f32 %v74, 0.5
    %v96 = vadd.f32 %v75, 0.5
    %v97 = vadd.f32 %v76, 0.5
    %v98 = vadd.f32 %v77, 0.5
    %v99 = vadd.f32 %v78, 0.5
    %v100 = vadd.f32 %v79, 0.5
    %v101 = vadd.f32 %v80, 0.5
    %v102 = vadd.f32 %v81, 0.5
    %v103 = vadd.f32 %v82, 0.5
    %v104 = vadd.f32 %v83, 0.5
    %v105 = vadd.f32 %v84, 0.5
    %v106 = vmul.f32 %v85, 0.11111111
    %v107 = vmul.f32 %v86, 0.11111111
    %v108 = vmul.f32 %v87, 0.11111111
    %v109 = vmul.f32 %v88, 0.11111111
    %v110 = vmul.f32 %v89, 0.11111111
    %v111 = vmul.f32 %v90, 0.11111111
    %v112 = vmul.f32 %v91, 0.11111111
    %v113 = vmul.f32 %v92, 0.11111111
    %v114 = vmul.f32 %v93, 0.11111111
    %v115 = vmul.f32 %v94, 0.11111111
    %v116 = vmul.f32 %v95, 0.11111111
    %v117 = vmul.f32 %v96, 0.11111111
    %v118 = vmul.f32 %v97, 0.11111111
    %v119 = vmul.f32 %v98, 0.11111111
    %v120 = vmul.f32 %v99, 0.11111111
    %v121 = vmul.f32 %v100, 0.11111111
    %v122 = vmul.f32 %v101, 0.11111111
    %v123 = vmul.f32 %v102, 0.11111111
    %v124 = vmul.f32 %v103, 0.11111111
    %v125 = vmul.f32 %v104, 0.11111111
    %v126 = vmul.f32 %v105, 0.11111111
    %v127 = vfloor.f32 %v106
    %v128 = vfloor.f32 %v107
    %v129 = vfloor.f32 %v108
    %v130 = vfloor.f32 %v109
    %v131 = vfloor.f32 %v110
    %v132 = vfloor.f32 %v111
    %v133 = vfloor.f32 %v112
    %v134 = vfloor.f32 %v113
    %v135 = vfloor.f32 %v114
    %v136 = vfloor.f32 %v115
    %v137 = vfloor.f32 %v116
    %v138 = vfloor.f32 %v117
    %v139 = vfloor.f32 %v118
    %v140 = vfloor.f32 %v119
    %v141 = vfloor.f32 %v120
    %v142 = vfloor.f32 %v121
    %v143 = vfloor.f32 %v122
    %v144 = vfloor.f32 %v123
    %v145 = vfloor.f32 %v124
    %v146 = vfloor.f32 %v125
    %v147 = vfloor.f32 %v126
    %v148 = vmul.f32 %v85, 0.012345679
    %v149 = vmul.f32 %v86, 0.012345679
    %v150 = vmul.f32 %v87, 0.012345679
    %v151 = vmul.f32 %v88, 0.012345679
    %v152 = vmul.f32 %v89, 0.012345679
    %v153 = vmul.f32 %v90, 0.012345679
    %v154 = vmul.f32 %v91, 0.012345679
    %v155 = vmul.f32 %v92, 0.012345679
    %v156 = vmul.f32 %v93, 0.012345679
    %v157 = vmul.f32 %v94, 0.012345679
    %v158 = vmul.f32 %v95, 0.012345679
    %v159 = vmul.f32 %v96, 0.012345679
    %v160 = vmul.f32 %v97, 0.012345679
    %v161 = vmul.f32 %v98, 0.012345679
    %v162 = vmul.f32 %v99, 0.012345679
    %v163 = vmul.f32 %v100, 0.012345679
    %v164 = vmul.f32 %v101, 0.012345679
    %v165 = vmul.f32 %v102, 0.012345679
    %v166 = vmul.f32 %v103, 0.012345679
    %v167 = vmul.f32 %v104, 0.012345679
    %v168 = vmul.f32 %v105, 0.012345679
    %v169 = vfloor.f32 %v148
    %v170 = vfloor.f32 %v149
    %v171 = vfloor.f32 %v150
    %v172 = vfloor.f32 %v151
    %v173 = vfloor.f32 %v152
    %v174 = vfloor.f32 %v153
    %v175 = vfloor.f32 %v154
    %v176 = vfloor.f32 %v155
    %v177 = vfloor.f32 %v156
    %v178 = vfloor.f32 %v157
    %v179 = vfloor.f32 %v158
    %v180 = vfloor.f32 %v159
    %v181 = vfloor.f32 %v160
    %v182 = vfloor.f32 %v161
    %v183 = vfloor.f32 %v162
    %v184 = vfloor.f32 %v163
    %v185 = vfloor.f32 %v164
    %v186 = vfloor.f32 %v165
    %v187 = vfloor.f32 %v166
    %v188 = vfloor.f32 %v167
    %v189 = vfloor.f32 %v168
    %v190 = vmul.f32 %v127, 9.0
    %v191 = vmul.f32 %v128, 9.0
    %v192 = vmul.f32 %v129, 9.0
    %v193 = vmul.f32 %v130, 9.0
    %v194 = vmul.f32 %v131, 9.0
    %v195 = vmul.f32 %v132, 9.0
    %v196 = vmul.f32 %v133, 9.0
    %v197 = vmul.f32 %v134, 9.0
    %v198 = vmul.f32 %v135, 9.0
    %v199 = vmul.f32 %v136, 9.0
    %v200 = vmul.f32 %v137, 9.0
    %v201 = vmul.f32 %v138, 9.0
    %v202 = vmul.f32 %v139, 9.0
    %v203 = vmul.f32 %v140, 9.0
    %v204 = vmul.f32 %v141, 9.0
    %v205 = vmul.f32 %v142, 9.0
    %v206 = vmul.f32 %v143, 9.0
    %v207 = vmul.f32 %v144, 9.0
    %v208 = vmul.f32 %v145, 9.0
    %v209 = vmul.f32 %v146, 9.0
    %v210 = vmul.f32 %v147, 9.0
    %v211 = vsub.f32 %v64, %v190
    %v212 = vsub.f32 %v65, %v191
    %v213 = vsub.f32 %v66, %v192
    %v214 = vsub.f32 %v67, %v193
    %v215 = vsub.f32 %v68, %v194
    %v216 = vsub.f32 %v69, %v195
    %v217 = vsub.f32 %v70, %v196
    %v218 = vsub.f32 %v71, %v197
    %v219 = vsub.f32 %v72, %v198
    %v220 = vsub.f32 %v73, %v199
    %v221 = vsub.f32 %v74, %v200
    %v222 = vsub.f32 %v75, %v201
    %v223 = vsub.f32 %v76, %v202
    %v224 = vsub.f32 %v77, %v203
    %v225 = vsub.f32 %v78, %v204
    %v226 = vsub.f32 %v79, %v205
    %v227 = vsub.f32 %v80, %v206
    %v228 = vsub.f32 %v81, %v207
    %v229 = vsub.f32 %v82, %v208
    %v230 = vsub.f32 %v83, %v209
    %v231 = vsub.f32 %v84, %v210
    %v232 = vmul.f32 %v169, 9.0
    %v233 = vmul.f32 %v170, 9.0
    %v234 = vmul.f32 %v171, 9.0
    %v235 = vmul.f32 %v172, 9.0
    %v236 = vmul.f32 %v173, 9.0
    %v237 = vmul.f32 %v174, 9.0
    %v238 = vmul.f32 %v175, 9.0
    %v239 = vmul.f32 %v176, 9.0
    %v240 = vmul.f32 %v177, 9.0
    %v241 = vmul.f32 %v178, 9.0
    %v242 = vmul.f32 %v179, 9.0
    %v243 = vmul.f32 %v180, 9.0
    %v244 = vmul.f32 %v181, 9.0
    %v245 = vmul.f32 %v182, 9.0
    %v246 = vmul.f32 %v183, 9.0
    %v247 = vmul.f32 %v184, 9.0
    %v248 = vmul.f32 %v185, 9.0
    %v249 = vmul.f32 %v186, 9.0
    %v250 = vmul.f32 %v187, 9.0
    %v251 = vmul.f32 %v188, 9.0
    %v252 = vmul.f32 %v189, 9.0
    %v253 = vsub.f32 %v127, %v232
    %v254 = vsub.f32 %v128, %v233
    %v255 = vsub.f32 %v129, %v234
    %v256 = vsub.f32 %v130, %v235
    %v257 = vsub.f32 %v131, %v236
    %v258 = vsub.f32 %v132, %v237
    %v259 = vsub.f32 %v133, %v238
    %v260 = vsub.f32 %v134, %v239
    %v261 = vsub.f32 %v135, %v240
    %v262 = vsub.f32 %v136, %v241
    %v263 = vsub.f32 %v137, %v242
    %v264 = vsub.f32 %v138, %v243
    %v265 = vsub.f32 %v139, %v244
    %v266 = vsub.f32 %v140, %v245
    %v267 = vsub.f32 %v141, %v246
    %v268 = vsub.f32 %v142, %v247
    %v269 = vsub.f32 %v143, %v248
    %v270 = vsub.f32 %v144, %v249
    %v271 = vsub.f32 %v145, %v250
    %v272 = vsub.f32 %v146, %v251
    %v273 = vsub.f32 %v147, %v252
    %vm274 = vcmp.gt.f32.partialorder %v253, 0.5
    %vm275 = vcmp.gt.f32.partialorder %v254, 0.5
    %vm276 = vcmp.gt.f32.partialorder %v255, 0.5
    %vm277 = vcmp.gt.f32.partialorder %v256, 0.5
    %vm278 = vcmp.gt.f32.partialorder %v257, 0.5
    %vm279 = vcmp.gt.f32.partialorder %v258, 0.5
    %vm280 = vcmp.gt.f32.partialorder %v259, 0.5
    %vm281 = vcmp.gt.f32.partialorder %v260, 0.5
    %vm282 = vcmp.gt.f32.partialorder %v261, 0.5
    %vm283 = vcmp.gt.f32.partialorder %v262, 0.5
    %vm284 = vcmp.gt.f32.partialorder %v263, 0.5
    %vm285 = vcmp.gt.f32.partialorder %v264, 0.5
    %vm286 = vcmp.gt.f32.partialorder %v265, 0.5
    %vm287 = vcmp.gt.f32.partialorder %v266, 0.5
    %vm288 = vcmp.gt.f32.partialorder %v267, 0.5
    %vm289 = vcmp.gt.f32.partialorder %v268, 0.5
    %vm290 = vcmp.gt.f32.partialorder %v269, 0.5
    %vm291 = vcmp.gt.f32.partialorder %v270, 0.5
    %vm292 = vcmp.gt.f32.partialorder %v271, 0.5
    %vm293 = vcmp.gt.f32.partialorder %v272, 0.5
    %vm294 = vcmp.gt.f32.partialorder %v273, 0.5
    %v295 = vsel %vm274, 1.0, 0.0
    %v296 = vsel %vm275, 1.0, 0.0
    %v297 = vsel %vm276, 1.0, 0.0
    %v298 = vsel %vm277, 1.0, 0.0
    %v299 = vsel %vm278, 1.0, 0.0
    %v300 = vsel %vm279, 1.0, 0.0
    %v301 = vsel %vm280, 1.0, 0.0
    %v302 = vsel %vm281, 1.0, 0.0
    %v303 = vsel %vm282, 1.0, 0.0
    %v304 = vsel %vm283, 1.0, 0.0
    %v305 = vsel %vm284, 1.0, 0.0
    %v306 = vsel %vm285, 1.0, 0.0
    %v307 = vsel %vm286, 1.0, 0.0
    %v308 = vsel %vm287, 1.0, 0.0
    %v309 = vsel %vm288, 1.0, 0.0
    %v310 = vsel %vm289, 1.0, 0.0
    %v311 = vsel %vm290, 1.0, 0.0
    %v312 = vsel %vm291, 1.0, 0.0
    %v313 = vsel %vm292, 1.0, 0.0
    %v314 = vsel %vm293, 1.0, 0.0
    %v315 = vsel %vm294, 1.0, 0.0
    %vm316 = vcmp.lt.f32.partialorder %v253, 7.5
    %vm317 = vcmp.lt.f32.partialorder %v254, 7.5
    %vm318 = vcmp.lt.f32.partialorder %v255, 7.5
    %vm319 = vcmp.lt.f32.partialorder %v256, 7.5
    %vm320 = vcmp.lt.f32.partialorder %v257, 7.5
    %vm321 = vcmp.lt.f32.partialorder %v258, 7.5
    %vm322 = vcmp.lt.f32.partialorder %v259, 7.5
    %vm323 = vcmp.lt.f32.partialorder %v260, 7.5
    %vm324 = vcmp.lt.f32.partialorder %v261, 7.5
    %vm325 = vcmp.lt.f32.partialorder %v262, 7.5
    %vm326 = vcmp.lt.f32.partialorder %v263, 7.5
    %vm327 = vcmp.lt.f32.partialorder %v264, 7.5
    %vm328 = vcmp.lt.f32.partialorder %v265, 7.5
    %vm329 = vcmp.lt.f32.partialorder %v266, 7.5
    %vm330 = vcmp.lt.f32.partialorder %v267, 7.5
    %vm331 = vcmp.lt.f32.partialorder %v268, 7.5
    %vm332 = vcmp.lt.f32.partialorder %v269, 7.5
    %vm333 = vcmp.lt.f32.partialorder %v270, 7.5
    %vm334 = vcmp.lt.f32.partialorder %v271, 7.5
    %vm335 = vcmp.lt.f32.partialorder %v272, 7.5
    %vm336 = vcmp.lt.f32.partialorder %v273, 7.5
    %v337 = vsel %vm316, 1.0, 0.0
    %v338 = vsel %vm317, 1.0, 0.0
    %v339 = vsel %vm318, 1.0, 0.0
    %v340 = vsel %vm319, 1.0, 0.0
    %v341 = vsel %vm320, 1.0, 0.0
    %v342 = vsel %vm321, 1.0, 0.0
    %v343 = vsel %vm322, 1.0, 0.0
    %v344 = vsel %vm323, 1.0, 0.0
    %v345 = vsel %vm324, 1.0, 0.0
    %v346 = vsel %vm325, 1.0, 0.0
    %v347 = vsel %vm326, 1.0, 0.0
    %v348 = vsel %vm327, 1.0, 0.0
    %v349 = vsel %vm328, 1.0, 0.0
    %v350 = vsel %vm329, 1.0, 0.0
    %v351 = vsel %vm330, 1.0, 0.0
    %v352 = vsel %vm331, 1.0, 0.0
    %v353 = vsel %vm332, 1.0, 0.0
    %v354 = vsel %vm333, 1.0, 0.0
    %v355 = vsel %vm334, 1.0, 0.0
    %v356 = vsel %vm335, 1.0, 0.0
    %v357 = vsel %vm336, 1.0, 0.0
    %vm358 = vcmp.gt.f32.partialorder %v211, 0.5
    %vm359 = vcmp.gt.f32.partialorder %v212, 0.5
    %vm360 = vcmp.gt.f32.partialorder %v213, 0.5
    %vm361 = vcmp.gt.f32.partialorder %v214, 0.5
    %vm362 = vcmp.gt.f32.partialorder %v215, 0.5
    %vm363 = vcmp.gt.f32.partialorder %v216, 0.5
    %vm364 = vcmp.gt.f32.partialorder %v217, 0.5
    %vm365 = vcmp.gt.f32.partialorder %v218, 0.5
    %vm366 = vcmp.gt.f32.partialorder %v219, 0.5
    %vm367 = vcmp.gt.f32.partialorder %v220, 0.5
    %vm368 = vcmp.gt.f32.partialorder %v221, 0.5
    %vm369 = vcmp.gt.f32.partialorder %v222, 0.5
    %vm370 = vcmp.gt.f32.partialorder %v223, 0.5
    %vm371 = vcmp.gt.f32.partialorder %v224, 0.5
    %vm372 = vcmp.gt.f32.partialorder %v225, 0.5
    %vm373 = vcmp.gt.f32.partialorder %v226, 0.5
    %vm374 = vcmp.gt.f32.partialorder %v227, 0.5
    %vm375 = vcmp.gt.f32.partialorder %v228, 0.5
    %vm376 = vcmp.gt.f32.partialorder %v229, 0.5
    %vm377 = vcmp.gt.f32.partialorder %v230, 0.5
    %vm378 = vcmp.gt.f32.partialorder %v231, 0.5
    %v379 = vsel %vm358, 1.0, 0.0
    %v380 = vsel %vm359, 1.0, 0.0
    %v381 = vsel %vm360, 1.0, 0.0
    %v382 = vsel %vm361, 1.0, 0.0
    %v383 = vsel %vm362, 1.0, 0.0
    %v384 = vsel %vm363, 1.0, 0.0
    %v385 = vsel %vm364, 1.0, 0.0
    %v386 = vsel %vm365, 1.0, 0.0
    %v387 = vsel %vm366, 1.0, 0.0
    %v388 = vsel %vm367, 1.0, 0.0
    %v389 = vsel %vm368, 1.0, 0.0
    %v390 = vsel %vm369, 1.0, 0.0
    %v391 = vsel %vm370, 1.0, 0.0
    %v392 = vsel %vm371, 1.0, 0.0
    %v393 = vsel %vm372, 1.0, 0.0
    %v394 = vsel %vm373, 1.0, 0.0
    %v395 = vsel %vm374, 1.0, 0.0
    %v396 = vsel %vm375, 1.0, 0.0
    %v397 = vsel %vm376, 1.0, 0.0
    %v398 = vsel %vm377, 1.0, 0.0
    %v399 = vsel %vm378, 1.0, 0.0
    %vm400 = vcmp.lt.f32.partialorder %v211, 7.5
    %vm401 = vcmp.lt.f32.partialorder %v212, 7.5
    %vm402 = vcmp.lt.f32.partialorder %v213, 7.5
    %vm403 = vcmp.lt.f32.partialorder %v214, 7.5
    %vm404 = vcmp.lt.f32.partialorder %v215, 7.5
    %vm405 = vcmp.lt.f32.partialorder %v216, 7.5
    %vm406 = vcmp.lt.f32.partialorder %v217, 7.5
    %vm407 = vcmp.lt.f32.partialorder %v218, 7.5
    %vm408 = vcmp.lt.f32.partialorder %v219, 7.5
    %vm409 = vcmp.lt.f32.partialorder %v220, 7.5
    %vm410 = vcmp.lt.f32.partialorder %v221, 7.5
    %vm411 = vcmp.lt.f32.partialorder %v222, 7.5
    %vm412 = vcmp.lt.f32.partialorder %v223, 7.5
    %vm413 = vcmp.lt.f32.partialorder %v224, 7.5
    %vm414 = vcmp.lt.f32.partialorder %v225, 7.5
    %vm415 = vcmp.lt.f32.partialorder %v226, 7.5
    %vm416 = vcmp.lt.f32.partialorder %v227, 7.5
    %vm417 = vcmp.lt.f32.partialorder %v228, 7.5
    %vm418 = vcmp.lt.f32.partialorder %v229, 7.5
    %vm419 = vcmp.lt.f32.partialorder %v230, 7.5
    %vm420 = vcmp.lt.f32.partialorder %v231, 7.5
    %v421 = vsel %vm400, 1.0, 0.0
    %v422 = vsel %vm401, 1.0, 0.0
    %v423 = vsel %vm402, 1.0, 0.0
    %v424 = vsel %vm403, 1.0, 0.0
    %v425 = vsel %vm404, 1.0, 0.0
    %v426 = vsel %vm405, 1.0, 0.0
    %v427 = vsel %vm406, 1.0, 0.0
    %v428 = vsel %vm407, 1.0, 0.0
    %v429 = vsel %vm408, 1.0, 0.0
    %v430 = vsel %vm409, 1.0, 0.0
    %v431 = vsel %vm410, 1.0, 0.0
    %v432 = vsel %vm411, 1.0, 0.0
    %v433 = vsel %vm412, 1.0, 0.0
    %v434 = vsel %vm413, 1.0, 0.0
    %v435 = vsel %vm414, 1.0, 0.0
    %v436 = vsel %vm415, 1.0, 0.0
    %v437 = vsel %vm416, 1.0, 0.0
    %v438 = vsel %vm417, 1.0, 0.0
    %v439 = vsel %vm418, 1.0, 0.0
    %v440 = vsel %vm419, 1.0, 0.0
    %v441 = vsel %vm420, 1.0, 0.0
    %v442 = vmul.f32 %v295, %v379
    %v443 = vmul.f32 %v296, %v380
    %v444 = vmul.f32 %v297, %v381
    %v445 = vmul.f32 %v298, %v382
    %v446 = vmul.f32 %v299, %v383
    %v447 = vmul.f32 %v300, %v384
    %v448 = vmul.f32 %v301, %v385
    %v449 = vmul.f32 %v302, %v386
    %v450 = vmul.f32 %v303, %v387
    %v451 = vmul.f32 %v304, %v388
    %v452 = vmul.f32 %v305, %v389
    %v453 = vmul.f32 %v306, %v390
    %v454 = vmul.f32 %v307, %v391
    %v455 = vmul.f32 %v308, %v392
    %v456 = vmul.f32 %v309, %v393
    %v457 = vmul.f32 %v310, %v394
    %v458 = vmul.f32 %v311, %v395
    %v459 = vmul.f32 %v312, %v396
    %v460 = vmul.f32 %v313, %v397
    %v461 = vmul.f32 %v314, %v398
    %v462 = vmul.f32 %v315, %v399
    %v463 = vmul.f32 %v295, %v421
    %v464 = vmul.f32 %v296, %v422
    %v465 = vmul.f32 %v297, %v423
    %v466 = vmul.f32 %v298, %v424
    %v467 = vmul.f32 %v299, %v425
    %v468 = vmul.f32 %v300, %v426
    %v469 = vmul.f32 %v301, %v427
    %v470 = vmul.f32 %v302, %v428
    %v471 = vmul.f32 %v303, %v429
    %v472 = vmul.f32 %v304, %v430
    %v473 = vmul.f32 %v305, %v431
    %v474 = vmul.f32 %v306, %v432
    %v475 = vmul.f32 %v307, %v433
    %v476 = vmul.f32 %v308, %v434
    %v477 = vmul.f32 %v309, %v435
    %v478 = vmul.f32 %v310, %v436
    %v479 = vmul.f32 %v311, %v437
    %v480 = vmul.f32 %v312, %v438
    %v481 = vmul.f32 %v313, %v439
    %v482 = vmul.f32 %v314, %v440
    %v483 = vmul.f32 %v315, %v441
    %v484 = vmul.f32 %v337, %v379
    %v485 = vmul.f32 %v338, %v380
    %v486 = vmul.f32 %v339, %v381
    %v487 = vmul.f32 %v340, %v382
    %v488 = vmul.f32 %v341, %v383
    %v489 = vmul.f32 %v342, %v384
    %v490 = vmul.f32 %v343, %v385
    %v491 = vmul.f32 %v344, %v386
    %v492 = vmul.f32 %v345, %v387
    %v493 = vmul.f32 %v346, %v388
    %v494 = vmul.f32 %v347, %v389
    %v495 = vmul.f32 %v348, %v390
    %v496 = vmul.f32 %v349, %v391
    %v497 = vmul.f32 %v350, %v392
    %v498 = vmul.f32 %v351, %v393
    %v499 = vmul.f32 %v352, %v394
    %v500 = vmul.f32 %v353, %v395
    %v501 = vmul.f32 %v354, %v396
    %v502 = vmul.f32 %v355, %v397
    %v503 = vmul.f32 %v356, %v398
    %v504 = vmul.f32 %v357, %v399
    %v505 = vmul.f32 %v337, %v421
    %v506 = vmul.f32 %v338, %v422
    %v507 = vmul.f32 %v339, %v423
    %v508 = vmul.f32 %v340, %v424
    %v509 = vmul.f32 %v341, %v425
    %v510 = vmul.f32 %v342, %v426
    %v511 = vmul.f32 %v343, %v427
    %v512 = vmul.f32 %v344, %v428
    %v513 = vmul.f32 %v345, %v429
    %v514 = vmul.f32 %v346, %v430
    %v515 = vmul.f32 %v347, %v431
    %v516 = vmul.f32 %v348, %v432
    %v517 = vmul.f32 %v349, %v433
    %v518 = vmul.f32 %v350, %v434
    %v519 = vmul.f32 %v351, %v435
    %v520 = vmul.f32 %v352, %v436
    %v521 = vmul.f32 %v353, %v437
    %v522 = vmul.f32 %v354, %v438
    %v523 = vmul.f32 %v355, %v439
    %v524 = vmul.f32 %v356, %v440
    %v525 = vmul.f32 %v357, %v441
    %vm526 = vcmask 7168
    %527 = vst.msk [vmem:[#allocation2] sm:$0xff] %vm526, 0.0
    %528 = vst.msk [vmem:[#allocation2 + $0x8] sm:$0xff] %vm526, 0.0
    %529 = vst.msk [vmem:[#allocation2 + $0xb2] sm:$0xff] %vm526, 0.0
    %530 = vst.msk [vmem:[#allocation2 + $0xba] sm:$0xff] %vm526, 0.0
    %v531 = vld [vmem:[%s0] sm:$0xff]
    %v532 = vld [vmem:[%s0 + $0x8] sm:$0xff]
    %v533 = vld [vmem:[%s0 + $0x10] sm:$0xff]
    %v534 = vld [vmem:[%s0 + $0x18] sm:$0xff]
    %v535 = vld [vmem:[%s0 + $0x20] sm:$0xff]
    %v536 = vld [vmem:[%s0 + $0x28] sm:$0xff]
    %v537 = vld [vmem:[%s0 + $0x30] sm:$0xff]
    %v538 = vld [vmem:[%s0 + $0x38] sm:$0xff]
    %v539 = vld [vmem:[%s0 + $0x40] sm:$0xff]
    %v540 = vld [vmem:[%s0 + $0x48] sm:$0xff]
    %v541 = vld [vmem:[%s0 + $0x50] sm:$0xff]
    %v542 = vld [vmem:[%s0 + $0x58] sm:$0xff]
    %v543 = vld [vmem:[%s0 + $0x60] sm:$0xff]
    %v544 = vld [vmem:[%s0 + $0x68] sm:$0xff]
    %v545 = vld [vmem:[%s0 + $0x70] sm:$0xff]
    %v546 = vld [vmem:[%s0 + $0x78] sm:$0xff]
    %v547 = vld [vmem:[%s0 + $0x80] sm:$0xff]
    %v548 = vld [vmem:[%s0 + $0x88] sm:$0xff]
    %v549 = vld [vmem:[%s0 + $0x90] sm:$0xff]
    %v550 = vld [vmem:[%s0 + $0x98] sm:$0xff]
    %v551 = vld [vmem:[%s0 + $0xa0] sm:$0x3]
    %552 = vst.msk [vmem:[#allocation2 + $0x10] sm:$0xff] %vm526, %v531
    %553 = vst.msk [vmem:[#allocation2 + $0x18] sm:$0xff] %vm526, %v532
    %554 = vst.msk [vmem:[#allocation2 + $0x20] sm:$0xff] %vm526, %v533
    %555 = vst.msk [vmem:[#allocation2 + $0x28] sm:$0xff] %vm526, %v534
    %556 = vst.msk [vmem:[#allocation2 + $0x30] sm:$0xff] %vm526, %v535
    %557 = vst.msk [vmem:[#allocation2 + $0x38] sm:$0xff] %vm526, %v536
    %558 = vst.msk [vmem:[#allocation2 + $0x40] sm:$0xff] %vm526, %v537
    %559 = vst.msk [vmem:[#allocation2 + $0x48] sm:$0xff] %vm526, %v538
    %560 = vst.msk [vmem:[#allocation2 + $0x50] sm:$0xff] %vm526, %v539
    %561 = vst.msk [vmem:[#allocation2 + $0x58] sm:$0xff] %vm526, %v540
    %562 = vst.msk [vmem:[#allocation2 + $0x60] sm:$0xff] %vm526, %v541
    %563 = vst.msk [vmem:[#allocation2 + $0x68] sm:$0xff] %vm526, %v542
    %564 = vst.msk [vmem:[#allocation2 + $0x70] sm:$0xff] %vm526, %v543
    %565 = vst.msk [vmem:[#allocation2 + $0x78] sm:$0xff] %vm526, %v544
    %566 = vst.msk [vmem:[#allocation2 + $0x80] sm:$0xff] %vm526, %v545
    %567 = vst.msk [vmem:[#allocation2 + $0x88] sm:$0xff] %vm526, %v546
    %568 = vst.msk [vmem:[#allocation2 + $0x90] sm:$0xff] %vm526, %v547
    %569 = vst.msk [vmem:[#allocation2 + $0x98] sm:$0xff] %vm526, %v548
    %570 = vst.msk [vmem:[#allocation2 + $0xa0] sm:$0xff] %vm526, %v549
    %571 = vst.msk [vmem:[#allocation2 + $0xa8] sm:$0xff] %vm526, %v550
    %vm572 = vcmask 1024
    %573 = vst.msk [vmem:[#allocation2 + $0xb0] sm:$0x3] %vm572, %v551
    %v574 = vld [vmem:[#allocation2 + $0x6] sm:$0xff]
    %v575 = vld [vmem:[#allocation2 + $0xe] sm:$0xff]
    %v576 = vld [vmem:[#allocation2 + $0x16] sm:$0xff]
    %v577 = vld [vmem:[#allocation2 + $0x1e] sm:$0xff]
    %v578 = vld [vmem:[#allocation2 + $0x26] sm:$0xff]
    %v579 = vld [vmem:[#allocation2 + $0x2e] sm:$0xff]
    %v580 = vld [vmem:[#allocation2 + $0x36] sm:$0xff]
    %v581 = vld [vmem:[#allocation2 + $0x3e] sm:$0xff]
    %v582 = vld [vmem:[#allocation2 + $0x46] sm:$0xff]
    %v583 = vld [vmem:[#allocation2 + $0x4e] sm:$0xff]
    %v584 = vld [vmem:[#allocation2 + $0x56] sm:$0xff]
    %v585 = vld [vmem:[#allocation2 + $0x5e] sm:$0xff]
    %v586 = vld [vmem:[#allocation2 + $0x66] sm:$0xff]
    %v587 = vld [vmem:[#allocation2 + $0x6e] sm:$0xff]
    %v588 = vld [vmem:[#allocation2 + $0x76] sm:$0xff]
    %v589 = vld [vmem:[#allocation2 + $0x7e] sm:$0xff]
    %v590 = vld [vmem:[#allocation2 + $0x86] sm:$0xff]
    %v591 = vld [vmem:[#allocation2 + $0x8e] sm:$0xff]
    %v592 = vld [vmem:[#allocation2 + $0x96] sm:$0xff]
    %v593 = vld [vmem:[#allocation2 + $0x9e] sm:$0xff]
    %v594 = vld [vmem:[#allocation2 + $0xa6] sm:$0x3]
    %v595 = vmul.f32 %v574, %v442
    %v596 = vmul.f32 %v575, %v443
    %v597 = vmul.f32 %v576, %v444
    %v598 = vmul.f32 %v577, %v445
    %v599 = vmul.f32 %v578, %v446
    %v600 = vmul.f32 %v579, %v447
    %v601 = vmul.f32 %v580, %v448
    %v602 = vmul.f32 %v581, %v449
    %v603 = vmul.f32 %v582, %v450
    %v604 = vmul.f32 %v583, %v451
    %v605 = vmul.f32 %v584, %v452
    %v606 = vmul.f32 %v585, %v453
    %v607 = vmul.f32 %v586, %v454
    %v608 = vmul.f32 %v587, %v455
    %v609 = vmul.f32 %v588, %v456
    %v610 = vmul.f32 %v589, %v457
    %v611 = vmul.f32 %v590, %v458
    %v612 = vmul.f32 %v591, %v459
    %v613 = vmul.f32 %v592, %v460
    %v614 = vmul.f32 %v593, %v461
    %v615 = vmul.f32 %v594, %v462
    %v616 = vld [vmem:[%s2] sm:$0x1]
    %618 = vset.pattern.permute.xlu0 0
    %619 = vperm.xlu0 %618, %v595
    %v620 = vpop.permute.xlu0 %619
    %623 = vset.pattern.permute.xlu0 0
    %624 = vperm.xlu0 %623, %v596
    %v625 = vpop.permute.xlu0 %624
    %628 = vset.pattern.permute.xlu0 0
    %629 = vperm.xlu0 %628, %v597
    %v630 = vpop.permute.xlu0 %629
    %633 = vset.pattern.permute.xlu0 0
    %634 = vperm.xlu0 %633, %v598
    %v635 = vpop.permute.xlu0 %634
    %638 = vset.pattern.permute.xlu0 0
    %639 = vperm.xlu0 %638, %v599
    %v640 = vpop.permute.xlu0 %639
    %643 = vset.pattern.permute.xlu0 0
    %644 = vperm.xlu0 %643, %v600
    %v645 = vpop.permute.xlu0 %644
    %648 = vset.pattern.permute.xlu0 0
    %649 = vperm.xlu0 %648, %v601
    %v650 = vpop.permute.xlu0 %649
    %653 = vset.pattern.permute.xlu0 0
    %654 = vperm.xlu0 %653, %v602
    %v655 = vpop.permute.xlu0 %654
    %658 = vset.pattern.permute.xlu0 0
    %659 = vperm.xlu0 %658, %v603
    %v660 = vpop.permute.xlu0 %659
    %663 = vset.pattern.permute.xlu0 0
    %664 = vperm.xlu0 %663, %v604
    %v665 = vpop.permute.xlu0 %664
    %668 = vset.pattern.permute.xlu0 0
    %669 = vperm.xlu0 %668, %v605
    %v670 = vpop.permute.xlu0 %669
    %673 = vset.pattern.permute.xlu0 0
    %674 = vperm.xlu0 %673, %v606
    %v675 = vpop.permute.xlu0 %674
    %678 = vset.pattern.permute.xlu0 0
    %679 = vperm.xlu0 %678, %v607
    %v680 = vpop.permute.xlu0 %679
    %683 = vset.pattern.permute.xlu0 0
    %684 = vperm.xlu0 %683, %v608
    %v685 = vpop.permute.xlu0 %684
    %688 = vset.pattern.permute.xlu0 0
    %689 = vperm.xlu0 %688, %v609
    %v690 = vpop.permute.xlu0 %689
    %693 = vset.pattern.permute.xlu0 0
    %694 = vperm.xlu0 %693, %v610
    %v695 = vpop.permute.xlu0 %694
    %698 = vset.pattern.permute.xlu0 0
    %699 = vperm.xlu0 %698, %v611
    %v700 = vpop.permute.xlu0 %699
    %703 = vset.pattern.permute.xlu0 0
    %704 = vperm.xlu0 %703, %v612
    %v705 = vpop.permute.xlu0 %704
    %708 = vset.pattern.permute.xlu0 0
    %709 = vperm.xlu0 %708, %v613
    %v710 = vpop.permute.xlu0 %709
    %713 = vset.pattern.permute.xlu0 0
    %714 = vperm.xlu0 %713, %v614
    %v715 = vpop.permute.xlu0 %714
    %718 = vset.pattern.permute.xlu0 0
    %719 = vperm.xlu0 %718, %v615
    %v720 = vpop.permute.xlu0 %719
    %v722 = vlaneseq
    %v723 = vshrl.u32 %v722, 7
    %v724 = vsub.s32 0, %v723
    %v725 = vrot.slane %v616, %v724
    %v726 = vmul.f32 %v620, %v725
    %v727 = vmul.f32 %v625, %v725
    %v728 = vmul.f32 %v630, %v725
    %v729 = vmul.f32 %v635, %v725
    %v730 = vmul.f32 %v640, %v725
    %v731 = vmul.f32 %v645, %v725
    %v732 = vmul.f32 %v650, %v725
    %v733 = vmul.f32 %v655, %v725
    %v734 = vmul.f32 %v660, %v725
    %v735 = vmul.f32 %v665, %v725
    %v736 = vmul.f32 %v670, %v725
    %v737 = vmul.f32 %v675, %v725
    %v738 = vmul.f32 %v680, %v725
    %v739 = vmul.f32 %v685, %v725
    %v740 = vmul.f32 %v690, %v725
    %v741 = vmul.f32 %v695, %v725
    %v742 = vmul.f32 %v700, %v725
    %v743 = vmul.f32 %v705, %v725
    %v744 = vmul.f32 %v710, %v725
    %v745 = vmul.f32 %v715, %v725
    %v746 = vmul.f32 %v720, %v725
    %v747 = vadd.f32 %v726, 0.0
    %v748 = vadd.f32 %v727, 0.0
    %v749 = vadd.f32 %v728, 0.0
    %v750 = vadd.f32 %v729, 0.0
    %v751 = vadd.f32 %v730, 0.0
    %v752 = vadd.f32 %v731, 0.0
    %v753 = vadd.f32 %v732, 0.0
    %v754 = vadd.f32 %v733, 0.0
    %v755 = vadd.f32 %v734, 0.0
    %v756 = vadd.f32 %v735, 0.0
    %v757 = vadd.f32 %v736, 0.0
    %v758 = vadd.f32 %v737, 0.0
    %v759 = vadd.f32 %v738, 0.0
    %v760 = vadd.f32 %v739, 0.0
    %v761 = vadd.f32 %v740, 0.0
    %v762 = vadd.f32 %v741, 0.0
    %v763 = vadd.f32 %v742, 0.0
    %v764 = vadd.f32 %v743, 0.0
    %v765 = vadd.f32 %v744, 0.0
    %v766 = vadd.f32 %v745, 0.0
    %v767 = vadd.f32 %v746, 0.0
    %v768 = vld [vmem:[#allocation2 + $0x7] sm:$0xff]
    %v769 = vld [vmem:[#allocation2 + $0xf] sm:$0xff]
    %v770 = vld [vmem:[#allocation2 + $0x17] sm:$0xff]
    %v771 = vld [vmem:[#allocation2 + $0x1f] sm:$0xff]
    %v772 = vld [vmem:[#allocation2 + $0x27] sm:$0xff]
    %v773 = vld [vmem:[#allocation2 + $0x2f] sm:$0xff]
    %v774 = vld [vmem:[#allocation2 + $0x37] sm:$0xff]
    %v775 = vld [vmem:[#allocation2 + $0x3f] sm:$0xff]
    %v776 = vld [vmem:[#allocation2 + $0x47] sm:$0xff]
    %v777 = vld [vmem:[#allocation2 + $0x4f] sm:$0xff]
    %v778 = vld [vmem:[#allocation2 + $0x57] sm:$0xff]
    %v779 = vld [vmem:[#allocation2 + $0x5f] sm:$0xff]
    %v780 = vld [vmem:[#allocation2 + $0x67] sm:$0xff]
    %v781 = vld [vmem:[#allocation2 + $0x6f] sm:$0xff]
    %v782 = vld [vmem:[#allocation2 + $0x77] sm:$0xff]
    %v783 = vld [vmem:[#allocation2 + $0x7f] sm:$0xff]
    %v784 = vld [vmem:[#allocation2 + $0x87] sm:$0xff]
    %v785 = vld [vmem:[#allocation2 + $0x8f] sm:$0xff]
    %v786 = vld [vmem:[#allocation2 + $0x97] sm:$0xff]
    %v787 = vld [vmem:[#allocation2 + $0x9f] sm:$0xff]
    %v788 = vld [vmem:[#allocation2 + $0xa7] sm:$0x3]
    %v789 = vmul.f32 %v768, %v295
    %v790 = vmul.f32 %v769, %v296
    %v791 = vmul.f32 %v770, %v297
    %v792 = vmul.f32 %v771, %v298
    %v793 = vmul.f32 %v772, %v299
    %v794 = vmul.f32 %v773, %v300
    %v795 = vmul.f32 %v774, %v301
    %v796 = vmul.f32 %v775, %v302
    %v797 = vmul.f32 %v776, %v303
    %v798 = vmul.f32 %v777, %v304
    %v799 = vmul.f32 %v778, %v305
    %v800 = vmul.f32 %v779, %v306
    %v801 = vmul.f32 %v780, %v307
    %v802 = vmul.f32 %v781, %v308
    %v803 = vmul.f32 %v782, %v309
    %v804 = vmul.f32 %v783, %v310
    %v805 = vmul.f32 %v784, %v311
    %v806 = vmul.f32 %v785, %v312
    %v807 = vmul.f32 %v786, %v313
    %v808 = vmul.f32 %v787, %v314
    %v809 = vmul.f32 %v788, %v315
    %v810 = vld [vmem:[%s2 + $0x1] sm:$0x1]
    %812 = vset.pattern.permute.xlu0 0
    %813 = vperm.xlu0 %812, %v789
    %v814 = vpop.permute.xlu0 %813
    %817 = vset.pattern.permute.xlu0 0
    %818 = vperm.xlu0 %817, %v790
    %v819 = vpop.permute.xlu0 %818
    %822 = vset.pattern.permute.xlu0 0
    %823 = vperm.xlu0 %822, %v791
    %v824 = vpop.permute.xlu0 %823
    %827 = vset.pattern.permute.xlu0 0
    %828 = vperm.xlu0 %827, %v792
    %v829 = vpop.permute.xlu0 %828
    %832 = vset.pattern.permute.xlu0 0
    %833 = vperm.xlu0 %832, %v793
    %v834 = vpop.permute.xlu0 %833
    %837 = vset.pattern.permute.xlu0 0
    %838 = vperm.xlu0 %837, %v794
    %v839 = vpop.permute.xlu0 %838
    %842 = vset.pattern.permute.xlu0 0
    %843 = vperm.xlu0 %842, %v795
    %v844 = vpop.permute.xlu0 %843
    %847 = vset.pattern.permute.xlu0 0
    %848 = vperm.xlu0 %847, %v796
    %v849 = vpop.permute.xlu0 %848
    %852 = vset.pattern.permute.xlu0 0
    %853 = vperm.xlu0 %852, %v797
    %v854 = vpop.permute.xlu0 %853
    %857 = vset.pattern.permute.xlu0 0
    %858 = vperm.xlu0 %857, %v798
    %v859 = vpop.permute.xlu0 %858
    %862 = vset.pattern.permute.xlu0 0
    %863 = vperm.xlu0 %862, %v799
    %v864 = vpop.permute.xlu0 %863
    %867 = vset.pattern.permute.xlu0 0
    %868 = vperm.xlu0 %867, %v800
    %v869 = vpop.permute.xlu0 %868
    %872 = vset.pattern.permute.xlu0 0
    %873 = vperm.xlu0 %872, %v801
    %v874 = vpop.permute.xlu0 %873
    %877 = vset.pattern.permute.xlu0 0
    %878 = vperm.xlu0 %877, %v802
    %v879 = vpop.permute.xlu0 %878
    %882 = vset.pattern.permute.xlu0 0
    %883 = vperm.xlu0 %882, %v803
    %v884 = vpop.permute.xlu0 %883
    %887 = vset.pattern.permute.xlu0 0
    %888 = vperm.xlu0 %887, %v804
    %v889 = vpop.permute.xlu0 %888
    %892 = vset.pattern.permute.xlu0 0
    %893 = vperm.xlu0 %892, %v805
    %v894 = vpop.permute.xlu0 %893
    %897 = vset.pattern.permute.xlu0 0
    %898 = vperm.xlu0 %897, %v806
    %v899 = vpop.permute.xlu0 %898
    %902 = vset.pattern.permute.xlu0 0
    %903 = vperm.xlu0 %902, %v807
    %v904 = vpop.permute.xlu0 %903
    %907 = vset.pattern.permute.xlu0 0
    %908 = vperm.xlu0 %907, %v808
    %v909 = vpop.permute.xlu0 %908
    %912 = vset.pattern.permute.xlu0 0
    %913 = vperm.xlu0 %912, %v809
    %v914 = vpop.permute.xlu0 %913
    %v916 = vlaneseq
    %v917 = vshrl.u32 %v916, 7
    %v918 = vsub.s32 0, %v917
    %v919 = vrot.slane %v810, %v918
    %v920 = vmul.f32 %v814, %v919
    %v921 = vmul.f32 %v819, %v919
    %v922 = vmul.f32 %v824, %v919
    %v923 = vmul.f32 %v829, %v919
    %v924 = vmul.f32 %v834, %v919
    %v925 = vmul.f32 %v839, %v919
    %v926 = vmul.f32 %v844, %v919
    %v927 = vmul.f32 %v849, %v919
    %v928 = vmul.f32 %v854, %v919
    %v929 = vmul.f32 %v859, %v919
    %v930 = vmul.f32 %v864, %v919
    %v931 = vmul.f32 %v869, %v919
    %v932 = vmul.f32 %v874, %v919
    %v933 = vmul.f32 %v879, %v919
    %v934 = vmul.f32 %v884, %v919
    %v935 = vmul.f32 %v889, %v919
    %v936 = vmul.f32 %v894, %v919
    %v937 = vmul.f32 %v899, %v919
    %v938 = vmul.f32 %v904, %v919
    %v939 = vmul.f32 %v909, %v919
    %v940 = vmul.f32 %v914, %v919
    %v941 = vadd.f32 %v747, %v920
    %v942 = vadd.f32 %v748, %v921
    %v943 = vadd.f32 %v749, %v922
    %v944 = vadd.f32 %v750, %v923
    %v945 = vadd.f32 %v751, %v924
    %v946 = vadd.f32 %v752, %v925
    %v947 = vadd.f32 %v753, %v926
    %v948 = vadd.f32 %v754, %v927
    %v949 = vadd.f32 %v755, %v928
    %v950 = vadd.f32 %v756, %v929
    %v951 = vadd.f32 %v757, %v930
    %v952 = vadd.f32 %v758, %v931
    %v953 = vadd.f32 %v759, %v932
    %v954 = vadd.f32 %v760, %v933
    %v955 = vadd.f32 %v761, %v934
    %v956 = vadd.f32 %v762, %v935
    %v957 = vadd.f32 %v763, %v936
    %v958 = vadd.f32 %v764, %v937
    %v959 = vadd.f32 %v765, %v938
    %v960 = vadd.f32 %v766, %v939
    %v961 = vadd.f32 %v767, %v940
    %v962 = vld [vmem:[#allocation2 + $0x8] sm:$0xff]
    %v963 = vld [vmem:[#allocation2 + $0x10] sm:$0xff]
    %v964 = vld [vmem:[#allocation2 + $0x18] sm:$0xff]
    %v965 = vld [vmem:[#allocation2 + $0x20] sm:$0xff]
    %v966 = vld [vmem:[#allocation2 + $0x28] sm:$0xff]
    %v967 = vld [vmem:[#allocation2 + $0x30] sm:$0xff]
    %v968 = vld [vmem:[#allocation2 + $0x38] sm:$0xff]
    %v969 = vld [vmem:[#allocation2 + $0x40] sm:$0xff]
    %v970 = vld [vmem:[#allocation2 + $0x48] sm:$0xff]
    %v971 = vld [vmem:[#allocation2 + $0x50] sm:$0xff]
    %v972 = vld [vmem:[#allocation2 + $0x58] sm:$0xff]
    %v973 = vld [vmem:[#allocation2 + $0x60] sm:$0xff]
    %v974 = vld [vmem:[#allocation2 + $0x68] sm:$0xff]
    %v975 = vld [vmem:[#allocation2 + $0x70] sm:$0xff]
    %v976 = vld [vmem:[#allocation2 + $0x78] sm:$0xff]
    %v977 = vld [vmem:[#allocation2 + $0x80] sm:$0xff]
    %v978 = vld [vmem:[#allocation2 + $0x88] sm:$0xff]
    %v979 = vld [vmem:[#allocation2 + $0x90] sm:$0xff]
    %v980 = vld [vmem:[#allocation2 + $0x98] sm:$0xff]
    %v981 = vld [vmem:[#allocation2 + $0xa0] sm:$0xff]
    %v982 = vld [vmem:[#allocation2 + $0xa8] sm:$0x3]
    %v983 = vmul.f32 %v962, %v463
    %v984 = vmul.f32 %v963, %v464
    %v985 = vmul.f32 %v964, %v465
    %v986 = vmul.f32 %v965, %v466
    %v987 = vmul.f32 %v966, %v467
    %v988 = vmul.f32 %v967, %v468
    %v989 = vmul.f32 %v968, %v469
    %v990 = vmul.f32 %v969, %v470
    %v991 = vmul.f32 %v970, %v471
    %v992 = vmul.f32 %v971, %v472
    %v993 = vmul.f32 %v972, %v473
    %v994 = vmul.f32 %v973, %v474
    %v995 = vmul.f32 %v974, %v475
    %v996 = vmul.f32 %v975, %v476
    %v997 = vmul.f32 %v976, %v477
    %v998 = vmul.f32 %v977, %v478
    %v999 = vmul.f32 %v978, %v479
    %v1000 = vmul.f32 %v979, %v480
    %v1001 = vmul.f32 %v980, %v481
    %v1002 = vmul.f32 %v981, %v482
    %v1003 = vmul.f32 %v982, %v483
    %v1004 = vld [vmem:[%s2 + $0x2] sm:$0x1]
    %1006 = vset.pattern.permute.xlu0 0
    %1007 = vperm.xlu0 %1006, %v983
    %v1008 = vpop.permute.xlu0 %1007
    %1011 = vset.pattern.permute.xlu0 0
    %1012 = vperm.xlu0 %1011, %v984
    %v1013 = vpop.permute.xlu0 %1012
    %1016 = vset.pattern.permute.xlu0 0
    %1017 = vperm.xlu0 %1016, %v985
    %v1018 = vpop.permute.xlu0 %1017
    %1021 = vset.pattern.permute.xlu0 0
    %1022 = vperm.xlu0 %1021, %v986
    %v1023 = vpop.permute.xlu0 %1022
    %1026 = vset.pattern.permute.xlu0 0
    %1027 = vperm.xlu0 %1026, %v987
    %v1028 = vpop.permute.xlu0 %1027
    %1031 = vset.pattern.permute.xlu0 0
    %1032 = vperm.xlu0 %1031, %v988
    %v1033 = vpop.permute.xlu0 %1032
    %1036 = vset.pattern.permute.xlu0 0
    %1037 = vperm.xlu0 %1036, %v989
    %v1038 = vpop.permute.xlu0 %1037
    %1041 = vset.pattern.permute.xlu0 0
    %1042 = vperm.xlu0 %1041, %v990
    %v1043 = vpop.permute.xlu0 %1042
    %1046 = vset.pattern.permute.xlu0 0
    %1047 = vperm.xlu0 %1046, %v991
    %v1048 = vpop.permute.xlu0 %1047
    %1051 = vset.pattern.permute.xlu0 0
    %1052 = vperm.xlu0 %1051, %v992
    %v1053 = vpop.permute.xlu0 %1052
    %1056 = vset.pattern.permute.xlu0 0
    %1057 = vperm.xlu0 %1056, %v993
    %v1058 = vpop.permute.xlu0 %1057
    %1061 = vset.pattern.permute.xlu0 0
    %1062 = vperm.xlu0 %1061, %v994
    %v1063 = vpop.permute.xlu0 %1062
    %1066 = vset.pattern.permute.xlu0 0
    %1067 = vperm.xlu0 %1066, %v995
    %v1068 = vpop.permute.xlu0 %1067
    %1071 = vset.pattern.permute.xlu0 0
    %1072 = vperm.xlu0 %1071, %v996
    %v1073 = vpop.permute.xlu0 %1072
    %1076 = vset.pattern.permute.xlu0 0
    %1077 = vperm.xlu0 %1076, %v997
    %v1078 = vpop.permute.xlu0 %1077
    %1081 = vset.pattern.permute.xlu0 0
    %1082 = vperm.xlu0 %1081, %v998
    %v1083 = vpop.permute.xlu0 %1082
    %1086 = vset.pattern.permute.xlu0 0
    %1087 = vperm.xlu0 %1086, %v999
    %v1088 = vpop.permute.xlu0 %1087
    %1091 = vset.pattern.permute.xlu0 0
    %1092 = vperm.xlu0 %1091, %v1000
    %v1093 = vpop.permute.xlu0 %1092
    %1096 = vset.pattern.permute.xlu0 0
    %1097 = vperm.xlu0 %1096, %v1001
    %v1098 = vpop.permute.xlu0 %1097
    %1101 = vset.pattern.permute.xlu0 0
    %1102 = vperm.xlu0 %1101, %v1002
    %v1103 = vpop.permute.xlu0 %1102
    %1106 = vset.pattern.permute.xlu0 0
    %1107 = vperm.xlu0 %1106, %v1003
    %v1108 = vpop.permute.xlu0 %1107
    %v1110 = vlaneseq
    %v1111 = vshrl.u32 %v1110, 7
    %v1112 = vsub.s32 0, %v1111
    %v1113 = vrot.slane %v1004, %v1112
    %v1114 = vmul.f32 %v1008, %v1113
    %v1115 = vmul.f32 %v1013, %v1113
    %v1116 = vmul.f32 %v1018, %v1113
    %v1117 = vmul.f32 %v1023, %v1113
    %v1118 = vmul.f32 %v1028, %v1113
    %v1119 = vmul.f32 %v1033, %v1113
    %v1120 = vmul.f32 %v1038, %v1113
    %v1121 = vmul.f32 %v1043, %v1113
    %v1122 = vmul.f32 %v1048, %v1113
    %v1123 = vmul.f32 %v1053, %v1113
    %v1124 = vmul.f32 %v1058, %v1113
    %v1125 = vmul.f32 %v1063, %v1113
    %v1126 = vmul.f32 %v1068, %v1113
    %v1127 = vmul.f32 %v1073, %v1113
    %v1128 = vmul.f32 %v1078, %v1113
    %v1129 = vmul.f32 %v1083, %v1113
    %v1130 = vmul.f32 %v1088, %v1113
    %v1131 = vmul.f32 %v1093, %v1113
    %v1132 = vmul.f32 %v1098, %v1113
    %v1133 = vmul.f32 %v1103, %v1113
    %v1134 = vmul.f32 %v1108, %v1113
    %v1135 = vadd.f32 %v941, %v1114
    %v1136 = vadd.f32 %v942, %v1115
    %v1137 = vadd.f32 %v943, %v1116
    %v1138 = vadd.f32 %v944, %v1117
    %v1139 = vadd.f32 %v945, %v1118
    %v1140 = vadd.f32 %v946, %v1119
    %v1141 = vadd.f32 %v947, %v1120
    %v1142 = vadd.f32 %v948, %v1121
    %v1143 = vadd.f32 %v949, %v1122
    %v1144 = vadd.f32 %v950, %v1123
    %v1145 = vadd.f32 %v951, %v1124
    %v1146 = vadd.f32 %v952, %v1125
    %v1147 = vadd.f32 %v953, %v1126
    %v1148 = vadd.f32 %v954, %v1127
    %v1149 = vadd.f32 %v955, %v1128
    %v1150 = vadd.f32 %v956, %v1129
    %v1151 = vadd.f32 %v957, %v1130
    %v1152 = vadd.f32 %v958, %v1131
    %v1153 = vadd.f32 %v959, %v1132
    %v1154 = vadd.f32 %v960, %v1133
    %v1155 = vadd.f32 %v961, %v1134
    %v1156 = vld [vmem:[#allocation2 + $0xf] sm:$0xff]
    %v1157 = vld [vmem:[#allocation2 + $0x17] sm:$0xff]
    %v1158 = vld [vmem:[#allocation2 + $0x1f] sm:$0xff]
    %v1159 = vld [vmem:[#allocation2 + $0x27] sm:$0xff]
    %v1160 = vld [vmem:[#allocation2 + $0x2f] sm:$0xff]
    %v1161 = vld [vmem:[#allocation2 + $0x37] sm:$0xff]
    %v1162 = vld [vmem:[#allocation2 + $0x3f] sm:$0xff]
    %v1163 = vld [vmem:[#allocation2 + $0x47] sm:$0xff]
    %v1164 = vld [vmem:[#allocation2 + $0x4f] sm:$0xff]
    %v1165 = vld [vmem:[#allocation2 + $0x57] sm:$0xff]
    %v1166 = vld [vmem:[#allocation2 + $0x5f] sm:$0xff]
    %v1167 = vld [vmem:[#allocation2 + $0x67] sm:$0xff]
    %v1168 = vld [vmem:[#allocation2 + $0x6f] sm:$0xff]
    %v1169 = vld [vmem:[#allocation2 + $0x77] sm:$0xff]
    %v1170 = vld [vmem:[#allocation2 + $0x7f] sm:$0xff]
    %v1171 = vld [vmem:[#allocation2 + $0x87] sm:$0xff]
    %v1172 = vld [vmem:[#allocation2 + $0x8f] sm:$0xff]
    %v1173 = vld [vmem:[#allocation2 + $0x97] sm:$0xff]
    %v1174 = vld [vmem:[#allocation2 + $0x9f] sm:$0xff]
    %v1175 = vld [vmem:[#allocation2 + $0xa7] sm:$0xff]
    %v1176 = vld [vmem:[#allocation2 + $0xaf] sm:$0x3]
    %v1177 = vmul.f32 %v1156, %v379
    %v1178 = vmul.f32 %v1157, %v380
    %v1179 = vmul.f32 %v1158, %v381
    %v1180 = vmul.f32 %v1159, %v382
    %v1181 = vmul.f32 %v1160, %v383
    %v1182 = vmul.f32 %v1161, %v384
    %v1183 = vmul.f32 %v1162, %v385
    %v1184 = vmul.f32 %v1163, %v386
    %v1185 = vmul.f32 %v1164, %v387
    %v1186 = vmul.f32 %v1165, %v388
    %v1187 = vmul.f32 %v1166, %v389
    %v1188 = vmul.f32 %v1167, %v390
    %v1189 = vmul.f32 %v1168, %v391
    %v1190 = vmul.f32 %v1169, %v392
    %v1191 = vmul.f32 %v1170, %v393
    %v1192 = vmul.f32 %v1171, %v394
    %v1193 = vmul.f32 %v1172, %v395
    %v1194 = vmul.f32 %v1173, %v396
    %v1195 = vmul.f32 %v1174, %v397
    %v1196 = vmul.f32 %v1175, %v398
    %v1197 = vmul.f32 %v1176, %v399
    %v1198 = vld [vmem:[%s2 + $0x3] sm:$0x1]
    %1200 = vset.pattern.permute.xlu0 0
    %1201 = vperm.xlu0 %1200, %v1177
    %v1202 = vpop.permute.xlu0 %1201
    %1205 = vset.pattern.permute.xlu0 0
    %1206 = vperm.xlu0 %1205, %v1178
    %v1207 = vpop.permute.xlu0 %1206
    %1210 = vset.pattern.permute.xlu0 0
    %1211 = vperm.xlu0 %1210, %v1179
    %v1212 = vpop.permute.xlu0 %1211
    %1215 = vset.pattern.permute.xlu0 0
    %1216 = vperm.xlu0 %1215, %v1180
    %v1217 = vpop.permute.xlu0 %1216
    %1220 = vset.pattern.permute.xlu0 0
    %1221 = vperm.xlu0 %1220, %v1181
    %v1222 = vpop.permute.xlu0 %1221
    %1225 = vset.pattern.permute.xlu0 0
    %1226 = vperm.xlu0 %1225, %v1182
    %v1227 = vpop.permute.xlu0 %1226
    %1230 = vset.pattern.permute.xlu0 0
    %1231 = vperm.xlu0 %1230, %v1183
    %v1232 = vpop.permute.xlu0 %1231
    %1235 = vset.pattern.permute.xlu0 0
    %1236 = vperm.xlu0 %1235, %v1184
    %v1237 = vpop.permute.xlu0 %1236
    %1240 = vset.pattern.permute.xlu0 0
    %1241 = vperm.xlu0 %1240, %v1185
    %v1242 = vpop.permute.xlu0 %1241
    %1245 = vset.pattern.permute.xlu0 0
    %1246 = vperm.xlu0 %1245, %v1186
    %v1247 = vpop.permute.xlu0 %1246
    %1250 = vset.pattern.permute.xlu0 0
    %1251 = vperm.xlu0 %1250, %v1187
    %v1252 = vpop.permute.xlu0 %1251
    %1255 = vset.pattern.permute.xlu0 0
    %1256 = vperm.xlu0 %1255, %v1188
    %v1257 = vpop.permute.xlu0 %1256
    %1260 = vset.pattern.permute.xlu0 0
    %1261 = vperm.xlu0 %1260, %v1189
    %v1262 = vpop.permute.xlu0 %1261
    %1265 = vset.pattern.permute.xlu0 0
    %1266 = vperm.xlu0 %1265, %v1190
    %v1267 = vpop.permute.xlu0 %1266
    %1270 = vset.pattern.permute.xlu0 0
    %1271 = vperm.xlu0 %1270, %v1191
    %v1272 = vpop.permute.xlu0 %1271
    %1275 = vset.pattern.permute.xlu0 0
    %1276 = vperm.xlu0 %1275, %v1192
    %v1277 = vpop.permute.xlu0 %1276
    %1280 = vset.pattern.permute.xlu0 0
    %1281 = vperm.xlu0 %1280, %v1193
    %v1282 = vpop.permute.xlu0 %1281
    %1285 = vset.pattern.permute.xlu0 0
    %1286 = vperm.xlu0 %1285, %v1194
    %v1287 = vpop.permute.xlu0 %1286
    %1290 = vset.pattern.permute.xlu0 0
    %1291 = vperm.xlu0 %1290, %v1195
    %v1292 = vpop.permute.xlu0 %1291
    %1295 = vset.pattern.permute.xlu0 0
    %1296 = vperm.xlu0 %1295, %v1196
    %v1297 = vpop.permute.xlu0 %1296
    %1300 = vset.pattern.permute.xlu0 0
    %1301 = vperm.xlu0 %1300, %v1197
    %v1302 = vpop.permute.xlu0 %1301
    %v1304 = vlaneseq
    %v1305 = vshrl.u32 %v1304, 7
    %v1306 = vsub.s32 0, %v1305
    %v1307 = vrot.slane %v1198, %v1306
    %v1308 = vmul.f32 %v1202, %v1307
    %v1309 = vmul.f32 %v1207, %v1307
    %v1310 = vmul.f32 %v1212, %v1307
    %v1311 = vmul.f32 %v1217, %v1307
    %v1312 = vmul.f32 %v1222, %v1307
    %v1313 = vmul.f32 %v1227, %v1307
    %v1314 = vmul.f32 %v1232, %v1307
    %v1315 = vmul.f32 %v1237, %v1307
    %v1316 = vmul.f32 %v1242, %v1307
    %v1317 = vmul.f32 %v1247, %v1307
    %v1318 = vmul.f32 %v1252, %v1307
    %v1319 = vmul.f32 %v1257, %v1307
    %v1320 = vmul.f32 %v1262, %v1307
    %v1321 = vmul.f32 %v1267, %v1307
    %v1322 = vmul.f32 %v1272, %v1307
    %v1323 = vmul.f32 %v1277, %v1307
    %v1324 = vmul.f32 %v1282, %v1307
    %v1325 = vmul.f32 %v1287, %v1307
    %v1326 = vmul.f32 %v1292, %v1307
    %v1327 = vmul.f32 %v1297, %v1307
    %v1328 = vmul.f32 %v1302, %v1307
    %v1329 = vadd.f32 %v1135, %v1308
    %v1330 = vadd.f32 %v1136, %v1309
    %v1331 = vadd.f32 %v1137, %v1310
    %v1332 = vadd.f32 %v1138, %v1311
    %v1333 = vadd.f32 %v1139, %v1312
    %v1334 = vadd.f32 %v1140, %v1313
    %v1335 = vadd.f32 %v1141, %v1314
    %v1336 = vadd.f32 %v1142, %v1315
    %v1337 = vadd.f32 %v1143, %v1316
    %v1338 = vadd.f32 %v1144, %v1317
    %v1339 = vadd.f32 %v1145, %v1318
    %v1340 = vadd.f32 %v1146, %v1319
    %v1341 = vadd.f32 %v1147, %v1320
    %v1342 = vadd.f32 %v1148, %v1321
    %v1343 = vadd.f32 %v1149, %v1322
    %v1344 = vadd.f32 %v1150, %v1323
    %v1345 = vadd.f32 %v1151, %v1324
    %v1346 = vadd.f32 %v1152, %v1325
    %v1347 = vadd.f32 %v1153, %v1326
    %v1348 = vadd.f32 %v1154, %v1327
    %v1349 = vadd.f32 %v1155, %v1328
    %v1350 = vld [vmem:[#allocation2 + $0x10] sm:$0xff]
    %v1351 = vld [vmem:[#allocation2 + $0x18] sm:$0xff]
    %v1352 = vld [vmem:[#allocation2 + $0x20] sm:$0xff]
    %v1353 = vld [vmem:[#allocation2 + $0x28] sm:$0xff]
    %v1354 = vld [vmem:[#allocation2 + $0x30] sm:$0xff]
    %v1355 = vld [vmem:[#allocation2 + $0x38] sm:$0xff]
    %v1356 = vld [vmem:[#allocation2 + $0x40] sm:$0xff]
    %v1357 = vld [vmem:[#allocation2 + $0x48] sm:$0xff]
    %v1358 = vld [vmem:[#allocation2 + $0x50] sm:$0xff]
    %v1359 = vld [vmem:[#allocation2 + $0x58] sm:$0xff]
    %v1360 = vld [vmem:[#allocation2 + $0x60] sm:$0xff]
    %v1361 = vld [vmem:[#allocation2 + $0x68] sm:$0xff]
    %v1362 = vld [vmem:[#allocation2 + $0x70] sm:$0xff]
    %v1363 = vld [vmem:[#allocation2 + $0x78] sm:$0xff]
    %v1364 = vld [vmem:[#allocation2 + $0x80] sm:$0xff]
    %v1365 = vld [vmem:[#allocation2 + $0x88] sm:$0xff]
    %v1366 = vld [vmem:[#allocation2 + $0x90] sm:$0xff]
    %v1367 = vld [vmem:[#allocation2 + $0x98] sm:$0xff]
    %v1368 = vld [vmem:[#allocation2 + $0xa0] sm:$0xff]
    %v1369 = vld [vmem:[#allocation2 + $0xa8] sm:$0xff]
    %v1370 = vld [vmem:[#allocation2 + $0xb0] sm:$0x3]
    %v1371 = vld [vmem:[%s2 + $0x4] sm:$0x1]
    %1373 = vset.pattern.permute.xlu0 0
    %1374 = vperm.xlu0 %1373, %v1350
    %v1375 = vpop.permute.xlu0 %1374
    %1378 = vset.pattern.permute.xlu0 0
    %1379 = vperm.xlu0 %1378, %v1351
    %v1380 = vpop.permute.xlu0 %1379
    %1383 = vset.pattern.permute.xlu0 0
    %1384 = vperm.xlu0 %1383, %v1352
    %v1385 = vpop.permute.xlu0 %1384
    %1388 = vset.pattern.permute.xlu0 0
    %1389 = vperm.xlu0 %1388, %v1353
    %v1390 = vpop.permute.xlu0 %1389
    %1393 = vset.pattern.permute.xlu0 0
    %1394 = vperm.xlu0 %1393, %v1354
    %v1395 = vpop.permute.xlu0 %1394
    %1398 = vset.pattern.permute.xlu0 0
    %1399 = vperm.xlu0 %1398, %v1355
    %v1400 = vpop.permute.xlu0 %1399
    %1403 = vset.pattern.permute.xlu0 0
    %1404 = vperm.xlu0 %1403, %v1356
    %v1405 = vpop.permute.xlu0 %1404
    %1408 = vset.pattern.permute.xlu0 0
    %1409 = vperm.xlu0 %1408, %v1357
    %v1410 = vpop.permute.xlu0 %1409
    %1413 = vset.pattern.permute.xlu0 0
    %1414 = vperm.xlu0 %1413, %v1358
    %v1415 = vpop.permute.xlu0 %1414
    %1418 = vset.pattern.permute.xlu0 0
    %1419 = vperm.xlu0 %1418, %v1359
    %v1420 = vpop.permute.xlu0 %1419
    %1423 = vset.pattern.permute.xlu0 0
    %1424 = vperm.xlu0 %1423, %v1360
    %v1425 = vpop.permute.xlu0 %1424
    %1428 = vset.pattern.permute.xlu0 0
    %1429 = vperm.xlu0 %1428, %v1361
    %v1430 = vpop.permute.xlu0 %1429
    %1433 = vset.pattern.permute.xlu0 0
    %1434 = vperm.xlu0 %1433, %v1362
    %v1435 = vpop.permute.xlu0 %1434
    %1438 = vset.pattern.permute.xlu0 0
    %1439 = vperm.xlu0 %1438, %v1363
    %v1440 = vpop.permute.xlu0 %1439
    %1443 = vset.pattern.permute.xlu0 0
    %1444 = vperm.xlu0 %1443, %v1364
    %v1445 = vpop.permute.xlu0 %1444
    %1448 = vset.pattern.permute.xlu0 0
    %1449 = vperm.xlu0 %1448, %v1365
    %v1450 = vpop.permute.xlu0 %1449
    %1453 = vset.pattern.permute.xlu0 0
    %1454 = vperm.xlu0 %1453, %v1366
    %v1455 = vpop.permute.xlu0 %1454
    %1458 = vset.pattern.permute.xlu0 0
    %1459 = vperm.xlu0 %1458, %v1367
    %v1460 = vpop.permute.xlu0 %1459
    %1463 = vset.pattern.permute.xlu0 0
    %1464 = vperm.xlu0 %1463, %v1368
    %v1465 = vpop.permute.xlu0 %1464
    %1468 = vset.pattern.permute.xlu0 0
    %1469 = vperm.xlu0 %1468, %v1369
    %v1470 = vpop.permute.xlu0 %1469
    %1473 = vset.pattern.permute.xlu0 0
    %1474 = vperm.xlu0 %1473, %v1370
    %v1475 = vpop.permute.xlu0 %1474
    %v1477 = vlaneseq
    %v1478 = vshrl.u32 %v1477, 7
    %v1479 = vsub.s32 0, %v1478
    %v1480 = vrot.slane %v1371, %v1479
    %v1481 = vmul.f32 %v1375, %v1480
    %v1482 = vmul.f32 %v1380, %v1480
    %v1483 = vmul.f32 %v1385, %v1480
    %v1484 = vmul.f32 %v1390, %v1480
    %v1485 = vmul.f32 %v1395, %v1480
    %v1486 = vmul.f32 %v1400, %v1480
    %v1487 = vmul.f32 %v1405, %v1480
    %v1488 = vmul.f32 %v1410, %v1480
    %v1489 = vmul.f32 %v1415, %v1480
    %v1490 = vmul.f32 %v1420, %v1480
    %v1491 = vmul.f32 %v1425, %v1480
    %v1492 = vmul.f32 %v1430, %v1480
    %v1493 = vmul.f32 %v1435, %v1480
    %v1494 = vmul.f32 %v1440, %v1480
    %v1495 = vmul.f32 %v1445, %v1480
    %v1496 = vmul.f32 %v1450, %v1480
    %v1497 = vmul.f32 %v1455, %v1480
    %v1498 = vmul.f32 %v1460, %v1480
    %v1499 = vmul.f32 %v1465, %v1480
    %v1500 = vmul.f32 %v1470, %v1480
    %v1501 = vmul.f32 %v1475, %v1480
    %v1502 = vadd.f32 %v1329, %v1481
    %v1503 = vadd.f32 %v1330, %v1482
    %v1504 = vadd.f32 %v1331, %v1483
    %v1505 = vadd.f32 %v1332, %v1484
    %v1506 = vadd.f32 %v1333, %v1485
    %v1507 = vadd.f32 %v1334, %v1486
    %v1508 = vadd.f32 %v1335, %v1487
    %v1509 = vadd.f32 %v1336, %v1488
    %v1510 = vadd.f32 %v1337, %v1489
    %v1511 = vadd.f32 %v1338, %v1490
    %v1512 = vadd.f32 %v1339, %v1491
    %v1513 = vadd.f32 %v1340, %v1492
    %v1514 = vadd.f32 %v1341, %v1493
    %v1515 = vadd.f32 %v1342, %v1494
    %v1516 = vadd.f32 %v1343, %v1495
    %v1517 = vadd.f32 %v1344, %v1496
    %v1518 = vadd.f32 %v1345, %v1497
    %v1519 = vadd.f32 %v1346, %v1498
    %v1520 = vadd.f32 %v1347, %v1499
    %v1521 = vadd.f32 %v1348, %v1500
    %v1522 = vadd.f32 %v1349, %v1501
    %v1523 = vld [vmem:[#allocation2 + $0x11] sm:$0xff]
    %v1524 = vld [vmem:[#allocation2 + $0x19] sm:$0xff]
    %v1525 = vld [vmem:[#allocation2 + $0x21] sm:$0xff]
    %v1526 = vld [vmem:[#allocation2 + $0x29] sm:$0xff]
    %v1527 = vld [vmem:[#allocation2 + $0x31] sm:$0xff]
    %v1528 = vld [vmem:[#allocation2 + $0x39] sm:$0xff]
    %v1529 = vld [vmem:[#allocation2 + $0x41] sm:$0xff]
    %v1530 = vld [vmem:[#allocation2 + $0x49] sm:$0xff]
    %v1531 = vld [vmem:[#allocation2 + $0x51] sm:$0xff]
    %v1532 = vld [vmem:[#allocation2 + $0x59] sm:$0xff]
    %v1533 = vld [vmem:[#allocation2 + $0x61] sm:$0xff]
    %v1534 = vld [vmem:[#allocation2 + $0x69] sm:$0xff]
    %v1535 = vld [vmem:[#allocation2 + $0x71] sm:$0xff]
    %v1536 = vld [vmem:[#allocation2 + $0x79] sm:$0xff]
    %v1537 = vld [vmem:[#allocation2 + $0x81] sm:$0xff]
    %v1538 = vld [vmem:[#allocation2 + $0x89] sm:$0xff]
    %v1539 = vld [vmem:[#allocation2 + $0x91] sm:$0xff]
    %v1540 = vld [vmem:[#allocation2 + $0x99] sm:$0xff]
    %v1541 = vld [vmem:[#allocation2 + $0xa1] sm:$0xff]
    %v1542 = vld [vmem:[#allocation2 + $0xa9] sm:$0xff]
    %v1543 = vld [vmem:[#allocation2 + $0xb1] sm:$0x3]
    %v1544 = vmul.f32 %v1523, %v421
    %v1545 = vmul.f32 %v1524, %v422
    %v1546 = vmul.f32 %v1525, %v423
    %v1547 = vmul.f32 %v1526, %v424
    %v1548 = vmul.f32 %v1527, %v425
    %v1549 = vmul.f32 %v1528, %v426
    %v1550 = vmul.f32 %v1529, %v427
    %v1551 = vmul.f32 %v1530, %v428
    %v1552 = vmul.f32 %v1531, %v429
    %v1553 = vmul.f32 %v1532, %v430
    %v1554 = vmul.f32 %v1533, %v431
    %v1555 = vmul.f32 %v1534, %v432
    %v1556 = vmul.f32 %v1535, %v433
    %v1557 = vmul.f32 %v1536, %v434
    %v1558 = vmul.f32 %v1537, %v435
    %v1559 = vmul.f32 %v1538, %v436
    %v1560 = vmul.f32 %v1539, %v437
    %v1561 = vmul.f32 %v1540, %v438
    %v1562 = vmul.f32 %v1541, %v439
    %v1563 = vmul.f32 %v1542, %v440
    %v1564 = vmul.f32 %v1543, %v441
    %v1565 = vld [vmem:[%s2 + $0x5] sm:$0x1]
    %1567 = vset.pattern.permute.xlu0 0
    %1568 = vperm.xlu0 %1567, %v1544
    %v1569 = vpop.permute.xlu0 %1568
    %1572 = vset.pattern.permute.xlu0 0
    %1573 = vperm.xlu0 %1572, %v1545
    %v1574 = vpop.permute.xlu0 %1573
    %1577 = vset.pattern.permute.xlu0 0
    %1578 = vperm.xlu0 %1577, %v1546
    %v1579 = vpop.permute.xlu0 %1578
    %1582 = vset.pattern.permute.xlu0 0
    %1583 = vperm.xlu0 %1582, %v1547
    %v1584 = vpop.permute.xlu0 %1583
    %1587 = vset.pattern.permute.xlu0 0
    %1588 = vperm.xlu0 %1587, %v1548
    %v1589 = vpop.permute.xlu0 %1588
    %1592 = vset.pattern.permute.xlu0 0
    %1593 = vperm.xlu0 %1592, %v1549
    %v1594 = vpop.permute.xlu0 %1593
    %1597 = vset.pattern.permute.xlu0 0
    %1598 = vperm.xlu0 %1597, %v1550
    %v1599 = vpop.permute.xlu0 %1598
    %1602 = vset.pattern.permute.xlu0 0
    %1603 = vperm.xlu0 %1602, %v1551
    %v1604 = vpop.permute.xlu0 %1603
    %1607 = vset.pattern.permute.xlu0 0
    %1608 = vperm.xlu0 %1607, %v1552
    %v1609 = vpop.permute.xlu0 %1608
    %1612 = vset.pattern.permute.xlu0 0
    %1613 = vperm.xlu0 %1612, %v1553
    %v1614 = vpop.permute.xlu0 %1613
    %1617 = vset.pattern.permute.xlu0 0
    %1618 = vperm.xlu0 %1617, %v1554
    %v1619 = vpop.permute.xlu0 %1618
    %1622 = vset.pattern.permute.xlu0 0
    %1623 = vperm.xlu0 %1622, %v1555
    %v1624 = vpop.permute.xlu0 %1623
    %1627 = vset.pattern.permute.xlu0 0
    %1628 = vperm.xlu0 %1627, %v1556
    %v1629 = vpop.permute.xlu0 %1628
    %1632 = vset.pattern.permute.xlu0 0
    %1633 = vperm.xlu0 %1632, %v1557
    %v1634 = vpop.permute.xlu0 %1633
    %1637 = vset.pattern.permute.xlu0 0
    %1638 = vperm.xlu0 %1637, %v1558
    %v1639 = vpop.permute.xlu0 %1638
    %1642 = vset.pattern.permute.xlu0 0
    %1643 = vperm.xlu0 %1642, %v1559
    %v1644 = vpop.permute.xlu0 %1643
    %1647 = vset.pattern.permute.xlu0 0
    %1648 = vperm.xlu0 %1647, %v1560
    %v1649 = vpop.permute.xlu0 %1648
    %1652 = vset.pattern.permute.xlu0 0
    %1653 = vperm.xlu0 %1652, %v1561
    %v1654 = vpop.permute.xlu0 %1653
    %1657 = vset.pattern.permute.xlu0 0
    %1658 = vperm.xlu0 %1657, %v1562
    %v1659 = vpop.permute.xlu0 %1658
    %1662 = vset.pattern.permute.xlu0 0
    %1663 = vperm.xlu0 %1662, %v1563
    %v1664 = vpop.permute.xlu0 %1663
    %1667 = vset.pattern.permute.xlu0 0
    %1668 = vperm.xlu0 %1667, %v1564
    %v1669 = vpop.permute.xlu0 %1668
    %v1671 = vlaneseq
    %v1672 = vshrl.u32 %v1671, 7
    %v1673 = vsub.s32 0, %v1672
    %v1674 = vrot.slane %v1565, %v1673
    %v1675 = vmul.f32 %v1569, %v1674
    %v1676 = vmul.f32 %v1574, %v1674
    %v1677 = vmul.f32 %v1579, %v1674
    %v1678 = vmul.f32 %v1584, %v1674
    %v1679 = vmul.f32 %v1589, %v1674
    %v1680 = vmul.f32 %v1594, %v1674
    %v1681 = vmul.f32 %v1599, %v1674
    %v1682 = vmul.f32 %v1604, %v1674
    %v1683 = vmul.f32 %v1609, %v1674
    %v1684 = vmul.f32 %v1614, %v1674
    %v1685 = vmul.f32 %v1619, %v1674
    %v1686 = vmul.f32 %v1624, %v1674
    %v1687 = vmul.f32 %v1629, %v1674
    %v1688 = vmul.f32 %v1634, %v1674
    %v1689 = vmul.f32 %v1639, %v1674
    %v1690 = vmul.f32 %v1644, %v1674
    %v1691 = vmul.f32 %v1649, %v1674
    %v1692 = vmul.f32 %v1654, %v1674
    %v1693 = vmul.f32 %v1659, %v1674
    %v1694 = vmul.f32 %v1664, %v1674
    %v1695 = vmul.f32 %v1669, %v1674
    %v1696 = vadd.f32 %v1502, %v1675
    %v1697 = vadd.f32 %v1503, %v1676
    %v1698 = vadd.f32 %v1504, %v1677
    %v1699 = vadd.f32 %v1505, %v1678
    %v1700 = vadd.f32 %v1506, %v1679
    %v1701 = vadd.f32 %v1507, %v1680
    %v1702 = vadd.f32 %v1508, %v1681
    %v1703 = vadd.f32 %v1509, %v1682
    %v1704 = vadd.f32 %v1510, %v1683
    %v1705 = vadd.f32 %v1511, %v1684
    %v1706 = vadd.f32 %v1512, %v1685
    %v1707 = vadd.f32 %v1513, %v1686
    %v1708 = vadd.f32 %v1514, %v1687
    %v1709 = vadd.f32 %v1515, %v1688
    %v1710 = vadd.f32 %v1516, %v1689
    %v1711 = vadd.f32 %v1517, %v1690
    %v1712 = vadd.f32 %v1518, %v1691
    %v1713 = vadd.f32 %v1519, %v1692
    %v1714 = vadd.f32 %v1520, %v1693
    %v1715 = vadd.f32 %v1521, %v1694
    %v1716 = vadd.f32 %v1522, %v1695
    %v1717 = vld [vmem:[#allocation2 + $0x18] sm:$0xff]
    %v1718 = vld [vmem:[#allocation2 + $0x20] sm:$0xff]
    %v1719 = vld [vmem:[#allocation2 + $0x28] sm:$0xff]
    %v1720 = vld [vmem:[#allocation2 + $0x30] sm:$0xff]
    %v1721 = vld [vmem:[#allocation2 + $0x38] sm:$0xff]
    %v1722 = vld [vmem:[#allocation2 + $0x40] sm:$0xff]
    %v1723 = vld [vmem:[#allocation2 + $0x48] sm:$0xff]
    %v1724 = vld [vmem:[#allocation2 + $0x50] sm:$0xff]
    %v1725 = vld [vmem:[#allocation2 + $0x58] sm:$0xff]
    %v1726 = vld [vmem:[#allocation2 + $0x60] sm:$0xff]
    %v1727 = vld [vmem:[#allocation2 + $0x68] sm:$0xff]
    %v1728 = vld [vmem:[#allocation2 + $0x70] sm:$0xff]
    %v1729 = vld [vmem:[#allocation2 + $0x78] sm:$0xff]
    %v1730 = vld [vmem:[#allocation2 + $0x80] sm:$0xff]
    %v1731 = vld [vmem:[#allocation2 + $0x88] sm:$0xff]
    %v1732 = vld [vmem:[#allocation2 + $0x90] sm:$0xff]
    %v1733 = vld [vmem:[#allocation2 + $0x98] sm:$0xff]
    %v1734 = vld [vmem:[#allocation2 + $0xa0] sm:$0xff]
    %v1735 = vld [vmem:[#allocation2 + $0xa8] sm:$0xff]
    %v1736 = vld [vmem:[#allocation2 + $0xb0] sm:$0xff]
    %v1737 = vld [vmem:[#allocation2 + $0xb8] sm:$0x3]
    %v1738 = vmul.f32 %v1717, %v484
    %v1739 = vmul.f32 %v1718, %v485
    %v1740 = vmul.f32 %v1719, %v486
    %v1741 = vmul.f32 %v1720, %v487
    %v1742 = vmul.f32 %v1721, %v488
    %v1743 = vmul.f32 %v1722, %v489
    %v1744 = vmul.f32 %v1723, %v490
    %v1745 = vmul.f32 %v1724, %v491
    %v1746 = vmul.f32 %v1725, %v492
    %v1747 = vmul.f32 %v1726, %v493
    %v1748 = vmul.f32 %v1727, %v494
    %v1749 = vmul.f32 %v1728, %v495
    %v1750 = vmul.f32 %v1729, %v496
    %v1751 = vmul.f32 %v1730, %v497
    %v1752 = vmul.f32 %v1731, %v498
    %v1753 = vmul.f32 %v1732, %v499
    %v1754 = vmul.f32 %v1733, %v500
    %v1755 = vmul.f32 %v1734, %v501
    %v1756 = vmul.f32 %v1735, %v502
    %v1757 = vmul.f32 %v1736, %v503
    %v1758 = vmul.f32 %v1737, %v504
    %v1759 = vld [vmem:[%s2 + $0x6] sm:$0x1]
    %1761 = vset.pattern.permute.xlu0 0
    %1762 = vperm.xlu0 %1761, %v1738
    %v1763 = vpop.permute.xlu0 %1762
    %1766 = vset.pattern.permute.xlu0 0
    %1767 = vperm.xlu0 %1766, %v1739
    %v1768 = vpop.permute.xlu0 %1767
    %1771 = vset.pattern.permute.xlu0 0
    %1772 = vperm.xlu0 %1771, %v1740
    %v1773 = vpop.permute.xlu0 %1772
    %1776 = vset.pattern.permute.xlu0 0
    %1777 = vperm.xlu0 %1776, %v1741
    %v1778 = vpop.permute.xlu0 %1777
    %1781 = vset.pattern.permute.xlu0 0
    %1782 = vperm.xlu0 %1781, %v1742
    %v1783 = vpop.permute.xlu0 %1782
    %1786 = vset.pattern.permute.xlu0 0
    %1787 = vperm.xlu0 %1786, %v1743
    %v1788 = vpop.permute.xlu0 %1787
    %1791 = vset.pattern.permute.xlu0 0
    %1792 = vperm.xlu0 %1791, %v1744
    %v1793 = vpop.permute.xlu0 %1792
    %1796 = vset.pattern.permute.xlu0 0
    %1797 = vperm.xlu0 %1796, %v1745
    %v1798 = vpop.permute.xlu0 %1797
    %1801 = vset.pattern.permute.xlu0 0
    %1802 = vperm.xlu0 %1801, %v1746
    %v1803 = vpop.permute.xlu0 %1802
    %1806 = vset.pattern.permute.xlu0 0
    %1807 = vperm.xlu0 %1806, %v1747
    %v1808 = vpop.permute.xlu0 %1807
    %1811 = vset.pattern.permute.xlu0 0
    %1812 = vperm.xlu0 %1811, %v1748
    %v1813 = vpop.permute.xlu0 %1812
    %1816 = vset.pattern.permute.xlu0 0
    %1817 = vperm.xlu0 %1816, %v1749
    %v1818 = vpop.permute.xlu0 %1817
    %1821 = vset.pattern.permute.xlu0 0
    %1822 = vperm.xlu0 %1821, %v1750
    %v1823 = vpop.permute.xlu0 %1822
    %1826 = vset.pattern.permute.xlu0 0
    %1827 = vperm.xlu0 %1826, %v1751
    %v1828 = vpop.permute.xlu0 %1827
    %1831 = vset.pattern.permute.xlu0 0
    %1832 = vperm.xlu0 %1831, %v1752
    %v1833 = vpop.permute.xlu0 %1832
    %1836 = vset.pattern.permute.xlu0 0
    %1837 = vperm.xlu0 %1836, %v1753
    %v1838 = vpop.permute.xlu0 %1837
    %1841 = vset.pattern.permute.xlu0 0
    %1842 = vperm.xlu0 %1841, %v1754
    %v1843 = vpop.permute.xlu0 %1842
    %1846 = vset.pattern.permute.xlu0 0
    %1847 = vperm.xlu0 %1846, %v1755
    %v1848 = vpop.permute.xlu0 %1847
    %1851 = vset.pattern.permute.xlu0 0
    %1852 = vperm.xlu0 %1851, %v1756
    %v1853 = vpop.permute.xlu0 %1852
    %1856 = vset.pattern.permute.xlu0 0
    %1857 = vperm.xlu0 %1856, %v1757
    %v1858 = vpop.permute.xlu0 %1857
    %1861 = vset.pattern.permute.xlu0 0
    %1862 = vperm.xlu0 %1861, %v1758
    %v1863 = vpop.permute.xlu0 %1862
    %v1865 = vlaneseq
    %v1866 = vshrl.u32 %v1865, 7
    %v1867 = vsub.s32 0, %v1866
    %v1868 = vrot.slane %v1759, %v1867
    %v1869 = vmul.f32 %v1763, %v1868
    %v1870 = vmul.f32 %v1768, %v1868
    %v1871 = vmul.f32 %v1773, %v1868
    %v1872 = vmul.f32 %v1778, %v1868
    %v1873 = vmul.f32 %v1783, %v1868
    %v1874 = vmul.f32 %v1788, %v1868
    %v1875 = vmul.f32 %v1793, %v1868
    %v1876 = vmul.f32 %v1798, %v1868
    %v1877 = vmul.f32 %v1803, %v1868
    %v1878 = vmul.f32 %v1808, %v1868
    %v1879 = vmul.f32 %v1813, %v1868
    %v1880 = vmul.f32 %v1818, %v1868
    %v1881 = vmul.f32 %v1823, %v1868
    %v1882 = vmul.f32 %v1828, %v1868
    %v1883 = vmul.f32 %v1833, %v1868
    %v1884 = vmul.f32 %v1838, %v1868
    %v1885 = vmul.f32 %v1843, %v1868
    %v1886 = vmul.f32 %v1848, %v1868
    %v1887 = vmul.f32 %v1853, %v1868
    %v1888 = vmul.f32 %v1858, %v1868
    %v1889 = vmul.f32 %v1863, %v1868
    %v1890 = vadd.f32 %v1696, %v1869
    %v1891 = vadd.f32 %v1697, %v1870
    %v1892 = vadd.f32 %v1698, %v1871
    %v1893 = vadd.f32 %v1699, %v1872
    %v1894 = vadd.f32 %v1700, %v1873
    %v1895 = vadd.f32 %v1701, %v1874
    %v1896 = vadd.f32 %v1702, %v1875
    %v1897 = vadd.f32 %v1703, %v1876
    %v1898 = vadd.f32 %v1704, %v1877
    %v1899 = vadd.f32 %v1705, %v1878
    %v1900 = vadd.f32 %v1706, %v1879
    %v1901 = vadd.f32 %v1707, %v1880
    %v1902 = vadd.f32 %v1708, %v1881
    %v1903 = vadd.f32 %v1709, %v1882
    %v1904 = vadd.f32 %v1710, %v1883
    %v1905 = vadd.f32 %v1711, %v1884
    %v1906 = vadd.f32 %v1712, %v1885
    %v1907 = vadd.f32 %v1713, %v1886
    %v1908 = vadd.f32 %v1714, %v1887
    %v1909 = vadd.f32 %v1715, %v1888
    %v1910 = vadd.f32 %v1716, %v1889
    %v1911 = vld [vmem:[#allocation2 + $0x19] sm:$0xff]
    %v1912 = vld [vmem:[#allocation2 + $0x21] sm:$0xff]
    %v1913 = vld [vmem:[#allocation2 + $0x29] sm:$0xff]
    %v1914 = vld [vmem:[#allocation2 + $0x31] sm:$0xff]
    %v1915 = vld [vmem:[#allocation2 + $0x39] sm:$0xff]
    %v1916 = vld [vmem:[#allocation2 + $0x41] sm:$0xff]
    %v1917 = vld [vmem:[#allocation2 + $0x49] sm:$0xff]
    %v1918 = vld [vmem:[#allocation2 + $0x51] sm:$0xff]
    %v1919 = vld [vmem:[#allocation2 + $0x59] sm:$0xff]
    %v1920 = vld [vmem:[#allocation2 + $0x61] sm:$0xff]
    %v1921 = vld [vmem:[#allocation2 + $0x69] sm:$0xff]
    %v1922 = vld [vmem:[#allocation2 + $0x71] sm:$0xff]
    %v1923 = vld [vmem:[#allocation2 + $0x79] sm:$0xff]
    %v1924 = vld [vmem:[#allocation2 + $0x81] sm:$0xff]
    %v1925 = vld [vmem:[#allocation2 + $0x89] sm:$0xff]
    %v1926 = vld [vmem:[#allocation2 + $0x91] sm:$0xff]
    %v1927 = vld [vmem:[#allocation2 + $0x99] sm:$0xff]
    %v1928 = vld [vmem:[#allocation2 + $0xa1] sm:$0xff]
    %v1929 = vld [vmem:[#allocation2 + $0xa9] sm:$0xff]
    %v1930 = vld [vmem:[#allocation2 + $0xb1] sm:$0xff]
    %v1931 = vld [vmem:[#allocation2 + $0xb9] sm:$0x3]
    %v1932 = vmul.f32 %v1911, %v337
    %v1933 = vmul.f32 %v1912, %v338
    %v1934 = vmul.f32 %v1913, %v339
    %v1935 = vmul.f32 %v1914, %v340
    %v1936 = vmul.f32 %v1915, %v341
    %v1937 = vmul.f32 %v1916, %v342
    %v1938 = vmul.f32 %v1917, %v343
    %v1939 = vmul.f32 %v1918, %v344
    %v1940 = vmul.f32 %v1919, %v345
    %v1941 = vmul.f32 %v1920, %v346
    %v1942 = vmul.f32 %v1921, %v347
    %v1943 = vmul.f32 %v1922, %v348
    %v1944 = vmul.f32 %v1923, %v349
    %v1945 = vmul.f32 %v1924, %v350
    %v1946 = vmul.f32 %v1925, %v351
    %v1947 = vmul.f32 %v1926, %v352
    %v1948 = vmul.f32 %v1927, %v353
    %v1949 = vmul.f32 %v1928, %v354
    %v1950 = vmul.f32 %v1929, %v355
    %v1951 = vmul.f32 %v1930, %v356
    %v1952 = vmul.f32 %v1931, %v357
    %v1953 = vld [vmem:[%s2 + $0x7] sm:$0x1]
    %1955 = vset.pattern.permute.xlu0 0
    %1956 = vperm.xlu0 %1955, %v1932
    %v1957 = vpop.permute.xlu0 %1956
    %1960 = vset.pattern.permute.xlu0 0
    %1961 = vperm.xlu0 %1960, %v1933
    %v1962 = vpop.permute.xlu0 %1961
    %1965 = vset.pattern.permute.xlu0 0
    %1966 = vperm.xlu0 %1965, %v1934
    %v1967 = vpop.permute.xlu0 %1966
    %1970 = vset.pattern.permute.xlu0 0
    %1971 = vperm.xlu0 %1970, %v1935
    %v1972 = vpop.permute.xlu0 %1971
    %1975 = vset.pattern.permute.xlu0 0
    %1976 = vperm.xlu0 %1975, %v1936
    %v1977 = vpop.permute.xlu0 %1976
    %1980 = vset.pattern.permute.xlu0 0
    %1981 = vperm.xlu0 %1980, %v1937
    %v1982 = vpop.permute.xlu0 %1981
    %1985 = vset.pattern.permute.xlu0 0
    %1986 = vperm.xlu0 %1985, %v1938
    %v1987 = vpop.permute.xlu0 %1986
    %1990 = vset.pattern.permute.xlu0 0
    %1991 = vperm.xlu0 %1990, %v1939
    %v1992 = vpop.permute.xlu0 %1991
    %1995 = vset.pattern.permute.xlu0 0
    %1996 = vperm.xlu0 %1995, %v1940
    %v1997 = vpop.permute.xlu0 %1996
    %2000 = vset.pattern.permute.xlu0 0
    %2001 = vperm.xlu0 %2000, %v1941
    %v2002 = vpop.permute.xlu0 %2001
    %2005 = vset.pattern.permute.xlu0 0
    %2006 = vperm.xlu0 %2005, %v1942
    %v2007 = vpop.permute.xlu0 %2006
    %2010 = vset.pattern.permute.xlu0 0
    %2011 = vperm.xlu0 %2010, %v1943
    %v2012 = vpop.permute.xlu0 %2011
    %2015 = vset.pattern.permute.xlu0 0
    %2016 = vperm.xlu0 %2015, %v1944
    %v2017 = vpop.permute.xlu0 %2016
    %2020 = vset.pattern.permute.xlu0 0
    %2021 = vperm.xlu0 %2020, %v1945
    %v2022 = vpop.permute.xlu0 %2021
    %2025 = vset.pattern.permute.xlu0 0
    %2026 = vperm.xlu0 %2025, %v1946
    %v2027 = vpop.permute.xlu0 %2026
    %2030 = vset.pattern.permute.xlu0 0
    %2031 = vperm.xlu0 %2030, %v1947
    %v2032 = vpop.permute.xlu0 %2031
    %2035 = vset.pattern.permute.xlu0 0
    %2036 = vperm.xlu0 %2035, %v1948
    %v2037 = vpop.permute.xlu0 %2036
    %2040 = vset.pattern.permute.xlu0 0
    %2041 = vperm.xlu0 %2040, %v1949
    %v2042 = vpop.permute.xlu0 %2041
    %2045 = vset.pattern.permute.xlu0 0
    %2046 = vperm.xlu0 %2045, %v1950
    %v2047 = vpop.permute.xlu0 %2046
    %2050 = vset.pattern.permute.xlu0 0
    %2051 = vperm.xlu0 %2050, %v1951
    %v2052 = vpop.permute.xlu0 %2051
    %2055 = vset.pattern.permute.xlu0 0
    %2056 = vperm.xlu0 %2055, %v1952
    %v2057 = vpop.permute.xlu0 %2056
    %v2059 = vlaneseq
    %v2060 = vshrl.u32 %v2059, 7
    %v2061 = vsub.s32 0, %v2060
    %v2062 = vrot.slane %v1953, %v2061
    %v2063 = vmul.f32 %v1957, %v2062
    %v2064 = vmul.f32 %v1962, %v2062
    %v2065 = vmul.f32 %v1967, %v2062
    %v2066 = vmul.f32 %v1972, %v2062
    %v2067 = vmul.f32 %v1977, %v2062
    %v2068 = vmul.f32 %v1982, %v2062
    %v2069 = vmul.f32 %v1987, %v2062
    %v2070 = vmul.f32 %v1992, %v2062
    %v2071 = vmul.f32 %v1997, %v2062
    %v2072 = vmul.f32 %v2002, %v2062
    %v2073 = vmul.f32 %v2007, %v2062
    %v2074 = vmul.f32 %v2012, %v2062
    %v2075 = vmul.f32 %v2017, %v2062
    %v2076 = vmul.f32 %v2022, %v2062
    %v2077 = vmul.f32 %v2027, %v2062
    %v2078 = vmul.f32 %v2032, %v2062
    %v2079 = vmul.f32 %v2037, %v2062
    %v2080 = vmul.f32 %v2042, %v2062
    %v2081 = vmul.f32 %v2047, %v2062
    %v2082 = vmul.f32 %v2052, %v2062
    %v2083 = vmul.f32 %v2057, %v2062
    %v2084 = vadd.f32 %v1890, %v2063
    %v2085 = vadd.f32 %v1891, %v2064
    %v2086 = vadd.f32 %v1892, %v2065
    %v2087 = vadd.f32 %v1893, %v2066
    %v2088 = vadd.f32 %v1894, %v2067
    %v2089 = vadd.f32 %v1895, %v2068
    %v2090 = vadd.f32 %v1896, %v2069
    %v2091 = vadd.f32 %v1897, %v2070
    %v2092 = vadd.f32 %v1898, %v2071
    %v2093 = vadd.f32 %v1899, %v2072
    %v2094 = vadd.f32 %v1900, %v2073
    %v2095 = vadd.f32 %v1901, %v2074
    %v2096 = vadd.f32 %v1902, %v2075
    %v2097 = vadd.f32 %v1903, %v2076
    %v2098 = vadd.f32 %v1904, %v2077
    %v2099 = vadd.f32 %v1905, %v2078
    %v2100 = vadd.f32 %v1906, %v2079
    %v2101 = vadd.f32 %v1907, %v2080
    %v2102 = vadd.f32 %v1908, %v2081
    %v2103 = vadd.f32 %v1909, %v2082
    %v2104 = vadd.f32 %v1910, %v2083
    %v2105 = vld [vmem:[#allocation2 + $0x1a] sm:$0xff]
    %v2106 = vld [vmem:[#allocation2 + $0x22] sm:$0xff]
    %v2107 = vld [vmem:[#allocation2 + $0x2a] sm:$0xff]
    %v2108 = vld [vmem:[#allocation2 + $0x32] sm:$0xff]
    %v2109 = vld [vmem:[#allocation2 + $0x3a] sm:$0xff]
    %v2110 = vld [vmem:[#allocation2 + $0x42] sm:$0xff]
    %v2111 = vld [vmem:[#allocation2 + $0x4a] sm:$0xff]
    %v2112 = vld [vmem:[#allocation2 + $0x52] sm:$0xff]
    %v2113 = vld [vmem:[#allocation2 + $0x5a] sm:$0xff]
    %v2114 = vld [vmem:[#allocation2 + $0x62] sm:$0xff]
    %v2115 = vld [vmem:[#allocation2 + $0x6a] sm:$0xff]
    %v2116 = vld [vmem:[#allocation2 + $0x72] sm:$0xff]
    %v2117 = vld [vmem:[#allocation2 + $0x7a] sm:$0xff]
    %v2118 = vld [vmem:[#allocation2 + $0x82] sm:$0xff]
    %v2119 = vld [vmem:[#allocation2 + $0x8a] sm:$0xff]
    %v2120 = vld [vmem:[#allocation2 + $0x92] sm:$0xff]
    %v2121 = vld [vmem:[#allocation2 + $0x9a] sm:$0xff]
    %v2122 = vld [vmem:[#allocation2 + $0xa2] sm:$0xff]
    %v2123 = vld [vmem:[#allocation2 + $0xaa] sm:$0xff]
    %v2124 = vld [vmem:[#allocation2 + $0xb2] sm:$0xff]
    %v2125 = vld [vmem:[#allocation2 + $0xba] sm:$0x3]
    %v2126 = vmul.f32 %v2105, %v505
    %v2127 = vmul.f32 %v2106, %v506
    %v2128 = vmul.f32 %v2107, %v507
    %v2129 = vmul.f32 %v2108, %v508
    %v2130 = vmul.f32 %v2109, %v509
    %v2131 = vmul.f32 %v2110, %v510
    %v2132 = vmul.f32 %v2111, %v511
    %v2133 = vmul.f32 %v2112, %v512
    %v2134 = vmul.f32 %v2113, %v513
    %v2135 = vmul.f32 %v2114, %v514
    %v2136 = vmul.f32 %v2115, %v515
    %v2137 = vmul.f32 %v2116, %v516
    %v2138 = vmul.f32 %v2117, %v517
    %v2139 = vmul.f32 %v2118, %v518
    %v2140 = vmul.f32 %v2119, %v519
    %v2141 = vmul.f32 %v2120, %v520
    %v2142 = vmul.f32 %v2121, %v521
    %v2143 = vmul.f32 %v2122, %v522
    %v2144 = vmul.f32 %v2123, %v523
    %v2145 = vmul.f32 %v2124, %v524
    %v2146 = vmul.f32 %v2125, %v525
    %v2147 = vld [vmem:[%s2 + $0x8] sm:$0x1]
    %2149 = vset.pattern.permute.xlu0 0
    %2150 = vperm.xlu0 %2149, %v2126
    %v2151 = vpop.permute.xlu0 %2150
    %2154 = vset.pattern.permute.xlu0 0
    %2155 = vperm.xlu0 %2154, %v2127
    %v2156 = vpop.permute.xlu0 %2155
    %2159 = vset.pattern.permute.xlu0 0
    %2160 = vperm.xlu0 %2159, %v2128
    %v2161 = vpop.permute.xlu0 %2160
    %2164 = vset.pattern.permute.xlu0 0
    %2165 = vperm.xlu0 %2164, %v2129
    %v2166 = vpop.permute.xlu0 %2165
    %2169 = vset.pattern.permute.xlu0 0
    %2170 = vperm.xlu0 %2169, %v2130
    %v2171 = vpop.permute.xlu0 %2170
    %2174 = vset.pattern.permute.xlu0 0
    %2175 = vperm.xlu0 %2174, %v2131
    %v2176 = vpop.permute.xlu0 %2175
    %2179 = vset.pattern.permute.xlu0 0
    %2180 = vperm.xlu0 %2179, %v2132
    %v2181 = vpop.permute.xlu0 %2180
    %2184 = vset.pattern.permute.xlu0 0
    %2185 = vperm.xlu0 %2184, %v2133
    %v2186 = vpop.permute.xlu0 %2185
    %2189 = vset.pattern.permute.xlu0 0
    %2190 = vperm.xlu0 %2189, %v2134
    %v2191 = vpop.permute.xlu0 %2190
    %2194 = vset.pattern.permute.xlu0 0
    %2195 = vperm.xlu0 %2194, %v2135
    %v2196 = vpop.permute.xlu0 %2195
    %2199 = vset.pattern.permute.xlu0 0
    %2200 = vperm.xlu0 %2199, %v2136
    %v2201 = vpop.permute.xlu0 %2200
    %2204 = vset.pattern.permute.xlu0 0
    %2205 = vperm.xlu0 %2204, %v2137
    %v2206 = vpop.permute.xlu0 %2205
    %2209 = vset.pattern.permute.xlu0 0
    %2210 = vperm.xlu0 %2209, %v2138
    %v2211 = vpop.permute.xlu0 %2210
    %2214 = vset.pattern.permute.xlu0 0
    %2215 = vperm.xlu0 %2214, %v2139
    %v2216 = vpop.permute.xlu0 %2215
    %2219 = vset.pattern.permute.xlu0 0
    %2220 = vperm.xlu0 %2219, %v2140
    %v2221 = vpop.permute.xlu0 %2220
    %2224 = vset.pattern.permute.xlu0 0
    %2225 = vperm.xlu0 %2224, %v2141
    %v2226 = vpop.permute.xlu0 %2225
    %2229 = vset.pattern.permute.xlu0 0
    %2230 = vperm.xlu0 %2229, %v2142
    %v2231 = vpop.permute.xlu0 %2230
    %2234 = vset.pattern.permute.xlu0 0
    %2235 = vperm.xlu0 %2234, %v2143
    %v2236 = vpop.permute.xlu0 %2235
    %2239 = vset.pattern.permute.xlu0 0
    %2240 = vperm.xlu0 %2239, %v2144
    %v2241 = vpop.permute.xlu0 %2240
    %2244 = vset.pattern.permute.xlu0 0
    %2245 = vperm.xlu0 %2244, %v2145
    %v2246 = vpop.permute.xlu0 %2245
    %2249 = vset.pattern.permute.xlu0 0
    %2250 = vperm.xlu0 %2249, %v2146
    %v2251 = vpop.permute.xlu0 %2250
    %v2253 = vlaneseq
    %v2254 = vshrl.u32 %v2253, 7
    %v2255 = vsub.s32 0, %v2254
    %v2256 = vrot.slane %v2147, %v2255
    %v2257 = vmul.f32 %v2151, %v2256
    %v2258 = vmul.f32 %v2156, %v2256
    %v2259 = vmul.f32 %v2161, %v2256
    %v2260 = vmul.f32 %v2166, %v2256
    %v2261 = vmul.f32 %v2171, %v2256
    %v2262 = vmul.f32 %v2176, %v2256
    %v2263 = vmul.f32 %v2181, %v2256
    %v2264 = vmul.f32 %v2186, %v2256
    %v2265 = vmul.f32 %v2191, %v2256
    %v2266 = vmul.f32 %v2196, %v2256
    %v2267 = vmul.f32 %v2201, %v2256
    %v2268 = vmul.f32 %v2206, %v2256
    %v2269 = vmul.f32 %v2211, %v2256
    %v2270 = vmul.f32 %v2216, %v2256
    %v2271 = vmul.f32 %v2221, %v2256
    %v2272 = vmul.f32 %v2226, %v2256
    %v2273 = vmul.f32 %v2231, %v2256
    %v2274 = vmul.f32 %v2236, %v2256
    %v2275 = vmul.f32 %v2241, %v2256
    %v2276 = vmul.f32 %v2246, %v2256
    %v2277 = vmul.f32 %v2251, %v2256
    %v2278 = vadd.f32 %v2084, %v2257
    %v2279 = vadd.f32 %v2085, %v2258
    %v2280 = vadd.f32 %v2086, %v2259
    %v2281 = vadd.f32 %v2087, %v2260
    %v2282 = vadd.f32 %v2088, %v2261
    %v2283 = vadd.f32 %v2089, %v2262
    %v2284 = vadd.f32 %v2090, %v2263
    %v2285 = vadd.f32 %v2091, %v2264
    %v2286 = vadd.f32 %v2092, %v2265
    %v2287 = vadd.f32 %v2093, %v2266
    %v2288 = vadd.f32 %v2094, %v2267
    %v2289 = vadd.f32 %v2095, %v2268
    %v2290 = vadd.f32 %v2096, %v2269
    %v2291 = vadd.f32 %v2097, %v2270
    %v2292 = vadd.f32 %v2098, %v2271
    %v2293 = vadd.f32 %v2099, %v2272
    %v2294 = vadd.f32 %v2100, %v2273
    %v2295 = vadd.f32 %v2101, %v2274
    %v2296 = vadd.f32 %v2102, %v2275
    %v2297 = vadd.f32 %v2103, %v2276
    %v2298 = vadd.f32 %v2104, %v2277
    %vm2299 = vcmask 523264
    %v2300 = vsel %vm2299, %v2278, 0.0
    %v2301 = vsel %vm2299, %v2279, 0.0
    %v2302 = vadd.f32 %v2300, %v2301
    %v2303 = vsel %vm2299, %v2280, 0.0
    %v2304 = vadd.f32 %v2302, %v2303
    %v2305 = vsel %vm2299, %v2281, 0.0
    %v2306 = vadd.f32 %v2304, %v2305
    %v2307 = vsel %vm2299, %v2282, 0.0
    %v2308 = vadd.f32 %v2306, %v2307
    %v2309 = vsel %vm2299, %v2283, 0.0
    %v2310 = vadd.f32 %v2308, %v2309
    %v2311 = vsel %vm2299, %v2284, 0.0
    %v2312 = vadd.f32 %v2310, %v2311
    %v2313 = vsel %vm2299, %v2285, 0.0
    %v2314 = vadd.f32 %v2312, %v2313
    %v2315 = vsel %vm2299, %v2286, 0.0
    %v2316 = vadd.f32 %v2314, %v2315
    %v2317 = vsel %vm2299, %v2287, 0.0
    %v2318 = vadd.f32 %v2316, %v2317
    %v2319 = vsel %vm2299, %v2288, 0.0
    %v2320 = vadd.f32 %v2318, %v2319
    %v2321 = vsel %vm2299, %v2289, 0.0
    %v2322 = vadd.f32 %v2320, %v2321
    %v2323 = vsel %vm2299, %v2290, 0.0
    %v2324 = vadd.f32 %v2322, %v2323
    %v2325 = vsel %vm2299, %v2291, 0.0
    %v2326 = vadd.f32 %v2324, %v2325
    %v2327 = vsel %vm2299, %v2292, 0.0
    %v2328 = vadd.f32 %v2326, %v2327
    %v2329 = vsel %vm2299, %v2293, 0.0
    %v2330 = vadd.f32 %v2328, %v2329
    %v2331 = vsel %vm2299, %v2294, 0.0
    %v2332 = vadd.f32 %v2330, %v2331
    %v2333 = vsel %vm2299, %v2295, 0.0
    %v2334 = vadd.f32 %v2332, %v2333
    %v2335 = vsel %vm2299, %v2296, 0.0
    %v2336 = vadd.f32 %v2334, %v2335
    %v2337 = vsel %vm2299, %v2297, 0.0
    %v2338 = vadd.f32 %v2336, %v2337
    %vm2339 = vcmask 517120
    %v2340 = vsel %vm2339, %v2298, 0.0
    %v2341 = vadd.f32 %v2338, %v2340
    %v2342 = vrot.slane %v2341, 4
    %v2343 = vadd.f32 %v2341, %v2342
    %v2344 = vrot.slane %v2343, 2
    %v2345 = vadd.f32 %v2343, %v2344
    %v2346 = vrot.slane %v2345, 1
    %v2347 = vadd.f32 %v2345, %v2346
    %v2348 = vrcp.pop 162.0
    %v2349 = vmul.f32 %v2347, %v2348
    %v2350 = vsub.f32 %v2278, %v2349
    %v2351 = vsub.f32 %v2279, %v2349
    %v2352 = vsub.f32 %v2280, %v2349
    %v2353 = vsub.f32 %v2281, %v2349
    %v2354 = vsub.f32 %v2282, %v2349
    %v2355 = vsub.f32 %v2283, %v2349
    %v2356 = vsub.f32 %v2284, %v2349
    %v2357 = vsub.f32 %v2285, %v2349
    %v2358 = vsub.f32 %v2286, %v2349
    %v2359 = vsub.f32 %v2287, %v2349
    %v2360 = vsub.f32 %v2288, %v2349
    %v2361 = vsub.f32 %v2289, %v2349
    %v2362 = vsub.f32 %v2290, %v2349
    %v2363 = vsub.f32 %v2291, %v2349
    %v2364 = vsub.f32 %v2292, %v2349
    %v2365 = vsub.f32 %v2293, %v2349
    %v2366 = vsub.f32 %v2294, %v2349
    %v2367 = vsub.f32 %v2295, %v2349
    %v2368 = vsub.f32 %v2296, %v2349
    %v2369 = vsub.f32 %v2297, %v2349
    %v2370 = vsub.f32 %v2298, %v2349
    %v2371 = vmul.f32 %v2350, %v2350
    %v2372 = vmul.f32 %v2351, %v2351
    %v2373 = vmul.f32 %v2352, %v2352
    %v2374 = vmul.f32 %v2353, %v2353
    %v2375 = vmul.f32 %v2354, %v2354
    %v2376 = vmul.f32 %v2355, %v2355
    %v2377 = vmul.f32 %v2356, %v2356
    %v2378 = vmul.f32 %v2357, %v2357
    %v2379 = vmul.f32 %v2358, %v2358
    %v2380 = vmul.f32 %v2359, %v2359
    %v2381 = vmul.f32 %v2360, %v2360
    %v2382 = vmul.f32 %v2361, %v2361
    %v2383 = vmul.f32 %v2362, %v2362
    %v2384 = vmul.f32 %v2363, %v2363
    %v2385 = vmul.f32 %v2364, %v2364
    %v2386 = vmul.f32 %v2365, %v2365
    %v2387 = vmul.f32 %v2366, %v2366
    %v2388 = vmul.f32 %v2367, %v2367
    %v2389 = vmul.f32 %v2368, %v2368
    %v2390 = vmul.f32 %v2369, %v2369
    %v2391 = vmul.f32 %v2370, %v2370
    %v2392 = vsel %vm2299, %v2371, 0.0
    %v2393 = vsel %vm2299, %v2372, 0.0
    %v2394 = vadd.f32 %v2392, %v2393
    %v2395 = vsel %vm2299, %v2373, 0.0
    %v2396 = vadd.f32 %v2394, %v2395
    %v2397 = vsel %vm2299, %v2374, 0.0
    %v2398 = vadd.f32 %v2396, %v2397
    %v2399 = vsel %vm2299, %v2375, 0.0
    %v2400 = vadd.f32 %v2398, %v2399
    %v2401 = vsel %vm2299, %v2376, 0.0
    %v2402 = vadd.f32 %v2400, %v2401
    %v2403 = vsel %vm2299, %v2377, 0.0
    %v2404 = vadd.f32 %v2402, %v2403
    %v2405 = vsel %vm2299, %v2378, 0.0
    %v2406 = vadd.f32 %v2404, %v2405
    %v2407 = vsel %vm2299, %v2379, 0.0
    %v2408 = vadd.f32 %v2406, %v2407
    %v2409 = vsel %vm2299, %v2380, 0.0
    %v2410 = vadd.f32 %v2408, %v2409
    %v2411 = vsel %vm2299, %v2381, 0.0
    %v2412 = vadd.f32 %v2410, %v2411
    %v2413 = vsel %vm2299, %v2382, 0.0
    %v2414 = vadd.f32 %v2412, %v2413
    %v2415 = vsel %vm2299, %v2383, 0.0
    %v2416 = vadd.f32 %v2414, %v2415
    %v2417 = vsel %vm2299, %v2384, 0.0
    %v2418 = vadd.f32 %v2416, %v2417
    %v2419 = vsel %vm2299, %v2385, 0.0
    %v2420 = vadd.f32 %v2418, %v2419
    %v2421 = vsel %vm2299, %v2386, 0.0
    %v2422 = vadd.f32 %v2420, %v2421
    %v2423 = vsel %vm2299, %v2387, 0.0
    %v2424 = vadd.f32 %v2422, %v2423
    %v2425 = vsel %vm2299, %v2388, 0.0
    %v2426 = vadd.f32 %v2424, %v2425
    %v2427 = vsel %vm2299, %v2389, 0.0
    %v2428 = vadd.f32 %v2426, %v2427
    %v2429 = vsel %vm2299, %v2390, 0.0
    %v2430 = vadd.f32 %v2428, %v2429
    %v2431 = vsel %vm2339, %v2391, 0.0
    %v2432 = vadd.f32 %v2430, %v2431
    %v2433 = vrot.slane %v2432, 4
    %v2434 = vadd.f32 %v2432, %v2433
    %v2435 = vrot.slane %v2434, 2
    %v2436 = vadd.f32 %v2434, %v2435
    %v2437 = vrot.slane %v2436, 1
    %v2438 = vadd.f32 %v2436, %v2437
    %v2439 = vmul.f32 %v2438, %v2348
    %v2440 = vld [vmem:[%s2 + $0x9] sm:$0x1]
    %v2441 = vadd.f32 %v2439, 1e-05
    %v2442 = vrsqrt.pop %v2441
    %v2443 = vmul.f32 %v2440, %v2442
    %v2444 = vlaneseq
    %v2445 = vshrl.u32 %v2444, 7
    %v2446 = vsub.s32 0, %v2445
    %v2447 = vrot.slane %v2443, %v2446
    %v2448 = vmul.f32 %v2278, %v2447
    %v2449 = vmul.f32 %v2279, %v2447
    %v2450 = vmul.f32 %v2280, %v2447
    %v2451 = vmul.f32 %v2281, %v2447
    %v2452 = vmul.f32 %v2282, %v2447
    %v2453 = vmul.f32 %v2283, %v2447
    %v2454 = vmul.f32 %v2284, %v2447
    %v2455 = vmul.f32 %v2285, %v2447
    %v2456 = vmul.f32 %v2286, %v2447
    %v2457 = vmul.f32 %v2287, %v2447
    %v2458 = vmul.f32 %v2288, %v2447
    %v2459 = vmul.f32 %v2289, %v2447
    %v2460 = vmul.f32 %v2290, %v2447
    %v2461 = vmul.f32 %v2291, %v2447
    %v2462 = vmul.f32 %v2292, %v2447
    %v2463 = vmul.f32 %v2293, %v2447
    %v2464 = vmul.f32 %v2294, %v2447
    %v2465 = vmul.f32 %v2295, %v2447
    %v2466 = vmul.f32 %v2296, %v2447
    %v2467 = vmul.f32 %v2297, %v2447
    %v2468 = vmul.f32 %v2298, %v2447
    %v2469 = vld [vmem:[%s2 + $0xa] sm:$0x1]
    %v2470 = vmul.f32 %v2349, %v2443
    %v2471 = vsub.f32 %v2469, %v2470
    %v2472 = vlaneseq
    %v2473 = vshrl.u32 %v2472, 7
    %v2474 = vsub.s32 0, %v2473
    %v2475 = vrot.slane %v2471, %v2474
    %v2476 = vadd.f32 %v2448, %v2475
    %v2477 = vadd.f32 %v2449, %v2475
    %v2478 = vadd.f32 %v2450, %v2475
    %v2479 = vadd.f32 %v2451, %v2475
    %v2480 = vadd.f32 %v2452, %v2475
    %v2481 = vadd.f32 %v2453, %v2475
    %v2482 = vadd.f32 %v2454, %v2475
    %v2483 = vadd.f32 %v2455, %v2475
    %v2484 = vadd.f32 %v2456, %v2475
    %v2485 = vadd.f32 %v2457, %v2475
    %v2486 = vadd.f32 %v2458, %v2475
    %v2487 = vadd.f32 %v2459, %v2475
    %v2488 = vadd.f32 %v2460, %v2475
    %v2489 = vadd.f32 %v2461, %v2475
    %v2490 = vadd.f32 %v2462, %v2475
    %v2491 = vadd.f32 %v2463, %v2475
    %v2492 = vadd.f32 %v2464, %v2475
    %v2493 = vadd.f32 %v2465, %v2475
    %v2494 = vadd.f32 %v2466, %v2475
    %v2495 = vadd.f32 %v2467, %v2475
    %v2496 = vadd.f32 %v2468, %v2475
    %v2497 = vmax.f32 %v2476, 0.0
    %v2498 = vmax.f32 %v2477, 0.0
    %v2499 = vmax.f32 %v2478, 0.0
    %v2500 = vmax.f32 %v2479, 0.0
    %v2501 = vmax.f32 %v2480, 0.0
    %v2502 = vmax.f32 %v2481, 0.0
    %v2503 = vmax.f32 %v2482, 0.0
    %v2504 = vmax.f32 %v2483, 0.0
    %v2505 = vmax.f32 %v2484, 0.0
    %v2506 = vmax.f32 %v2485, 0.0
    %v2507 = vmax.f32 %v2486, 0.0
    %v2508 = vmax.f32 %v2487, 0.0
    %v2509 = vmax.f32 %v2488, 0.0
    %v2510 = vmax.f32 %v2489, 0.0
    %v2511 = vmax.f32 %v2490, 0.0
    %v2512 = vmax.f32 %v2491, 0.0
    %v2513 = vmax.f32 %v2492, 0.0
    %v2514 = vmax.f32 %v2493, 0.0
    %v2515 = vmax.f32 %v2494, 0.0
    %v2516 = vmax.f32 %v2495, 0.0
    %v2517 = vmax.f32 %v2496, 0.0
    %2518 = vst.msk [vmem:[#allocation3] sm:$0xff] %vm2299, 0.0
    %2519 = vst.msk [vmem:[#allocation3 + $0x8] sm:$0xff] %vm2299, 0.0
    %2520 = vst.msk [vmem:[#allocation3 + $0xb2] sm:$0xff] %vm2299, 0.0
    %2521 = vst.msk [vmem:[#allocation3 + $0xba] sm:$0xff] %vm2299, 0.0
    %2522 = vst.msk [vmem:[#allocation3 + $0x10] sm:$0xff] %vm2299, %v2497
    %2523 = vst.msk [vmem:[#allocation3 + $0x18] sm:$0xff] %vm2299, %v2498
    %2524 = vst.msk [vmem:[#allocation3 + $0x20] sm:$0xff] %vm2299, %v2499
    %2525 = vst.msk [vmem:[#allocation3 + $0x28] sm:$0xff] %vm2299, %v2500
    %2526 = vst.msk [vmem:[#allocation3 + $0x30] sm:$0xff] %vm2299, %v2501
    %2527 = vst.msk [vmem:[#allocation3 + $0x38] sm:$0xff] %vm2299, %v2502
    %2528 = vst.msk [vmem:[#allocation3 + $0x40] sm:$0xff] %vm2299, %v2503
    %2529 = vst.msk [vmem:[#allocation3 + $0x48] sm:$0xff] %vm2299, %v2504
    %2530 = vst.msk [vmem:[#allocation3 + $0x50] sm:$0xff] %vm2299, %v2505
    %2531 = vst.msk [vmem:[#allocation3 + $0x58] sm:$0xff] %vm2299, %v2506
    %2532 = vst.msk [vmem:[#allocation3 + $0x60] sm:$0xff] %vm2299, %v2507
    %2533 = vst.msk [vmem:[#allocation3 + $0x68] sm:$0xff] %vm2299, %v2508
    %2534 = vst.msk [vmem:[#allocation3 + $0x70] sm:$0xff] %vm2299, %v2509
    %2535 = vst.msk [vmem:[#allocation3 + $0x78] sm:$0xff] %vm2299, %v2510
    %2536 = vst.msk [vmem:[#allocation3 + $0x80] sm:$0xff] %vm2299, %v2511
    %2537 = vst.msk [vmem:[#allocation3 + $0x88] sm:$0xff] %vm2299, %v2512
    %2538 = vst.msk [vmem:[#allocation3 + $0x90] sm:$0xff] %vm2299, %v2513
    %2539 = vst.msk [vmem:[#allocation3 + $0x98] sm:$0xff] %vm2299, %v2514
    %2540 = vst.msk [vmem:[#allocation3 + $0xa0] sm:$0xff] %vm2299, %v2515
    %2541 = vst.msk [vmem:[#allocation3 + $0xa8] sm:$0xff] %vm2299, %v2516
    %2542 = vst.msk [vmem:[#allocation3 + $0xb0] sm:$0x3] %vm2339, %v2517
    %v2543 = vld [vmem:[#allocation3 + $0x6] sm:$0xff]
    %v2544 = vld [vmem:[#allocation3 + $0xe] sm:$0xff]
    %v2545 = vld [vmem:[#allocation3 + $0x16] sm:$0xff]
    %v2546 = vld [vmem:[#allocation3 + $0x1e] sm:$0xff]
    %v2547 = vld [vmem:[#allocation3 + $0x26] sm:$0xff]
    %v2548 = vld [vmem:[#allocation3 + $0x2e] sm:$0xff]
    %v2549 = vld [vmem:[#allocation3 + $0x36] sm:$0xff]
    %v2550 = vld [vmem:[#allocation3 + $0x3e] sm:$0xff]
    %v2551 = vld [vmem:[#allocation3 + $0x46] sm:$0xff]
    %v2552 = vld [vmem:[#allocation3 + $0x4e] sm:$0xff]
    %v2553 = vld [vmem:[#allocation3 + $0x56] sm:$0xff]
    %v2554 = vld [vmem:[#allocation3 + $0x5e] sm:$0xff]
    %v2555 = vld [vmem:[#allocation3 + $0x66] sm:$0xff]
    %v2556 = vld [vmem:[#allocation3 + $0x6e] sm:$0xff]
    %v2557 = vld [vmem:[#allocation3 + $0x76] sm:$0xff]
    %v2558 = vld [vmem:[#allocation3 + $0x7e] sm:$0xff]
    %v2559 = vld [vmem:[#allocation3 + $0x86] sm:$0xff]
    %v2560 = vld [vmem:[#allocation3 + $0x8e] sm:$0xff]
    %v2561 = vld [vmem:[#allocation3 + $0x96] sm:$0xff]
    %v2562 = vld [vmem:[#allocation3 + $0x9e] sm:$0xff]
    %v2563 = vld [vmem:[#allocation3 + $0xa6] sm:$0x3]
    %v2564 = vmul.f32 %v2543, %v442
    %v2565 = vmul.f32 %v2544, %v443
    %v2566 = vmul.f32 %v2545, %v444
    %v2567 = vmul.f32 %v2546, %v445
    %v2568 = vmul.f32 %v2547, %v446
    %v2569 = vmul.f32 %v2548, %v447
    %v2570 = vmul.f32 %v2549, %v448
    %v2571 = vmul.f32 %v2550, %v449
    %v2572 = vmul.f32 %v2551, %v450
    %v2573 = vmul.f32 %v2552, %v451
    %v2574 = vmul.f32 %v2553, %v452
    %v2575 = vmul.f32 %v2554, %v453
    %v2576 = vmul.f32 %v2555, %v454
    %v2577 = vmul.f32 %v2556, %v455
    %v2578 = vmul.f32 %v2557, %v456
    %v2579 = vmul.f32 %v2558, %v457
    %v2580 = vmul.f32 %v2559, %v458
    %v2581 = vmul.f32 %v2560, %v459
    %v2582 = vmul.f32 %v2561, %v460
    %v2583 = vmul.f32 %v2562, %v461
    %v2584 = vmul.f32 %v2563, %v462
    %v2585 = vld [vmem:[%s3] sm:$0xff]
    %v2586 = vld [vmem:[%s3 + $0x8] sm:$0xff]
    %v2587 = vld [vmem:[%s3 + $0x10] sm:$0xff]
    %v2588 = vld [vmem:[%s3 + $0x18] sm:$0xff]
    %v2589 = vld [vmem:[%s3 + $0x20] sm:$0xff]
    %v2590 = vld [vmem:[%s3 + $0x28] sm:$0xff]
    %v2591 = vld [vmem:[%s3 + $0x30] sm:$0xff]
    %v2592 = vld [vmem:[%s3 + $0x38] sm:$0xff]
    %v2593 = vld [vmem:[#allocation3 + $0x7] sm:$0xff]
    %v2594 = vld [vmem:[#allocation3 + $0xf] sm:$0xff]
    %v2595 = vld [vmem:[#allocation3 + $0x17] sm:$0xff]
    %v2596 = vld [vmem:[#allocation3 + $0x1f] sm:$0xff]
    %v2597 = vld [vmem:[#allocation3 + $0x27] sm:$0xff]
    %v2598 = vld [vmem:[#allocation3 + $0x2f] sm:$0xff]
    %v2599 = vld [vmem:[#allocation3 + $0x37] sm:$0xff]
    %v2600 = vld [vmem:[#allocation3 + $0x3f] sm:$0xff]
    %v2601 = vld [vmem:[#allocation3 + $0x47] sm:$0xff]
    %v2602 = vld [vmem:[#allocation3 + $0x4f] sm:$0xff]
    %v2603 = vld [vmem:[#allocation3 + $0x57] sm:$0xff]
    %v2604 = vld [vmem:[#allocation3 + $0x5f] sm:$0xff]
    %v2605 = vld [vmem:[#allocation3 + $0x67] sm:$0xff]
    %v2606 = vld [vmem:[#allocation3 + $0x6f] sm:$0xff]
    %v2607 = vld [vmem:[#allocation3 + $0x77] sm:$0xff]
    %v2608 = vld [vmem:[#allocation3 + $0x7f] sm:$0xff]
    %v2609 = vld [vmem:[#allocation3 + $0x87] sm:$0xff]
    %v2610 = vld [vmem:[#allocation3 + $0x8f] sm:$0xff]
    %v2611 = vld [vmem:[#allocation3 + $0x97] sm:$0xff]
    %v2612 = vld [vmem:[#allocation3 + $0x9f] sm:$0xff]
    %v2613 = vld [vmem:[#allocation3 + $0xa7] sm:$0x3]
    %v2614 = vmul.f32 %v2593, %v295
    %v2615 = vmul.f32 %v2594, %v296
    %v2616 = vmul.f32 %v2595, %v297
    %v2617 = vmul.f32 %v2596, %v298
    %v2618 = vmul.f32 %v2597, %v299
    %v2619 = vmul.f32 %v2598, %v300
    %v2620 = vmul.f32 %v2599, %v301
    %v2621 = vmul.f32 %v2600, %v302
    %v2622 = vmul.f32 %v2601, %v303
    %v2623 = vmul.f32 %v2602, %v304
    %v2624 = vmul.f32 %v2603, %v305
    %v2625 = vmul.f32 %v2604, %v306
    %v2626 = vmul.f32 %v2605, %v307
    %v2627 = vmul.f32 %v2606, %v308
    %v2628 = vmul.f32 %v2607, %v309
    %v2629 = vmul.f32 %v2608, %v310
    %v2630 = vmul.f32 %v2609, %v311
    %v2631 = vmul.f32 %v2610, %v312
    %v2632 = vmul.f32 %v2611, %v313
    %v2633 = vmul.f32 %v2612, %v314
    %v2634 = vmul.f32 %v2613, %v315
    %s2635 = scalar_lea.vmem %s3, 64
    %v2636 = vld [vmem:[%s2635] sm:$0xff]
    %v2637 = vld [vmem:[%s2635 + $0x8] sm:$0xff]
    %v2638 = vld [vmem:[%s2635 + $0x10] sm:$0xff]
    %v2639 = vld [vmem:[%s2635 + $0x18] sm:$0xff]
    %v2640 = vld [vmem:[%s2635 + $0x20] sm:$0xff]
    %v2641 = vld [vmem:[%s2635 + $0x28] sm:$0xff]
    %v2642 = vld [vmem:[%s2635 + $0x30] sm:$0xff]
    %v2643 = vld [vmem:[%s2635 + $0x38] sm:$0xff]
    %v2645 = vsel %vm2299, %v2614, 0
    %v2648 = vsel %vm2299, %v2615, 0
    %v2651 = vsel %vm2299, %v2616, 0
    %v2654 = vsel %vm2299, %v2617, 0
    %v2657 = vsel %vm2299, %v2618, 0
    %v2660 = vsel %vm2299, %v2619, 0
    %v2663 = vsel %vm2299, %v2620, 0
    %v2666 = vsel %vm2299, %v2621, 0
    %v2669 = vsel %vm2299, %v2622, 0
    %v2672 = vsel %vm2299, %v2623, 0
    %v2675 = vsel %vm2299, %v2624, 0
    %v2678 = vsel %vm2299, %v2625, 0
    %v2681 = vsel %vm2299, %v2626, 0
    %v2684 = vsel %vm2299, %v2627, 0
    %v2687 = vsel %vm2299, %v2628, 0
    %v2690 = vsel %vm2299, %v2629, 0
    %v2693 = vsel %vm2299, %v2630, 0
    %v2696 = vsel %vm2299, %v2631, 0
    %v2699 = vsel %vm2299, %v2632, 0
    %v2702 = vsel %vm2299, %v2633, 0
    %v2705 = vsel %vm2299, %v2634, 0
    %2707 = vmatprep.subr.mxu0 0.0
    %2708 = vmatpush1.msra.mxu0 0.0
    %2709 = vmatprep.subr.mxu0 0.0
    %2710 = vmatpush1.msra.mxu0 0.0
    %2711 = vmatprep.subr.mxu0 0.0
    %2712 = vmatpush1.msra.mxu0 0.0
    %2713 = vmatprep.subr.mxu0 0.0
    %2714 = vmatpush1.msra.mxu0 0.0
    %2715 = vmatprep.subr.mxu0 0.0
    %2716 = vmatpush1.msra.mxu0 0.0
    %2717 = vmatprep.subr.mxu0 0.0
    %2718 = vmatpush1.msra.mxu0 0.0
    %2719 = vmatprep.subr.mxu0 0.0
    %2720 = vmatpush1.msra.mxu0 0.0
    %2721 = vmatprep.subr.mxu0 0.0
    %2722 = vmatpush1.msra.mxu0 0.0
    %2723 = vmatprep.subr.mxu0 0.0
    %2724 = vmatpush1.msra.mxu0 %v2643
    %2725 = vmatprep.subr.mxu0 0.0
    %2726 = vmatpush1.msra.mxu0 %v2642
    %2727 = vmatprep.subr.mxu0 0.0
    %2728 = vmatpush1.msra.mxu0 %v2641
    %2729 = vmatprep.subr.mxu0 0.0
    %2730 = vmatpush1.msra.mxu0 %v2640
    %2731 = vmatprep.subr.mxu0 0.0
    %2732 = vmatpush1.msra.mxu0 %v2639
    %2733 = vmatprep.subr.mxu0 0.0
    %2734 = vmatpush1.msra.mxu0 %v2638
    %2735 = vmatprep.subr.mxu0 0.0
    %2736 = vmatpush1.msra.mxu0 %v2637
    %2737 = vmatprep.subr.mxu0 0.0
    %2738 = vmatpush1.msra.mxu0 %v2636
    %2739 = vmatprep.subr.mxu0 0.0
    %2740 = vmatpush2.msra.mxu0 0.0
    %2741 = vmatprep.subr.mxu0 0.0
    %2742 = vmatpush2.msra.mxu0 0.0
    %2743 = vmatprep.subr.mxu0 0.0
    %2744 = vmatpush2.msra.mxu0 0.0
    %2745 = vmatprep.subr.mxu0 0.0
    %2746 = vmatpush2.msra.mxu0 0.0
    %2747 = vmatprep.subr.mxu0 0.0
    %2748 = vmatpush2.msra.mxu0 0.0
    %2749 = vmatprep.subr.mxu0 0.0
    %2750 = vmatpush2.msra.mxu0 0.0
    %2751 = vmatprep.subr.mxu0 0.0
    %2752 = vmatpush2.msra.mxu0 0.0
    %2753 = vmatprep.subr.mxu0 0.0
    %2754 = vmatpush2.msra.mxu0 0.0
    %2755 = vmatprep.subr.mxu0 0.0
    %2756 = vmatpush2.msra.mxu0 0.0
    %2757 = vmatprep.subr.mxu0 0.0
    %2758 = vmatpush2.msra.mxu0 0.0
    %2759 = vmatprep.subr.mxu0 0.0
    %2760 = vmatpush2.msra.mxu0 0.0
    %2761 = vmatprep.subr.mxu0 0.0
    %2762 = vmatpush2.msra.mxu0 0.0
    %2763 = vmatprep.subr.mxu0 0.0
    %2764 = vmatpush2.msra.mxu0 0.0
    %2765 = vmatprep.subr.mxu0 0.0
    %2766 = vmatpush2.msra.mxu0 0.0
    %2767 = vmatprep.subr.mxu0 0.0
    %2768 = vmatpush2.msra.mxu0 0.0
    %2769 = vmatprep.subr.mxu0 0.0
    %2770 = vmatpush2.msra.mxu0 0.0
    %2771 = vmatprep.mubr.f32.mxu0 0.0
    %2772 = vmatmul.mubr.f32.gmra.mxu0 %v2645
    %v2773 = vpop.f32.mrf.mxu0
    %v2774 = vadd.f32 0.0, %v2773
    %v2775 = vpop.f32.mrf.mxu0
    %2776 = vmatprep.mubr.f32.mxu0 0.0
    %2777 = vmatmul.mubr.f32.gmra.mxu0 %v2648
    %v2778 = vpop.f32.mrf.mxu0
    %v2779 = vadd.f32 0.0, %v2778
    %v2780 = vpop.f32.mrf.mxu0
    %2781 = vmatprep.mubr.f32.mxu0 0.0
    %2782 = vmatmul.mubr.f32.gmra.mxu0 %v2651
    %v2783 = vpop.f32.mrf.mxu0
    %v2784 = vadd.f32 0.0, %v2783
    %v2785 = vpop.f32.mrf.mxu0
    %2786 = vmatprep.mubr.f32.mxu0 0.0
    %2787 = vmatmul.mubr.f32.gmra.mxu0 %v2654
    %v2788 = vpop.f32.mrf.mxu0
    %v2789 = vadd.f32 0.0, %v2788
    %v2790 = vpop.f32.mrf.mxu0
    %2791 = vmatprep.mubr.f32.mxu0 0.0
    %2792 = vmatmul.mubr.f32.gmra.mxu0 %v2657
    %v2793 = vpop.f32.mrf.mxu0
    %v2794 = vadd.f32 0.0, %v2793
    %v2795 = vpop.f32.mrf.mxu0
    %2796 = vmatprep.mubr.f32.mxu0 0.0
    %2797 = vmatmul.mubr.f32.gmra.mxu0 %v2660
    %v2798 = vpop.f32.mrf.mxu0
    %v2799 = vadd.f32 0.0, %v2798
    %v2800 = vpop.f32.mrf.mxu0
    %2801 = vmatprep.mubr.f32.mxu0 0.0
    %2802 = vmatmul.mubr.f32.gmra.mxu0 %v2663
    %v2803 = vpop.f32.mrf.mxu0
    %v2804 = vadd.f32 0.0, %v2803
    %v2805 = vpop.f32.mrf.mxu0
    %2806 = vmatprep.mubr.f32.mxu0 0.0
    %2807 = vmatmul.mubr.f32.gmra.mxu0 %v2666
    %v2808 = vpop.f32.mrf.mxu0
    %v2809 = vadd.f32 0.0, %v2808
    %v2810 = vpop.f32.mrf.mxu0
    %2811 = vmatprep.mubr.f32.mxu0 0.0
    %2812 = vmatmul.mubr.f32.gmra.mxu0 %v2669
    %v2813 = vpop.f32.mrf.mxu0
    %v2814 = vadd.f32 0.0, %v2813
    %v2815 = vpop.f32.mrf.mxu0
    %2816 = vmatprep.mubr.f32.mxu0 0.0
    %2817 = vmatmul.mubr.f32.gmra.mxu0 %v2672
    %v2818 = vpop.f32.mrf.mxu0
    %v2819 = vadd.f32 0.0, %v2818
    %v2820 = vpop.f32.mrf.mxu0
    %2821 = vmatprep.mubr.f32.mxu0 0.0
    %2822 = vmatmul.mubr.f32.gmra.mxu0 %v2675
    %v2823 = vpop.f32.mrf.mxu0
    %v2824 = vadd.f32 0.0, %v2823
    %v2825 = vpop.f32.mrf.mxu0
    %2826 = vmatprep.mubr.f32.mxu0 0.0
    %2827 = vmatmul.mubr.f32.gmra.mxu0 %v2678
    %v2828 = vpop.f32.mrf.mxu0
    %v2829 = vadd.f32 0.0, %v2828
    %v2830 = vpop.f32.mrf.mxu0
    %2831 = vmatprep.mubr.f32.mxu0 0.0
    %2832 = vmatmul.mubr.f32.gmra.mxu0 %v2681
    %v2833 = vpop.f32.mrf.mxu0
    %v2834 = vadd.f32 0.0, %v2833
    %v2835 = vpop.f32.mrf.mxu0
    %2836 = vmatprep.mubr.f32.mxu0 0.0
    %2837 = vmatmul.mubr.f32.gmra.mxu0 %v2684
    %v2838 = vpop.f32.mrf.mxu0
    %v2839 = vadd.f32 0.0, %v2838
    %v2840 = vpop.f32.mrf.mxu0
    %2841 = vmatprep.mubr.f32.mxu0 0.0
    %2842 = vmatmul.mubr.f32.gmra.mxu0 %v2687
    %v2843 = vpop.f32.mrf.mxu0
    %v2844 = vadd.f32 0.0, %v2843
    %v2845 = vpop.f32.mrf.mxu0
    %2846 = vmatprep.mubr.f32.mxu0 0.0
    %2847 = vmatmul.mubr.f32.gmra.mxu0 %v2690
    %v2848 = vpop.f32.mrf.mxu0
    %v2849 = vadd.f32 0.0, %v2848
    %v2850 = vpop.f32.mrf.mxu0
    %2851 = vmatprep.mubr.f32.mxu0 0.0
    %2852 = vmatmul.mubr.f32.gmra.mxu0 %v2693
    %v2853 = vpop.f32.mrf.mxu0
    %v2854 = vadd.f32 0.0, %v2853
    %v2855 = vpop.f32.mrf.mxu0
    %2856 = vmatprep.mubr.f32.mxu0 0.0
    %2857 = vmatmul.mubr.f32.gmra.mxu0 %v2696
    %v2858 = vpop.f32.mrf.mxu0
    %v2859 = vadd.f32 0.0, %v2858
    %v2860 = vpop.f32.mrf.mxu0
    %2861 = vmatprep.mubr.f32.mxu0 0.0
    %2862 = vmatmul.mubr.f32.gmra.mxu0 %v2699
    %v2863 = vpop.f32.mrf.mxu0
    %v2864 = vadd.f32 0.0, %v2863
    %v2865 = vpop.f32.mrf.mxu0
    %2866 = vmatprep.mubr.f32.mxu0 0.0
    %2867 = vmatmul.mubr.f32.gmra.mxu0 %v2702
    %v2868 = vpop.f32.mrf.mxu0
    %v2869 = vadd.f32 0.0, %v2868
    %v2870 = vpop.f32.mrf.mxu0
    %2871 = vmatprep.mubr.f32.mxu0 0.0
    %2872 = vmatmul.mubr.f32.gmra.mxu0 %v2705
    %v2873 = vpop.f32.mrf.mxu0
    %v2874 = vadd.f32 0.0, %v2873
    %v2875 = vpop.f32.mrf.mxu0
    %2876 = vdwg.mxu0
    %v2878 = vsel %vm2299, %v2564, 0
    %v2881 = vsel %vm2299, %v2565, 0
    %v2884 = vsel %vm2299, %v2566, 0
    %v2887 = vsel %vm2299, %v2567, 0
    %v2890 = vsel %vm2299, %v2568, 0
    %v2893 = vsel %vm2299, %v2569, 0
    %v2896 = vsel %vm2299, %v2570, 0
    %v2899 = vsel %vm2299, %v2571, 0
    %v2902 = vsel %vm2299, %v2572, 0
    %v2905 = vsel %vm2299, %v2573, 0
    %v2908 = vsel %vm2299, %v2574, 0
    %v2911 = vsel %vm2299, %v2575, 0
    %v2914 = vsel %vm2299, %v2576, 0
    %v2917 = vsel %vm2299, %v2577, 0
    %v2920 = vsel %vm2299, %v2578, 0
    %v2923 = vsel %vm2299, %v2579, 0
    %v2926 = vsel %vm2299, %v2580, 0
    %v2929 = vsel %vm2299, %v2581, 0
    %v2932 = vsel %vm2299, %v2582, 0
    %v2935 = vsel %vm2299, %v2583, 0
    %v2938 = vsel %vm2299, %v2584, 0
    %2940 = vmatprep.subr.mxu0 0.0
    %2941 = vmatpush1.msra.mxu0 0.0
    %2942 = vmatprep.subr.mxu0 0.0
    %2943 = vmatpush1.msra.mxu0 0.0
    %2944 = vmatprep.subr.mxu0 0.0
    %2945 = vmatpush1.msra.mxu0 0.0
    %2946 = vmatprep.subr.mxu0 0.0
    %2947 = vmatpush1.msra.mxu0 0.0
    %2948 = vmatprep.subr.mxu0 0.0
    %2949 = vmatpush1.msra.mxu0 0.0
    %2950 = vmatprep.subr.mxu0 0.0
    %2951 = vmatpush1.msra.mxu0 0.0
    %2952 = vmatprep.subr.mxu0 0.0
    %2953 = vmatpush1.msra.mxu0 0.0
    %2954 = vmatprep.subr.mxu0 0.0
    %2955 = vmatpush1.msra.mxu0 0.0
    %2956 = vmatprep.subr.mxu0 0.0
    %2957 = vmatpush1.msra.mxu0 %v2592
    %2958 = vmatprep.subr.mxu0 0.0
    %2959 = vmatpush1.msra.mxu0 %v2591
    %2960 = vmatprep.subr.mxu0 0.0
    %2961 = vmatpush1.msra.mxu0 %v2590
    %2962 = vmatprep.subr.mxu0 0.0
    %2963 = vmatpush1.msra.mxu0 %v2589
    %2964 = vmatprep.subr.mxu0 0.0
    %2965 = vmatpush1.msra.mxu0 %v2588
    %2966 = vmatprep.subr.mxu0 0.0
    %2967 = vmatpush1.msra.mxu0 %v2587
    %2968 = vmatprep.subr.mxu0 0.0
    %2969 = vmatpush1.msra.mxu0 %v2586
    %2970 = vmatprep.subr.mxu0 0.0
    %2971 = vmatpush1.msra.mxu0 %v2585
    %2972 = vmatprep.subr.mxu0 0.0
    %2973 = vmatpush2.msra.mxu0 0.0
    %2974 = vmatprep.subr.mxu0 0.0
    %2975 = vmatpush2.msra.mxu0 0.0
    %2976 = vmatprep.subr.mxu0 0.0
    %2977 = vmatpush2.msra.mxu0 0.0
    %2978 = vmatprep.subr.mxu0 0.0
    %2979 = vmatpush2.msra.mxu0 0.0
    %2980 = vmatprep.subr.mxu0 0.0
    %2981 = vmatpush2.msra.mxu0 0.0
    %2982 = vmatprep.subr.mxu0 0.0
    %2983 = vmatpush2.msra.mxu0 0.0
    %2984 = vmatprep.subr.mxu0 0.0
    %2985 = vmatpush2.msra.mxu0 0.0
    %2986 = vmatprep.subr.mxu0 0.0
    %2987 = vmatpush2.msra.mxu0 0.0
    %2988 = vmatprep.subr.mxu0 0.0
    %2989 = vmatpush2.msra.mxu0 0.0
    %2990 = vmatprep.subr.mxu0 0.0
    %2991 = vmatpush2.msra.mxu0 0.0
    %2992 = vmatprep.subr.mxu0 0.0
    %2993 = vmatpush2.msra.mxu0 0.0
    %2994 = vmatprep.subr.mxu0 0.0
    %2995 = vmatpush2.msra.mxu0 0.0
    %2996 = vmatprep.subr.mxu0 0.0
    %2997 = vmatpush2.msra.mxu0 0.0
    %2998 = vmatprep.subr.mxu0 0.0
    %2999 = vmatpush2.msra.mxu0 0.0
    %3000 = vmatprep.subr.mxu0 0.0
    %3001 = vmatpush2.msra.mxu0 0.0
    %3002 = vmatprep.subr.mxu0 0.0
    %3003 = vmatpush2.msra.mxu0 0.0
    %3004 = vmatprep.mubr.f32.mxu0 0.0
    %3005 = vmatmul.mubr.f32.gmra.mxu0 %v2878
    %v3006 = vpop.f32.mrf.mxu0
    %v3007 = vadd.f32 %v2774, %v3006
    %v3008 = vpop.f32.mrf.mxu0
    %3009 = vmatprep.mubr.f32.mxu0 0.0
    %3010 = vmatmul.mubr.f32.gmra.mxu0 %v2881
    %v3011 = vpop.f32.mrf.mxu0
    %v3012 = vadd.f32 %v2779, %v3011
    %v3013 = vpop.f32.mrf.mxu0
    %3014 = vmatprep.mubr.f32.mxu0 0.0
    %3015 = vmatmul.mubr.f32.gmra.mxu0 %v2884
    %v3016 = vpop.f32.mrf.mxu0
    %v3017 = vadd.f32 %v2784, %v3016
    %v3018 = vpop.f32.mrf.mxu0
    %3019 = vmatprep.mubr.f32.mxu0 0.0
    %3020 = vmatmul.mubr.f32.gmra.mxu0 %v2887
    %v3021 = vpop.f32.mrf.mxu0
    %v3022 = vadd.f32 %v2789, %v3021
    %v3023 = vpop.f32.mrf.mxu0
    %3024 = vmatprep.mubr.f32.mxu0 0.0
    %3025 = vmatmul.mubr.f32.gmra.mxu0 %v2890
    %v3026 = vpop.f32.mrf.mxu0
    %v3027 = vadd.f32 %v2794, %v3026
    %v3028 = vpop.f32.mrf.mxu0
    %3029 = vmatprep.mubr.f32.mxu0 0.0
    %3030 = vmatmul.mubr.f32.gmra.mxu0 %v2893
    %v3031 = vpop.f32.mrf.mxu0
    %v3032 = vadd.f32 %v2799, %v3031
    %v3033 = vpop.f32.mrf.mxu0
    %3034 = vmatprep.mubr.f32.mxu0 0.0
    %3035 = vmatmul.mubr.f32.gmra.mxu0 %v2896
    %v3036 = vpop.f32.mrf.mxu0
    %v3037 = vadd.f32 %v2804, %v3036
    %v3038 = vpop.f32.mrf.mxu0
    %3039 = vmatprep.mubr.f32.mxu0 0.0
    %3040 = vmatmul.mubr.f32.gmra.mxu0 %v2899
    %v3041 = vpop.f32.mrf.mxu0
    %v3042 = vadd.f32 %v2809, %v3041
    %v3043 = vpop.f32.mrf.mxu0
    %3044 = vmatprep.mubr.f32.mxu0 0.0
    %3045 = vmatmul.mubr.f32.gmra.mxu0 %v2902
    %v3046 = vpop.f32.mrf.mxu0
    %v3047 = vadd.f32 %v2814, %v3046
    %v3048 = vpop.f32.mrf.mxu0
    %3049 = vmatprep.mubr.f32.mxu0 0.0
    %3050 = vmatmul.mubr.f32.gmra.mxu0 %v2905
    %v3051 = vpop.f32.mrf.mxu0
    %v3052 = vadd.f32 %v2819, %v3051
    %v3053 = vpop.f32.mrf.mxu0
    %3054 = vmatprep.mubr.f32.mxu0 0.0
    %3055 = vmatmul.mubr.f32.gmra.mxu0 %v2908
    %v3056 = vpop.f32.mrf.mxu0
    %v3057 = vadd.f32 %v2824, %v3056
    %v3058 = vpop.f32.mrf.mxu0
    %3059 = vmatprep.mubr.f32.mxu0 0.0
    %3060 = vmatmul.mubr.f32.gmra.mxu0 %v2911
    %v3061 = vpop.f32.mrf.mxu0
    %v3062 = vadd.f32 %v2829, %v3061
    %v3063 = vpop.f32.mrf.mxu0
    %3064 = vmatprep.mubr.f32.mxu0 0.0
    %3065 = vmatmul.mubr.f32.gmra.mxu0 %v2914
    %v3066 = vpop.f32.mrf.mxu0
    %v3067 = vadd.f32 %v2834, %v3066
    %v3068 = vpop.f32.mrf.mxu0
    %3069 = vmatprep.mubr.f32.mxu0 0.0
    %3070 = vmatmul.mubr.f32.gmra.mxu0 %v2917
    %v3071 = vpop.f32.mrf.mxu0
    %v3072 = vadd.f32 %v2839, %v3071
    %v3073 = vpop.f32.mrf.mxu0
    %3074 = vmatprep.mubr.f32.mxu0 0.0
    %3075 = vmatmul.mubr.f32.gmra.mxu0 %v2920
    %v3076 = vpop.f32.mrf.mxu0
    %v3077 = vadd.f32 %v2844, %v3076
    %v3078 = vpop.f32.mrf.mxu0
    %3079 = vmatprep.mubr.f32.mxu0 0.0
    %3080 = vmatmul.mubr.f32.gmra.mxu0 %v2923
    %v3081 = vpop.f32.mrf.mxu0
    %v3082 = vadd.f32 %v2849, %v3081
    %v3083 = vpop.f32.mrf.mxu0
    %3084 = vmatprep.mubr.f32.mxu0 0.0
    %3085 = vmatmul.mubr.f32.gmra.mxu0 %v2926
    %v3086 = vpop.f32.mrf.mxu0
    %v3087 = vadd.f32 %v2854, %v3086
    %v3088 = vpop.f32.mrf.mxu0
    %3089 = vmatprep.mubr.f32.mxu0 0.0
    %3090 = vmatmul.mubr.f32.gmra.mxu0 %v2929
    %v3091 = vpop.f32.mrf.mxu0
    %v3092 = vadd.f32 %v2859, %v3091
    %v3093 = vpop.f32.mrf.mxu0
    %3094 = vmatprep.mubr.f32.mxu0 0.0
    %3095 = vmatmul.mubr.f32.gmra.mxu0 %v2932
    %v3096 = vpop.f32.mrf.mxu0
    %v3097 = vadd.f32 %v2864, %v3096
    %v3098 = vpop.f32.mrf.mxu0
    %3099 = vmatprep.mubr.f32.mxu0 0.0
    %3100 = vmatmul.mubr.f32.gmra.mxu0 %v2935
    %v3101 = vpop.f32.mrf.mxu0
    %v3102 = vadd.f32 %v2869, %v3101
    %v3103 = vpop.f32.mrf.mxu0
    %3104 = vmatprep.mubr.f32.mxu0 0.0
    %3105 = vmatmul.mubr.f32.gmra.mxu0 %v2938
    %v3106 = vpop.f32.mrf.mxu0
    %v3107 = vadd.f32 %v2874, %v3106
    %v3108 = vpop.f32.mrf.mxu0
    %3109 = vdwg.mxu0
    %v3110 = vld [vmem:[#allocation3 + $0x8] sm:$0xff]
    %v3111 = vld [vmem:[#allocation3 + $0x10] sm:$0xff]
    %v3112 = vld [vmem:[#allocation3 + $0x18] sm:$0xff]
    %v3113 = vld [vmem:[#allocation3 + $0x20] sm:$0xff]
    %v3114 = vld [vmem:[#allocation3 + $0x28] sm:$0xff]
    %v3115 = vld [vmem:[#allocation3 + $0x30] sm:$0xff]
    %v3116 = vld [vmem:[#allocation3 + $0x38] sm:$0xff]
    %v3117 = vld [vmem:[#allocation3 + $0x40] sm:$0xff]
    %v3118 = vld [vmem:[#allocation3 + $0x48] sm:$0xff]
    %v3119 = vld [vmem:[#allocation3 + $0x50] sm:$0xff]
    %v3120 = vld [vmem:[#allocation3 + $0x58] sm:$0xff]
    %v3121 = vld [vmem:[#allocation3 + $0x60] sm:$0xff]
    %v3122 = vld [vmem:[#allocation3 + $0x68] sm:$0xff]
    %v3123 = vld [vmem:[#allocation3 + $0x70] sm:$0xff]
    %v3124 = vld [vmem:[#allocation3 + $0x78] sm:$0xff]
    %v3125 = vld [vmem:[#allocation3 + $0x80] sm:$0xff]
    %v3126 = vld [vmem:[#allocation3 + $0x88] sm:$0xff]
    %v3127 = vld [vmem:[#allocation3 + $0x90] sm:$0xff]
    %v3128 = vld [vmem:[#allocation3 + $0x98] sm:$0xff]
    %v3129 = vld [vmem:[#allocation3 + $0xa0] sm:$0xff]
    %v3130 = vld [vmem:[#allocation3 + $0xa8] sm:$0x3]
    %v3131 = vmul.f32 %v3110, %v463
    %v3132 = vmul.f32 %v3111, %v464
    %v3133 = vmul.f32 %v3112, %v465
    %v3134 = vmul.f32 %v3113, %v466
    %v3135 = vmul.f32 %v3114, %v467
    %v3136 = vmul.f32 %v3115, %v468
    %v3137 = vmul.f32 %v3116, %v469
    %v3138 = vmul.f32 %v3117, %v470
    %v3139 = vmul.f32 %v3118, %v471
    %v3140 = vmul.f32 %v3119, %v472
    %v3141 = vmul.f32 %v3120, %v473
    %v3142 = vmul.f32 %v3121, %v474
    %v3143 = vmul.f32 %v3122, %v475
    %v3144 = vmul.f32 %v3123, %v476
    %v3145 = vmul.f32 %v3124, %v477
    %v3146 = vmul.f32 %v3125, %v478
    %v3147 = vmul.f32 %v3126, %v479
    %v3148 = vmul.f32 %v3127, %v480
    %v3149 = vmul.f32 %v3128, %v481
    %v3150 = vmul.f32 %v3129, %v482
    %v3151 = vmul.f32 %v3130, %v483
    %s3152 = scalar_lea.vmem %s3, 128
    %v3153 = vld [vmem:[%s3152] sm:$0xff]
    %v3154 = vld [vmem:[%s3152 + $0x8] sm:$0xff]
    %v3155 = vld [vmem:[%s3152 + $0x10] sm:$0xff]
    %v3156 = vld [vmem:[%s3152 + $0x18] sm:$0xff]
    %v3157 = vld [vmem:[%s3152 + $0x20] sm:$0xff]
    %v3158 = vld [vmem:[%s3152 + $0x28] sm:$0xff]
    %v3159 = vld [vmem:[%s3152 + $0x30] sm:$0xff]
    %v3160 = vld [vmem:[%s3152 + $0x38] sm:$0xff]
    %v3162 = vsel %vm2299, %v3131, 0
    %v3165 = vsel %vm2299, %v3132, 0
    %v3168 = vsel %vm2299, %v3133, 0
    %v3171 = vsel %vm2299, %v3134, 0
    %v3174 = vsel %vm2299, %v3135, 0
    %v3177 = vsel %vm2299, %v3136, 0
    %v3180 = vsel %vm2299, %v3137, 0
    %v3183 = vsel %vm2299, %v3138, 0
    %v3186 = vsel %vm2299, %v3139, 0
    %v3189 = vsel %vm2299, %v3140, 0
    %v3192 = vsel %vm2299, %v3141, 0
    %v3195 = vsel %vm2299, %v3142, 0
    %v3198 = vsel %vm2299, %v3143, 0
    %v3201 = vsel %vm2299, %v3144, 0
    %v3204 = vsel %vm2299, %v3145, 0
    %v3207 = vsel %vm2299, %v3146, 0
    %v3210 = vsel %vm2299, %v3147, 0
    %v3213 = vsel %vm2299, %v3148, 0
    %v3216 = vsel %vm2299, %v3149, 0
    %v3219 = vsel %vm2299, %v3150, 0
    %v3222 = vsel %vm2299, %v3151, 0
    %3224 = vmatprep.subr.mxu0 0.0
    %3225 = vmatpush1.msra.mxu0 0.0
    %3226 = vmatprep.subr.mxu0 0.0
    %3227 = vmatpush1.msra.mxu0 0.0
    %3228 = vmatprep.subr.mxu0 0.0
    %3229 = vmatpush1.msra.mxu0 0.0
    %3230 = vmatprep.subr.mxu0 0.0
    %3231 = vmatpush1.msra.mxu0 0.0
    %3232 = vmatprep.subr.mxu0 0.0
    %3233 = vmatpush1.msra.mxu0 0.0
    %3234 = vmatprep.subr.mxu0 0.0
    %3235 = vmatpush1.msra.mxu0 0.0
    %3236 = vmatprep.subr.mxu0 0.0
    %3237 = vmatpush1.msra.mxu0 0.0
    %3238 = vmatprep.subr.mxu0 0.0
    %3239 = vmatpush1.msra.mxu0 0.0
    %3240 = vmatprep.subr.mxu0 0.0
    %3241 = vmatpush1.msra.mxu0 %v3160
    %3242 = vmatprep.subr.mxu0 0.0
    %3243 = vmatpush1.msra.mxu0 %v3159
    %3244 = vmatprep.subr.mxu0 0.0
    %3245 = vmatpush1.msra.mxu0 %v3158
    %3246 = vmatprep.subr.mxu0 0.0
    %3247 = vmatpush1.msra.mxu0 %v3157
    %3248 = vmatprep.subr.mxu0 0.0
    %3249 = vmatpush1.msra.mxu0 %v3156
    %3250 = vmatprep.subr.mxu0 0.0
    %3251 = vmatpush1.msra.mxu0 %v3155
    %3252 = vmatprep.subr.mxu0 0.0
    %3253 = vmatpush1.msra.mxu0 %v3154
    %3254 = vmatprep.subr.mxu0 0.0
    %3255 = vmatpush1.msra.mxu0 %v3153
    %3256 = vmatprep.subr.mxu0 0.0
    %3257 = vmatpush2.msra.mxu0 0.0
    %3258 = vmatprep.subr.mxu0 0.0
    %3259 = vmatpush2.msra.mxu0 0.0
    %3260 = vmatprep.subr.mxu0 0.0
    %3261 = vmatpush2.msra.mxu0 0.0
    %3262 = vmatprep.subr.mxu0 0.0
    %3263 = vmatpush2.msra.mxu0 0.0
    %3264 = vmatprep.subr.mxu0 0.0
    %3265 = vmatpush2.msra.mxu0 0.0
    %3266 = vmatprep.subr.mxu0 0.0
    %3267 = vmatpush2.msra.mxu0 0.0
    %3268 = vmatprep.subr.mxu0 0.0
    %3269 = vmatpush2.msra.mxu0 0.0
    %3270 = vmatprep.subr.mxu0 0.0
    %3271 = vmatpush2.msra.mxu0 0.0
    %3272 = vmatprep.subr.mxu0 0.0
    %3273 = vmatpush2.msra.mxu0 0.0
    %3274 = vmatprep.subr.mxu0 0.0
    %3275 = vmatpush2.msra.mxu0 0.0
    %3276 = vmatprep.subr.mxu0 0.0
    %3277 = vmatpush2.msra.mxu0 0.0
    %3278 = vmatprep.subr.mxu0 0.0
    %3279 = vmatpush2.msra.mxu0 0.0
    %3280 = vmatprep.subr.mxu0 0.0
    %3281 = vmatpush2.msra.mxu0 0.0
    %3282 = vmatprep.subr.mxu0 0.0
    %3283 = vmatpush2.msra.mxu0 0.0
    %3284 = vmatprep.subr.mxu0 0.0
    %3285 = vmatpush2.msra.mxu0 0.0
    %3286 = vmatprep.subr.mxu0 0.0
    %3287 = vmatpush2.msra.mxu0 0.0
    %3288 = vmatprep.mubr.f32.mxu0 0.0
    %3289 = vmatmul.mubr.f32.gmra.mxu0 %v3162
    %v3290 = vpop.f32.mrf.mxu0
    %v3291 = vadd.f32 0.0, %v3290
    %v3292 = vpop.f32.mrf.mxu0
    %3293 = vmatprep.mubr.f32.mxu0 0.0
    %3294 = vmatmul.mubr.f32.gmra.mxu0 %v3165
    %v3295 = vpop.f32.mrf.mxu0
    %v3296 = vadd.f32 0.0, %v3295
    %v3297 = vpop.f32.mrf.mxu0
    %3298 = vmatprep.mubr.f32.mxu0 0.0
    %3299 = vmatmul.mubr.f32.gmra.mxu0 %v3168
    %v3300 = vpop.f32.mrf.mxu0
    %v3301 = vadd.f32 0.0, %v3300
    %v3302 = vpop.f32.mrf.mxu0
    %3303 = vmatprep.mubr.f32.mxu0 0.0
    %3304 = vmatmul.mubr.f32.gmra.mxu0 %v3171
    %v3305 = vpop.f32.mrf.mxu0
    %v3306 = vadd.f32 0.0, %v3305
    %v3307 = vpop.f32.mrf.mxu0
    %3308 = vmatprep.mubr.f32.mxu0 0.0
    %3309 = vmatmul.mubr.f32.gmra.mxu0 %v3174
    %v3310 = vpop.f32.mrf.mxu0
    %v3311 = vadd.f32 0.0, %v3310
    %v3312 = vpop.f32.mrf.mxu0
    %3313 = vmatprep.mubr.f32.mxu0 0.0
    %3314 = vmatmul.mubr.f32.gmra.mxu0 %v3177
    %v3315 = vpop.f32.mrf.mxu0
    %v3316 = vadd.f32 0.0, %v3315
    %v3317 = vpop.f32.mrf.mxu0
    %3318 = vmatprep.mubr.f32.mxu0 0.0
    %3319 = vmatmul.mubr.f32.gmra.mxu0 %v3180
    %v3320 = vpop.f32.mrf.mxu0
    %v3321 = vadd.f32 0.0, %v3320
    %v3322 = vpop.f32.mrf.mxu0
    %3323 = vmatprep.mubr.f32.mxu0 0.0
    %3324 = vmatmul.mubr.f32.gmra.mxu0 %v3183
    %v3325 = vpop.f32.mrf.mxu0
    %v3326 = vadd.f32 0.0, %v3325
    %v3327 = vpop.f32.mrf.mxu0
    %3328 = vmatprep.mubr.f32.mxu0 0.0
    %3329 = vmatmul.mubr.f32.gmra.mxu0 %v3186
    %v3330 = vpop.f32.mrf.mxu0
    %v3331 = vadd.f32 0.0, %v3330
    %v3332 = vpop.f32.mrf.mxu0
    %3333 = vmatprep.mubr.f32.mxu0 0.0
    %3334 = vmatmul.mubr.f32.gmra.mxu0 %v3189
    %v3335 = vpop.f32.mrf.mxu0
    %v3336 = vadd.f32 0.0, %v3335
    %v3337 = vpop.f32.mrf.mxu0
    %3338 = vmatprep.mubr.f32.mxu0 0.0
    %3339 = vmatmul.mubr.f32.gmra.mxu0 %v3192
    %v3340 = vpop.f32.mrf.mxu0
    %v3341 = vadd.f32 0.0, %v3340
    %v3342 = vpop.f32.mrf.mxu0
    %3343 = vmatprep.mubr.f32.mxu0 0.0
    %3344 = vmatmul.mubr.f32.gmra.mxu0 %v3195
    %v3345 = vpop.f32.mrf.mxu0
    %v3346 = vadd.f32 0.0, %v3345
    %v3347 = vpop.f32.mrf.mxu0
    %3348 = vmatprep.mubr.f32.mxu0 0.0
    %3349 = vmatmul.mubr.f32.gmra.mxu0 %v3198
    %v3350 = vpop.f32.mrf.mxu0
    %v3351 = vadd.f32 0.0, %v3350
    %v3352 = vpop.f32.mrf.mxu0
    %3353 = vmatprep.mubr.f32.mxu0 0.0
    %3354 = vmatmul.mubr.f32.gmra.mxu0 %v3201
    %v3355 = vpop.f32.mrf.mxu0
    %v3356 = vadd.f32 0.0, %v3355
    %v3357 = vpop.f32.mrf.mxu0
    %3358 = vmatprep.mubr.f32.mxu0 0.0
    %3359 = vmatmul.mubr.f32.gmra.mxu0 %v3204
    %v3360 = vpop.f32.mrf.mxu0
    %v3361 = vadd.f32 0.0, %v3360
    %v3362 = vpop.f32.mrf.mxu0
    %3363 = vmatprep.mubr.f32.mxu0 0.0
    %3364 = vmatmul.mubr.f32.gmra.mxu0 %v3207
    %v3365 = vpop.f32.mrf.mxu0
    %v3366 = vadd.f32 0.0, %v3365
    %v3367 = vpop.f32.mrf.mxu0
    %3368 = vmatprep.mubr.f32.mxu0 0.0
    %3369 = vmatmul.mubr.f32.gmra.mxu0 %v3210
    %v3370 = vpop.f32.mrf.mxu0
    %v3371 = vadd.f32 0.0, %v3370
    %v3372 = vpop.f32.mrf.mxu0
    %3373 = vmatprep.mubr.f32.mxu0 0.0
    %3374 = vmatmul.mubr.f32.gmra.mxu0 %v3213
    %v3375 = vpop.f32.mrf.mxu0
    %v3376 = vadd.f32 0.0, %v3375
    %v3377 = vpop.f32.mrf.mxu0
    %3378 = vmatprep.mubr.f32.mxu0 0.0
    %3379 = vmatmul.mubr.f32.gmra.mxu0 %v3216
    %v3380 = vpop.f32.mrf.mxu0
    %v3381 = vadd.f32 0.0, %v3380
    %v3382 = vpop.f32.mrf.mxu0
    %3383 = vmatprep.mubr.f32.mxu0 0.0
    %3384 = vmatmul.mubr.f32.gmra.mxu0 %v3219
    %v3385 = vpop.f32.mrf.mxu0
    %v3386 = vadd.f32 0.0, %v3385
    %v3387 = vpop.f32.mrf.mxu0
    %3388 = vmatprep.mubr.f32.mxu0 0.0
    %3389 = vmatmul.mubr.f32.gmra.mxu0 %v3222
    %v3390 = vpop.f32.mrf.mxu0
    %v3391 = vadd.f32 0.0, %v3390
    %v3392 = vpop.f32.mrf.mxu0
    %3393 = vdwg.mxu0
    %v3394 = vadd.f32 %v3007, %v3291
    %v3395 = vadd.f32 %v3012, %v3296
    %v3396 = vadd.f32 %v3017, %v3301
    %v3397 = vadd.f32 %v3022, %v3306
    %v3398 = vadd.f32 %v3027, %v3311
    %v3399 = vadd.f32 %v3032, %v3316
    %v3400 = vadd.f32 %v3037, %v3321
    %v3401 = vadd.f32 %v3042, %v3326
    %v3402 = vadd.f32 %v3047, %v3331
    %v3403 = vadd.f32 %v3052, %v3336
    %v3404 = vadd.f32 %v3057, %v3341
    %v3405 = vadd.f32 %v3062, %v3346
    %v3406 = vadd.f32 %v3067, %v3351
    %v3407 = vadd.f32 %v3072, %v3356
    %v3408 = vadd.f32 %v3077, %v3361
    %v3409 = vadd.f32 %v3082, %v3366
    %v3410 = vadd.f32 %v3087, %v3371
    %v3411 = vadd.f32 %v3092, %v3376
    %v3412 = vadd.f32 %v3097, %v3381
    %v3413 = vadd.f32 %v3102, %v3386
    %v3414 = vadd.f32 %v3107, %v3391
    %v3415 = vld [vmem:[#allocation3 + $0xf] sm:$0xff]
    %v3416 = vld [vmem:[#allocation3 + $0x17] sm:$0xff]
    %v3417 = vld [vmem:[#allocation3 + $0x1f] sm:$0xff]
    %v3418 = vld [vmem:[#allocation3 + $0x27] sm:$0xff]
    %v3419 = vld [vmem:[#allocation3 + $0x2f] sm:$0xff]
    %v3420 = vld [vmem:[#allocation3 + $0x37] sm:$0xff]
    %v3421 = vld [vmem:[#allocation3 + $0x3f] sm:$0xff]
    %v3422 = vld [vmem:[#allocation3 + $0x47] sm:$0xff]
    %v3423 = vld [vmem:[#allocation3 + $0x4f] sm:$0xff]
    %v3424 = vld [vmem:[#allocation3 + $0x57] sm:$0xff]
    %v3425 = vld [vmem:[#allocation3 + $0x5f] sm:$0xff]
    %v3426 = vld [vmem:[#allocation3 + $0x67] sm:$0xff]
    %v3427 = vld [vmem:[#allocation3 + $0x6f] sm:$0xff]
    %v3428 = vld [vmem:[#allocation3 + $0x77] sm:$0xff]
    %v3429 = vld [vmem:[#allocation3 + $0x7f] sm:$0xff]
    %v3430 = vld [vmem:[#allocation3 + $0x87] sm:$0xff]
    %v3431 = vld [vmem:[#allocation3 + $0x8f] sm:$0xff]
    %v3432 = vld [vmem:[#allocation3 + $0x97] sm:$0xff]
    %v3433 = vld [vmem:[#allocation3 + $0x9f] sm:$0xff]
    %v3434 = vld [vmem:[#allocation3 + $0xa7] sm:$0xff]
    %v3435 = vld [vmem:[#allocation3 + $0xaf] sm:$0x3]
    %v3436 = vmul.f32 %v3415, %v379
    %v3437 = vmul.f32 %v3416, %v380
    %v3438 = vmul.f32 %v3417, %v381
    %v3439 = vmul.f32 %v3418, %v382
    %v3440 = vmul.f32 %v3419, %v383
    %v3441 = vmul.f32 %v3420, %v384
    %v3442 = vmul.f32 %v3421, %v385
    %v3443 = vmul.f32 %v3422, %v386
    %v3444 = vmul.f32 %v3423, %v387
    %v3445 = vmul.f32 %v3424, %v388
    %v3446 = vmul.f32 %v3425, %v389
    %v3447 = vmul.f32 %v3426, %v390
    %v3448 = vmul.f32 %v3427, %v391
    %v3449 = vmul.f32 %v3428, %v392
    %v3450 = vmul.f32 %v3429, %v393
    %v3451 = vmul.f32 %v3430, %v394
    %v3452 = vmul.f32 %v3431, %v395
    %v3453 = vmul.f32 %v3432, %v396
    %v3454 = vmul.f32 %v3433, %v397
    %v3455 = vmul.f32 %v3434, %v398
    %v3456 = vmul.f32 %v3435, %v399
    %s3457 = scalar_lea.vmem %s3, 192
    %v3458 = vld [vmem:[%s3457] sm:$0xff]
    %v3459 = vld [vmem:[%s3457 + $0x8] sm:$0xff]
    %v3460 = vld [vmem:[%s3457 + $0x10] sm:$0xff]
    %v3461 = vld [vmem:[%s3457 + $0x18] sm:$0xff]
    %v3462 = vld [vmem:[%s3457 + $0x20] sm:$0xff]
    %v3463 = vld [vmem:[%s3457 + $0x28] sm:$0xff]
    %v3464 = vld [vmem:[%s3457 + $0x30] sm:$0xff]
    %v3465 = vld [vmem:[%s3457 + $0x38] sm:$0xff]
    %v3467 = vsel %vm2299, %v3436, 0
    %v3470 = vsel %vm2299, %v3437, 0
    %v3473 = vsel %vm2299, %v3438, 0
    %v3476 = vsel %vm2299, %v3439, 0
    %v3479 = vsel %vm2299, %v3440, 0
    %v3482 = vsel %vm2299, %v3441, 0
    %v3485 = vsel %vm2299, %v3442, 0
    %v3488 = vsel %vm2299, %v3443, 0
    %v3491 = vsel %vm2299, %v3444, 0
    %v3494 = vsel %vm2299, %v3445, 0
    %v3497 = vsel %vm2299, %v3446, 0
    %v3500 = vsel %vm2299, %v3447, 0
    %v3503 = vsel %vm2299, %v3448, 0
    %v3506 = vsel %vm2299, %v3449, 0
    %v3509 = vsel %vm2299, %v3450, 0
    %v3512 = vsel %vm2299, %v3451, 0
    %v3515 = vsel %vm2299, %v3452, 0
    %v3518 = vsel %vm2299, %v3453, 0
    %v3521 = vsel %vm2299, %v3454, 0
    %v3524 = vsel %vm2299, %v3455, 0
    %v3527 = vsel %vm2299, %v3456, 0
    %3529 = vmatprep.subr.mxu0 0.0
    %3530 = vmatpush1.msra.mxu0 0.0
    %3531 = vmatprep.subr.mxu0 0.0
    %3532 = vmatpush1.msra.mxu0 0.0
    %3533 = vmatprep.subr.mxu0 0.0
    %3534 = vmatpush1.msra.mxu0 0.0
    %3535 = vmatprep.subr.mxu0 0.0
    %3536 = vmatpush1.msra.mxu0 0.0
    %3537 = vmatprep.subr.mxu0 0.0
    %3538 = vmatpush1.msra.mxu0 0.0
    %3539 = vmatprep.subr.mxu0 0.0
    %3540 = vmatpush1.msra.mxu0 0.0
    %3541 = vmatprep.subr.mxu0 0.0
    %3542 = vmatpush1.msra.mxu0 0.0
    %3543 = vmatprep.subr.mxu0 0.0
    %3544 = vmatpush1.msra.mxu0 0.0
    %3545 = vmatprep.subr.mxu0 0.0
    %3546 = vmatpush1.msra.mxu0 %v3465
    %3547 = vmatprep.subr.mxu0 0.0
    %3548 = vmatpush1.msra.mxu0 %v3464
    %3549 = vmatprep.subr.mxu0 0.0
    %3550 = vmatpush1.msra.mxu0 %v3463
    %3551 = vmatprep.subr.mxu0 0.0
    %3552 = vmatpush1.msra.mxu0 %v3462
    %3553 = vmatprep.subr.mxu0 0.0
    %3554 = vmatpush1.msra.mxu0 %v3461
    %3555 = vmatprep.subr.mxu0 0.0
    %3556 = vmatpush1.msra.mxu0 %v3460
    %3557 = vmatprep.subr.mxu0 0.0
    %3558 = vmatpush1.msra.mxu0 %v3459
    %3559 = vmatprep.subr.mxu0 0.0
    %3560 = vmatpush1.msra.mxu0 %v3458
    %3561 = vmatprep.subr.mxu0 0.0
    %3562 = vmatpush2.msra.mxu0 0.0
    %3563 = vmatprep.subr.mxu0 0.0
    %3564 = vmatpush2.msra.mxu0 0.0
    %3565 = vmatprep.subr.mxu0 0.0
    %3566 = vmatpush2.msra.mxu0 0.0
    %3567 = vmatprep.subr.mxu0 0.0
    %3568 = vmatpush2.msra.mxu0 0.0
    %3569 = vmatprep.subr.mxu0 0.0
    %3570 = vmatpush2.msra.mxu0 0.0
    %3571 = vmatprep.subr.mxu0 0.0
    %3572 = vmatpush2.msra.mxu0 0.0
    %3573 = vmatprep.subr.mxu0 0.0
    %3574 = vmatpush2.msra.mxu0 0.0
    %3575 = vmatprep.subr.mxu0 0.0
    %3576 = vmatpush2.msra.mxu0 0.0
    %3577 = vmatprep.subr.mxu0 0.0
    %3578 = vmatpush2.msra.mxu0 0.0
    %3579 = vmatprep.subr.mxu0 0.0
    %3580 = vmatpush2.msra.mxu0 0.0
    %3581 = vmatprep.subr.mxu0 0.0
    %3582 = vmatpush2.msra.mxu0 0.0
    %3583 = vmatprep.subr.mxu0 0.0
    %3584 = vmatpush2.msra.mxu0 0.0
    %3585 = vmatprep.subr.mxu0 0.0
    %3586 = vmatpush2.msra.mxu0 0.0
    %3587 = vmatprep.subr.mxu0 0.0
    %3588 = vmatpush2.msra.mxu0 0.0
    %3589 = vmatprep.subr.mxu0 0.0
    %3590 = vmatpush2.msra.mxu0 0.0
    %3591 = vmatprep.subr.mxu0 0.0
    %3592 = vmatpush2.msra.mxu0 0.0
    %3593 = vmatprep.mubr.f32.mxu0 0.0
    %3594 = vmatmul.mubr.f32.gmra.mxu0 %v3467
    %v3595 = vpop.f32.mrf.mxu0
    %v3596 = vadd.f32 0.0, %v3595
    %v3597 = vpop.f32.mrf.mxu0
    %3598 = vmatprep.mubr.f32.mxu0 0.0
    %3599 = vmatmul.mubr.f32.gmra.mxu0 %v3470
    %v3600 = vpop.f32.mrf.mxu0
    %v3601 = vadd.f32 0.0, %v3600
    %v3602 = vpop.f32.mrf.mxu0
    %3603 = vmatprep.mubr.f32.mxu0 0.0
    %3604 = vmatmul.mubr.f32.gmra.mxu0 %v3473
    %v3605 = vpop.f32.mrf.mxu0
    %v3606 = vadd.f32 0.0, %v3605
    %v3607 = vpop.f32.mrf.mxu0
    %3608 = vmatprep.mubr.f32.mxu0 0.0
    %3609 = vmatmul.mubr.f32.gmra.mxu0 %v3476
    %v3610 = vpop.f32.mrf.mxu0
    %v3611 = vadd.f32 0.0, %v3610
    %v3612 = vpop.f32.mrf.mxu0
    %3613 = vmatprep.mubr.f32.mxu0 0.0
    %3614 = vmatmul.mubr.f32.gmra.mxu0 %v3479
    %v3615 = vpop.f32.mrf.mxu0
    %v3616 = vadd.f32 0.0, %v3615
    %v3617 = vpop.f32.mrf.mxu0
    %3618 = vmatprep.mubr.f32.mxu0 0.0
    %3619 = vmatmul.mubr.f32.gmra.mxu0 %v3482
    %v3620 = vpop.f32.mrf.mxu0
    %v3621 = vadd.f32 0.0, %v3620
    %v3622 = vpop.f32.mrf.mxu0
    %3623 = vmatprep.mubr.f32.mxu0 0.0
    %3624 = vmatmul.mubr.f32.gmra.mxu0 %v3485
    %v3625 = vpop.f32.mrf.mxu0
    %v3626 = vadd.f32 0.0, %v3625
    %v3627 = vpop.f32.mrf.mxu0
    %3628 = vmatprep.mubr.f32.mxu0 0.0
    %3629 = vmatmul.mubr.f32.gmra.mxu0 %v3488
    %v3630 = vpop.f32.mrf.mxu0
    %v3631 = vadd.f32 0.0, %v3630
    %v3632 = vpop.f32.mrf.mxu0
    %3633 = vmatprep.mubr.f32.mxu0 0.0
    %3634 = vmatmul.mubr.f32.gmra.mxu0 %v3491
    %v3635 = vpop.f32.mrf.mxu0
    %v3636 = vadd.f32 0.0, %v3635
    %v3637 = vpop.f32.mrf.mxu0
    %3638 = vmatprep.mubr.f32.mxu0 0.0
    %3639 = vmatmul.mubr.f32.gmra.mxu0 %v3494
    %v3640 = vpop.f32.mrf.mxu0
    %v3641 = vadd.f32 0.0, %v3640
    %v3642 = vpop.f32.mrf.mxu0
    %3643 = vmatprep.mubr.f32.mxu0 0.0
    %3644 = vmatmul.mubr.f32.gmra.mxu0 %v3497
    %v3645 = vpop.f32.mrf.mxu0
    %v3646 = vadd.f32 0.0, %v3645
    %v3647 = vpop.f32.mrf.mxu0
    %3648 = vmatprep.mubr.f32.mxu0 0.0
    %3649 = vmatmul.mubr.f32.gmra.mxu0 %v3500
    %v3650 = vpop.f32.mrf.mxu0
    %v3651 = vadd.f32 0.0, %v3650
    %v3652 = vpop.f32.mrf.mxu0
    %3653 = vmatprep.mubr.f32.mxu0 0.0
    %3654 = vmatmul.mubr.f32.gmra.mxu0 %v3503
    %v3655 = vpop.f32.mrf.mxu0
    %v3656 = vadd.f32 0.0, %v3655
    %v3657 = vpop.f32.mrf.mxu0
    %3658 = vmatprep.mubr.f32.mxu0 0.0
    %3659 = vmatmul.mubr.f32.gmra.mxu0 %v3506
    %v3660 = vpop.f32.mrf.mxu0
    %v3661 = vadd.f32 0.0, %v3660
    %v3662 = vpop.f32.mrf.mxu0
    %3663 = vmatprep.mubr.f32.mxu0 0.0
    %3664 = vmatmul.mubr.f32.gmra.mxu0 %v3509
    %v3665 = vpop.f32.mrf.mxu0
    %v3666 = vadd.f32 0.0, %v3665
    %v3667 = vpop.f32.mrf.mxu0
    %3668 = vmatprep.mubr.f32.mxu0 0.0
    %3669 = vmatmul.mubr.f32.gmra.mxu0 %v3512
    %v3670 = vpop.f32.mrf.mxu0
    %v3671 = vadd.f32 0.0, %v3670
    %v3672 = vpop.f32.mrf.mxu0
    %3673 = vmatprep.mubr.f32.mxu0 0.0
    %3674 = vmatmul.mubr.f32.gmra.mxu0 %v3515
    %v3675 = vpop.f32.mrf.mxu0
    %v3676 = vadd.f32 0.0, %v3675
    %v3677 = vpop.f32.mrf.mxu0
    %3678 = vmatprep.mubr.f32.mxu0 0.0
    %3679 = vmatmul.mubr.f32.gmra.mxu0 %v3518
    %v3680 = vpop.f32.mrf.mxu0
    %v3681 = vadd.f32 0.0, %v3680
    %v3682 = vpop.f32.mrf.mxu0
    %3683 = vmatprep.mubr.f32.mxu0 0.0
    %3684 = vmatmul.mubr.f32.gmra.mxu0 %v3521
    %v3685 = vpop.f32.mrf.mxu0
    %v3686 = vadd.f32 0.0, %v3685
    %v3687 = vpop.f32.mrf.mxu0
    %3688 = vmatprep.mubr.f32.mxu0 0.0
    %3689 = vmatmul.mubr.f32.gmra.mxu0 %v3524
    %v3690 = vpop.f32.mrf.mxu0
    %v3691 = vadd.f32 0.0, %v3690
    %v3692 = vpop.f32.mrf.mxu0
    %3693 = vmatprep.mubr.f32.mxu0 0.0
    %3694 = vmatmul.mubr.f32.gmra.mxu0 %v3527
    %v3695 = vpop.f32.mrf.mxu0
    %v3696 = vadd.f32 0.0, %v3695
    %v3697 = vpop.f32.mrf.mxu0
    %3698 = vdwg.mxu0
    %v3699 = vadd.f32 %v3394, %v3596
    %v3700 = vadd.f32 %v3395, %v3601
    %v3701 = vadd.f32 %v3396, %v3606
    %v3702 = vadd.f32 %v3397, %v3611
    %v3703 = vadd.f32 %v3398, %v3616
    %v3704 = vadd.f32 %v3399, %v3621
    %v3705 = vadd.f32 %v3400, %v3626
    %v3706 = vadd.f32 %v3401, %v3631
    %v3707 = vadd.f32 %v3402, %v3636
    %v3708 = vadd.f32 %v3403, %v3641
    %v3709 = vadd.f32 %v3404, %v3646
    %v3710 = vadd.f32 %v3405, %v3651
    %v3711 = vadd.f32 %v3406, %v3656
    %v3712 = vadd.f32 %v3407, %v3661
    %v3713 = vadd.f32 %v3408, %v3666
    %v3714 = vadd.f32 %v3409, %v3671
    %v3715 = vadd.f32 %v3410, %v3676
    %v3716 = vadd.f32 %v3411, %v3681
    %v3717 = vadd.f32 %v3412, %v3686
    %v3718 = vadd.f32 %v3413, %v3691
    %v3719 = vadd.f32 %v3414, %v3696
    %v3720 = vld [vmem:[#allocation3 + $0x10] sm:$0xff]
    %v3721 = vld [vmem:[#allocation3 + $0x18] sm:$0xff]
    %v3722 = vld [vmem:[#allocation3 + $0x20] sm:$0xff]
    %v3723 = vld [vmem:[#allocation3 + $0x28] sm:$0xff]
    %v3724 = vld [vmem:[#allocation3 + $0x30] sm:$0xff]
    %v3725 = vld [vmem:[#allocation3 + $0x38] sm:$0xff]
    %v3726 = vld [vmem:[#allocation3 + $0x40] sm:$0xff]
    %v3727 = vld [vmem:[#allocation3 + $0x48] sm:$0xff]
    %v3728 = vld [vmem:[#allocation3 + $0x50] sm:$0xff]
    %v3729 = vld [vmem:[#allocation3 + $0x58] sm:$0xff]
    %v3730 = vld [vmem:[#allocation3 + $0x60] sm:$0xff]
    %v3731 = vld [vmem:[#allocation3 + $0x68] sm:$0xff]
    %v3732 = vld [vmem:[#allocation3 + $0x70] sm:$0xff]
    %v3733 = vld [vmem:[#allocation3 + $0x78] sm:$0xff]
    %v3734 = vld [vmem:[#allocation3 + $0x80] sm:$0xff]
    %v3735 = vld [vmem:[#allocation3 + $0x88] sm:$0xff]
    %v3736 = vld [vmem:[#allocation3 + $0x90] sm:$0xff]
    %v3737 = vld [vmem:[#allocation3 + $0x98] sm:$0xff]
    %v3738 = vld [vmem:[#allocation3 + $0xa0] sm:$0xff]
    %v3739 = vld [vmem:[#allocation3 + $0xa8] sm:$0xff]
    %v3740 = vld [vmem:[#allocation3 + $0xb0] sm:$0x3]
    %s3741 = scalar_lea.vmem %s3, 256
    %v3742 = vld [vmem:[%s3741] sm:$0xff]
    %v3743 = vld [vmem:[%s3741 + $0x8] sm:$0xff]
    %v3744 = vld [vmem:[%s3741 + $0x10] sm:$0xff]
    %v3745 = vld [vmem:[%s3741 + $0x18] sm:$0xff]
    %v3746 = vld [vmem:[%s3741 + $0x20] sm:$0xff]
    %v3747 = vld [vmem:[%s3741 + $0x28] sm:$0xff]
    %v3748 = vld [vmem:[%s3741 + $0x30] sm:$0xff]
    %v3749 = vld [vmem:[%s3741 + $0x38] sm:$0xff]
    %v3751 = vsel %vm2299, %v3720, 0
    %v3754 = vsel %vm2299, %v3721, 0
    %v3757 = vsel %vm2299, %v3722, 0
    %v3760 = vsel %vm2299, %v3723, 0
    %v3763 = vsel %vm2299, %v3724, 0
    %v3766 = vsel %vm2299, %v3725, 0
    %v3769 = vsel %vm2299, %v3726, 0
    %v3772 = vsel %vm2299, %v3727, 0
    %v3775 = vsel %vm2299, %v3728, 0
    %v3778 = vsel %vm2299, %v3729, 0
    %v3781 = vsel %vm2299, %v3730, 0
    %v3784 = vsel %vm2299, %v3731, 0
    %v3787 = vsel %vm2299, %v3732, 0
    %v3790 = vsel %vm2299, %v3733, 0
    %v3793 = vsel %vm2299, %v3734, 0
    %v3796 = vsel %vm2299, %v3735, 0
    %v3799 = vsel %vm2299, %v3736, 0
    %v3802 = vsel %vm2299, %v3737, 0
    %v3805 = vsel %vm2299, %v3738, 0
    %v3808 = vsel %vm2299, %v3739, 0
    %v3811 = vsel %vm2299, %v3740, 0
    %3813 = vmatprep.subr.mxu0 0.0
    %3814 = vmatpush1.msra.mxu0 0.0
    %3815 = vmatprep.subr.mxu0 0.0
    %3816 = vmatpush1.msra.mxu0 0.0
    %3817 = vmatprep.subr.mxu0 0.0
    %3818 = vmatpush1.msra.mxu0 0.0
    %3819 = vmatprep.subr.mxu0 0.0
    %3820 = vmatpush1.msra.mxu0 0.0
    %3821 = vmatprep.subr.mxu0 0.0
    %3822 = vmatpush1.msra.mxu0 0.0
    %3823 = vmatprep.subr.mxu0 0.0
    %3824 = vmatpush1.msra.mxu0 0.0
    %3825 = vmatprep.subr.mxu0 0.0
    %3826 = vmatpush1.msra.mxu0 0.0
    %3827 = vmatprep.subr.mxu0 0.0
    %3828 = vmatpush1.msra.mxu0 0.0
    %3829 = vmatprep.subr.mxu0 0.0
    %3830 = vmatpush1.msra.mxu0 %v3749
    %3831 = vmatprep.subr.mxu0 0.0
    %3832 = vmatpush1.msra.mxu0 %v3748
    %3833 = vmatprep.subr.mxu0 0.0
    %3834 = vmatpush1.msra.mxu0 %v3747
    %3835 = vmatprep.subr.mxu0 0.0
    %3836 = vmatpush1.msra.mxu0 %v3746
    %3837 = vmatprep.subr.mxu0 0.0
    %3838 = vmatpush1.msra.mxu0 %v3745
    %3839 = vmatprep.subr.mxu0 0.0
    %3840 = vmatpush1.msra.mxu0 %v3744
    %3841 = vmatprep.subr.mxu0 0.0
    %3842 = vmatpush1.msra.mxu0 %v3743
    %3843 = vmatprep.subr.mxu0 0.0
    %3844 = vmatpush1.msra.mxu0 %v3742
    %3845 = vmatprep.subr.mxu0 0.0
    %3846 = vmatpush2.msra.mxu0 0.0
    %3847 = vmatprep.subr.mxu0 0.0
    %3848 = vmatpush2.msra.mxu0 0.0
    %3849 = vmatprep.subr.mxu0 0.0
    %3850 = vmatpush2.msra.mxu0 0.0
    %3851 = vmatprep.subr.mxu0 0.0
    %3852 = vmatpush2.msra.mxu0 0.0
    %3853 = vmatprep.subr.mxu0 0.0
    %3854 = vmatpush2.msra.mxu0 0.0
    %3855 = vmatprep.subr.mxu0 0.0
    %3856 = vmatpush2.msra.mxu0 0.0
    %3857 = vmatprep.subr.mxu0 0.0
    %3858 = vmatpush2.msra.mxu0 0.0
    %3859 = vmatprep.subr.mxu0 0.0
    %3860 = vmatpush2.msra.mxu0 0.0
    %3861 = vmatprep.subr.mxu0 0.0
    %3862 = vmatpush2.msra.mxu0 0.0
    %3863 = vmatprep.subr.mxu0 0.0
    %3864 = vmatpush2.msra.mxu0 0.0
    %3865 = vmatprep.subr.mxu0 0.0
    %3866 = vmatpush2.msra.mxu0 0.0
    %3867 = vmatprep.subr.mxu0 0.0
    %3868 = vmatpush2.msra.mxu0 0.0
    %3869 = vmatprep.subr.mxu0 0.0
    %3870 = vmatpush2.msra.mxu0 0.0
    %3871 = vmatprep.subr.mxu0 0.0
    %3872 = vmatpush2.msra.mxu0 0.0
    %3873 = vmatprep.subr.mxu0 0.0
    %3874 = vmatpush2.msra.mxu0 0.0
    %3875 = vmatprep.subr.mxu0 0.0
    %3876 = vmatpush2.msra.mxu0 0.0
    %3877 = vmatprep.mubr.f32.mxu0 0.0
    %3878 = vmatmul.mubr.f32.gmra.mxu0 %v3751
    %v3879 = vpop.f32.mrf.mxu0
    %v3880 = vadd.f32 0.0, %v3879
    %v3881 = vpop.f32.mrf.mxu0
    %3882 = vmatprep.mubr.f32.mxu0 0.0
    %3883 = vmatmul.mubr.f32.gmra.mxu0 %v3754
    %v3884 = vpop.f32.mrf.mxu0
    %v3885 = vadd.f32 0.0, %v3884
    %v3886 = vpop.f32.mrf.mxu0
    %3887 = vmatprep.mubr.f32.mxu0 0.0
    %3888 = vmatmul.mubr.f32.gmra.mxu0 %v3757
    %v3889 = vpop.f32.mrf.mxu0
    %v3890 = vadd.f32 0.0, %v3889
    %v3891 = vpop.f32.mrf.mxu0
    %3892 = vmatprep.mubr.f32.mxu0 0.0
    %3893 = vmatmul.mubr.f32.gmra.mxu0 %v3760
    %v3894 = vpop.f32.mrf.mxu0
    %v3895 = vadd.f32 0.0, %v3894
    %v3896 = vpop.f32.mrf.mxu0
    %3897 = vmatprep.mubr.f32.mxu0 0.0
    %3898 = vmatmul.mubr.f32.gmra.mxu0 %v3763
    %v3899 = vpop.f32.mrf.mxu0
    %v3900 = vadd.f32 0.0, %v3899
    %v3901 = vpop.f32.mrf.mxu0
    %3902 = vmatprep.mubr.f32.mxu0 0.0
    %3903 = vmatmul.mubr.f32.gmra.mxu0 %v3766
    %v3904 = vpop.f32.mrf.mxu0
    %v3905 = vadd.f32 0.0, %v3904
    %v3906 = vpop.f32.mrf.mxu0
    %3907 = vmatprep.mubr.f32.mxu0 0.0
    %3908 = vmatmul.mubr.f32.gmra.mxu0 %v3769
    %v3909 = vpop.f32.mrf.mxu0
    %v3910 = vadd.f32 0.0, %v3909
    %v3911 = vpop.f32.mrf.mxu0
    %3912 = vmatprep.mubr.f32.mxu0 0.0
    %3913 = vmatmul.mubr.f32.gmra.mxu0 %v3772
    %v3914 = vpop.f32.mrf.mxu0
    %v3915 = vadd.f32 0.0, %v3914
    %v3916 = vpop.f32.mrf.mxu0
    %3917 = vmatprep.mubr.f32.mxu0 0.0
    %3918 = vmatmul.mubr.f32.gmra.mxu0 %v3775
    %v3919 = vpop.f32.mrf.mxu0
    %v3920 = vadd.f32 0.0, %v3919
    %v3921 = vpop.f32.mrf.mxu0
    %3922 = vmatprep.mubr.f32.mxu0 0.0
    %3923 = vmatmul.mubr.f32.gmra.mxu0 %v3778
    %v3924 = vpop.f32.mrf.mxu0
    %v3925 = vadd.f32 0.0, %v3924
    %v3926 = vpop.f32.mrf.mxu0
    %3927 = vmatprep.mubr.f32.mxu0 0.0
    %3928 = vmatmul.mubr.f32.gmra.mxu0 %v3781
    %v3929 = vpop.f32.mrf.mxu0
    %v3930 = vadd.f32 0.0, %v3929
    %v3931 = vpop.f32.mrf.mxu0
    %3932 = vmatprep.mubr.f32.mxu0 0.0
    %3933 = vmatmul.mubr.f32.gmra.mxu0 %v3784
    %v3934 = vpop.f32.mrf.mxu0
    %v3935 = vadd.f32 0.0, %v3934
    %v3936 = vpop.f32.mrf.mxu0
    %3937 = vmatprep.mubr.f32.mxu0 0.0
    %3938 = vmatmul.mubr.f32.gmra.mxu0 %v3787
    %v3939 = vpop.f32.mrf.mxu0
    %v3940 = vadd.f32 0.0, %v3939
    %v3941 = vpop.f32.mrf.mxu0
    %3942 = vmatprep.mubr.f32.mxu0 0.0
    %3943 = vmatmul.mubr.f32.gmra.mxu0 %v3790
    %v3944 = vpop.f32.mrf.mxu0
    %v3945 = vadd.f32 0.0, %v3944
    %v3946 = vpop.f32.mrf.mxu0
    %3947 = vmatprep.mubr.f32.mxu0 0.0
    %3948 = vmatmul.mubr.f32.gmra.mxu0 %v3793
    %v3949 = vpop.f32.mrf.mxu0
    %v3950 = vadd.f32 0.0, %v3949
    %v3951 = vpop.f32.mrf.mxu0
    %3952 = vmatprep.mubr.f32.mxu0 0.0
    %3953 = vmatmul.mubr.f32.gmra.mxu0 %v3796
    %v3954 = vpop.f32.mrf.mxu0
    %v3955 = vadd.f32 0.0, %v3954
    %v3956 = vpop.f32.mrf.mxu0
    %3957 = vmatprep.mubr.f32.mxu0 0.0
    %3958 = vmatmul.mubr.f32.gmra.mxu0 %v3799
    %v3959 = vpop.f32.mrf.mxu0
    %v3960 = vadd.f32 0.0, %v3959
    %v3961 = vpop.f32.mrf.mxu0
    %3962 = vmatprep.mubr.f32.mxu0 0.0
    %3963 = vmatmul.mubr.f32.gmra.mxu0 %v3802
    %v3964 = vpop.f32.mrf.mxu0
    %v3965 = vadd.f32 0.0, %v3964
    %v3966 = vpop.f32.mrf.mxu0
    %3967 = vmatprep.mubr.f32.mxu0 0.0
    %3968 = vmatmul.mubr.f32.gmra.mxu0 %v3805
    %v3969 = vpop.f32.mrf.mxu0
    %v3970 = vadd.f32 0.0, %v3969
    %v3971 = vpop.f32.mrf.mxu0
    %3972 = vmatprep.mubr.f32.mxu0 0.0
    %3973 = vmatmul.mubr.f32.gmra.mxu0 %v3808
    %v3974 = vpop.f32.mrf.mxu0
    %v3975 = vadd.f32 0.0, %v3974
    %v3976 = vpop.f32.mrf.mxu0
    %3977 = vmatprep.mubr.f32.mxu0 0.0
    %3978 = vmatmul.mubr.f32.gmra.mxu0 %v3811
    %v3979 = vpop.f32.mrf.mxu0
    %v3980 = vadd.f32 0.0, %v3979
    %v3981 = vpop.f32.mrf.mxu0
    %3982 = vdwg.mxu0
    %v3983 = vadd.f32 %v3699, %v3880
    %v3984 = vadd.f32 %v3700, %v3885
    %v3985 = vadd.f32 %v3701, %v3890
    %v3986 = vadd.f32 %v3702, %v3895
    %v3987 = vadd.f32 %v3703, %v3900
    %v3988 = vadd.f32 %v3704, %v3905
    %v3989 = vadd.f32 %v3705, %v3910
    %v3990 = vadd.f32 %v3706, %v3915
    %v3991 = vadd.f32 %v3707, %v3920
    %v3992 = vadd.f32 %v3708, %v3925
    %v3993 = vadd.f32 %v3709, %v3930
    %v3994 = vadd.f32 %v3710, %v3935
    %v3995 = vadd.f32 %v3711, %v3940
    %v3996 = vadd.f32 %v3712, %v3945
    %v3997 = vadd.f32 %v3713, %v3950
    %v3998 = vadd.f32 %v3714, %v3955
    %v3999 = vadd.f32 %v3715, %v3960
    %v4000 = vadd.f32 %v3716, %v3965
    %v4001 = vadd.f32 %v3717, %v3970
    %v4002 = vadd.f32 %v3718, %v3975
    %v4003 = vadd.f32 %v3719, %v3980
    %v4004 = vld [vmem:[#allocation3 + $0x11] sm:$0xff]
    %v4005 = vld [vmem:[#allocation3 + $0x19] sm:$0xff]
    %v4006 = vld [vmem:[#allocation3 + $0x21] sm:$0xff]
    %v4007 = vld [vmem:[#allocation3 + $0x29] sm:$0xff]
    %v4008 = vld [vmem:[#allocation3 + $0x31] sm:$0xff]
    %v4009 = vld [vmem:[#allocation3 + $0x39] sm:$0xff]
    %v4010 = vld [vmem:[#allocation3 + $0x41] sm:$0xff]
    %v4011 = vld [vmem:[#allocation3 + $0x49] sm:$0xff]
    %v4012 = vld [vmem:[#allocation3 + $0x51] sm:$0xff]
    %v4013 = vld [vmem:[#allocation3 + $0x59] sm:$0xff]
    %v4014 = vld [vmem:[#allocation3 + $0x61] sm:$0xff]
    %v4015 = vld [vmem:[#allocation3 + $0x69] sm:$0xff]
    %v4016 = vld [vmem:[#allocation3 + $0x71] sm:$0xff]
    %v4017 = vld [vmem:[#allocation3 + $0x79] sm:$0xff]
    %v4018 = vld [vmem:[#allocation3 + $0x81] sm:$0xff]
    %v4019 = vld [vmem:[#allocation3 + $0x89] sm:$0xff]
    %v4020 = vld [vmem:[#allocation3 + $0x91] sm:$0xff]
    %v4021 = vld [vmem:[#allocation3 + $0x99] sm:$0xff]
    %v4022 = vld [vmem:[#allocation3 + $0xa1] sm:$0xff]
    %v4023 = vld [vmem:[#allocation3 + $0xa9] sm:$0xff]
    %v4024 = vld [vmem:[#allocation3 + $0xb1] sm:$0x3]
    %v4025 = vmul.f32 %v4004, %v421
    %v4026 = vmul.f32 %v4005, %v422
    %v4027 = vmul.f32 %v4006, %v423
    %v4028 = vmul.f32 %v4007, %v424
    %v4029 = vmul.f32 %v4008, %v425
    %v4030 = vmul.f32 %v4009, %v426
    %v4031 = vmul.f32 %v4010, %v427
    %v4032 = vmul.f32 %v4011, %v428
    %v4033 = vmul.f32 %v4012, %v429
    %v4034 = vmul.f32 %v4013, %v430
    %v4035 = vmul.f32 %v4014, %v431
    %v4036 = vmul.f32 %v4015, %v432
    %v4037 = vmul.f32 %v4016, %v433
    %v4038 = vmul.f32 %v4017, %v434
    %v4039 = vmul.f32 %v4018, %v435
    %v4040 = vmul.f32 %v4019, %v436
    %v4041 = vmul.f32 %v4020, %v437
    %v4042 = vmul.f32 %v4021, %v438
    %v4043 = vmul.f32 %v4022, %v439
    %v4044 = vmul.f32 %v4023, %v440
    %v4045 = vmul.f32 %v4024, %v441
    %s4046 = scalar_lea.vmem %s3, 320
    %v4047 = vld [vmem:[%s4046] sm:$0xff]
    %v4048 = vld [vmem:[%s4046 + $0x8] sm:$0xff]
    %v4049 = vld [vmem:[%s4046 + $0x10] sm:$0xff]
    %v4050 = vld [vmem:[%s4046 + $0x18] sm:$0xff]
    %v4051 = vld [vmem:[%s4046 + $0x20] sm:$0xff]
    %v4052 = vld [vmem:[%s4046 + $0x28] sm:$0xff]
    %v4053 = vld [vmem:[%s4046 + $0x30] sm:$0xff]
    %v4054 = vld [vmem:[%s4046 + $0x38] sm:$0xff]
    %v4056 = vsel %vm2299, %v4025, 0
    %v4059 = vsel %vm2299, %v4026, 0
    %v4062 = vsel %vm2299, %v4027, 0
    %v4065 = vsel %vm2299, %v4028, 0
    %v4068 = vsel %vm2299, %v4029, 0
    %v4071 = vsel %vm2299, %v4030, 0
    %v4074 = vsel %vm2299, %v4031, 0
    %v4077 = vsel %vm2299, %v4032, 0
    %v4080 = vsel %vm2299, %v4033, 0
    %v4083 = vsel %vm2299, %v4034, 0
    %v4086 = vsel %vm2299, %v4035, 0
    %v4089 = vsel %vm2299, %v4036, 0
    %v4092 = vsel %vm2299, %v4037, 0
    %v4095 = vsel %vm2299, %v4038, 0
    %v4098 = vsel %vm2299, %v4039, 0
    %v4101 = vsel %vm2299, %v4040, 0
    %v4104 = vsel %vm2299, %v4041, 0
    %v4107 = vsel %vm2299, %v4042, 0
    %v4110 = vsel %vm2299, %v4043, 0
    %v4113 = vsel %vm2299, %v4044, 0
    %v4116 = vsel %vm2299, %v4045, 0
    %4118 = vmatprep.subr.mxu0 0.0
    %4119 = vmatpush1.msra.mxu0 0.0
    %4120 = vmatprep.subr.mxu0 0.0
    %4121 = vmatpush1.msra.mxu0 0.0
    %4122 = vmatprep.subr.mxu0 0.0
    %4123 = vmatpush1.msra.mxu0 0.0
    %4124 = vmatprep.subr.mxu0 0.0
    %4125 = vmatpush1.msra.mxu0 0.0
    %4126 = vmatprep.subr.mxu0 0.0
    %4127 = vmatpush1.msra.mxu0 0.0
    %4128 = vmatprep.subr.mxu0 0.0
    %4129 = vmatpush1.msra.mxu0 0.0
    %4130 = vmatprep.subr.mxu0 0.0
    %4131 = vmatpush1.msra.mxu0 0.0
    %4132 = vmatprep.subr.mxu0 0.0
    %4133 = vmatpush1.msra.mxu0 0.0
    %4134 = vmatprep.subr.mxu0 0.0
    %4135 = vmatpush1.msra.mxu0 %v4054
    %4136 = vmatprep.subr.mxu0 0.0
    %4137 = vmatpush1.msra.mxu0 %v4053
    %4138 = vmatprep.subr.mxu0 0.0
    %4139 = vmatpush1.msra.mxu0 %v4052
    %4140 = vmatprep.subr.mxu0 0.0
    %4141 = vmatpush1.msra.mxu0 %v4051
    %4142 = vmatprep.subr.mxu0 0.0
    %4143 = vmatpush1.msra.mxu0 %v4050
    %4144 = vmatprep.subr.mxu0 0.0
    %4145 = vmatpush1.msra.mxu0 %v4049
    %4146 = vmatprep.subr.mxu0 0.0
    %4147 = vmatpush1.msra.mxu0 %v4048
    %4148 = vmatprep.subr.mxu0 0.0
    %4149 = vmatpush1.msra.mxu0 %v4047
    %4150 = vmatprep.subr.mxu0 0.0
    %4151 = vmatpush2.msra.mxu0 0.0
    %4152 = vmatprep.subr.mxu0 0.0
    %4153 = vmatpush2.msra.mxu0 0.0
    %4154 = vmatprep.subr.mxu0 0.0
    %4155 = vmatpush2.msra.mxu0 0.0
    %4156 = vmatprep.subr.mxu0 0.0
    %4157 = vmatpush2.msra.mxu0 0.0
    %4158 = vmatprep.subr.mxu0 0.0
    %4159 = vmatpush2.msra.mxu0 0.0
    %4160 = vmatprep.subr.mxu0 0.0
    %4161 = vmatpush2.msra.mxu0 0.0
    %4162 = vmatprep.subr.mxu0 0.0
    %4163 = vmatpush2.msra.mxu0 0.0
    %4164 = vmatprep.subr.mxu0 0.0
    %4165 = vmatpush2.msra.mxu0 0.0
    %4166 = vmatprep.subr.mxu0 0.0
    %4167 = vmatpush2.msra.mxu0 0.0
    %4168 = vmatprep.subr.mxu0 0.0
    %4169 = vmatpush2.msra.mxu0 0.0
    %4170 = vmatprep.subr.mxu0 0.0
    %4171 = vmatpush2.msra.mxu0 0.0
    %4172 = vmatprep.subr.mxu0 0.0
    %4173 = vmatpush2.msra.mxu0 0.0
    %4174 = vmatprep.subr.mxu0 0.0
    %4175 = vmatpush2.msra.mxu0 0.0
    %4176 = vmatprep.subr.mxu0 0.0
    %4177 = vmatpush2.msra.mxu0 0.0
    %4178 = vmatprep.subr.mxu0 0.0
    %4179 = vmatpush2.msra.mxu0 0.0
    %4180 = vmatprep.subr.mxu0 0.0
    %4181 = vmatpush2.msra.mxu0 0.0
    %4182 = vmatprep.mubr.f32.mxu0 0.0
    %4183 = vmatmul.mubr.f32.gmra.mxu0 %v4056
    %v4184 = vpop.f32.mrf.mxu0
    %v4185 = vadd.f32 0.0, %v4184
    %v4186 = vpop.f32.mrf.mxu0
    %4187 = vmatprep.mubr.f32.mxu0 0.0
    %4188 = vmatmul.mubr.f32.gmra.mxu0 %v4059
    %v4189 = vpop.f32.mrf.mxu0
    %v4190 = vadd.f32 0.0, %v4189
    %v4191 = vpop.f32.mrf.mxu0
    %4192 = vmatprep.mubr.f32.mxu0 0.0
    %4193 = vmatmul.mubr.f32.gmra.mxu0 %v4062
    %v4194 = vpop.f32.mrf.mxu0
    %v4195 = vadd.f32 0.0, %v4194
    %v4196 = vpop.f32.mrf.mxu0
    %4197 = vmatprep.mubr.f32.mxu0 0.0
    %4198 = vmatmul.mubr.f32.gmra.mxu0 %v4065
    %v4199 = vpop.f32.mrf.mxu0
    %v4200 = vadd.f32 0.0, %v4199
    %v4201 = vpop.f32.mrf.mxu0
    %4202 = vmatprep.mubr.f32.mxu0 0.0
    %4203 = vmatmul.mubr.f32.gmra.mxu0 %v4068
    %v4204 = vpop.f32.mrf.mxu0
    %v4205 = vadd.f32 0.0, %v4204
    %v4206 = vpop.f32.mrf.mxu0
    %4207 = vmatprep.mubr.f32.mxu0 0.0
    %4208 = vmatmul.mubr.f32.gmra.mxu0 %v4071
    %v4209 = vpop.f32.mrf.mxu0
    %v4210 = vadd.f32 0.0, %v4209
    %v4211 = vpop.f32.mrf.mxu0
    %4212 = vmatprep.mubr.f32.mxu0 0.0
    %4213 = vmatmul.mubr.f32.gmra.mxu0 %v4074
    %v4214 = vpop.f32.mrf.mxu0
    %v4215 = vadd.f32 0.0, %v4214
    %v4216 = vpop.f32.mrf.mxu0
    %4217 = vmatprep.mubr.f32.mxu0 0.0
    %4218 = vmatmul.mubr.f32.gmra.mxu0 %v4077
    %v4219 = vpop.f32.mrf.mxu0
    %v4220 = vadd.f32 0.0, %v4219
    %v4221 = vpop.f32.mrf.mxu0
    %4222 = vmatprep.mubr.f32.mxu0 0.0
    %4223 = vmatmul.mubr.f32.gmra.mxu0 %v4080
    %v4224 = vpop.f32.mrf.mxu0
    %v4225 = vadd.f32 0.0, %v4224
    %v4226 = vpop.f32.mrf.mxu0
    %4227 = vmatprep.mubr.f32.mxu0 0.0
    %4228 = vmatmul.mubr.f32.gmra.mxu0 %v4083
    %v4229 = vpop.f32.mrf.mxu0
    %v4230 = vadd.f32 0.0, %v4229
    %v4231 = vpop.f32.mrf.mxu0
    %4232 = vmatprep.mubr.f32.mxu0 0.0
    %4233 = vmatmul.mubr.f32.gmra.mxu0 %v4086
    %v4234 = vpop.f32.mrf.mxu0
    %v4235 = vadd.f32 0.0, %v4234
    %v4236 = vpop.f32.mrf.mxu0
    %4237 = vmatprep.mubr.f32.mxu0 0.0
    %4238 = vmatmul.mubr.f32.gmra.mxu0 %v4089
    %v4239 = vpop.f32.mrf.mxu0
    %v4240 = vadd.f32 0.0, %v4239
    %v4241 = vpop.f32.mrf.mxu0
    %4242 = vmatprep.mubr.f32.mxu0 0.0
    %4243 = vmatmul.mubr.f32.gmra.mxu0 %v4092
    %v4244 = vpop.f32.mrf.mxu0
    %v4245 = vadd.f32 0.0, %v4244
    %v4246 = vpop.f32.mrf.mxu0
    %4247 = vmatprep.mubr.f32.mxu0 0.0
    %4248 = vmatmul.mubr.f32.gmra.mxu0 %v4095
    %v4249 = vpop.f32.mrf.mxu0
    %v4250 = vadd.f32 0.0, %v4249
    %v4251 = vpop.f32.mrf.mxu0
    %4252 = vmatprep.mubr.f32.mxu0 0.0
    %4253 = vmatmul.mubr.f32.gmra.mxu0 %v4098
    %v4254 = vpop.f32.mrf.mxu0
    %v4255 = vadd.f32 0.0, %v4254
    %v4256 = vpop.f32.mrf.mxu0
    %4257 = vmatprep.mubr.f32.mxu0 0.0
    %4258 = vmatmul.mubr.f32.gmra.mxu0 %v4101
    %v4259 = vpop.f32.mrf.mxu0
    %v4260 = vadd.f32 0.0, %v4259
    %v4261 = vpop.f32.mrf.mxu0
    %4262 = vmatprep.mubr.f32.mxu0 0.0
    %4263 = vmatmul.mubr.f32.gmra.mxu0 %v4104
    %v4264 = vpop.f32.mrf.mxu0
    %v4265 = vadd.f32 0.0, %v4264
    %v4266 = vpop.f32.mrf.mxu0
    %4267 = vmatprep.mubr.f32.mxu0 0.0
    %4268 = vmatmul.mubr.f32.gmra.mxu0 %v4107
    %v4269 = vpop.f32.mrf.mxu0
    %v4270 = vadd.f32 0.0, %v4269
    %v4271 = vpop.f32.mrf.mxu0
    %4272 = vmatprep.mubr.f32.mxu0 0.0
    %4273 = vmatmul.mubr.f32.gmra.mxu0 %v4110
    %v4274 = vpop.f32.mrf.mxu0
    %v4275 = vadd.f32 0.0, %v4274
    %v4276 = vpop.f32.mrf.mxu0
    %4277 = vmatprep.mubr.f32.mxu0 0.0
    %4278 = vmatmul.mubr.f32.gmra.mxu0 %v4113
    %v4279 = vpop.f32.mrf.mxu0
    %v4280 = vadd.f32 0.0, %v4279
    %v4281 = vpop.f32.mrf.mxu0
    %4282 = vmatprep.mubr.f32.mxu0 0.0
    %4283 = vmatmul.mubr.f32.gmra.mxu0 %v4116
    %v4284 = vpop.f32.mrf.mxu0
    %v4285 = vadd.f32 0.0, %v4284
    %v4286 = vpop.f32.mrf.mxu0
    %4287 = vdwg.mxu0
    %v4288 = vadd.f32 %v3983, %v4185
    %v4289 = vadd.f32 %v3984, %v4190
    %v4290 = vadd.f32 %v3985, %v4195
    %v4291 = vadd.f32 %v3986, %v4200
    %v4292 = vadd.f32 %v3987, %v4205
    %v4293 = vadd.f32 %v3988, %v4210
    %v4294 = vadd.f32 %v3989, %v4215
    %v4295 = vadd.f32 %v3990, %v4220
    %v4296 = vadd.f32 %v3991, %v4225
    %v4297 = vadd.f32 %v3992, %v4230
    %v4298 = vadd.f32 %v3993, %v4235
    %v4299 = vadd.f32 %v3994, %v4240
    %v4300 = vadd.f32 %v3995, %v4245
    %v4301 = vadd.f32 %v3996, %v4250
    %v4302 = vadd.f32 %v3997, %v4255
    %v4303 = vadd.f32 %v3998, %v4260
    %v4304 = vadd.f32 %v3999, %v4265
    %v4305 = vadd.f32 %v4000, %v4270
    %v4306 = vadd.f32 %v4001, %v4275
    %v4307 = vadd.f32 %v4002, %v4280
    %v4308 = vadd.f32 %v4003, %v4285
    %v4309 = vld [vmem:[#allocation3 + $0x18] sm:$0xff]
    %v4310 = vld [vmem:[#allocation3 + $0x20] sm:$0xff]
    %v4311 = vld [vmem:[#allocation3 + $0x28] sm:$0xff]
    %v4312 = vld [vmem:[#allocation3 + $0x30] sm:$0xff]
    %v4313 = vld [vmem:[#allocation3 + $0x38] sm:$0xff]
    %v4314 = vld [vmem:[#allocation3 + $0x40] sm:$0xff]
    %v4315 = vld [vmem:[#allocation3 + $0x48] sm:$0xff]
    %v4316 = vld [vmem:[#allocation3 + $0x50] sm:$0xff]
    %v4317 = vld [vmem:[#allocation3 + $0x58] sm:$0xff]
    %v4318 = vld [vmem:[#allocation3 + $0x60] sm:$0xff]
    %v4319 = vld [vmem:[#allocation3 + $0x68] sm:$0xff]
    %v4320 = vld [vmem:[#allocation3 + $0x70] sm:$0xff]
    %v4321 = vld [vmem:[#allocation3 + $0x78] sm:$0xff]
    %v4322 = vld [vmem:[#allocation3 + $0x80] sm:$0xff]
    %v4323 = vld [vmem:[#allocation3 + $0x88] sm:$0xff]
    %v4324 = vld [vmem:[#allocation3 + $0x90] sm:$0xff]
    %v4325 = vld [vmem:[#allocation3 + $0x98] sm:$0xff]
    %v4326 = vld [vmem:[#allocation3 + $0xa0] sm:$0xff]
    %v4327 = vld [vmem:[#allocation3 + $0xa8] sm:$0xff]
    %v4328 = vld [vmem:[#allocation3 + $0xb0] sm:$0xff]
    %v4329 = vld [vmem:[#allocation3 + $0xb8] sm:$0x3]
    %v4330 = vmul.f32 %v4309, %v484
    %v4331 = vmul.f32 %v4310, %v485
    %v4332 = vmul.f32 %v4311, %v486
    %v4333 = vmul.f32 %v4312, %v487
    %v4334 = vmul.f32 %v4313, %v488
    %v4335 = vmul.f32 %v4314, %v489
    %v4336 = vmul.f32 %v4315, %v490
    %v4337 = vmul.f32 %v4316, %v491
    %v4338 = vmul.f32 %v4317, %v492
    %v4339 = vmul.f32 %v4318, %v493
    %v4340 = vmul.f32 %v4319, %v494
    %v4341 = vmul.f32 %v4320, %v495
    %v4342 = vmul.f32 %v4321, %v496
    %v4343 = vmul.f32 %v4322, %v497
    %v4344 = vmul.f32 %v4323, %v498
    %v4345 = vmul.f32 %v4324, %v499
    %v4346 = vmul.f32 %v4325, %v500
    %v4347 = vmul.f32 %v4326, %v501
    %v4348 = vmul.f32 %v4327, %v502
    %v4349 = vmul.f32 %v4328, %v503
    %v4350 = vmul.f32 %v4329, %v504
    %s4351 = scalar_lea.vmem %s3, 384
    %v4352 = vld [vmem:[%s4351] sm:$0xff]
    %v4353 = vld [vmem:[%s4351 + $0x8] sm:$0xff]
    %v4354 = vld [vmem:[%s4351 + $0x10] sm:$0xff]
    %v4355 = vld [vmem:[%s4351 + $0x18] sm:$0xff]
    %v4356 = vld [vmem:[%s4351 + $0x20] sm:$0xff]
    %v4357 = vld [vmem:[%s4351 + $0x28] sm:$0xff]
    %v4358 = vld [vmem:[%s4351 + $0x30] sm:$0xff]
    %v4359 = vld [vmem:[%s4351 + $0x38] sm:$0xff]
    %v4361 = vsel %vm2299, %v4330, 0
    %v4364 = vsel %vm2299, %v4331, 0
    %v4367 = vsel %vm2299, %v4332, 0
    %v4370 = vsel %vm2299, %v4333, 0
    %v4373 = vsel %vm2299, %v4334, 0
    %v4376 = vsel %vm2299, %v4335, 0
    %v4379 = vsel %vm2299, %v4336, 0
    %v4382 = vsel %vm2299, %v4337, 0
    %v4385 = vsel %vm2299, %v4338, 0
    %v4388 = vsel %vm2299, %v4339, 0
    %v4391 = vsel %vm2299, %v4340, 0
    %v4394 = vsel %vm2299, %v4341, 0
    %v4397 = vsel %vm2299, %v4342, 0
    %v4400 = vsel %vm2299, %v4343, 0
    %v4403 = vsel %vm2299, %v4344, 0
    %v4406 = vsel %vm2299, %v4345, 0
    %v4409 = vsel %vm2299, %v4346, 0
    %v4412 = vsel %vm2299, %v4347, 0
    %v4415 = vsel %vm2299, %v4348, 0
    %v4418 = vsel %vm2299, %v4349, 0
    %v4421 = vsel %vm2299, %v4350, 0
    %4423 = vmatprep.subr.mxu0 0.0
    %4424 = vmatpush1.msra.mxu0 0.0
    %4425 = vmatprep.subr.mxu0 0.0
    %4426 = vmatpush1.msra.mxu0 0.0
    %4427 = vmatprep.subr.mxu0 0.0
    %4428 = vmatpush1.msra.mxu0 0.0
    %4429 = vmatprep.subr.mxu0 0.0
    %4430 = vmatpush1.msra.mxu0 0.0
    %4431 = vmatprep.subr.mxu0 0.0
    %4432 = vmatpush1.msra.mxu0 0.0
    %4433 = vmatprep.subr.mxu0 0.0
    %4434 = vmatpush1.msra.mxu0 0.0
    %4435 = vmatprep.subr.mxu0 0.0
    %4436 = vmatpush1.msra.mxu0 0.0
    %4437 = vmatprep.subr.mxu0 0.0
    %4438 = vmatpush1.msra.mxu0 0.0
    %4439 = vmatprep.subr.mxu0 0.0
    %4440 = vmatpush1.msra.mxu0 %v4359
    %4441 = vmatprep.subr.mxu0 0.0
    %4442 = vmatpush1.msra.mxu0 %v4358
    %4443 = vmatprep.subr.mxu0 0.0
    %4444 = vmatpush1.msra.mxu0 %v4357
    %4445 = vmatprep.subr.mxu0 0.0
    %4446 = vmatpush1.msra.mxu0 %v4356
    %4447 = vmatprep.subr.mxu0 0.0
    %4448 = vmatpush1.msra.mxu0 %v4355
    %4449 = vmatprep.subr.mxu0 0.0
    %4450 = vmatpush1.msra.mxu0 %v4354
    %4451 = vmatprep.subr.mxu0 0.0
    %4452 = vmatpush1.msra.mxu0 %v4353
    %4453 = vmatprep.subr.mxu0 0.0
    %4454 = vmatpush1.msra.mxu0 %v4352
    %4455 = vmatprep.subr.mxu0 0.0
    %4456 = vmatpush2.msra.mxu0 0.0
    %4457 = vmatprep.subr.mxu0 0.0
    %4458 = vmatpush2.msra.mxu0 0.0
    %4459 = vmatprep.subr.mxu0 0.0
    %4460 = vmatpush2.msra.mxu0 0.0
    %4461 = vmatprep.subr.mxu0 0.0
    %4462 = vmatpush2.msra.mxu0 0.0
    %4463 = vmatprep.subr.mxu0 0.0
    %4464 = vmatpush2.msra.mxu0 0.0
    %4465 = vmatprep.subr.mxu0 0.0
    %4466 = vmatpush2.msra.mxu0 0.0
    %4467 = vmatprep.subr.mxu0 0.0
    %4468 = vmatpush2.msra.mxu0 0.0
    %4469 = vmatprep.subr.mxu0 0.0
    %4470 = vmatpush2.msra.mxu0 0.0
    %4471 = vmatprep.subr.mxu0 0.0
    %4472 = vmatpush2.msra.mxu0 0.0
    %4473 = vmatprep.subr.mxu0 0.0
    %4474 = vmatpush2.msra.mxu0 0.0
    %4475 = vmatprep.subr.mxu0 0.0
    %4476 = vmatpush2.msra.mxu0 0.0
    %4477 = vmatprep.subr.mxu0 0.0
    %4478 = vmatpush2.msra.mxu0 0.0
    %4479 = vmatprep.subr.mxu0 0.0
    %4480 = vmatpush2.msra.mxu0 0.0
    %4481 = vmatprep.subr.mxu0 0.0
    %4482 = vmatpush2.msra.mxu0 0.0
    %4483 = vmatprep.subr.mxu0 0.0
    %4484 = vmatpush2.msra.mxu0 0.0
    %4485 = vmatprep.subr.mxu0 0.0
    %4486 = vmatpush2.msra.mxu0 0.0
    %4487 = vmatprep.mubr.f32.mxu0 0.0
    %4488 = vmatmul.mubr.f32.gmra.mxu0 %v4361
    %v4489 = vpop.f32.mrf.mxu0
    %v4490 = vadd.f32 0.0, %v4489
    %v4491 = vpop.f32.mrf.mxu0
    %4492 = vmatprep.mubr.f32.mxu0 0.0
    %4493 = vmatmul.mubr.f32.gmra.mxu0 %v4364
    %v4494 = vpop.f32.mrf.mxu0
    %v4495 = vadd.f32 0.0, %v4494
    %v4496 = vpop.f32.mrf.mxu0
    %4497 = vmatprep.mubr.f32.mxu0 0.0
    %4498 = vmatmul.mubr.f32.gmra.mxu0 %v4367
    %v4499 = vpop.f32.mrf.mxu0
    %v4500 = vadd.f32 0.0, %v4499
    %v4501 = vpop.f32.mrf.mxu0
    %4502 = vmatprep.mubr.f32.mxu0 0.0
    %4503 = vmatmul.mubr.f32.gmra.mxu0 %v4370
    %v4504 = vpop.f32.mrf.mxu0
    %v4505 = vadd.f32 0.0, %v4504
    %v4506 = vpop.f32.mrf.mxu0
    %4507 = vmatprep.mubr.f32.mxu0 0.0
    %4508 = vmatmul.mubr.f32.gmra.mxu0 %v4373
    %v4509 = vpop.f32.mrf.mxu0
    %v4510 = vadd.f32 0.0, %v4509
    %v4511 = vpop.f32.mrf.mxu0
    %4512 = vmatprep.mubr.f32.mxu0 0.0
    %4513 = vmatmul.mubr.f32.gmra.mxu0 %v4376
    %v4514 = vpop.f32.mrf.mxu0
    %v4515 = vadd.f32 0.0, %v4514
    %v4516 = vpop.f32.mrf.mxu0
    %4517 = vmatprep.mubr.f32.mxu0 0.0
    %4518 = vmatmul.mubr.f32.gmra.mxu0 %v4379
    %v4519 = vpop.f32.mrf.mxu0
    %v4520 = vadd.f32 0.0, %v4519
    %v4521 = vpop.f32.mrf.mxu0
    %4522 = vmatprep.mubr.f32.mxu0 0.0
    %4523 = vmatmul.mubr.f32.gmra.mxu0 %v4382
    %v4524 = vpop.f32.mrf.mxu0
    %v4525 = vadd.f32 0.0, %v4524
    %v4526 = vpop.f32.mrf.mxu0
    %4527 = vmatprep.mubr.f32.mxu0 0.0
    %4528 = vmatmul.mubr.f32.gmra.mxu0 %v4385
    %v4529 = vpop.f32.mrf.mxu0
    %v4530 = vadd.f32 0.0, %v4529
    %v4531 = vpop.f32.mrf.mxu0
    %4532 = vmatprep.mubr.f32.mxu0 0.0
    %4533 = vmatmul.mubr.f32.gmra.mxu0 %v4388
    %v4534 = vpop.f32.mrf.mxu0
    %v4535 = vadd.f32 0.0, %v4534
    %v4536 = vpop.f32.mrf.mxu0
    %4537 = vmatprep.mubr.f32.mxu0 0.0
    %4538 = vmatmul.mubr.f32.gmra.mxu0 %v4391
    %v4539 = vpop.f32.mrf.mxu0
    %v4540 = vadd.f32 0.0, %v4539
    %v4541 = vpop.f32.mrf.mxu0
    %4542 = vmatprep.mubr.f32.mxu0 0.0
    %4543 = vmatmul.mubr.f32.gmra.mxu0 %v4394
    %v4544 = vpop.f32.mrf.mxu0
    %v4545 = vadd.f32 0.0, %v4544
    %v4546 = vpop.f32.mrf.mxu0
    %4547 = vmatprep.mubr.f32.mxu0 0.0
    %4548 = vmatmul.mubr.f32.gmra.mxu0 %v4397
    %v4549 = vpop.f32.mrf.mxu0
    %v4550 = vadd.f32 0.0, %v4549
    %v4551 = vpop.f32.mrf.mxu0
    %4552 = vmatprep.mubr.f32.mxu0 0.0
    %4553 = vmatmul.mubr.f32.gmra.mxu0 %v4400
    %v4554 = vpop.f32.mrf.mxu0
    %v4555 = vadd.f32 0.0, %v4554
    %v4556 = vpop.f32.mrf.mxu0
    %4557 = vmatprep.mubr.f32.mxu0 0.0
    %4558 = vmatmul.mubr.f32.gmra.mxu0 %v4403
    %v4559 = vpop.f32.mrf.mxu0
    %v4560 = vadd.f32 0.0, %v4559
    %v4561 = vpop.f32.mrf.mxu0
    %4562 = vmatprep.mubr.f32.mxu0 0.0
    %4563 = vmatmul.mubr.f32.gmra.mxu0 %v4406
    %v4564 = vpop.f32.mrf.mxu0
    %v4565 = vadd.f32 0.0, %v4564
    %v4566 = vpop.f32.mrf.mxu0
    %4567 = vmatprep.mubr.f32.mxu0 0.0
    %4568 = vmatmul.mubr.f32.gmra.mxu0 %v4409
    %v4569 = vpop.f32.mrf.mxu0
    %v4570 = vadd.f32 0.0, %v4569
    %v4571 = vpop.f32.mrf.mxu0
    %4572 = vmatprep.mubr.f32.mxu0 0.0
    %4573 = vmatmul.mubr.f32.gmra.mxu0 %v4412
    %v4574 = vpop.f32.mrf.mxu0
    %v4575 = vadd.f32 0.0, %v4574
    %v4576 = vpop.f32.mrf.mxu0
    %4577 = vmatprep.mubr.f32.mxu0 0.0
    %4578 = vmatmul.mubr.f32.gmra.mxu0 %v4415
    %v4579 = vpop.f32.mrf.mxu0
    %v4580 = vadd.f32 0.0, %v4579
    %v4581 = vpop.f32.mrf.mxu0
    %4582 = vmatprep.mubr.f32.mxu0 0.0
    %4583 = vmatmul.mubr.f32.gmra.mxu0 %v4418
    %v4584 = vpop.f32.mrf.mxu0
    %v4585 = vadd.f32 0.0, %v4584
    %v4586 = vpop.f32.mrf.mxu0
    %4587 = vmatprep.mubr.f32.mxu0 0.0
    %4588 = vmatmul.mubr.f32.gmra.mxu0 %v4421
    %v4589 = vpop.f32.mrf.mxu0
    %v4590 = vadd.f32 0.0, %v4589
    %v4591 = vpop.f32.mrf.mxu0
    %4592 = vdwg.mxu0
    %v4593 = vadd.f32 %v4288, %v4490
    %v4594 = vadd.f32 %v4289, %v4495
    %v4595 = vadd.f32 %v4290, %v4500
    %v4596 = vadd.f32 %v4291, %v4505
    %v4597 = vadd.f32 %v4292, %v4510
    %v4598 = vadd.f32 %v4293, %v4515
    %v4599 = vadd.f32 %v4294, %v4520
    %v4600 = vadd.f32 %v4295, %v4525
    %v4601 = vadd.f32 %v4296, %v4530
    %v4602 = vadd.f32 %v4297, %v4535
    %v4603 = vadd.f32 %v4298, %v4540
    %v4604 = vadd.f32 %v4299, %v4545
    %v4605 = vadd.f32 %v4300, %v4550
    %v4606 = vadd.f32 %v4301, %v4555
    %v4607 = vadd.f32 %v4302, %v4560
    %v4608 = vadd.f32 %v4303, %v4565
    %v4609 = vadd.f32 %v4304, %v4570
    %v4610 = vadd.f32 %v4305, %v4575
    %v4611 = vadd.f32 %v4306, %v4580
    %v4612 = vadd.f32 %v4307, %v4585
    %v4613 = vadd.f32 %v4308, %v4590
    %v4614 = vld [vmem:[#allocation3 + $0x19] sm:$0xff]
    %v4615 = vld [vmem:[#allocation3 + $0x21] sm:$0xff]
    %v4616 = vld [vmem:[#allocation3 + $0x29] sm:$0xff]
    %v4617 = vld [vmem:[#allocation3 + $0x31] sm:$0xff]
    %v4618 = vld [vmem:[#allocation3 + $0x39] sm:$0xff]
    %v4619 = vld [vmem:[#allocation3 + $0x41] sm:$0xff]
    %v4620 = vld [vmem:[#allocation3 + $0x49] sm:$0xff]
    %v4621 = vld [vmem:[#allocation3 + $0x51] sm:$0xff]
    %v4622 = vld [vmem:[#allocation3 + $0x59] sm:$0xff]
    %v4623 = vld [vmem:[#allocation3 + $0x61] sm:$0xff]
    %v4624 = vld [vmem:[#allocation3 + $0x69] sm:$0xff]
    %v4625 = vld [vmem:[#allocation3 + $0x71] sm:$0xff]
    %v4626 = vld [vmem:[#allocation3 + $0x79] sm:$0xff]
    %v4627 = vld [vmem:[#allocation3 + $0x81] sm:$0xff]
    %v4628 = vld [vmem:[#allocation3 + $0x89] sm:$0xff]
    %v4629 = vld [vmem:[#allocation3 + $0x91] sm:$0xff]
    %v4630 = vld [vmem:[#allocation3 + $0x99] sm:$0xff]
    %v4631 = vld [vmem:[#allocation3 + $0xa1] sm:$0xff]
    %v4632 = vld [vmem:[#allocation3 + $0xa9] sm:$0xff]
    %v4633 = vld [vmem:[#allocation3 + $0xb1] sm:$0xff]
    %v4634 = vld [vmem:[#allocation3 + $0xb9] sm:$0x3]
    %v4635 = vmul.f32 %v4614, %v337
    %v4636 = vmul.f32 %v4615, %v338
    %v4637 = vmul.f32 %v4616, %v339
    %v4638 = vmul.f32 %v4617, %v340
    %v4639 = vmul.f32 %v4618, %v341
    %v4640 = vmul.f32 %v4619, %v342
    %v4641 = vmul.f32 %v4620, %v343
    %v4642 = vmul.f32 %v4621, %v344
    %v4643 = vmul.f32 %v4622, %v345
    %v4644 = vmul.f32 %v4623, %v346
    %v4645 = vmul.f32 %v4624, %v347
    %v4646 = vmul.f32 %v4625, %v348
    %v4647 = vmul.f32 %v4626, %v349
    %v4648 = vmul.f32 %v4627, %v350
    %v4649 = vmul.f32 %v4628, %v351
    %v4650 = vmul.f32 %v4629, %v352
    %v4651 = vmul.f32 %v4630, %v353
    %v4652 = vmul.f32 %v4631, %v354
    %v4653 = vmul.f32 %v4632, %v355
    %v4654 = vmul.f32 %v4633, %v356
    %v4655 = vmul.f32 %v4634, %v357
    %s4656 = scalar_lea.vmem %s3, 448
    %v4657 = vld [vmem:[%s4656] sm:$0xff]
    %v4658 = vld [vmem:[%s4656 + $0x8] sm:$0xff]
    %v4659 = vld [vmem:[%s4656 + $0x10] sm:$0xff]
    %v4660 = vld [vmem:[%s4656 + $0x18] sm:$0xff]
    %v4661 = vld [vmem:[%s4656 + $0x20] sm:$0xff]
    %v4662 = vld [vmem:[%s4656 + $0x28] sm:$0xff]
    %v4663 = vld [vmem:[%s4656 + $0x30] sm:$0xff]
    %v4664 = vld [vmem:[%s4656 + $0x38] sm:$0xff]
    %v4666 = vsel %vm2299, %v4635, 0
    %v4669 = vsel %vm2299, %v4636, 0
    %v4672 = vsel %vm2299, %v4637, 0
    %v4675 = vsel %vm2299, %v4638, 0
    %v4678 = vsel %vm2299, %v4639, 0
    %v4681 = vsel %vm2299, %v4640, 0
    %v4684 = vsel %vm2299, %v4641, 0
    %v4687 = vsel %vm2299, %v4642, 0
    %v4690 = vsel %vm2299, %v4643, 0
    %v4693 = vsel %vm2299, %v4644, 0
    %v4696 = vsel %vm2299, %v4645, 0
    %v4699 = vsel %vm2299, %v4646, 0
    %v4702 = vsel %vm2299, %v4647, 0
    %v4705 = vsel %vm2299, %v4648, 0
    %v4708 = vsel %vm2299, %v4649, 0
    %v4711 = vsel %vm2299, %v4650, 0
    %v4714 = vsel %vm2299, %v4651, 0
    %v4717 = vsel %vm2299, %v4652, 0
    %v4720 = vsel %vm2299, %v4653, 0
    %v4723 = vsel %vm2299, %v4654, 0
    %v4726 = vsel %vm2299, %v4655, 0
    %4728 = vmatprep.subr.mxu0 0.0
    %4729 = vmatpush1.msra.mxu0 0.0
    %4730 = vmatprep.subr.mxu0 0.0
    %4731 = vmatpush1.msra.mxu0 0.0
    %4732 = vmatprep.subr.mxu0 0.0
    %4733 = vmatpush1.msra.mxu0 0.0
    %4734 = vmatprep.subr.mxu0 0.0
    %4735 = vmatpush1.msra.mxu0 0.0
    %4736 = vmatprep.subr.mxu0 0.0
    %4737 = vmatpush1.msra.mxu0 0.0
    %4738 = vmatprep.subr.mxu0 0.0
    %4739 = vmatpush1.msra.mxu0 0.0
    %4740 = vmatprep.subr.mxu0 0.0
    %4741 = vmatpush1.msra.mxu0 0.0
    %4742 = vmatprep.subr.mxu0 0.0
    %4743 = vmatpush1.msra.mxu0 0.0
    %4744 = vmatprep.subr.mxu0 0.0
    %4745 = vmatpush1.msra.mxu0 %v4664
    %4746 = vmatprep.subr.mxu0 0.0
    %4747 = vmatpush1.msra.mxu0 %v4663
    %4748 = vmatprep.subr.mxu0 0.0
    %4749 = vmatpush1.msra.mxu0 %v4662
    %4750 = vmatprep.subr.mxu0 0.0
    %4751 = vmatpush1.msra.mxu0 %v4661
    %4752 = vmatprep.subr.mxu0 0.0
    %4753 = vmatpush1.msra.mxu0 %v4660
    %4754 = vmatprep.subr.mxu0 0.0
    %4755 = vmatpush1.msra.mxu0 %v4659
    %4756 = vmatprep.subr.mxu0 0.0
    %4757 = vmatpush1.msra.mxu0 %v4658
    %4758 = vmatprep.subr.mxu0 0.0
    %4759 = vmatpush1.msra.mxu0 %v4657
    %4760 = vmatprep.subr.mxu0 0.0
    %4761 = vmatpush2.msra.mxu0 0.0
    %4762 = vmatprep.subr.mxu0 0.0
    %4763 = vmatpush2.msra.mxu0 0.0
    %4764 = vmatprep.subr.mxu0 0.0
    %4765 = vmatpush2.msra.mxu0 0.0
    %4766 = vmatprep.subr.mxu0 0.0
    %4767 = vmatpush2.msra.mxu0 0.0
    %4768 = vmatprep.subr.mxu0 0.0
    %4769 = vmatpush2.msra.mxu0 0.0
    %4770 = vmatprep.subr.mxu0 0.0
    %4771 = vmatpush2.msra.mxu0 0.0
    %4772 = vmatprep.subr.mxu0 0.0
    %4773 = vmatpush2.msra.mxu0 0.0
    %4774 = vmatprep.subr.mxu0 0.0
    %4775 = vmatpush2.msra.mxu0 0.0
    %4776 = vmatprep.subr.mxu0 0.0
    %4777 = vmatpush2.msra.mxu0 0.0
    %4778 = vmatprep.subr.mxu0 0.0
    %4779 = vmatpush2.msra.mxu0 0.0
    %4780 = vmatprep.subr.mxu0 0.0
    %4781 = vmatpush2.msra.mxu0 0.0
    %4782 = vmatprep.subr.mxu0 0.0
    %4783 = vmatpush2.msra.mxu0 0.0
    %4784 = vmatprep.subr.mxu0 0.0
    %4785 = vmatpush2.msra.mxu0 0.0
    %4786 = vmatprep.subr.mxu0 0.0
    %4787 = vmatpush2.msra.mxu0 0.0
    %4788 = vmatprep.subr.mxu0 0.0
    %4789 = vmatpush2.msra.mxu0 0.0
    %4790 = vmatprep.subr.mxu0 0.0
    %4791 = vmatpush2.msra.mxu0 0.0
    %4792 = vmatprep.mubr.f32.mxu0 0.0
    %4793 = vmatmul.mubr.f32.gmra.mxu0 %v4666
    %v4794 = vpop.f32.mrf.mxu0
    %v4795 = vadd.f32 0.0, %v4794
    %v4796 = vpop.f32.mrf.mxu0
    %4797 = vmatprep.mubr.f32.mxu0 0.0
    %4798 = vmatmul.mubr.f32.gmra.mxu0 %v4669
    %v4799 = vpop.f32.mrf.mxu0
    %v4800 = vadd.f32 0.0, %v4799
    %v4801 = vpop.f32.mrf.mxu0
    %4802 = vmatprep.mubr.f32.mxu0 0.0
    %4803 = vmatmul.mubr.f32.gmra.mxu0 %v4672
    %v4804 = vpop.f32.mrf.mxu0
    %v4805 = vadd.f32 0.0, %v4804
    %v4806 = vpop.f32.mrf.mxu0
    %4807 = vmatprep.mubr.f32.mxu0 0.0
    %4808 = vmatmul.mubr.f32.gmra.mxu0 %v4675
    %v4809 = vpop.f32.mrf.mxu0
    %v4810 = vadd.f32 0.0, %v4809
    %v4811 = vpop.f32.mrf.mxu0
    %4812 = vmatprep.mubr.f32.mxu0 0.0
    %4813 = vmatmul.mubr.f32.gmra.mxu0 %v4678
    %v4814 = vpop.f32.mrf.mxu0
    %v4815 = vadd.f32 0.0, %v4814
    %v4816 = vpop.f32.mrf.mxu0
    %4817 = vmatprep.mubr.f32.mxu0 0.0
    %4818 = vmatmul.mubr.f32.gmra.mxu0 %v4681
    %v4819 = vpop.f32.mrf.mxu0
    %v4820 = vadd.f32 0.0, %v4819
    %v4821 = vpop.f32.mrf.mxu0
    %4822 = vmatprep.mubr.f32.mxu0 0.0
    %4823 = vmatmul.mubr.f32.gmra.mxu0 %v4684
    %v4824 = vpop.f32.mrf.mxu0
    %v4825 = vadd.f32 0.0, %v4824
    %v4826 = vpop.f32.mrf.mxu0
    %4827 = vmatprep.mubr.f32.mxu0 0.0
    %4828 = vmatmul.mubr.f32.gmra.mxu0 %v4687
    %v4829 = vpop.f32.mrf.mxu0
    %v4830 = vadd.f32 0.0, %v4829
    %v4831 = vpop.f32.mrf.mxu0
    %4832 = vmatprep.mubr.f32.mxu0 0.0
    %4833 = vmatmul.mubr.f32.gmra.mxu0 %v4690
    %v4834 = vpop.f32.mrf.mxu0
    %v4835 = vadd.f32 0.0, %v4834
    %v4836 = vpop.f32.mrf.mxu0
    %4837 = vmatprep.mubr.f32.mxu0 0.0
    %4838 = vmatmul.mubr.f32.gmra.mxu0 %v4693
    %v4839 = vpop.f32.mrf.mxu0
    %v4840 = vadd.f32 0.0, %v4839
    %v4841 = vpop.f32.mrf.mxu0
    %4842 = vmatprep.mubr.f32.mxu0 0.0
    %4843 = vmatmul.mubr.f32.gmra.mxu0 %v4696
    %v4844 = vpop.f32.mrf.mxu0
    %v4845 = vadd.f32 0.0, %v4844
    %v4846 = vpop.f32.mrf.mxu0
    %4847 = vmatprep.mubr.f32.mxu0 0.0
    %4848 = vmatmul.mubr.f32.gmra.mxu0 %v4699
    %v4849 = vpop.f32.mrf.mxu0
    %v4850 = vadd.f32 0.0, %v4849
    %v4851 = vpop.f32.mrf.mxu0
    %4852 = vmatprep.mubr.f32.mxu0 0.0
    %4853 = vmatmul.mubr.f32.gmra.mxu0 %v4702
    %v4854 = vpop.f32.mrf.mxu0
    %v4855 = vadd.f32 0.0, %v4854
    %v4856 = vpop.f32.mrf.mxu0
    %4857 = vmatprep.mubr.f32.mxu0 0.0
    %4858 = vmatmul.mubr.f32.gmra.mxu0 %v4705
    %v4859 = vpop.f32.mrf.mxu0
    %v4860 = vadd.f32 0.0, %v4859
    %v4861 = vpop.f32.mrf.mxu0
    %4862 = vmatprep.mubr.f32.mxu0 0.0
    %4863 = vmatmul.mubr.f32.gmra.mxu0 %v4708
    %v4864 = vpop.f32.mrf.mxu0
    %v4865 = vadd.f32 0.0, %v4864
    %v4866 = vpop.f32.mrf.mxu0
    %4867 = vmatprep.mubr.f32.mxu0 0.0
    %4868 = vmatmul.mubr.f32.gmra.mxu0 %v4711
    %v4869 = vpop.f32.mrf.mxu0
    %v4870 = vadd.f32 0.0, %v4869
    %v4871 = vpop.f32.mrf.mxu0
    %4872 = vmatprep.mubr.f32.mxu0 0.0
    %4873 = vmatmul.mubr.f32.gmra.mxu0 %v4714
    %v4874 = vpop.f32.mrf.mxu0
    %v4875 = vadd.f32 0.0, %v4874
    %v4876 = vpop.f32.mrf.mxu0
    %4877 = vmatprep.mubr.f32.mxu0 0.0
    %4878 = vmatmul.mubr.f32.gmra.mxu0 %v4717
    %v4879 = vpop.f32.mrf.mxu0
    %v4880 = vadd.f32 0.0, %v4879
    %v4881 = vpop.f32.mrf.mxu0
    %4882 = vmatprep.mubr.f32.mxu0 0.0
    %4883 = vmatmul.mubr.f32.gmra.mxu0 %v4720
    %v4884 = vpop.f32.mrf.mxu0
    %v4885 = vadd.f32 0.0, %v4884
    %v4886 = vpop.f32.mrf.mxu0
    %4887 = vmatprep.mubr.f32.mxu0 0.0
    %4888 = vmatmul.mubr.f32.gmra.mxu0 %v4723
    %v4889 = vpop.f32.mrf.mxu0
    %v4890 = vadd.f32 0.0, %v4889
    %v4891 = vpop.f32.mrf.mxu0
    %4892 = vmatprep.mubr.f32.mxu0 0.0
    %4893 = vmatmul.mubr.f32.gmra.mxu0 %v4726
    %v4894 = vpop.f32.mrf.mxu0
    %v4895 = vadd.f32 0.0, %v4894
    %v4896 = vpop.f32.mrf.mxu0
    %4897 = vdwg.mxu0
    %v4898 = vadd.f32 %v4593, %v4795
    %v4899 = vadd.f32 %v4594, %v4800
    %v4900 = vadd.f32 %v4595, %v4805
    %v4901 = vadd.f32 %v4596, %v4810
    %v4902 = vadd.f32 %v4597, %v4815
    %v4903 = vadd.f32 %v4598, %v4820
    %v4904 = vadd.f32 %v4599, %v4825
    %v4905 = vadd.f32 %v4600, %v4830
    %v4906 = vadd.f32 %v4601, %v4835
    %v4907 = vadd.f32 %v4602, %v4840
    %v4908 = vadd.f32 %v4603, %v4845
    %v4909 = vadd.f32 %v4604, %v4850
    %v4910 = vadd.f32 %v4605, %v4855
    %v4911 = vadd.f32 %v4606, %v4860
    %v4912 = vadd.f32 %v4607, %v4865
    %v4913 = vadd.f32 %v4608, %v4870
    %v4914 = vadd.f32 %v4609, %v4875
    %v4915 = vadd.f32 %v4610, %v4880
    %v4916 = vadd.f32 %v4611, %v4885
    %v4917 = vadd.f32 %v4612, %v4890
    %v4918 = vadd.f32 %v4613, %v4895
    %v4919 = vld [vmem:[#allocation3 + $0x1a] sm:$0xff]
    %v4920 = vld [vmem:[#allocation3 + $0x22] sm:$0xff]
    %v4921 = vld [vmem:[#allocation3 + $0x2a] sm:$0xff]
    %v4922 = vld [vmem:[#allocation3 + $0x32] sm:$0xff]
    %v4923 = vld [vmem:[#allocation3 + $0x3a] sm:$0xff]
    %v4924 = vld [vmem:[#allocation3 + $0x42] sm:$0xff]
    %v4925 = vld [vmem:[#allocation3 + $0x4a] sm:$0xff]
    %v4926 = vld [vmem:[#allocation3 + $0x52] sm:$0xff]
    %v4927 = vld [vmem:[#allocation3 + $0x5a] sm:$0xff]
    %v4928 = vld [vmem:[#allocation3 + $0x62] sm:$0xff]
    %v4929 = vld [vmem:[#allocation3 + $0x6a] sm:$0xff]
    %v4930 = vld [vmem:[#allocation3 + $0x72] sm:$0xff]
    %v4931 = vld [vmem:[#allocation3 + $0x7a] sm:$0xff]
    %v4932 = vld [vmem:[#allocation3 + $0x82] sm:$0xff]
    %v4933 = vld [vmem:[#allocation3 + $0x8a] sm:$0xff]
    %v4934 = vld [vmem:[#allocation3 + $0x92] sm:$0xff]
    %v4935 = vld [vmem:[#allocation3 + $0x9a] sm:$0xff]
    %v4936 = vld [vmem:[#allocation3 + $0xa2] sm:$0xff]
    %v4937 = vld [vmem:[#allocation3 + $0xaa] sm:$0xff]
    %v4938 = vld [vmem:[#allocation3 + $0xb2] sm:$0xff]
    %v4939 = vld [vmem:[#allocation3 + $0xba] sm:$0x3]
    %v4940 = vmul.f32 %v4919, %v505
    %v4941 = vmul.f32 %v4920, %v506
    %v4942 = vmul.f32 %v4921, %v507
    %v4943 = vmul.f32 %v4922, %v508
    %v4944 = vmul.f32 %v4923, %v509
    %v4945 = vmul.f32 %v4924, %v510
    %v4946 = vmul.f32 %v4925, %v511
    %v4947 = vmul.f32 %v4926, %v512
    %v4948 = vmul.f32 %v4927, %v513
    %v4949 = vmul.f32 %v4928, %v514
    %v4950 = vmul.f32 %v4929, %v515
    %v4951 = vmul.f32 %v4930, %v516
    %v4952 = vmul.f32 %v4931, %v517
    %v4953 = vmul.f32 %v4932, %v518
    %v4954 = vmul.f32 %v4933, %v519
    %v4955 = vmul.f32 %v4934, %v520
    %v4956 = vmul.f32 %v4935, %v521
    %v4957 = vmul.f32 %v4936, %v522
    %v4958 = vmul.f32 %v4937, %v523
    %v4959 = vmul.f32 %v4938, %v524
    %v4960 = vmul.f32 %v4939, %v525
    %s4961 = scalar_lea.vmem %s3, 512
    %v4962 = vld [vmem:[%s4961] sm:$0xff]
    %v4963 = vld [vmem:[%s4961 + $0x8] sm:$0xff]
    %v4964 = vld [vmem:[%s4961 + $0x10] sm:$0xff]
    %v4965 = vld [vmem:[%s4961 + $0x18] sm:$0xff]
    %v4966 = vld [vmem:[%s4961 + $0x20] sm:$0xff]
    %v4967 = vld [vmem:[%s4961 + $0x28] sm:$0xff]
    %v4968 = vld [vmem:[%s4961 + $0x30] sm:$0xff]
    %v4969 = vld [vmem:[%s4961 + $0x38] sm:$0xff]
    %v4971 = vsel %vm2299, %v4940, 0
    %v4974 = vsel %vm2299, %v4941, 0
    %v4977 = vsel %vm2299, %v4942, 0
    %v4980 = vsel %vm2299, %v4943, 0
    %v4983 = vsel %vm2299, %v4944, 0
    %v4986 = vsel %vm2299, %v4945, 0
    %v4989 = vsel %vm2299, %v4946, 0
    %v4992 = vsel %vm2299, %v4947, 0
    %v4995 = vsel %vm2299, %v4948, 0
    %v4998 = vsel %vm2299, %v4949, 0
    %v5001 = vsel %vm2299, %v4950, 0
    %v5004 = vsel %vm2299, %v4951, 0
    %v5007 = vsel %vm2299, %v4952, 0
    %v5010 = vsel %vm2299, %v4953, 0
    %v5013 = vsel %vm2299, %v4954, 0
    %v5016 = vsel %vm2299, %v4955, 0
    %v5019 = vsel %vm2299, %v4956, 0
    %v5022 = vsel %vm2299, %v4957, 0
    %v5025 = vsel %vm2299, %v4958, 0
    %v5028 = vsel %vm2299, %v4959, 0
    %v5031 = vsel %vm2299, %v4960, 0
    %5033 = vmatprep.subr.mxu0 0.0
    %5034 = vmatpush1.msra.mxu0 0.0
    %5035 = vmatprep.subr.mxu0 0.0
    %5036 = vmatpush1.msra.mxu0 0.0
    %5037 = vmatprep.subr.mxu0 0.0
    %5038 = vmatpush1.msra.mxu0 0.0
    %5039 = vmatprep.subr.mxu0 0.0
    %5040 = vmatpush1.msra.mxu0 0.0
    %5041 = vmatprep.subr.mxu0 0.0
    %5042 = vmatpush1.msra.mxu0 0.0
    %5043 = vmatprep.subr.mxu0 0.0
    %5044 = vmatpush1.msra.mxu0 0.0
    %5045 = vmatprep.subr.mxu0 0.0
    %5046 = vmatpush1.msra.mxu0 0.0
    %5047 = vmatprep.subr.mxu0 0.0
    %5048 = vmatpush1.msra.mxu0 0.0
    %5049 = vmatprep.subr.mxu0 0.0
    %5050 = vmatpush1.msra.mxu0 %v4969
    %5051 = vmatprep.subr.mxu0 0.0
    %5052 = vmatpush1.msra.mxu0 %v4968
    %5053 = vmatprep.subr.mxu0 0.0
    %5054 = vmatpush1.msra.mxu0 %v4967
    %5055 = vmatprep.subr.mxu0 0.0
    %5056 = vmatpush1.msra.mxu0 %v4966
    %5057 = vmatprep.subr.mxu0 0.0
    %5058 = vmatpush1.msra.mxu0 %v4965
    %5059 = vmatprep.subr.mxu0 0.0
    %5060 = vmatpush1.msra.mxu0 %v4964
    %5061 = vmatprep.subr.mxu0 0.0
    %5062 = vmatpush1.msra.mxu0 %v4963
    %5063 = vmatprep.subr.mxu0 0.0
    %5064 = vmatpush1.msra.mxu0 %v4962
    %5065 = vmatprep.subr.mxu0 0.0
    %5066 = vmatpush2.msra.mxu0 0.0
    %5067 = vmatprep.subr.mxu0 0.0
    %5068 = vmatpush2.msra.mxu0 0.0
    %5069 = vmatprep.subr.mxu0 0.0
    %5070 = vmatpush2.msra.mxu0 0.0
    %5071 = vmatprep.subr.mxu0 0.0
    %5072 = vmatpush2.msra.mxu0 0.0
    %5073 = vmatprep.subr.mxu0 0.0
    %5074 = vmatpush2.msra.mxu0 0.0
    %5075 = vmatprep.subr.mxu0 0.0
    %5076 = vmatpush2.msra.mxu0 0.0
    %5077 = vmatprep.subr.mxu0 0.0
    %5078 = vmatpush2.msra.mxu0 0.0
    %5079 = vmatprep.subr.mxu0 0.0
    %5080 = vmatpush2.msra.mxu0 0.0
    %5081 = vmatprep.subr.mxu0 0.0
    %5082 = vmatpush2.msra.mxu0 0.0
    %5083 = vmatprep.subr.mxu0 0.0
    %5084 = vmatpush2.msra.mxu0 0.0
    %5085 = vmatprep.subr.mxu0 0.0
    %5086 = vmatpush2.msra.mxu0 0.0
    %5087 = vmatprep.subr.mxu0 0.0
    %5088 = vmatpush2.msra.mxu0 0.0
    %5089 = vmatprep.subr.mxu0 0.0
    %5090 = vmatpush2.msra.mxu0 0.0
    %5091 = vmatprep.subr.mxu0 0.0
    %5092 = vmatpush2.msra.mxu0 0.0
    %5093 = vmatprep.subr.mxu0 0.0
    %5094 = vmatpush2.msra.mxu0 0.0
    %5095 = vmatprep.subr.mxu0 0.0
    %5096 = vmatpush2.msra.mxu0 0.0
    %5097 = vmatprep.mubr.f32.mxu0 0.0
    %5098 = vmatmul.mubr.f32.gmra.mxu0 %v4971
    %v5099 = vpop.f32.mrf.mxu0
    %v5100 = vadd.f32 0.0, %v5099
    %v5101 = vpop.f32.mrf.mxu0
    %5102 = vmatprep.mubr.f32.mxu0 0.0
    %5103 = vmatmul.mubr.f32.gmra.mxu0 %v4974
    %v5104 = vpop.f32.mrf.mxu0
    %v5105 = vadd.f32 0.0, %v5104
    %v5106 = vpop.f32.mrf.mxu0
    %5107 = vmatprep.mubr.f32.mxu0 0.0
    %5108 = vmatmul.mubr.f32.gmra.mxu0 %v4977
    %v5109 = vpop.f32.mrf.mxu0
    %v5110 = vadd.f32 0.0, %v5109
    %v5111 = vpop.f32.mrf.mxu0
    %5112 = vmatprep.mubr.f32.mxu0 0.0
    %5113 = vmatmul.mubr.f32.gmra.mxu0 %v4980
    %v5114 = vpop.f32.mrf.mxu0
    %v5115 = vadd.f32 0.0, %v5114
    %v5116 = vpop.f32.mrf.mxu0
    %5117 = vmatprep.mubr.f32.mxu0 0.0
    %5118 = vmatmul.mubr.f32.gmra.mxu0 %v4983
    %v5119 = vpop.f32.mrf.mxu0
    %v5120 = vadd.f32 0.0, %v5119
    %v5121 = vpop.f32.mrf.mxu0
    %5122 = vmatprep.mubr.f32.mxu0 0.0
    %5123 = vmatmul.mubr.f32.gmra.mxu0 %v4986
    %v5124 = vpop.f32.mrf.mxu0
    %v5125 = vadd.f32 0.0, %v5124
    %v5126 = vpop.f32.mrf.mxu0
    %5127 = vmatprep.mubr.f32.mxu0 0.0
    %5128 = vmatmul.mubr.f32.gmra.mxu0 %v4989
    %v5129 = vpop.f32.mrf.mxu0
    %v5130 = vadd.f32 0.0, %v5129
    %v5131 = vpop.f32.mrf.mxu0
    %5132 = vmatprep.mubr.f32.mxu0 0.0
    %5133 = vmatmul.mubr.f32.gmra.mxu0 %v4992
    %v5134 = vpop.f32.mrf.mxu0
    %v5135 = vadd.f32 0.0, %v5134
    %v5136 = vpop.f32.mrf.mxu0
    %5137 = vmatprep.mubr.f32.mxu0 0.0
    %5138 = vmatmul.mubr.f32.gmra.mxu0 %v4995
    %v5139 = vpop.f32.mrf.mxu0
    %v5140 = vadd.f32 0.0, %v5139
    %v5141 = vpop.f32.mrf.mxu0
    %5142 = vmatprep.mubr.f32.mxu0 0.0
    %5143 = vmatmul.mubr.f32.gmra.mxu0 %v4998
    %v5144 = vpop.f32.mrf.mxu0
    %v5145 = vadd.f32 0.0, %v5144
    %v5146 = vpop.f32.mrf.mxu0
    %5147 = vmatprep.mubr.f32.mxu0 0.0
    %5148 = vmatmul.mubr.f32.gmra.mxu0 %v5001
    %v5149 = vpop.f32.mrf.mxu0
    %v5150 = vadd.f32 0.0, %v5149
    %v5151 = vpop.f32.mrf.mxu0
    %5152 = vmatprep.mubr.f32.mxu0 0.0
    %5153 = vmatmul.mubr.f32.gmra.mxu0 %v5004
    %v5154 = vpop.f32.mrf.mxu0
    %v5155 = vadd.f32 0.0, %v5154
    %v5156 = vpop.f32.mrf.mxu0
    %5157 = vmatprep.mubr.f32.mxu0 0.0
    %5158 = vmatmul.mubr.f32.gmra.mxu0 %v5007
    %v5159 = vpop.f32.mrf.mxu0
    %v5160 = vadd.f32 0.0, %v5159
    %v5161 = vpop.f32.mrf.mxu0
    %5162 = vmatprep.mubr.f32.mxu0 0.0
    %5163 = vmatmul.mubr.f32.gmra.mxu0 %v5010
    %v5164 = vpop.f32.mrf.mxu0
    %v5165 = vadd.f32 0.0, %v5164
    %v5166 = vpop.f32.mrf.mxu0
    %5167 = vmatprep.mubr.f32.mxu0 0.0
    %5168 = vmatmul.mubr.f32.gmra.mxu0 %v5013
    %v5169 = vpop.f32.mrf.mxu0
    %v5170 = vadd.f32 0.0, %v5169
    %v5171 = vpop.f32.mrf.mxu0
    %5172 = vmatprep.mubr.f32.mxu0 0.0
    %5173 = vmatmul.mubr.f32.gmra.mxu0 %v5016
    %v5174 = vpop.f32.mrf.mxu0
    %v5175 = vadd.f32 0.0, %v5174
    %v5176 = vpop.f32.mrf.mxu0
    %5177 = vmatprep.mubr.f32.mxu0 0.0
    %5178 = vmatmul.mubr.f32.gmra.mxu0 %v5019
    %v5179 = vpop.f32.mrf.mxu0
    %v5180 = vadd.f32 0.0, %v5179
    %v5181 = vpop.f32.mrf.mxu0
    %5182 = vmatprep.mubr.f32.mxu0 0.0
    %5183 = vmatmul.mubr.f32.gmra.mxu0 %v5022
    %v5184 = vpop.f32.mrf.mxu0
    %v5185 = vadd.f32 0.0, %v5184
    %v5186 = vpop.f32.mrf.mxu0
    %5187 = vmatprep.mubr.f32.mxu0 0.0
    %5188 = vmatmul.mubr.f32.gmra.mxu0 %v5025
    %v5189 = vpop.f32.mrf.mxu0
    %v5190 = vadd.f32 0.0, %v5189
    %v5191 = vpop.f32.mrf.mxu0
    %5192 = vmatprep.mubr.f32.mxu0 0.0
    %5193 = vmatmul.mubr.f32.gmra.mxu0 %v5028
    %v5194 = vpop.f32.mrf.mxu0
    %v5195 = vadd.f32 0.0, %v5194
    %v5196 = vpop.f32.mrf.mxu0
    %5197 = vmatprep.mubr.f32.mxu0 0.0
    %5198 = vmatmul.mubr.f32.gmra.mxu0 %v5031
    %v5199 = vpop.f32.mrf.mxu0
    %v5200 = vadd.f32 0.0, %v5199
    %v5201 = vpop.f32.mrf.mxu0
    %5202 = vdwg.mxu0
    %v5203 = vadd.f32 %v4898, %v5100
    %v5204 = vadd.f32 %v4899, %v5105
    %v5205 = vadd.f32 %v4900, %v5110
    %v5206 = vadd.f32 %v4901, %v5115
    %v5207 = vadd.f32 %v4902, %v5120
    %v5208 = vadd.f32 %v4903, %v5125
    %v5209 = vadd.f32 %v4904, %v5130
    %v5210 = vadd.f32 %v4905, %v5135
    %v5211 = vadd.f32 %v4906, %v5140
    %v5212 = vadd.f32 %v4907, %v5145
    %v5213 = vadd.f32 %v4908, %v5150
    %v5214 = vadd.f32 %v4909, %v5155
    %v5215 = vadd.f32 %v4910, %v5160
    %v5216 = vadd.f32 %v4911, %v5165
    %v5217 = vadd.f32 %v4912, %v5170
    %v5218 = vadd.f32 %v4913, %v5175
    %v5219 = vadd.f32 %v4914, %v5180
    %v5220 = vadd.f32 %v4915, %v5185
    %v5221 = vadd.f32 %v4916, %v5190
    %v5222 = vadd.f32 %v4917, %v5195
    %v5223 = vadd.f32 %v4918, %v5200
    %v5224 = vadd.f32 %v5203, %v5204
    %v5225 = vadd.f32 %v5224, %v5205
    %v5226 = vadd.f32 %v5225, %v5206
    %v5227 = vadd.f32 %v5226, %v5207
    %v5228 = vadd.f32 %v5227, %v5208
    %v5229 = vadd.f32 %v5228, %v5209
    %v5230 = vadd.f32 %v5229, %v5210
    %v5231 = vadd.f32 %v5230, %v5211
    %v5232 = vadd.f32 %v5231, %v5212
    %v5233 = vadd.f32 %v5232, %v5213
    %v5234 = vadd.f32 %v5233, %v5214
    %v5235 = vadd.f32 %v5234, %v5215
    %v5236 = vadd.f32 %v5235, %v5216
    %v5237 = vadd.f32 %v5236, %v5217
    %v5238 = vadd.f32 %v5237, %v5218
    %v5239 = vadd.f32 %v5238, %v5219
    %v5240 = vadd.f32 %v5239, %v5220
    %v5241 = vadd.f32 %v5240, %v5221
    %v5242 = vadd.f32 %v5241, %v5222
    %vm5243 = vcmask 1041408
    %v5244 = vsel %vm5243, %v5223, 0.0
    %v5245 = vadd.f32 %v5242, %v5244
    %v5246 = vrot.slane %v5245, 4
    %v5247 = vadd.f32 %v5245, %v5246
    %v5248 = vrot.slane %v5247, 2
    %v5249 = vadd.f32 %v5247, %v5248
    %v5250 = vrot.slane %v5249, 1
    %v5251 = vadd.f32 %v5249, %v5250
    %v5252 = vmul.f32 %v5251, %v2348
    %v5253 = vsub.f32 %v5203, %v5252
    %v5254 = vsub.f32 %v5204, %v5252
    %v5255 = vsub.f32 %v5205, %v5252
    %v5256 = vsub.f32 %v5206, %v5252
    %v5257 = vsub.f32 %v5207, %v5252
    %v5258 = vsub.f32 %v5208, %v5252
    %v5259 = vsub.f32 %v5209, %v5252
    %v5260 = vsub.f32 %v5210, %v5252
    %v5261 = vsub.f32 %v5211, %v5252
    %v5262 = vsub.f32 %v5212, %v5252
    %v5263 = vsub.f32 %v5213, %v5252
    %v5264 = vsub.f32 %v5214, %v5252
    %v5265 = vsub.f32 %v5215, %v5252
    %v5266 = vsub.f32 %v5216, %v5252
    %v5267 = vsub.f32 %v5217, %v5252
    %v5268 = vsub.f32 %v5218, %v5252
    %v5269 = vsub.f32 %v5219, %v5252
    %v5270 = vsub.f32 %v5220, %v5252
    %v5271 = vsub.f32 %v5221, %v5252
    %v5272 = vsub.f32 %v5222, %v5252
    %v5273 = vsub.f32 %v5223, %v5252
    %v5274 = vmul.f32 %v5253, %v5253
    %v5275 = vmul.f32 %v5254, %v5254
    %v5276 = vmul.f32 %v5255, %v5255
    %v5277 = vmul.f32 %v5256, %v5256
    %v5278 = vmul.f32 %v5257, %v5257
    %v5279 = vmul.f32 %v5258, %v5258
    %v5280 = vmul.f32 %v5259, %v5259
    %v5281 = vmul.f32 %v5260, %v5260
    %v5282 = vmul.f32 %v5261, %v5261
    %v5283 = vmul.f32 %v5262, %v5262
    %v5284 = vmul.f32 %v5263, %v5263
    %v5285 = vmul.f32 %v5264, %v5264
    %v5286 = vmul.f32 %v5265, %v5265
    %v5287 = vmul.f32 %v5266, %v5266
    %v5288 = vmul.f32 %v5267, %v5267
    %v5289 = vmul.f32 %v5268, %v5268
    %v5290 = vmul.f32 %v5269, %v5269
    %v5291 = vmul.f32 %v5270, %v5270
    %v5292 = vmul.f32 %v5271, %v5271
    %v5293 = vmul.f32 %v5272, %v5272
    %v5294 = vmul.f32 %v5273, %v5273
    %v5295 = vadd.f32 %v5274, %v5275
    %v5296 = vadd.f32 %v5295, %v5276
    %v5297 = vadd.f32 %v5296, %v5277
    %v5298 = vadd.f32 %v5297, %v5278
    %v5299 = vadd.f32 %v5298, %v5279
    %v5300 = vadd.f32 %v5299, %v5280
    %v5301 = vadd.f32 %v5300, %v5281
    %v5302 = vadd.f32 %v5301, %v5282
    %v5303 = vadd.f32 %v5302, %v5283
    %v5304 = vadd.f32 %v5303, %v5284
    %v5305 = vadd.f32 %v5304, %v5285
    %v5306 = vadd.f32 %v5305, %v5286
    %v5307 = vadd.f32 %v5306, %v5287
    %v5308 = vadd.f32 %v5307, %v5288
    %v5309 = vadd.f32 %v5308, %v5289
    %v5310 = vadd.f32 %v5309, %v5290
    %v5311 = vadd.f32 %v5310, %v5291
    %v5312 = vadd.f32 %v5311, %v5292
    %v5313 = vadd.f32 %v5312, %v5293
    %v5314 = vsel %vm5243, %v5294, 0.0
    %v5315 = vadd.f32 %v5313, %v5314
    %v5316 = vrot.slane %v5315, 4
    %v5317 = vadd.f32 %v5315, %v5316
    %v5318 = vrot.slane %v5317, 2
    %v5319 = vadd.f32 %v5317, %v5318
    %v5320 = vrot.slane %v5319, 1
    %v5321 = vadd.f32 %v5319, %v5320
    %v5322 = vmul.f32 %v5321, %v2348
    %v5323 = vld [vmem:[%s2 + $0xb] sm:$0x1]
    %v5324 = vadd.f32 %v5322, 1e-05
    %v5325 = vrsqrt.pop %v5324
    %v5326 = vmul.f32 %v5323, %v5325
    %v5327 = vlaneseq
    %v5328 = vshrl.u32 %v5327, 7
    %v5329 = vsub.s32 0, %v5328
    %v5330 = vrot.slane %v5326, %v5329
    %v5331 = vmul.f32 %v5203, %v5330
    %v5332 = vmul.f32 %v5204, %v5330
    %v5333 = vmul.f32 %v5205, %v5330
    %v5334 = vmul.f32 %v5206, %v5330
    %v5335 = vmul.f32 %v5207, %v5330
    %v5336 = vmul.f32 %v5208, %v5330
    %v5337 = vmul.f32 %v5209, %v5330
    %v5338 = vmul.f32 %v5210, %v5330
    %v5339 = vmul.f32 %v5211, %v5330
    %v5340 = vmul.f32 %v5212, %v5330
    %v5341 = vmul.f32 %v5213, %v5330
    %v5342 = vmul.f32 %v5214, %v5330
    %v5343 = vmul.f32 %v5215, %v5330
    %v5344 = vmul.f32 %v5216, %v5330
    %v5345 = vmul.f32 %v5217, %v5330
    %v5346 = vmul.f32 %v5218, %v5330
    %v5347 = vmul.f32 %v5219, %v5330
    %v5348 = vmul.f32 %v5220, %v5330
    %v5349 = vmul.f32 %v5221, %v5330
    %v5350 = vmul.f32 %v5222, %v5330
    %v5351 = vmul.f32 %v5223, %v5330
    %v5352 = vld [vmem:[%s2 + $0xc] sm:$0x1]
    %v5353 = vmul.f32 %v5252, %v5326
    %v5354 = vsub.f32 %v5352, %v5353
    %v5355 = vlaneseq
    %v5356 = vshrl.u32 %v5355, 7
    %v5357 = vsub.s32 0, %v5356
    %v5358 = vrot.slane %v5354, %v5357
    %v5359 = vadd.f32 %v5331, %v5358
    %v5360 = vadd.f32 %v5332, %v5358
    %v5361 = vadd.f32 %v5333, %v5358
    %v5362 = vadd.f32 %v5334, %v5358
    %v5363 = vadd.f32 %v5335, %v5358
    %v5364 = vadd.f32 %v5336, %v5358
    %v5365 = vadd.f32 %v5337, %v5358
    %v5366 = vadd.f32 %v5338, %v5358
    %v5367 = vadd.f32 %v5339, %v5358
    %v5368 = vadd.f32 %v5340, %v5358
    %v5369 = vadd.f32 %v5341, %v5358
    %v5370 = vadd.f32 %v5342, %v5358
    %v5371 = vadd.f32 %v5343, %v5358
    %v5372 = vadd.f32 %v5344, %v5358
    %v5373 = vadd.f32 %v5345, %v5358
    %v5374 = vadd.f32 %v5346, %v5358
    %v5375 = vadd.f32 %v5347, %v5358
    %v5376 = vadd.f32 %v5348, %v5358
    %v5377 = vadd.f32 %v5349, %v5358
    %v5378 = vadd.f32 %v5350, %v5358
    %v5379 = vadd.f32 %v5351, %v5358
    %v5380 = vmax.f32 %v5359, 0.0
    %v5381 = vmax.f32 %v5360, 0.0
    %v5382 = vmax.f32 %v5361, 0.0
    %v5383 = vmax.f32 %v5362, 0.0
    %v5384 = vmax.f32 %v5363, 0.0
    %v5385 = vmax.f32 %v5364, 0.0
    %v5386 = vmax.f32 %v5365, 0.0
    %v5387 = vmax.f32 %v5366, 0.0
    %v5388 = vmax.f32 %v5367, 0.0
    %v5389 = vmax.f32 %v5368, 0.0
    %v5390 = vmax.f32 %v5369, 0.0
    %v5391 = vmax.f32 %v5370, 0.0
    %v5392 = vmax.f32 %v5371, 0.0
    %v5393 = vmax.f32 %v5372, 0.0
    %v5394 = vmax.f32 %v5373, 0.0
    %v5395 = vmax.f32 %v5374, 0.0
    %v5396 = vmax.f32 %v5375, 0.0
    %v5397 = vmax.f32 %v5376, 0.0
    %v5398 = vmax.f32 %v5377, 0.0
    %v5399 = vmax.f32 %v5378, 0.0
    %v5400 = vmax.f32 %v5379, 0.0
    %5401 = vst [vmem:[#allocation4] sm:$0xff] %v5380
    %5402 = vst [vmem:[#allocation4 + $0x8] sm:$0xff] %v5381
    %5403 = vst [vmem:[#allocation4 + $0x10] sm:$0xff] %v5382
    %5404 = vst [vmem:[#allocation4 + $0x18] sm:$0xff] %v5383
    %5405 = vst [vmem:[#allocation4 + $0x20] sm:$0xff] %v5384
    %5406 = vst [vmem:[#allocation4 + $0x28] sm:$0xff] %v5385
    %5407 = vst [vmem:[#allocation4 + $0x30] sm:$0xff] %v5386
    %5408 = vst [vmem:[#allocation4 + $0x38] sm:$0xff] %v5387
    %5409 = vst [vmem:[#allocation4 + $0x40] sm:$0xff] %v5388
    %5410 = vst [vmem:[#allocation4 + $0x48] sm:$0xff] %v5389
    %5411 = vst [vmem:[#allocation4 + $0x50] sm:$0xff] %v5390
    %5412 = vst [vmem:[#allocation4 + $0x58] sm:$0xff] %v5391
    %5413 = vst [vmem:[#allocation4 + $0x60] sm:$0xff] %v5392
    %5414 = vst [vmem:[#allocation4 + $0x68] sm:$0xff] %v5393
    %5415 = vst [vmem:[#allocation4 + $0x70] sm:$0xff] %v5394
    %5416 = vst [vmem:[#allocation4 + $0x78] sm:$0xff] %v5395
    %5417 = vst [vmem:[#allocation4 + $0x80] sm:$0xff] %v5396
    %5418 = vst [vmem:[#allocation4 + $0x88] sm:$0xff] %v5397
    %5419 = vst [vmem:[#allocation4 + $0x90] sm:$0xff] %v5398
    %5420 = vst [vmem:[#allocation4 + $0x98] sm:$0xff] %v5399
    %5421 = vst [vmem:[#allocation4 + $0xa0] sm:$0x3] %v5400
    %v5422 = vld [vmem:[#allocation4] sm:$0x1]
    %5423 = vst [vmem:[#allocation5] sm:$0x1] %v5422
    %v5424 = vld [vmem:[#allocation4 + $0x51] sm:$0x1]
    %5425 = vst [vmem:[#allocation5 + $0x1] sm:$0x1] %v5424
    %v5426 = vld [vmem:[#allocation4 + $0x3] sm:$0x1]
    %5427 = vst [vmem:[#allocation5 + $0x2] sm:$0x1] %v5426
    %v5428 = vld [vmem:[#allocation4 + $0x54] sm:$0x1]
    %5429 = vst [vmem:[#allocation5 + $0x3] sm:$0x1] %v5428
    %v5430 = vld [vmem:[#allocation4 + $0x6] sm:$0x1]
    %5431 = vst [vmem:[#allocation5 + $0x4] sm:$0x1] %v5430
    %v5432 = vld [vmem:[#allocation4 + $0x57] sm:$0x1]
    %5433 = vst [vmem:[#allocation5 + $0x5] sm:$0x1] %v5432
    %v5434 = vld [vmem:[#allocation4 + $0x1b] sm:$0x1]
    %5435 = vst [vmem:[#allocation5 + $0x6] sm:$0x1] %v5434
    %v5436 = vld [vmem:[#allocation4 + $0x6c] sm:$0x1]
    %5437 = vst [vmem:[#allocation5 + $0x7] sm:$0x1] %v5436
    %v5438 = vld [vmem:[#allocation4 + $0x1e] sm:$0x1]
    %5439 = vst [vmem:[#allocation5 + $0x48] sm:$0x1] %v5438
    %v5440 = vld [vmem:[#allocation4 + $0x6f] sm:$0x1]
    %5441 = vst [vmem:[#allocation5 + $0x49] sm:$0x1] %v5440
    %v5442 = vld [vmem:[#allocation4 + $0x21] sm:$0x1]
    %5443 = vst [vmem:[#allocation5 + $0x4a] sm:$0x1] %v5442
    %v5444 = vld [vmem:[#allocation4 + $0x72] sm:$0x1]
    %5445 = vst [vmem:[#allocation5 + $0x4b] sm:$0x1] %v5444
    %v5446 = vld [vmem:[#allocation4 + $0x36] sm:$0x1]
    %5447 = vst [vmem:[#allocation5 + $0x4c] sm:$0x1] %v5446
    %v5448 = vld [vmem:[#allocation4 + $0x87] sm:$0x1]
    %5449 = vst [vmem:[#allocation5 + $0x4d] sm:$0x1] %v5448
    %v5450 = vld [vmem:[#allocation4 + $0x39] sm:$0x1]
    %5451 = vst [vmem:[#allocation5 + $0x4e] sm:$0x1] %v5450
    %v5452 = vld [vmem:[#allocation4 + $0x8a] sm:$0x1]
    %5453 = vst [vmem:[#allocation5 + $0x4f] sm:$0x1] %v5452
    %v5454 = vld [vmem:[#allocation4 + $0x3c] sm:$0x1]
    %5455 = vst [vmem:[#allocation5 + $0x90] sm:$0x1] %v5454
    %v5456 = vld [vmem:[#allocation4 + $0x8d] sm:$0x1]
    %5457 = vst [vmem:[#allocation5 + $0x91] sm:$0x1] %v5456
    %v5458 = vld [vmem:[#allocation4 + $0x1] sm:$0x1]
    %5459 = vst [vmem:[#allocation5 + $0x8] sm:$0x1] %v5458
    %v5460 = vld [vmem:[#allocation4 + $0x52] sm:$0x1]
    %5461 = vst [vmem:[#allocation5 + $0x9] sm:$0x1] %v5460
    %v5462 = vld [vmem:[#allocation4 + $0x4] sm:$0x1]
    %5463 = vst [vmem:[#allocation5 + $0xa] sm:$0x1] %v5462
    %v5464 = vld [vmem:[#allocation4 + $0x55] sm:$0x1]
    %5465 = vst [vmem:[#allocation5 + $0xb] sm:$0x1] %v5464
    %v5466 = vld [vmem:[#allocation4 + $0x7] sm:$0x1]
    %5467 = vst [vmem:[#allocation5 + $0xc] sm:$0x1] %v5466
    %v5468 = vld [vmem:[#allocation4 + $0x58] sm:$0x1]
    %5469 = vst [vmem:[#allocation5 + $0xd] sm:$0x1] %v5468
    %v5470 = vld [vmem:[#allocation4 + $0x1c] sm:$0x1]
    %5471 = vst [vmem:[#allocation5 + $0xe] sm:$0x1] %v5470
    %v5472 = vld [vmem:[#allocation4 + $0x6d] sm:$0x1]
    %5473 = vst [vmem:[#allocation5 + $0xf] sm:$0x1] %v5472
    %v5474 = vld [vmem:[#allocation4 + $0x1f] sm:$0x1]
    %5475 = vst [vmem:[#allocation5 + $0x50] sm:$0x1] %v5474
    %v5476 = vld [vmem:[#allocation4 + $0x70] sm:$0x1]
    %5477 = vst [vmem:[#allocation5 + $0x51] sm:$0x1] %v5476
    %v5478 = vld [vmem:[#allocation4 + $0x22] sm:$0x1]
    %5479 = vst [vmem:[#allocation5 + $0x52] sm:$0x1] %v5478
    %v5480 = vld [vmem:[#allocation4 + $0x73] sm:$0x1]
    %5481 = vst [vmem:[#allocation5 + $0x53] sm:$0x1] %v5480
    %v5482 = vld [vmem:[#allocation4 + $0x37] sm:$0x1]
    %5483 = vst [vmem:[#allocation5 + $0x54] sm:$0x1] %v5482
    %v5484 = vld [vmem:[#allocation4 + $0x88] sm:$0x1]
    %5485 = vst [vmem:[#allocation5 + $0x55] sm:$0x1] %v5484
    %v5486 = vld [vmem:[#allocation4 + $0x3a] sm:$0x1]
    %5487 = vst [vmem:[#allocation5 + $0x56] sm:$0x1] %v5486
    %v5488 = vld [vmem:[#allocation4 + $0x8b] sm:$0x1]
    %5489 = vst [vmem:[#allocation5 + $0x57] sm:$0x1] %v5488
    %v5490 = vld [vmem:[#allocation4 + $0x3d] sm:$0x1]
    %5491 = vst [vmem:[#allocation5 + $0x98] sm:$0x1] %v5490
    %v5492 = vld [vmem:[#allocation4 + $0x8e] sm:$0x1]
    %5493 = vst [vmem:[#allocation5 + $0x99] sm:$0x1] %v5492
    %v5494 = vld [vmem:[#allocation4 + $0x2] sm:$0x1]
    %5495 = vst [vmem:[#allocation5 + $0x10] sm:$0x1] %v5494
    %v5496 = vld [vmem:[#allocation4 + $0x53] sm:$0x1]
    %5497 = vst [vmem:[#allocation5 + $0x11] sm:$0x1] %v5496
    %v5498 = vld [vmem:[#allocation4 + $0x5] sm:$0x1]
    %5499 = vst [vmem:[#allocation5 + $0x12] sm:$0x1] %v5498
    %v5500 = vld [vmem:[#allocation4 + $0x56] sm:$0x1]
    %5501 = vst [vmem:[#allocation5 + $0x13] sm:$0x1] %v5500
    %v5502 = vld [vmem:[#allocation4 + $0x8] sm:$0x1]
    %5503 = vst [vmem:[#allocation5 + $0x14] sm:$0x1] %v5502
    %v5504 = vld [vmem:[#allocation4 + $0x59] sm:$0x1]
    %5505 = vst [vmem:[#allocation5 + $0x15] sm:$0x1] %v5504
    %v5506 = vld [vmem:[#allocation4 + $0x1d] sm:$0x1]
    %5507 = vst [vmem:[#allocation5 + $0x16] sm:$0x1] %v5506
    %v5508 = vld [vmem:[#allocation4 + $0x6e] sm:$0x1]
    %5509 = vst [vmem:[#allocation5 + $0x17] sm:$0x1] %v5508
    %v5510 = vld [vmem:[#allocation4 + $0x20] sm:$0x1]
    %5511 = vst [vmem:[#allocation5 + $0x58] sm:$0x1] %v5510
    %v5512 = vld [vmem:[#allocation4 + $0x71] sm:$0x1]
    %5513 = vst [vmem:[#allocation5 + $0x59] sm:$0x1] %v5512
    %v5514 = vld [vmem:[#allocation4 + $0x23] sm:$0x1]
    %5515 = vst [vmem:[#allocation5 + $0x5a] sm:$0x1] %v5514
    %v5516 = vld [vmem:[#allocation4 + $0x74] sm:$0x1]
    %5517 = vst [vmem:[#allocation5 + $0x5b] sm:$0x1] %v5516
    %v5518 = vld [vmem:[#allocation4 + $0x38] sm:$0x1]
    %5519 = vst [vmem:[#allocation5 + $0x5c] sm:$0x1] %v5518
    %v5520 = vld [vmem:[#allocation4 + $0x89] sm:$0x1]
    %5521 = vst [vmem:[#allocation5 + $0x5d] sm:$0x1] %v5520
    %v5522 = vld [vmem:[#allocation4 + $0x3b] sm:$0x1]
    %5523 = vst [vmem:[#allocation5 + $0x5e] sm:$0x1] %v5522
    %v5524 = vld [vmem:[#allocation4 + $0x8c] sm:$0x1]
    %5525 = vst [vmem:[#allocation5 + $0x5f] sm:$0x1] %v5524
    %v5526 = vld [vmem:[#allocation4 + $0x3e] sm:$0x1]
    %5527 = vst [vmem:[#allocation5 + $0xa0] sm:$0x1] %v5526
    %v5528 = vld [vmem:[#allocation4 + $0x8f] sm:$0x1]
    %5529 = vst [vmem:[#allocation5 + $0xa1] sm:$0x1] %v5528
    %v5530 = vld [vmem:[#allocation4 + $0x9] sm:$0x1]
    %5531 = vst [vmem:[#allocation5 + $0x18] sm:$0x1] %v5530
    %v5532 = vld [vmem:[#allocation4 + $0x5a] sm:$0x1]
    %5533 = vst [vmem:[#allocation5 + $0x19] sm:$0x1] %v5532
    %v5534 = vld [vmem:[#allocation4 + $0xc] sm:$0x1]
    %5535 = vst [vmem:[#allocation5 + $0x1a] sm:$0x1] %v5534
    %v5536 = vld [vmem:[#allocation4 + $0x5d] sm:$0x1]
    %5537 = vst [vmem:[#allocation5 + $0x1b] sm:$0x1] %v5536
    %v5538 = vld [vmem:[#allocation4 + $0xf] sm:$0x1]
    %5539 = vst [vmem:[#allocation5 + $0x1c] sm:$0x1] %v5538
    %v5540 = vld [vmem:[#allocation4 + $0x60] sm:$0x1]
    %5541 = vst [vmem:[#allocation5 + $0x1d] sm:$0x1] %v5540
    %v5542 = vld [vmem:[#allocation4 + $0x24] sm:$0x1]
    %5543 = vst [vmem:[#allocation5 + $0x1e] sm:$0x1] %v5542
    %v5544 = vld [vmem:[#allocation4 + $0x75] sm:$0x1]
    %5545 = vst [vmem:[#allocation5 + $0x1f] sm:$0x1] %v5544
    %v5546 = vld [vmem:[#allocation4 + $0x27] sm:$0x1]
    %5547 = vst [vmem:[#allocation5 + $0x60] sm:$0x1] %v5546
    %v5548 = vld [vmem:[#allocation4 + $0x78] sm:$0x1]
    %5549 = vst [vmem:[#allocation5 + $0x61] sm:$0x1] %v5548
    %v5550 = vld [vmem:[#allocation4 + $0x2a] sm:$0x1]
    %5551 = vst [vmem:[#allocation5 + $0x62] sm:$0x1] %v5550
    %v5552 = vld [vmem:[#allocation4 + $0x7b] sm:$0x1]
    %5553 = vst [vmem:[#allocation5 + $0x63] sm:$0x1] %v5552
    %v5554 = vld [vmem:[#allocation4 + $0x3f] sm:$0x1]
    %5555 = vst [vmem:[#allocation5 + $0x64] sm:$0x1] %v5554
    %v5556 = vld [vmem:[#allocation4 + $0x90] sm:$0x1]
    %5557 = vst [vmem:[#allocation5 + $0x65] sm:$0x1] %v5556
    %v5558 = vld [vmem:[#allocation4 + $0x42] sm:$0x1]
    %5559 = vst [vmem:[#allocation5 + $0x66] sm:$0x1] %v5558
    %v5560 = vld [vmem:[#allocation4 + $0x93] sm:$0x1]
    %5561 = vst [vmem:[#allocation5 + $0x67] sm:$0x1] %v5560
    %v5562 = vld [vmem:[#allocation4 + $0x45] sm:$0x1]
    %5563 = vst [vmem:[#allocation5 + $0xa8] sm:$0x1] %v5562
    %v5564 = vld [vmem:[#allocation4 + $0x96] sm:$0x1]
    %5565 = vst [vmem:[#allocation5 + $0xa9] sm:$0x1] %v5564
    %v5566 = vld [vmem:[#allocation4 + $0xa] sm:$0x1]
    %5567 = vst [vmem:[#allocation5 + $0x20] sm:$0x1] %v5566
    %v5568 = vld [vmem:[#allocation4 + $0x5b] sm:$0x1]
    %5569 = vst [vmem:[#allocation5 + $0x21] sm:$0x1] %v5568
    %v5570 = vld [vmem:[#allocation4 + $0xd] sm:$0x1]
    %5571 = vst [vmem:[#allocation5 + $0x22] sm:$0x1] %v5570
    %v5572 = vld [vmem:[#allocation4 + $0x5e] sm:$0x1]
    %5573 = vst [vmem:[#allocation5 + $0x23] sm:$0x1] %v5572
    %v5574 = vld [vmem:[#allocation4 + $0x10] sm:$0x1]
    %5575 = vst [vmem:[#allocation5 + $0x24] sm:$0x1] %v5574
    %v5576 = vld [vmem:[#allocation4 + $0x61] sm:$0x1]
    %5577 = vst [vmem:[#allocation5 + $0x25] sm:$0x1] %v5576
    %v5578 = vld [vmem:[#allocation4 + $0x25] sm:$0x1]
    %5579 = vst [vmem:[#allocation5 + $0x26] sm:$0x1] %v5578
    %v5580 = vld [vmem:[#allocation4 + $0x76] sm:$0x1]
    %5581 = vst [vmem:[#allocation5 + $0x27] sm:$0x1] %v5580
    %v5582 = vld [vmem:[#allocation4 + $0x28] sm:$0x1]
    %5583 = vst [vmem:[#allocation5 + $0x68] sm:$0x1] %v5582
    %v5584 = vld [vmem:[#allocation4 + $0x79] sm:$0x1]
    %5585 = vst [vmem:[#allocation5 + $0x69] sm:$0x1] %v5584
    %v5586 = vld [vmem:[#allocation4 + $0x2b] sm:$0x1]
    %5587 = vst [vmem:[#allocation5 + $0x6a] sm:$0x1] %v5586
    %v5588 = vld [vmem:[#allocation4 + $0x7c] sm:$0x1]
    %5589 = vst [vmem:[#allocation5 + $0x6b] sm:$0x1] %v5588
    %v5590 = vld [vmem:[#allocation4 + $0x40] sm:$0x1]
    %5591 = vst [vmem:[#allocation5 + $0x6c] sm:$0x1] %v5590
    %v5592 = vld [vmem:[#allocation4 + $0x91] sm:$0x1]
    %5593 = vst [vmem:[#allocation5 + $0x6d] sm:$0x1] %v5592
    %v5594 = vld [vmem:[#allocation4 + $0x43] sm:$0x1]
    %5595 = vst [vmem:[#allocation5 + $0x6e] sm:$0x1] %v5594
    %v5596 = vld [vmem:[#allocation4 + $0x94] sm:$0x1]
    %5597 = vst [vmem:[#allocation5 + $0x6f] sm:$0x1] %v5596
    %v5598 = vld [vmem:[#allocation4 + $0x46] sm:$0x1]
    %5599 = vst [vmem:[#allocation5 + $0xb0] sm:$0x1] %v5598
    %v5600 = vld [vmem:[#allocation4 + $0x97] sm:$0x1]
    %5601 = vst [vmem:[#allocation5 + $0xb1] sm:$0x1] %v5600
    %v5602 = vld [vmem:[#allocation4 + $0xb] sm:$0x1]
    %5603 = vst [vmem:[#allocation5 + $0x28] sm:$0x1] %v5602
    %v5604 = vld [vmem:[#allocation4 + $0x5c] sm:$0x1]
    %5605 = vst [vmem:[#allocation5 + $0x29] sm:$0x1] %v5604
    %v5606 = vld [vmem:[#allocation4 + $0xe] sm:$0x1]
    %5607 = vst [vmem:[#allocation5 + $0x2a] sm:$0x1] %v5606
    %v5608 = vld [vmem:[#allocation4 + $0x5f] sm:$0x1]
    %5609 = vst [vmem:[#allocation5 + $0x2b] sm:$0x1] %v5608
    %v5610 = vld [vmem:[#allocation4 + $0x11] sm:$0x1]
    %5611 = vst [vmem:[#allocation5 + $0x2c] sm:$0x1] %v5610
    %v5612 = vld [vmem:[#allocation4 + $0x62] sm:$0x1]
    %5613 = vst [vmem:[#allocation5 + $0x2d] sm:$0x1] %v5612
    %v5614 = vld [vmem:[#allocation4 + $0x26] sm:$0x1]
    %5615 = vst [vmem:[#allocation5 + $0x2e] sm:$0x1] %v5614
    %v5616 = vld [vmem:[#allocation4 + $0x77] sm:$0x1]
    %5617 = vst [vmem:[#allocation5 + $0x2f] sm:$0x1] %v5616
    %v5618 = vld [vmem:[#allocation4 + $0x29] sm:$0x1]
    %5619 = vst [vmem:[#allocation5 + $0x70] sm:$0x1] %v5618
    %v5620 = vld [vmem:[#allocation4 + $0x7a] sm:$0x1]
    %5621 = vst [vmem:[#allocation5 + $0x71] sm:$0x1] %v5620
    %v5622 = vld [vmem:[#allocation4 + $0x2c] sm:$0x1]
    %5623 = vst [vmem:[#allocation5 + $0x72] sm:$0x1] %v5622
    %v5624 = vld [vmem:[#allocation4 + $0x7d] sm:$0x1]
    %5625 = vst [vmem:[#allocation5 + $0x73] sm:$0x1] %v5624
    %v5626 = vld [vmem:[#allocation4 + $0x41] sm:$0x1]
    %5627 = vst [vmem:[#allocation5 + $0x74] sm:$0x1] %v5626
    %v5628 = vld [vmem:[#allocation4 + $0x92] sm:$0x1]
    %5629 = vst [vmem:[#allocation5 + $0x75] sm:$0x1] %v5628
    %v5630 = vld [vmem:[#allocation4 + $0x44] sm:$0x1]
    %5631 = vst [vmem:[#allocation5 + $0x76] sm:$0x1] %v5630
    %v5632 = vld [vmem:[#allocation4 + $0x95] sm:$0x1]
    %5633 = vst [vmem:[#allocation5 + $0x77] sm:$0x1] %v5632
    %v5634 = vld [vmem:[#allocation4 + $0x47] sm:$0x1]
    %5635 = vst [vmem:[#allocation5 + $0xb8] sm:$0x1] %v5634
    %v5636 = vld [vmem:[#allocation4 + $0x98] sm:$0x1]
    %5637 = vst [vmem:[#allocation5 + $0xb9] sm:$0x1] %v5636
    %v5638 = vld [vmem:[#allocation4 + $0x12] sm:$0x1]
    %5639 = vst [vmem:[#allocation5 + $0x30] sm:$0x1] %v5638
    %v5640 = vld [vmem:[#allocation4 + $0x63] sm:$0x1]
    %5641 = vst [vmem:[#allocation5 + $0x31] sm:$0x1] %v5640
    %v5642 = vld [vmem:[#allocation4 + $0x15] sm:$0x1]
    %5643 = vst [vmem:[#allocation5 + $0x32] sm:$0x1] %v5642
    %v5644 = vld [vmem:[#allocation4 + $0x66] sm:$0x1]
    %5645 = vst [vmem:[#allocation5 + $0x33] sm:$0x1] %v5644
    %v5646 = vld [vmem:[#allocation4 + $0x18] sm:$0x1]
    %5647 = vst [vmem:[#allocation5 + $0x34] sm:$0x1] %v5646
    %v5648 = vld [vmem:[#allocation4 + $0x69] sm:$0x1]
    %5649 = vst [vmem:[#allocation5 + $0x35] sm:$0x1] %v5648
    %v5650 = vld [vmem:[#allocation4 + $0x2d] sm:$0x1]
    %5651 = vst [vmem:[#allocation5 + $0x36] sm:$0x1] %v5650
    %v5652 = vld [vmem:[#allocation4 + $0x7e] sm:$0x1]
    %5653 = vst [vmem:[#allocation5 + $0x37] sm:$0x1] %v5652
    %v5654 = vld [vmem:[#allocation4 + $0x30] sm:$0x1]
    %5655 = vst [vmem:[#allocation5 + $0x78] sm:$0x1] %v5654
    %v5656 = vld [vmem:[#allocation4 + $0x81] sm:$0x1]
    %5657 = vst [vmem:[#allocation5 + $0x79] sm:$0x1] %v5656
    %v5658 = vld [vmem:[#allocation4 + $0x33] sm:$0x1]
    %5659 = vst [vmem:[#allocation5 + $0x7a] sm:$0x1] %v5658
    %v5660 = vld [vmem:[#allocation4 + $0x84] sm:$0x1]
    %5661 = vst [vmem:[#allocation5 + $0x7b] sm:$0x1] %v5660
    %v5662 = vld [vmem:[#allocation4 + $0x48] sm:$0x1]
    %5663 = vst [vmem:[#allocation5 + $0x7c] sm:$0x1] %v5662
    %v5664 = vld [vmem:[#allocation4 + $0x99] sm:$0x1]
    %5665 = vst [vmem:[#allocation5 + $0x7d] sm:$0x1] %v5664
    %v5666 = vld [vmem:[#allocation4 + $0x4b] sm:$0x1]
    %5667 = vst [vmem:[#allocation5 + $0x7e] sm:$0x1] %v5666
    %v5668 = vld [vmem:[#allocation4 + $0x9c] sm:$0x1]
    %5669 = vst [vmem:[#allocation5 + $0x7f] sm:$0x1] %v5668
    %v5670 = vld [vmem:[#allocation4 + $0x4e] sm:$0x1]
    %5671 = vst [vmem:[#allocation5 + $0xc0] sm:$0x1] %v5670
    %v5672 = vld [vmem:[#allocation4 + $0x9f] sm:$0x1]
    %5673 = vst [vmem:[#allocation5 + $0xc1] sm:$0x1] %v5672
    %v5674 = vld [vmem:[#allocation4 + $0x13] sm:$0x1]
    %5675 = vst [vmem:[#allocation5 + $0x38] sm:$0x1] %v5674
    %v5676 = vld [vmem:[#allocation4 + $0x64] sm:$0x1]
    %5677 = vst [vmem:[#allocation5 + $0x39] sm:$0x1] %v5676
    %v5678 = vld [vmem:[#allocation4 + $0x16] sm:$0x1]
    %5679 = vst [vmem:[#allocation5 + $0x3a] sm:$0x1] %v5678
    %v5680 = vld [vmem:[#allocation4 + $0x67] sm:$0x1]
    %5681 = vst [vmem:[#allocation5 + $0x3b] sm:$0x1] %v5680
    %v5682 = vld [vmem:[#allocation4 + $0x19] sm:$0x1]
    %5683 = vst [vmem:[#allocation5 + $0x3c] sm:$0x1] %v5682
    %v5684 = vld [vmem:[#allocation4 + $0x6a] sm:$0x1]
    %5685 = vst [vmem:[#allocation5 + $0x3d] sm:$0x1] %v5684
    %v5686 = vld [vmem:[#allocation4 + $0x2e] sm:$0x1]
    %5687 = vst [vmem:[#allocation5 + $0x3e] sm:$0x1] %v5686
    %v5688 = vld [vmem:[#allocation4 + $0x7f] sm:$0x1]
    %5689 = vst [vmem:[#allocation5 + $0x3f] sm:$0x1] %v5688
    %v5690 = vld [vmem:[#allocation4 + $0x31] sm:$0x1]
    %5691 = vst [vmem:[#allocation5 + $0x80] sm:$0x1] %v5690
    %v5692 = vld [vmem:[#allocation4 + $0x82] sm:$0x1]
    %5693 = vst [vmem:[#allocation5 + $0x81] sm:$0x1] %v5692
    %v5694 = vld [vmem:[#allocation4 + $0x34] sm:$0x1]
    %5695 = vst [vmem:[#allocation5 + $0x82] sm:$0x1] %v5694
    %v5696 = vld [vmem:[#allocation4 + $0x85] sm:$0x1]
    %5697 = vst [vmem:[#allocation5 + $0x83] sm:$0x1] %v5696
    %v5698 = vld [vmem:[#allocation4 + $0x49] sm:$0x1]
    %5699 = vst [vmem:[#allocation5 + $0x84] sm:$0x1] %v5698
    %v5700 = vld [vmem:[#allocation4 + $0x9a] sm:$0x1]
    %5701 = vst [vmem:[#allocation5 + $0x85] sm:$0x1] %v5700
    %v5702 = vld [vmem:[#allocation4 + $0x4c] sm:$0x1]
    %5703 = vst [vmem:[#allocation5 + $0x86] sm:$0x1] %v5702
    %v5704 = vld [vmem:[#allocation4 + $0x9d] sm:$0x1]
    %5705 = vst [vmem:[#allocation5 + $0x87] sm:$0x1] %v5704
    %v5706 = vld [vmem:[#allocation4 + $0x4f] sm:$0x1]
    %5707 = vst [vmem:[#allocation5 + $0xc8] sm:$0x1] %v5706
    %v5708 = vld [vmem:[#allocation4 + $0xa0] sm:$0x1]
    %5709 = vst [vmem:[#allocation5 + $0xc9] sm:$0x1] %v5708
    %v5710 = vld [vmem:[#allocation4 + $0x14] sm:$0x1]
    %5711 = vst [vmem:[#allocation5 + $0x40] sm:$0x1] %v5710
    %v5712 = vld [vmem:[#allocation4 + $0x65] sm:$0x1]
    %5713 = vst [vmem:[#allocation5 + $0x41] sm:$0x1] %v5712
    %v5714 = vld [vmem:[#allocation4 + $0x17] sm:$0x1]
    %5715 = vst [vmem:[#allocation5 + $0x42] sm:$0x1] %v5714
    %v5716 = vld [vmem:[#allocation4 + $0x68] sm:$0x1]
    %5717 = vst [vmem:[#allocation5 + $0x43] sm:$0x1] %v5716
    %v5718 = vld [vmem:[#allocation4 + $0x1a] sm:$0x1]
    %5719 = vst [vmem:[#allocation5 + $0x44] sm:$0x1] %v5718
    %v5720 = vld [vmem:[#allocation4 + $0x6b] sm:$0x1]
    %5721 = vst [vmem:[#allocation5 + $0x45] sm:$0x1] %v5720
    %v5722 = vld [vmem:[#allocation4 + $0x2f] sm:$0x1]
    %5723 = vst [vmem:[#allocation5 + $0x46] sm:$0x1] %v5722
    %v5724 = vld [vmem:[#allocation4 + $0x80] sm:$0x1]
    %5725 = vst [vmem:[#allocation5 + $0x47] sm:$0x1] %v5724
    %v5726 = vld [vmem:[#allocation4 + $0x32] sm:$0x1]
    %5727 = vst [vmem:[#allocation5 + $0x88] sm:$0x1] %v5726
    %v5728 = vld [vmem:[#allocation4 + $0x83] sm:$0x1]
    %5729 = vst [vmem:[#allocation5 + $0x89] sm:$0x1] %v5728
    %v5730 = vld [vmem:[#allocation4 + $0x35] sm:$0x1]
    %5731 = vst [vmem:[#allocation5 + $0x8a] sm:$0x1] %v5730
    %v5732 = vld [vmem:[#allocation4 + $0x86] sm:$0x1]
    %5733 = vst [vmem:[#allocation5 + $0x8b] sm:$0x1] %v5732
    %v5734 = vld [vmem:[#allocation4 + $0x4a] sm:$0x1]
    %5735 = vst [vmem:[#allocation5 + $0x8c] sm:$0x1] %v5734
    %v5736 = vld [vmem:[#allocation4 + $0x9b] sm:$0x1]
    %5737 = vst [vmem:[#allocation5 + $0x8d] sm:$0x1] %v5736
    %v5738 = vld [vmem:[#allocation4 + $0x4d] sm:$0x1]
    %5739 = vst [vmem:[#allocation5 + $0x8e] sm:$0x1] %v5738
    %v5740 = vld [vmem:[#allocation4 + $0x9e] sm:$0x1]
    %5741 = vst [vmem:[#allocation5 + $0x8f] sm:$0x1] %v5740
    %v5742 = vld [vmem:[#allocation4 + $0x50] sm:$0x1]
    %5743 = vst [vmem:[#allocation5 + $0xd0] sm:$0x1] %v5742
    %v5744 = vld [vmem:[#allocation4 + $0xa1] sm:$0x1]
    %5745 = vst [vmem:[#allocation5 + $0xd1] sm:$0x1] %v5744
    %v5746 = vld [vmem:[#allocation5] sm:$0xff]
    %v5747 = vld [vmem:[#allocation5 + $0x8] sm:$0xff]
    %v5748 = vld [vmem:[#allocation5 + $0x10] sm:$0xff]
    %v5749 = vld [vmem:[#allocation5 + $0x18] sm:$0xff]
    %v5750 = vld [vmem:[#allocation5 + $0x20] sm:$0xff]
    %v5751 = vld [vmem:[#allocation5 + $0x28] sm:$0xff]
    %v5752 = vld [vmem:[#allocation5 + $0x30] sm:$0xff]
    %v5753 = vld [vmem:[#allocation5 + $0x38] sm:$0xff]
    %v5754 = vld [vmem:[#allocation5 + $0x40] sm:$0xff]
    %v5755 = vld [vmem:[#allocation5 + $0x48] sm:$0xff]
    %v5756 = vld [vmem:[#allocation5 + $0x50] sm:$0xff]
    %v5757 = vld [vmem:[#allocation5 + $0x58] sm:$0xff]
    %v5758 = vld [vmem:[#allocation5 + $0x60] sm:$0xff]
    %v5759 = vld [vmem:[#allocation5 + $0x68] sm:$0xff]
    %v5760 = vld [vmem:[#allocation5 + $0x70] sm:$0xff]
    %v5761 = vld [vmem:[#allocation5 + $0x78] sm:$0xff]
    %v5762 = vld [vmem:[#allocation5 + $0x80] sm:$0xff]
    %v5763 = vld [vmem:[#allocation5 + $0x88] sm:$0xff]
    %v5764 = vld [vmem:[#allocation5 + $0x90] sm:$0x3]
    %v5765 = vld [vmem:[#allocation5 + $0x98] sm:$0x3]
    %v5766 = vld [vmem:[#allocation5 + $0xa0] sm:$0x3]
    %v5767 = vld [vmem:[#allocation5 + $0xa8] sm:$0x3]
    %v5768 = vld [vmem:[#allocation5 + $0xb0] sm:$0x3]
    %v5769 = vld [vmem:[#allocation5 + $0xb8] sm:$0x3]
    %v5770 = vld [vmem:[#allocation5 + $0xc0] sm:$0x3]
    %v5771 = vld [vmem:[#allocation5 + $0xc8] sm:$0x3]
    %v5772 = vld [vmem:[#allocation5 + $0xd0] sm:$0x3]
    %v5773 = vld [vmem:[%s4] sm:$0xff]
    %v5774 = vld [vmem:[%s4 + $0x8] sm:$0xff]
    %v5775 = vld [vmem:[%s4 + $0x10] sm:$0xff]
    %v5776 = vld [vmem:[%s4 + $0x18] sm:$0xff]
    %v5777 = vld [vmem:[%s4 + $0x20] sm:$0xff]
    %v5778 = vld [vmem:[%s4 + $0x28] sm:$0xff]
    %v5779 = vld [vmem:[%s4 + $0x30] sm:$0xff]
    %v5780 = vld [vmem:[%s4 + $0x38] sm:$0xff]
    %v5781 = vld [vmem:[%s4 + $0x40] sm:$0xff]
    %v5782 = vld [vmem:[%s4 + $0x48] sm:$0xff]
    %v5783 = vld [vmem:[%s4 + $0x50] sm:$0xff]
    %v5784 = vld [vmem:[%s4 + $0x58] sm:$0xff]
    %v5785 = vld [vmem:[%s4 + $0x60] sm:$0xff]
    %v5786 = vld [vmem:[%s4 + $0x68] sm:$0xff]
    %v5787 = vld [vmem:[%s4 + $0x70] sm:$0xff]
    %v5788 = vld [vmem:[%s4 + $0x78] sm:$0xff]
    %v5789 = vld [vmem:[%s4 + $0x80] sm:$0xff]
    %v5790 = vld [vmem:[%s4 + $0x88] sm:$0xff]
    %v5791 = vld [vmem:[%s4 + $0x90] sm:$0xff]
    %v5792 = vld [vmem:[%s4 + $0x98] sm:$0xff]
    %v5793 = vld [vmem:[%s4 + $0xa0] sm:$0xff]
    %v5794 = vld [vmem:[%s4 + $0xa8] sm:$0xff]
    %v5795 = vld [vmem:[%s4 + $0xb0] sm:$0xff]
    %v5796 = vld [vmem:[%s4 + $0xb8] sm:$0xff]
    %v5797 = vld [vmem:[%s4 + $0xc0] sm:$0xff]
    %v5798 = vld [vmem:[%s4 + $0xc8] sm:$0xff]
    %v5799 = vld [vmem:[%s4 + $0xd0] sm:$0xff]
    %v5800 = vld [vmem:[%s4 + $0xd8] sm:$0xff]
    %v5801 = vld [vmem:[%s4 + $0xe0] sm:$0xff]
    %v5802 = vld [vmem:[%s4 + $0xe8] sm:$0xff]
    %v5803 = vld [vmem:[%s4 + $0xf0] sm:$0xff]
    %v5804 = vld [vmem:[%s4 + $0xf8] sm:$0xff]
    %v5805 = vld [vmem:[%s4 + $0x100] sm:$0xff]
    %v5806 = vld [vmem:[%s4 + $0x108] sm:$0xff]
    %v5807 = vld [vmem:[%s4 + $0x110] sm:$0xff]
    %v5808 = vld [vmem:[%s4 + $0x118] sm:$0xff]
    %v5809 = vld [vmem:[%s4 + $0x120] sm:$0xff]
    %v5810 = vld [vmem:[%s4 + $0x128] sm:$0xff]
    %v5811 = vld [vmem:[%s4 + $0x130] sm:$0xff]
    %v5812 = vld [vmem:[%s4 + $0x138] sm:$0xff]
    %v5813 = vld [vmem:[%s4 + $0x140] sm:$0xff]
    %v5814 = vld [vmem:[%s4 + $0x148] sm:$0xff]
    %v5815 = vld [vmem:[%s4 + $0x150] sm:$0xff]
    %v5816 = vld [vmem:[%s4 + $0x158] sm:$0xff]
    %v5817 = vld [vmem:[%s4 + $0x160] sm:$0xff]
    %v5818 = vld [vmem:[%s4 + $0x168] sm:$0xff]
    %v5819 = vld [vmem:[%s4 + $0x170] sm:$0xff]
    %v5820 = vld [vmem:[%s4 + $0x178] sm:$0xff]
    %v5821 = vld [vmem:[%s4 + $0x180] sm:$0xff]
    %v5822 = vld [vmem:[%s4 + $0x188] sm:$0xff]
    %v5823 = vld [vmem:[%s4 + $0x190] sm:$0xff]
    %v5824 = vld [vmem:[%s4 + $0x198] sm:$0xff]
    %v5825 = vld [vmem:[%s4 + $0x1a0] sm:$0xff]
    %v5826 = vld [vmem:[%s4 + $0x1a8] sm:$0xff]
    %v5827 = vld [vmem:[%s4 + $0x1b0] sm:$0xff]
    %v5828 = vld [vmem:[%s4 + $0x1b8] sm:$0xff]
    %v5829 = vld [vmem:[%s4 + $0x1c0] sm:$0xff]
    %v5830 = vld [vmem:[%s4 + $0x1c8] sm:$0xff]
    %v5831 = vld [vmem:[%s4 + $0x1d0] sm:$0xff]
    %v5832 = vld [vmem:[%s4 + $0x1d8] sm:$0xff]
    %v5833 = vld [vmem:[%s4 + $0x1e0] sm:$0xff]
    %v5834 = vld [vmem:[%s4 + $0x1e8] sm:$0xff]
    %v5835 = vld [vmem:[%s4 + $0x1f0] sm:$0xff]
    %v5836 = vld [vmem:[%s4 + $0x1f8] sm:$0xff]
    %v5837 = vld [vmem:[%s4 + $0x200] sm:$0xff]
    %v5838 = vld [vmem:[%s4 + $0x208] sm:$0xff]
    %v5839 = vld [vmem:[%s4 + $0x210] sm:$0xff]
    %v5840 = vld [vmem:[%s4 + $0x218] sm:$0xff]
    %v5841 = vld [vmem:[%s4 + $0x220] sm:$0xff]
    %v5842 = vld [vmem:[%s4 + $0x228] sm:$0xff]
    %v5843 = vld [vmem:[%s4 + $0x230] sm:$0xff]
    %v5844 = vld [vmem:[%s4 + $0x238] sm:$0xff]
    %v5845 = vld [vmem:[%s4 + $0x240] sm:$0xff]
    %v5846 = vld [vmem:[%s4 + $0x248] sm:$0xff]
    %v5847 = vld [vmem:[%s4 + $0x250] sm:$0xff]
    %v5848 = vld [vmem:[%s4 + $0x258] sm:$0xff]
    %v5849 = vld [vmem:[%s4 + $0x260] sm:$0xff]
    %v5850 = vld [vmem:[%s4 + $0x268] sm:$0xff]
    %v5851 = vld [vmem:[%s4 + $0x270] sm:$0xff]
    %v5852 = vld [vmem:[%s4 + $0x278] sm:$0xff]
    %v5853 = vld [vmem:[%s4 + $0x280] sm:$0xff]
    %v5854 = vld [vmem:[%s4 + $0x288] sm:$0xff]
    %v5855 = vld [vmem:[%s4 + $0x290] sm:$0xff]
    %v5856 = vld [vmem:[%s4 + $0x298] sm:$0xff]
    %v5857 = vld [vmem:[%s4 + $0x2a0] sm:$0xff]
    %v5858 = vld [vmem:[%s4 + $0x2a8] sm:$0xff]
    %v5859 = vld [vmem:[%s4 + $0x2b0] sm:$0xff]
    %v5860 = vld [vmem:[%s4 + $0x2b8] sm:$0xff]
    %v5861 = vld [vmem:[%s4 + $0x2c0] sm:$0xff]
    %v5862 = vld [vmem:[%s4 + $0x2c8] sm:$0xff]
    %v5863 = vld [vmem:[%s4 + $0x2d0] sm:$0xff]
    %v5864 = vld [vmem:[%s4 + $0x2d8] sm:$0xff]
    %v5865 = vld [vmem:[%s4 + $0x2e0] sm:$0xff]
    %v5866 = vld [vmem:[%s4 + $0x2e8] sm:$0xff]
    %v5867 = vld [vmem:[%s4 + $0x2f0] sm:$0xff]
    %v5868 = vld [vmem:[%s4 + $0x2f8] sm:$0xff]
    %v5869 = vld [vmem:[%s4 + $0x300] sm:$0xff]
    %v5870 = vld [vmem:[%s4 + $0x308] sm:$0xff]
    %v5871 = vld [vmem:[%s4 + $0x310] sm:$0xff]
    %v5872 = vld [vmem:[%s4 + $0x318] sm:$0xff]
    %v5873 = vld [vmem:[%s4 + $0x320] sm:$0xff]
    %v5874 = vld [vmem:[%s4 + $0x328] sm:$0xff]
    %v5875 = vld [vmem:[%s4 + $0x330] sm:$0xff]
    %v5876 = vld [vmem:[%s4 + $0x338] sm:$0xff]
    %v5877 = vld [vmem:[%s4 + $0x340] sm:$0xff]
    %v5878 = vld [vmem:[%s4 + $0x348] sm:$0xff]
    %v5879 = vld [vmem:[%s4 + $0x350] sm:$0xff]
    %v5880 = vld [vmem:[%s4 + $0x358] sm:$0xff]
    %v5881 = vld [vmem:[%s4 + $0x360] sm:$0xff]
    %v5882 = vld [vmem:[%s4 + $0x368] sm:$0xff]
    %v5883 = vld [vmem:[%s4 + $0x370] sm:$0xff]
    %v5884 = vld [vmem:[%s4 + $0x378] sm:$0xff]
    %v5885 = vld [vmem:[%s4 + $0x380] sm:$0xff]
    %v5886 = vld [vmem:[%s4 + $0x388] sm:$0xff]
    %v5887 = vld [vmem:[%s4 + $0x390] sm:$0xff]
    %v5888 = vld [vmem:[%s4 + $0x398] sm:$0xff]
    %v5889 = vld [vmem:[%s4 + $0x3a0] sm:$0xff]
    %v5890 = vld [vmem:[%s4 + $0x3a8] sm:$0xff]
    %v5891 = vld [vmem:[%s4 + $0x3b0] sm:$0xff]
    %v5892 = vld [vmem:[%s4 + $0x3b8] sm:$0xff]
    %v5893 = vld [vmem:[%s4 + $0x3c0] sm:$0xff]
    %v5894 = vld [vmem:[%s4 + $0x3c8] sm:$0xff]
    %v5895 = vld [vmem:[%s4 + $0x3d0] sm:$0xff]
    %v5896 = vld [vmem:[%s4 + $0x3d8] sm:$0xff]
    %v5897 = vld [vmem:[%s4 + $0x3e0] sm:$0xff]
    %v5898 = vld [vmem:[%s4 + $0x3e8] sm:$0xff]
    %v5899 = vld [vmem:[%s4 + $0x3f0] sm:$0xff]
    %v5900 = vld [vmem:[%s4 + $0x3f8] sm:$0xff]
    %v5901 = vld [vmem:[%s4 + $0x400] sm:$0xff]
    %v5902 = vld [vmem:[%s4 + $0x408] sm:$0xff]
    %v5903 = vld [vmem:[%s4 + $0x410] sm:$0xff]
    %v5904 = vld [vmem:[%s4 + $0x418] sm:$0xff]
    %v5905 = vld [vmem:[%s4 + $0x420] sm:$0xff]
    %v5906 = vld [vmem:[%s4 + $0x428] sm:$0xff]
    %v5907 = vld [vmem:[%s4 + $0x430] sm:$0xff]
    %v5908 = vld [vmem:[%s4 + $0x438] sm:$0xff]
    %v5909 = vld [vmem:[%s4 + $0x440] sm:$0xff]
    %v5910 = vld [vmem:[%s4 + $0x448] sm:$0xff]
    %v5911 = vld [vmem:[%s4 + $0x450] sm:$0xff]
    %v5912 = vld [vmem:[%s4 + $0x458] sm:$0xff]
    %v5913 = vld [vmem:[%s4 + $0x460] sm:$0xff]
    %v5914 = vld [vmem:[%s4 + $0x468] sm:$0xff]
    %v5915 = vld [vmem:[%s4 + $0x470] sm:$0xff]
    %v5916 = vld [vmem:[%s4 + $0x478] sm:$0xff]
    %5917 = vmatprep.subr.mxu0 0.0
    %5918 = vmatpush1.msra.mxu0 %v5788
    %5919 = vmatprep.subr.mxu0 0.0
    %5920 = vmatpush1.msra.mxu0 %v5787
    %5921 = vmatprep.subr.mxu0 0.0
    %5922 = vmatpush1.msra.mxu0 %v5786
    %5923 = vmatprep.subr.mxu0 0.0
    %5924 = vmatpush1.msra.mxu0 %v5785
    %5925 = vmatprep.subr.mxu0 0.0
    %5926 = vmatpush1.msra.mxu0 %v5784
    %5927 = vmatprep.subr.mxu0 0.0
    %5928 = vmatpush1.msra.mxu0 %v5783
    %5929 = vmatprep.subr.mxu0 0.0
    %5930 = vmatpush1.msra.mxu0 %v5782
    %5931 = vmatprep.subr.mxu0 0.0
    %5932 = vmatpush1.msra.mxu0 %v5781
    %5933 = vmatprep.subr.mxu0 0.0
    %5934 = vmatpush1.msra.mxu0 %v5780
    %5935 = vmatprep.subr.mxu0 0.0
    %5936 = vmatpush1.msra.mxu0 %v5779
    %5937 = vmatprep.subr.mxu0 0.0
    %5938 = vmatpush1.msra.mxu0 %v5778
    %5939 = vmatprep.subr.mxu0 0.0
    %5940 = vmatpush1.msra.mxu0 %v5777
    %5941 = vmatprep.subr.mxu0 0.0
    %5942 = vmatpush1.msra.mxu0 %v5776
    %5943 = vmatprep.subr.mxu0 0.0
    %5944 = vmatpush1.msra.mxu0 %v5775
    %5945 = vmatprep.subr.mxu0 0.0
    %5946 = vmatpush1.msra.mxu0 %v5774
    %5947 = vmatprep.subr.mxu0 0.0
    %5948 = vmatpush1.msra.mxu0 %v5773
    %5949 = vmatprep.subr.mxu0 0.0
    %5950 = vmatpush2.msra.mxu0 %v5804
    %5951 = vmatprep.subr.mxu0 0.0
    %5952 = vmatpush2.msra.mxu0 %v5803
    %5953 = vmatprep.subr.mxu0 0.0
    %5954 = vmatpush2.msra.mxu0 %v5802
    %5955 = vmatprep.subr.mxu0 0.0
    %5956 = vmatpush2.msra.mxu0 %v5801
    %5957 = vmatprep.subr.mxu0 0.0
    %5958 = vmatpush2.msra.mxu0 %v5800
    %5959 = vmatprep.subr.mxu0 0.0
    %5960 = vmatpush2.msra.mxu0 %v5799
    %5961 = vmatprep.subr.mxu0 0.0
    %5962 = vmatpush2.msra.mxu0 %v5798
    %5963 = vmatprep.subr.mxu0 0.0
    %5964 = vmatpush2.msra.mxu0 %v5797
    %5965 = vmatprep.subr.mxu0 0.0
    %5966 = vmatpush2.msra.mxu0 %v5796
    %5967 = vmatprep.subr.mxu0 0.0
    %5968 = vmatpush2.msra.mxu0 %v5795
    %5969 = vmatprep.subr.mxu0 0.0
    %5970 = vmatpush2.msra.mxu0 %v5794
    %5971 = vmatprep.subr.mxu0 0.0
    %5972 = vmatpush2.msra.mxu0 %v5793
    %5973 = vmatprep.subr.mxu0 0.0
    %5974 = vmatpush2.msra.mxu0 %v5792
    %5975 = vmatprep.subr.mxu0 0.0
    %5976 = vmatpush2.msra.mxu0 %v5791
    %5977 = vmatprep.subr.mxu0 0.0
    %5978 = vmatpush2.msra.mxu0 %v5790
    %5979 = vmatprep.subr.mxu0 0.0
    %5980 = vmatpush2.msra.mxu0 %v5789
    %5981 = vmatprep.mubr.f32.mxu0 %v5747
    %5982 = vmatmul.mubr.f32.gmra.mxu0 %v5746
    %v5983 = vpop.f32.mrf.mxu0
    %v5984 = vadd.f32 0.0, %v5983
    %v5985 = vpop.f32.mrf.mxu0
    %5986 = vmatprep.mubr.f32.mxu0 %v5756
    %5987 = vmatmul.mubr.f32.gmra.mxu0 %v5755
    %v5988 = vpop.f32.mrf.mxu0
    %v5989 = vadd.f32 0.0, %v5988
    %v5990 = vpop.f32.mrf.mxu0
    %5991 = vmatprep.mubr.f32.mxu0 %v5765
    %5992 = vmatmul.mubr.f32.gmra.mxu0 %v5764
    %v5993 = vpop.f32.mrf.mxu0
    %v5994 = vadd.f32 0.0, %v5993
    %v5995 = vpop.f32.mrf.mxu0
    %5996 = vdwg.mxu0
    %5997 = vmatprep.subr.mxu0 0.0
    %5998 = vmatpush1.msra.mxu0 %v5820
    %5999 = vmatprep.subr.mxu0 0.0
    %6000 = vmatpush1.msra.mxu0 %v5819
    %6001 = vmatprep.subr.mxu0 0.0
    %6002 = vmatpush1.msra.mxu0 %v5818
    %6003 = vmatprep.subr.mxu0 0.0
    %6004 = vmatpush1.msra.mxu0 %v5817
    %6005 = vmatprep.subr.mxu0 0.0
    %6006 = vmatpush1.msra.mxu0 %v5816
    %6007 = vmatprep.subr.mxu0 0.0
    %6008 = vmatpush1.msra.mxu0 %v5815
    %6009 = vmatprep.subr.mxu0 0.0
    %6010 = vmatpush1.msra.mxu0 %v5814
    %6011 = vmatprep.subr.mxu0 0.0
    %6012 = vmatpush1.msra.mxu0 %v5813
    %6013 = vmatprep.subr.mxu0 0.0
    %6014 = vmatpush1.msra.mxu0 %v5812
    %6015 = vmatprep.subr.mxu0 0.0
    %6016 = vmatpush1.msra.mxu0 %v5811
    %6017 = vmatprep.subr.mxu0 0.0
    %6018 = vmatpush1.msra.mxu0 %v5810
    %6019 = vmatprep.subr.mxu0 0.0
    %6020 = vmatpush1.msra.mxu0 %v5809
    %6021 = vmatprep.subr.mxu0 0.0
    %6022 = vmatpush1.msra.mxu0 %v5808
    %6023 = vmatprep.subr.mxu0 0.0
    %6024 = vmatpush1.msra.mxu0 %v5807
    %6025 = vmatprep.subr.mxu0 0.0
    %6026 = vmatpush1.msra.mxu0 %v5806
    %6027 = vmatprep.subr.mxu0 0.0
    %6028 = vmatpush1.msra.mxu0 %v5805
    %6029 = vmatprep.subr.mxu0 0.0
    %6030 = vmatpush2.msra.mxu0 %v5836
    %6031 = vmatprep.subr.mxu0 0.0
    %6032 = vmatpush2.msra.mxu0 %v5835
    %6033 = vmatprep.subr.mxu0 0.0
    %6034 = vmatpush2.msra.mxu0 %v5834
    %6035 = vmatprep.subr.mxu0 0.0
    %6036 = vmatpush2.msra.mxu0 %v5833
    %6037 = vmatprep.subr.mxu0 0.0
    %6038 = vmatpush2.msra.mxu0 %v5832
    %6039 = vmatprep.subr.mxu0 0.0
    %6040 = vmatpush2.msra.mxu0 %v5831
    %6041 = vmatprep.subr.mxu0 0.0
    %6042 = vmatpush2.msra.mxu0 %v5830
    %6043 = vmatprep.subr.mxu0 0.0
    %6044 = vmatpush2.msra.mxu0 %v5829
    %6045 = vmatprep.subr.mxu0 0.0
    %6046 = vmatpush2.msra.mxu0 %v5828
    %6047 = vmatprep.subr.mxu0 0.0
    %6048 = vmatpush2.msra.mxu0 %v5827
    %6049 = vmatprep.subr.mxu0 0.0
    %6050 = vmatpush2.msra.mxu0 %v5826
    %6051 = vmatprep.subr.mxu0 0.0
    %6052 = vmatpush2.msra.mxu0 %v5825
    %6053 = vmatprep.subr.mxu0 0.0
    %6054 = vmatpush2.msra.mxu0 %v5824
    %6055 = vmatprep.subr.mxu0 0.0
    %6056 = vmatpush2.msra.mxu0 %v5823
    %6057 = vmatprep.subr.mxu0 0.0
    %6058 = vmatpush2.msra.mxu0 %v5822
    %6059 = vmatprep.subr.mxu0 0.0
    %6060 = vmatpush2.msra.mxu0 %v5821
    %6061 = vmatprep.mubr.f32.mxu0 %v5749
    %6062 = vmatmul.mubr.f32.gmra.mxu0 %v5748
    %v6063 = vpop.f32.mrf.mxu0
    %v6064 = vadd.f32 %v5984, %v6063
    %v6065 = vpop.f32.mrf.mxu0
    %6066 = vmatprep.mubr.f32.mxu0 %v5758
    %6067 = vmatmul.mubr.f32.gmra.mxu0 %v5757
    %v6068 = vpop.f32.mrf.mxu0
    %v6069 = vadd.f32 %v5989, %v6068
    %v6070 = vpop.f32.mrf.mxu0
    %6071 = vmatprep.mubr.f32.mxu0 %v5767
    %6072 = vmatmul.mubr.f32.gmra.mxu0 %v5766
    %v6073 = vpop.f32.mrf.mxu0
    %v6074 = vadd.f32 %v5994, %v6073
    %v6075 = vpop.f32.mrf.mxu0
    %6076 = vdwg.mxu0
    %6077 = vmatprep.subr.mxu0 0.0
    %6078 = vmatpush1.msra.mxu0 %v5852
    %6079 = vmatprep.subr.mxu0 0.0
    %6080 = vmatpush1.msra.mxu0 %v5851
    %6081 = vmatprep.subr.mxu0 0.0
    %6082 = vmatpush1.msra.mxu0 %v5850
    %6083 = vmatprep.subr.mxu0 0.0
    %6084 = vmatpush1.msra.mxu0 %v5849
    %6085 = vmatprep.subr.mxu0 0.0
    %6086 = vmatpush1.msra.mxu0 %v5848
    %6087 = vmatprep.subr.mxu0 0.0
    %6088 = vmatpush1.msra.mxu0 %v5847
    %6089 = vmatprep.subr.mxu0 0.0
    %6090 = vmatpush1.msra.mxu0 %v5846
    %6091 = vmatprep.subr.mxu0 0.0
    %6092 = vmatpush1.msra.mxu0 %v5845
    %6093 = vmatprep.subr.mxu0 0.0
    %6094 = vmatpush1.msra.mxu0 %v5844
    %6095 = vmatprep.subr.mxu0 0.0
    %6096 = vmatpush1.msra.mxu0 %v5843
    %6097 = vmatprep.subr.mxu0 0.0
    %6098 = vmatpush1.msra.mxu0 %v5842
    %6099 = vmatprep.subr.mxu0 0.0
    %6100 = vmatpush1.msra.mxu0 %v5841
    %6101 = vmatprep.subr.mxu0 0.0
    %6102 = vmatpush1.msra.mxu0 %v5840
    %6103 = vmatprep.subr.mxu0 0.0
    %6104 = vmatpush1.msra.mxu0 %v5839
    %6105 = vmatprep.subr.mxu0 0.0
    %6106 = vmatpush1.msra.mxu0 %v5838
    %6107 = vmatprep.subr.mxu0 0.0
    %6108 = vmatpush1.msra.mxu0 %v5837
    %6109 = vmatprep.subr.mxu0 0.0
    %6110 = vmatpush2.msra.mxu0 %v5868
    %6111 = vmatprep.subr.mxu0 0.0
    %6112 = vmatpush2.msra.mxu0 %v5867
    %6113 = vmatprep.subr.mxu0 0.0
    %6114 = vmatpush2.msra.mxu0 %v5866
    %6115 = vmatprep.subr.mxu0 0.0
    %6116 = vmatpush2.msra.mxu0 %v5865
    %6117 = vmatprep.subr.mxu0 0.0
    %6118 = vmatpush2.msra.mxu0 %v5864
    %6119 = vmatprep.subr.mxu0 0.0
    %6120 = vmatpush2.msra.mxu0 %v5863
    %6121 = vmatprep.subr.mxu0 0.0
    %6122 = vmatpush2.msra.mxu0 %v5862
    %6123 = vmatprep.subr.mxu0 0.0
    %6124 = vmatpush2.msra.mxu0 %v5861
    %6125 = vmatprep.subr.mxu0 0.0
    %6126 = vmatpush2.msra.mxu0 %v5860
    %6127 = vmatprep.subr.mxu0 0.0
    %6128 = vmatpush2.msra.mxu0 %v5859
    %6129 = vmatprep.subr.mxu0 0.0
    %6130 = vmatpush2.msra.mxu0 %v5858
    %6131 = vmatprep.subr.mxu0 0.0
    %6132 = vmatpush2.msra.mxu0 %v5857
    %6133 = vmatprep.subr.mxu0 0.0
    %6134 = vmatpush2.msra.mxu0 %v5856
    %6135 = vmatprep.subr.mxu0 0.0
    %6136 = vmatpush2.msra.mxu0 %v5855
    %6137 = vmatprep.subr.mxu0 0.0
    %6138 = vmatpush2.msra.mxu0 %v5854
    %6139 = vmatprep.subr.mxu0 0.0
    %6140 = vmatpush2.msra.mxu0 %v5853
    %6141 = vmatprep.mubr.f32.mxu0 %v5751
    %6142 = vmatmul.mubr.f32.gmra.mxu0 %v5750
    %v6143 = vpop.f32.mrf.mxu0
    %v6144 = vadd.f32 %v6064, %v6143
    %v6145 = vpop.f32.mrf.mxu0
    %6146 = vmatprep.mubr.f32.mxu0 %v5760
    %6147 = vmatmul.mubr.f32.gmra.mxu0 %v5759
    %v6148 = vpop.f32.mrf.mxu0
    %v6149 = vadd.f32 %v6069, %v6148
    %v6150 = vpop.f32.mrf.mxu0
    %6151 = vmatprep.mubr.f32.mxu0 %v5769
    %6152 = vmatmul.mubr.f32.gmra.mxu0 %v5768
    %v6153 = vpop.f32.mrf.mxu0
    %v6154 = vadd.f32 %v6074, %v6153
    %v6155 = vpop.f32.mrf.mxu0
    %6156 = vdwg.mxu0
    %6157 = vmatprep.subr.mxu0 0.0
    %6158 = vmatpush1.msra.mxu0 %v5884
    %6159 = vmatprep.subr.mxu0 0.0
    %6160 = vmatpush1.msra.mxu0 %v5883
    %6161 = vmatprep.subr.mxu0 0.0
    %6162 = vmatpush1.msra.mxu0 %v5882
    %6163 = vmatprep.subr.mxu0 0.0
    %6164 = vmatpush1.msra.mxu0 %v5881
    %6165 = vmatprep.subr.mxu0 0.0
    %6166 = vmatpush1.msra.mxu0 %v5880
    %6167 = vmatprep.subr.mxu0 0.0
    %6168 = vmatpush1.msra.mxu0 %v5879
    %6169 = vmatprep.subr.mxu0 0.0
    %6170 = vmatpush1.msra.mxu0 %v5878
    %6171 = vmatprep.subr.mxu0 0.0
    %6172 = vmatpush1.msra.mxu0 %v5877
    %6173 = vmatprep.subr.mxu0 0.0
    %6174 = vmatpush1.msra.mxu0 %v5876
    %6175 = vmatprep.subr.mxu0 0.0
    %6176 = vmatpush1.msra.mxu0 %v5875
    %6177 = vmatprep.subr.mxu0 0.0
    %6178 = vmatpush1.msra.mxu0 %v5874
    %6179 = vmatprep.subr.mxu0 0.0
    %6180 = vmatpush1.msra.mxu0 %v5873
    %6181 = vmatprep.subr.mxu0 0.0
    %6182 = vmatpush1.msra.mxu0 %v5872
    %6183 = vmatprep.subr.mxu0 0.0
    %6184 = vmatpush1.msra.mxu0 %v5871
    %6185 = vmatprep.subr.mxu0 0.0
    %6186 = vmatpush1.msra.mxu0 %v5870
    %6187 = vmatprep.subr.mxu0 0.0
    %6188 = vmatpush1.msra.mxu0 %v5869
    %6189 = vmatprep.subr.mxu0 0.0
    %6190 = vmatpush2.msra.mxu0 %v5900
    %6191 = vmatprep.subr.mxu0 0.0
    %6192 = vmatpush2.msra.mxu0 %v5899
    %6193 = vmatprep.subr.mxu0 0.0
    %6194 = vmatpush2.msra.mxu0 %v5898
    %6195 = vmatprep.subr.mxu0 0.0
    %6196 = vmatpush2.msra.mxu0 %v5897
    %6197 = vmatprep.subr.mxu0 0.0
    %6198 = vmatpush2.msra.mxu0 %v5896
    %6199 = vmatprep.subr.mxu0 0.0
    %6200 = vmatpush2.msra.mxu0 %v5895
    %6201 = vmatprep.subr.mxu0 0.0
    %6202 = vmatpush2.msra.mxu0 %v5894
    %6203 = vmatprep.subr.mxu0 0.0
    %6204 = vmatpush2.msra.mxu0 %v5893
    %6205 = vmatprep.subr.mxu0 0.0
    %6206 = vmatpush2.msra.mxu0 %v5892
    %6207 = vmatprep.subr.mxu0 0.0
    %6208 = vmatpush2.msra.mxu0 %v5891
    %6209 = vmatprep.subr.mxu0 0.0
    %6210 = vmatpush2.msra.mxu0 %v5890
    %6211 = vmatprep.subr.mxu0 0.0
    %6212 = vmatpush2.msra.mxu0 %v5889
    %6213 = vmatprep.subr.mxu0 0.0
    %6214 = vmatpush2.msra.mxu0 %v5888
    %6215 = vmatprep.subr.mxu0 0.0
    %6216 = vmatpush2.msra.mxu0 %v5887
    %6217 = vmatprep.subr.mxu0 0.0
    %6218 = vmatpush2.msra.mxu0 %v5886
    %6219 = vmatprep.subr.mxu0 0.0
    %6220 = vmatpush2.msra.mxu0 %v5885
    %6221 = vmatprep.mubr.f32.mxu0 %v5753
    %6222 = vmatmul.mubr.f32.gmra.mxu0 %v5752
    %v6223 = vpop.f32.mrf.mxu0
    %v6224 = vadd.f32 %v6144, %v6223
    %v6225 = vpop.f32.mrf.mxu0
    %6226 = vmatprep.mubr.f32.mxu0 %v5762
    %6227 = vmatmul.mubr.f32.gmra.mxu0 %v5761
    %v6228 = vpop.f32.mrf.mxu0
    %v6229 = vadd.f32 %v6149, %v6228
    %v6230 = vpop.f32.mrf.mxu0
    %6231 = vmatprep.mubr.f32.mxu0 %v5771
    %6232 = vmatmul.mubr.f32.gmra.mxu0 %v5770
    %v6233 = vpop.f32.mrf.mxu0
    %v6234 = vadd.f32 %v6154, %v6233
    %v6235 = vpop.f32.mrf.mxu0
    %6236 = vdwg.mxu0
    %6237 = vmatprep.subr.mxu0 0.0
    %6238 = vmatpush1.msra.mxu0 %v5916
    %6239 = vmatprep.subr.mxu0 0.0
    %6240 = vmatpush1.msra.mxu0 %v5915
    %6241 = vmatprep.subr.mxu0 0.0
    %6242 = vmatpush1.msra.mxu0 %v5914
    %6243 = vmatprep.subr.mxu0 0.0
    %6244 = vmatpush1.msra.mxu0 %v5913
    %6245 = vmatprep.subr.mxu0 0.0
    %6246 = vmatpush1.msra.mxu0 %v5912
    %6247 = vmatprep.subr.mxu0 0.0
    %6248 = vmatpush1.msra.mxu0 %v5911
    %6249 = vmatprep.subr.mxu0 0.0
    %6250 = vmatpush1.msra.mxu0 %v5910
    %6251 = vmatprep.subr.mxu0 0.0
    %6252 = vmatpush1.msra.mxu0 %v5909
    %6253 = vmatprep.subr.mxu0 0.0
    %6254 = vmatpush1.msra.mxu0 %v5908
    %6255 = vmatprep.subr.mxu0 0.0
    %6256 = vmatpush1.msra.mxu0 %v5907
    %6257 = vmatprep.subr.mxu0 0.0
    %6258 = vmatpush1.msra.mxu0 %v5906
    %6259 = vmatprep.subr.mxu0 0.0
    %6260 = vmatpush1.msra.mxu0 %v5905
    %6261 = vmatprep.subr.mxu0 0.0
    %6262 = vmatpush1.msra.mxu0 %v5904
    %6263 = vmatprep.subr.mxu0 0.0
    %6264 = vmatpush1.msra.mxu0 %v5903
    %6265 = vmatprep.subr.mxu0 0.0
    %6266 = vmatpush1.msra.mxu0 %v5902
    %6267 = vmatprep.subr.mxu0 0.0
    %6268 = vmatpush1.msra.mxu0 %v5901
    %6269 = vmatprep.subr.mxu0 0.0
    %6270 = vmatpush2.msra.mxu0 0.0
    %6271 = vmatprep.subr.mxu0 0.0
    %6272 = vmatpush2.msra.mxu0 0.0
    %6273 = vmatprep.subr.mxu0 0.0
    %6274 = vmatpush2.msra.mxu0 0.0
    %6275 = vmatprep.subr.mxu0 0.0
    %6276 = vmatpush2.msra.mxu0 0.0
    %6277 = vmatprep.subr.mxu0 0.0
    %6278 = vmatpush2.msra.mxu0 0.0
    %6279 = vmatprep.subr.mxu0 0.0
    %6280 = vmatpush2.msra.mxu0 0.0
    %6281 = vmatprep.subr.mxu0 0.0
    %6282 = vmatpush2.msra.mxu0 0.0
    %6283 = vmatprep.subr.mxu0 0.0
    %6284 = vmatpush2.msra.mxu0 0.0
    %6285 = vmatprep.subr.mxu0 0.0
    %6286 = vmatpush2.msra.mxu0 0.0
    %6287 = vmatprep.subr.mxu0 0.0
    %6288 = vmatpush2.msra.mxu0 0.0
    %6289 = vmatprep.subr.mxu0 0.0
    %6290 = vmatpush2.msra.mxu0 0.0
    %6291 = vmatprep.subr.mxu0 0.0
    %6292 = vmatpush2.msra.mxu0 0.0
    %6293 = vmatprep.subr.mxu0 0.0
    %6294 = vmatpush2.msra.mxu0 0.0
    %6295 = vmatprep.subr.mxu0 0.0
    %6296 = vmatpush2.msra.mxu0 0.0
    %6297 = vmatprep.subr.mxu0 0.0
    %6298 = vmatpush2.msra.mxu0 0.0
    %6299 = vmatprep.subr.mxu0 0.0
    %6300 = vmatpush2.msra.mxu0 0.0
    %6301 = vmatprep.mubr.f32.mxu0 0.0
    %6302 = vmatmul.mubr.f32.gmra.mxu0 %v5754
    %v6303 = vpop.f32.mrf.mxu0
    %v6304 = vadd.f32 %v6224, %v6303
    %v6305 = vpop.f32.mrf.mxu0
    %6306 = vmatprep.mubr.f32.mxu0 0.0
    %6307 = vmatmul.mubr.f32.gmra.mxu0 %v5763
    %v6308 = vpop.f32.mrf.mxu0
    %v6309 = vadd.f32 %v6229, %v6308
    %v6310 = vpop.f32.mrf.mxu0
    %6311 = vmatprep.mubr.f32.mxu0 0.0
    %6312 = vmatmul.mubr.f32.gmra.mxu0 %v5772
    %v6313 = vpop.f32.mrf.mxu0
    %v6314 = vadd.f32 %v6234, %v6313
    %v6315 = vpop.f32.mrf.mxu0
    %6316 = vdwg.mxu0
    %vm6317 = vcmask 261120
    %v6318 = vsel %vm6317, %v6304, 0.0
    %v6319 = vsel %vm6317, %v6309, 0.0
    %v6320 = vadd.f32 %v6318, %v6319
    %vm6321 = vcmask 254976
    %v6322 = vsel %vm6321, %v6314, 0.0
    %v6323 = vadd.f32 %v6320, %v6322
    %v6324 = vrot.slane %v6323, 4
    %v6325 = vadd.f32 %v6323, %v6324
    %v6326 = vrot.slane %v6325, 2
    %v6327 = vadd.f32 %v6325, %v6326
    %v6328 = vrot.slane %v6327, 1
    %v6329 = vadd.f32 %v6327, %v6328
    %v6330 = vrcp.pop 18.0
    %v6331 = vmul.f32 %v6329, %v6330
    %v6332 = vsub.f32 %v6304, %v6331
    %v6333 = vsub.f32 %v6309, %v6331
    %v6334 = vsub.f32 %v6314, %v6331
    %v6335 = vmul.f32 %v6332, %v6332
    %v6336 = vmul.f32 %v6333, %v6333
    %v6337 = vmul.f32 %v6334, %v6334
    %v6338 = vsel %vm6317, %v6335, 0.0
    %v6339 = vsel %vm6317, %v6336, 0.0
    %v6340 = vadd.f32 %v6338, %v6339
    %v6341 = vsel %vm6321, %v6337, 0.0
    %v6342 = vadd.f32 %v6340, %v6341
    %v6343 = vrot.slane %v6342, 4
    %v6344 = vadd.f32 %v6342, %v6343
    %v6345 = vrot.slane %v6344, 2
    %v6346 = vadd.f32 %v6344, %v6345
    %v6347 = vrot.slane %v6346, 1
    %v6348 = vadd.f32 %v6346, %v6347
    %v6349 = vmul.f32 %v6348, %v6330
    %v6350 = vld [vmem:[%s2 + $0xd] sm:$0x1]
    %v6351 = vadd.f32 %v6349, 1e-05
    %v6352 = vrsqrt.pop %v6351
    %v6353 = vmul.f32 %v6350, %v6352
    %v6354 = vlaneseq
    %v6355 = vshrl.u32 %v6354, 7
    %v6356 = vsub.s32 0, %v6355
    %v6357 = vrot.slane %v6353, %v6356
    %v6358 = vmul.f32 %v6304, %v6357
    %v6359 = vmul.f32 %v6309, %v6357
    %v6360 = vmul.f32 %v6314, %v6357
    %v6361 = vld [vmem:[%s2 + $0xe] sm:$0x1]
    %v6362 = vmul.f32 %v6331, %v6353
    %v6363 = vsub.f32 %v6361, %v6362
    %v6364 = vlaneseq
    %v6365 = vshrl.u32 %v6364, 7
    %v6366 = vsub.s32 0, %v6365
    %v6367 = vrot.slane %v6363, %v6366
    %v6368 = vadd.f32 %v6358, %v6367
    %v6369 = vadd.f32 %v6359, %v6367
    %v6370 = vadd.f32 %v6360, %v6367
    %v6371 = vmax.f32 %v6368, 0.0
    %v6372 = vmax.f32 %v6369, 0.0
    %v6373 = vmax.f32 %v6370, 0.0
    %6374 = vst.msk [vmem:[#allocation6] sm:$0xff] %vm6317, %v6371
    %6375 = vst.msk [vmem:[#allocation6 + $0x8] sm:$0xff] %vm6317, %v6372
    %6376 = vst.msk [vmem:[#allocation6 + $0x10] sm:$0x3] %vm6321, %v6373
    %v6377 = vld [vmem:[#allocation6] sm:$0x3]
    %v6378 = vld [vmem:[%s5] sm:$0xff]
    %v6379 = vld [vmem:[%s5 + $0x8] sm:$0xff]
    %v6380 = vld [vmem:[%s5 + $0x10] sm:$0xff]
    %v6381 = vld [vmem:[%s5 + $0x18] sm:$0xff]
    %v6382 = vld [vmem:[#allocation6 + $0x2] sm:$0x3]
    %s6383 = scalar_lea.vmem %s5, 32
    %v6384 = vld [vmem:[%s6383] sm:$0xff]
    %v6385 = vld [vmem:[%s6383 + $0x8] sm:$0xff]
    %v6386 = vld [vmem:[%s6383 + $0x10] sm:$0xff]
    %v6387 = vld [vmem:[%s6383 + $0x18] sm:$0xff]
    %v6389 = vsel %vm6317, %v6382, 0
    %6391 = vmatprep.subr.mxu0 0.0
    %6392 = vmatpush1.msra.mxu0 0.0
    %6393 = vmatprep.subr.mxu0 0.0
    %6394 = vmatpush1.msra.mxu0 0.0
    %6395 = vmatprep.subr.mxu0 0.0
    %6396 = vmatpush1.msra.mxu0 0.0
    %6397 = vmatprep.subr.mxu0 0.0
    %6398 = vmatpush1.msra.mxu0 0.0
    %6399 = vmatprep.subr.mxu0 0.0
    %6400 = vmatpush1.msra.mxu0 0.0
    %6401 = vmatprep.subr.mxu0 0.0
    %6402 = vmatpush1.msra.mxu0 0.0
    %6403 = vmatprep.subr.mxu0 0.0
    %6404 = vmatpush1.msra.mxu0 0.0
    %6405 = vmatprep.subr.mxu0 0.0
    %6406 = vmatpush1.msra.mxu0 0.0
    %6407 = vmatprep.subr.mxu0 0.0
    %6408 = vmatpush1.msra.mxu0 0.0
    %6409 = vmatprep.subr.mxu0 0.0
    %6410 = vmatpush1.msra.mxu0 0.0
    %6411 = vmatprep.subr.mxu0 0.0
    %6412 = vmatpush1.msra.mxu0 0.0
    %6413 = vmatprep.subr.mxu0 0.0
    %6414 = vmatpush1.msra.mxu0 0.0
    %6415 = vmatprep.subr.mxu0 0.0
    %6416 = vmatpush1.msra.mxu0 %v6387
    %6417 = vmatprep.subr.mxu0 0.0
    %6418 = vmatpush1.msra.mxu0 %v6386
    %6419 = vmatprep.subr.mxu0 0.0
    %6420 = vmatpush1.msra.mxu0 %v6385
    %6421 = vmatprep.subr.mxu0 0.0
    %6422 = vmatpush1.msra.mxu0 %v6384
    %6423 = vmatprep.subr.mxu0 0.0
    %6424 = vmatpush2.msra.mxu0 0.0
    %6425 = vmatprep.subr.mxu0 0.0
    %6426 = vmatpush2.msra.mxu0 0.0
    %6427 = vmatprep.subr.mxu0 0.0
    %6428 = vmatpush2.msra.mxu0 0.0
    %6429 = vmatprep.subr.mxu0 0.0
    %6430 = vmatpush2.msra.mxu0 0.0
    %6431 = vmatprep.subr.mxu0 0.0
    %6432 = vmatpush2.msra.mxu0 0.0
    %6433 = vmatprep.subr.mxu0 0.0
    %6434 = vmatpush2.msra.mxu0 0.0
    %6435 = vmatprep.subr.mxu0 0.0
    %6436 = vmatpush2.msra.mxu0 0.0
    %6437 = vmatprep.subr.mxu0 0.0
    %6438 = vmatpush2.msra.mxu0 0.0
    %6439 = vmatprep.subr.mxu0 0.0
    %6440 = vmatpush2.msra.mxu0 0.0
    %6441 = vmatprep.subr.mxu0 0.0
    %6442 = vmatpush2.msra.mxu0 0.0
    %6443 = vmatprep.subr.mxu0 0.0
    %6444 = vmatpush2.msra.mxu0 0.0
    %6445 = vmatprep.subr.mxu0 0.0
    %6446 = vmatpush2.msra.mxu0 0.0
    %6447 = vmatprep.subr.mxu0 0.0
    %6448 = vmatpush2.msra.mxu0 0.0
    %6449 = vmatprep.subr.mxu0 0.0
    %6450 = vmatpush2.msra.mxu0 0.0
    %6451 = vmatprep.subr.mxu0 0.0
    %6452 = vmatpush2.msra.mxu0 0.0
    %6453 = vmatprep.subr.mxu0 0.0
    %6454 = vmatpush2.msra.mxu0 0.0
    %6455 = vmatprep.mubr.f32.mxu0 0.0
    %6456 = vmatmul.mubr.f32.gmra.mxu0 %v6389
    %v6457 = vpop.f32.mrf.mxu0
    %v6458 = vadd.f32 0.0, %v6457
    %v6459 = vpop.f32.mrf.mxu0
    %6460 = vdwg.mxu0
    %v6462 = vsel %vm6317, %v6377, 0
    %6464 = vmatprep.subr.mxu0 0.0
    %6465 = vmatpush1.msra.mxu0 0.0
    %6466 = vmatprep.subr.mxu0 0.0
    %6467 = vmatpush1.msra.mxu0 0.0
    %6468 = vmatprep.subr.mxu0 0.0
    %6469 = vmatpush1.msra.mxu0 0.0
    %6470 = vmatprep.subr.mxu0 0.0
    %6471 = vmatpush1.msra.mxu0 0.0
    %6472 = vmatprep.subr.mxu0 0.0
    %6473 = vmatpush1.msra.mxu0 0.0
    %6474 = vmatprep.subr.mxu0 0.0
    %6475 = vmatpush1.msra.mxu0 0.0
    %6476 = vmatprep.subr.mxu0 0.0
    %6477 = vmatpush1.msra.mxu0 0.0
    %6478 = vmatprep.subr.mxu0 0.0
    %6479 = vmatpush1.msra.mxu0 0.0
    %6480 = vmatprep.subr.mxu0 0.0
    %6481 = vmatpush1.msra.mxu0 0.0
    %6482 = vmatprep.subr.mxu0 0.0
    %6483 = vmatpush1.msra.mxu0 0.0
    %6484 = vmatprep.subr.mxu0 0.0
    %6485 = vmatpush1.msra.mxu0 0.0
    %6486 = vmatprep.subr.mxu0 0.0
    %6487 = vmatpush1.msra.mxu0 0.0
    %6488 = vmatprep.subr.mxu0 0.0
    %6489 = vmatpush1.msra.mxu0 %v6381
    %6490 = vmatprep.subr.mxu0 0.0
    %6491 = vmatpush1.msra.mxu0 %v6380
    %6492 = vmatprep.subr.mxu0 0.0
    %6493 = vmatpush1.msra.mxu0 %v6379
    %6494 = vmatprep.subr.mxu0 0.0
    %6495 = vmatpush1.msra.mxu0 %v6378
    %6496 = vmatprep.subr.mxu0 0.0
    %6497 = vmatpush2.msra.mxu0 0.0
    %6498 = vmatprep.subr.mxu0 0.0
    %6499 = vmatpush2.msra.mxu0 0.0
    %6500 = vmatprep.subr.mxu0 0.0
    %6501 = vmatpush2.msra.mxu0 0.0
    %6502 = vmatprep.subr.mxu0 0.0
    %6503 = vmatpush2.msra.mxu0 0.0
    %6504 = vmatprep.subr.mxu0 0.0
    %6505 = vmatpush2.msra.mxu0 0.0
    %6506 = vmatprep.subr.mxu0 0.0
    %6507 = vmatpush2.msra.mxu0 0.0
    %6508 = vmatprep.subr.mxu0 0.0
    %6509 = vmatpush2.msra.mxu0 0.0
    %6510 = vmatprep.subr.mxu0 0.0
    %6511 = vmatpush2.msra.mxu0 0.0
    %6512 = vmatprep.subr.mxu0 0.0
    %6513 = vmatpush2.msra.mxu0 0.0
    %6514 = vmatprep.subr.mxu0 0.0
    %6515 = vmatpush2.msra.mxu0 0.0
    %6516 = vmatprep.subr.mxu0 0.0
    %6517 = vmatpush2.msra.mxu0 0.0
    %6518 = vmatprep.subr.mxu0 0.0
    %6519 = vmatpush2.msra.mxu0 0.0
    %6520 = vmatprep.subr.mxu0 0.0
    %6521 = vmatpush2.msra.mxu0 0.0
    %6522 = vmatprep.subr.mxu0 0.0
    %6523 = vmatpush2.msra.mxu0 0.0
    %6524 = vmatprep.subr.mxu0 0.0
    %6525 = vmatpush2.msra.mxu0 0.0
    %6526 = vmatprep.subr.mxu0 0.0
    %6527 = vmatpush2.msra.mxu0 0.0
    %6528 = vmatprep.mubr.f32.mxu0 0.0
    %6529 = vmatmul.mubr.f32.gmra.mxu0 %v6462
    %v6530 = vpop.f32.mrf.mxu0
    %v6531 = vadd.f32 %v6458, %v6530
    %v6532 = vpop.f32.mrf.mxu0
    %6533 = vdwg.mxu0
    %v6534 = vld [vmem:[#allocation6 + $0x4] sm:$0x3]
    %s6535 = scalar_lea.vmem %s5, 64
    %v6536 = vld [vmem:[%s6535] sm:$0xff]
    %v6537 = vld [vmem:[%s6535 + $0x8] sm:$0xff]
    %v6538 = vld [vmem:[%s6535 + $0x10] sm:$0xff]
    %v6539 = vld [vmem:[%s6535 + $0x18] sm:$0xff]
    %v6541 = vsel %vm6317, %v6534, 0
    %6543 = vmatprep.subr.mxu0 0.0
    %6544 = vmatpush1.msra.mxu0 0.0
    %6545 = vmatprep.subr.mxu0 0.0
    %6546 = vmatpush1.msra.mxu0 0.0
    %6547 = vmatprep.subr.mxu0 0.0
    %6548 = vmatpush1.msra.mxu0 0.0
    %6549 = vmatprep.subr.mxu0 0.0
    %6550 = vmatpush1.msra.mxu0 0.0
    %6551 = vmatprep.subr.mxu0 0.0
    %6552 = vmatpush1.msra.mxu0 0.0
    %6553 = vmatprep.subr.mxu0 0.0
    %6554 = vmatpush1.msra.mxu0 0.0
    %6555 = vmatprep.subr.mxu0 0.0
    %6556 = vmatpush1.msra.mxu0 0.0
    %6557 = vmatprep.subr.mxu0 0.0
    %6558 = vmatpush1.msra.mxu0 0.0
    %6559 = vmatprep.subr.mxu0 0.0
    %6560 = vmatpush1.msra.mxu0 0.0
    %6561 = vmatprep.subr.mxu0 0.0
    %6562 = vmatpush1.msra.mxu0 0.0
    %6563 = vmatprep.subr.mxu0 0.0
    %6564 = vmatpush1.msra.mxu0 0.0
    %6565 = vmatprep.subr.mxu0 0.0
    %6566 = vmatpush1.msra.mxu0 0.0
    %6567 = vmatprep.subr.mxu0 0.0
    %6568 = vmatpush1.msra.mxu0 %v6539
    %6569 = vmatprep.subr.mxu0 0.0
    %6570 = vmatpush1.msra.mxu0 %v6538
    %6571 = vmatprep.subr.mxu0 0.0
    %6572 = vmatpush1.msra.mxu0 %v6537
    %6573 = vmatprep.subr.mxu0 0.0
    %6574 = vmatpush1.msra.mxu0 %v6536
    %6575 = vmatprep.subr.mxu0 0.0
    %6576 = vmatpush2.msra.mxu0 0.0
    %6577 = vmatprep.subr.mxu0 0.0
    %6578 = vmatpush2.msra.mxu0 0.0
    %6579 = vmatprep.subr.mxu0 0.0
    %6580 = vmatpush2.msra.mxu0 0.0
    %6581 = vmatprep.subr.mxu0 0.0
    %6582 = vmatpush2.msra.mxu0 0.0
    %6583 = vmatprep.subr.mxu0 0.0
    %6584 = vmatpush2.msra.mxu0 0.0
    %6585 = vmatprep.subr.mxu0 0.0
    %6586 = vmatpush2.msra.mxu0 0.0
    %6587 = vmatprep.subr.mxu0 0.0
    %6588 = vmatpush2.msra.mxu0 0.0
    %6589 = vmatprep.subr.mxu0 0.0
    %6590 = vmatpush2.msra.mxu0 0.0
    %6591 = vmatprep.subr.mxu0 0.0
    %6592 = vmatpush2.msra.mxu0 0.0
    %6593 = vmatprep.subr.mxu0 0.0
    %6594 = vmatpush2.msra.mxu0 0.0
    %6595 = vmatprep.subr.mxu0 0.0
    %6596 = vmatpush2.msra.mxu0 0.0
    %6597 = vmatprep.subr.mxu0 0.0
    %6598 = vmatpush2.msra.mxu0 0.0
    %6599 = vmatprep.subr.mxu0 0.0
    %6600 = vmatpush2.msra.mxu0 0.0
    %6601 = vmatprep.subr.mxu0 0.0
    %6602 = vmatpush2.msra.mxu0 0.0
    %6603 = vmatprep.subr.mxu0 0.0
    %6604 = vmatpush2.msra.mxu0 0.0
    %6605 = vmatprep.subr.mxu0 0.0
    %6606 = vmatpush2.msra.mxu0 0.0
    %6607 = vmatprep.mubr.f32.mxu0 0.0
    %6608 = vmatmul.mubr.f32.gmra.mxu0 %v6541
    %v6609 = vpop.f32.mrf.mxu0
    %v6610 = vadd.f32 0.0, %v6609
    %v6611 = vpop.f32.mrf.mxu0
    %6612 = vdwg.mxu0
    %v6613 = vadd.f32 %v6531, %v6610
    %v6614 = vld [vmem:[#allocation6 + $0x6] sm:$0x3]
    %s6615 = scalar_lea.vmem %s5, 96
    %v6616 = vld [vmem:[%s6615] sm:$0xff]
    %v6617 = vld [vmem:[%s6615 + $0x8] sm:$0xff]
    %v6618 = vld [vmem:[%s6615 + $0x10] sm:$0xff]
    %v6619 = vld [vmem:[%s6615 + $0x18] sm:$0xff]
    %v6621 = vsel %vm6317, %v6614, 0
    %6623 = vmatprep.subr.mxu0 0.0
    %6624 = vmatpush1.msra.mxu0 0.0
    %6625 = vmatprep.subr.mxu0 0.0
    %6626 = vmatpush1.msra.mxu0 0.0
    %6627 = vmatprep.subr.mxu0 0.0
    %6628 = vmatpush1.msra.mxu0 0.0
    %6629 = vmatprep.subr.mxu0 0.0
    %6630 = vmatpush1.msra.mxu0 0.0
    %6631 = vmatprep.subr.mxu0 0.0
    %6632 = vmatpush1.msra.mxu0 0.0
    %6633 = vmatprep.subr.mxu0 0.0
    %6634 = vmatpush1.msra.mxu0 0.0
    %6635 = vmatprep.subr.mxu0 0.0
    %6636 = vmatpush1.msra.mxu0 0.0
    %6637 = vmatprep.subr.mxu0 0.0
    %6638 = vmatpush1.msra.mxu0 0.0
    %6639 = vmatprep.subr.mxu0 0.0
    %6640 = vmatpush1.msra.mxu0 0.0
    %6641 = vmatprep.subr.mxu0 0.0
    %6642 = vmatpush1.msra.mxu0 0.0
    %6643 = vmatprep.subr.mxu0 0.0
    %6644 = vmatpush1.msra.mxu0 0.0
    %6645 = vmatprep.subr.mxu0 0.0
    %6646 = vmatpush1.msra.mxu0 0.0
    %6647 = vmatprep.subr.mxu0 0.0
    %6648 = vmatpush1.msra.mxu0 %v6619
    %6649 = vmatprep.subr.mxu0 0.0
    %6650 = vmatpush1.msra.mxu0 %v6618
    %6651 = vmatprep.subr.mxu0 0.0
    %6652 = vmatpush1.msra.mxu0 %v6617
    %6653 = vmatprep.subr.mxu0 0.0
    %6654 = vmatpush1.msra.mxu0 %v6616
    %6655 = vmatprep.subr.mxu0 0.0
    %6656 = vmatpush2.msra.mxu0 0.0
    %6657 = vmatprep.subr.mxu0 0.0
    %6658 = vmatpush2.msra.mxu0 0.0
    %6659 = vmatprep.subr.mxu0 0.0
    %6660 = vmatpush2.msra.mxu0 0.0
    %6661 = vmatprep.subr.mxu0 0.0
    %6662 = vmatpush2.msra.mxu0 0.0
    %6663 = vmatprep.subr.mxu0 0.0
    %6664 = vmatpush2.msra.mxu0 0.0
    %6665 = vmatprep.subr.mxu0 0.0
    %6666 = vmatpush2.msra.mxu0 0.0
    %6667 = vmatprep.subr.mxu0 0.0
    %6668 = vmatpush2.msra.mxu0 0.0
    %6669 = vmatprep.subr.mxu0 0.0
    %6670 = vmatpush2.msra.mxu0 0.0
    %6671 = vmatprep.subr.mxu0 0.0
    %6672 = vmatpush2.msra.mxu0 0.0
    %6673 = vmatprep.subr.mxu0 0.0
    %6674 = vmatpush2.msra.mxu0 0.0
    %6675 = vmatprep.subr.mxu0 0.0
    %6676 = vmatpush2.msra.mxu0 0.0
    %6677 = vmatprep.subr.mxu0 0.0
    %6678 = vmatpush2.msra.mxu0 0.0
    %6679 = vmatprep.subr.mxu0 0.0
    %6680 = vmatpush2.msra.mxu0 0.0
    %6681 = vmatprep.subr.mxu0 0.0
    %6682 = vmatpush2.msra.mxu0 0.0
    %6683 = vmatprep.subr.mxu0 0.0
    %6684 = vmatpush2.msra.mxu0 0.0
    %6685 = vmatprep.subr.mxu0 0.0
    %6686 = vmatpush2.msra.mxu0 0.0
    %6687 = vmatprep.mubr.f32.mxu0 0.0
    %6688 = vmatmul.mubr.f32.gmra.mxu0 %v6621
    %v6689 = vpop.f32.mrf.mxu0
    %v6690 = vadd.f32 0.0, %v6689
    %v6691 = vpop.f32.mrf.mxu0
    %6692 = vdwg.mxu0
    %v6693 = vadd.f32 %v6613, %v6690
    %v6694 = vld [vmem:[#allocation6 + $0x8] sm:$0x3]
    %s6695 = scalar_lea.vmem %s5, 128
    %v6696 = vld [vmem:[%s6695] sm:$0xff]
    %v6697 = vld [vmem:[%s6695 + $0x8] sm:$0xff]
    %v6698 = vld [vmem:[%s6695 + $0x10] sm:$0xff]
    %v6699 = vld [vmem:[%s6695 + $0x18] sm:$0xff]
    %v6701 = vsel %vm6317, %v6694, 0
    %6703 = vmatprep.subr.mxu0 0.0
    %6704 = vmatpush1.msra.mxu0 0.0
    %6705 = vmatprep.subr.mxu0 0.0
    %6706 = vmatpush1.msra.mxu0 0.0
    %6707 = vmatprep.subr.mxu0 0.0
    %6708 = vmatpush1.msra.mxu0 0.0
    %6709 = vmatprep.subr.mxu0 0.0
    %6710 = vmatpush1.msra.mxu0 0.0
    %6711 = vmatprep.subr.mxu0 0.0
    %6712 = vmatpush1.msra.mxu0 0.0
    %6713 = vmatprep.subr.mxu0 0.0
    %6714 = vmatpush1.msra.mxu0 0.0
    %6715 = vmatprep.subr.mxu0 0.0
    %6716 = vmatpush1.msra.mxu0 0.0
    %6717 = vmatprep.subr.mxu0 0.0
    %6718 = vmatpush1.msra.mxu0 0.0
    %6719 = vmatprep.subr.mxu0 0.0
    %6720 = vmatpush1.msra.mxu0 0.0
    %6721 = vmatprep.subr.mxu0 0.0
    %6722 = vmatpush1.msra.mxu0 0.0
    %6723 = vmatprep.subr.mxu0 0.0
    %6724 = vmatpush1.msra.mxu0 0.0
    %6725 = vmatprep.subr.mxu0 0.0
    %6726 = vmatpush1.msra.mxu0 0.0
    %6727 = vmatprep.subr.mxu0 0.0
    %6728 = vmatpush1.msra.mxu0 %v6699
    %6729 = vmatprep.subr.mxu0 0.0
    %6730 = vmatpush1.msra.mxu0 %v6698
    %6731 = vmatprep.subr.mxu0 0.0
    %6732 = vmatpush1.msra.mxu0 %v6697
    %6733 = vmatprep.subr.mxu0 0.0
    %6734 = vmatpush1.msra.mxu0 %v6696
    %6735 = vmatprep.subr.mxu0 0.0
    %6736 = vmatpush2.msra.mxu0 0.0
    %6737 = vmatprep.subr.mxu0 0.0
    %6738 = vmatpush2.msra.mxu0 0.0
    %6739 = vmatprep.subr.mxu0 0.0
    %6740 = vmatpush2.msra.mxu0 0.0
    %6741 = vmatprep.subr.mxu0 0.0
    %6742 = vmatpush2.msra.mxu0 0.0
    %6743 = vmatprep.subr.mxu0 0.0
    %6744 = vmatpush2.msra.mxu0 0.0
    %6745 = vmatprep.subr.mxu0 0.0
    %6746 = vmatpush2.msra.mxu0 0.0
    %6747 = vmatprep.subr.mxu0 0.0
    %6748 = vmatpush2.msra.mxu0 0.0
    %6749 = vmatprep.subr.mxu0 0.0
    %6750 = vmatpush2.msra.mxu0 0.0
    %6751 = vmatprep.subr.mxu0 0.0
    %6752 = vmatpush2.msra.mxu0 0.0
    %6753 = vmatprep.subr.mxu0 0.0
    %6754 = vmatpush2.msra.mxu0 0.0
    %6755 = vmatprep.subr.mxu0 0.0
    %6756 = vmatpush2.msra.mxu0 0.0
    %6757 = vmatprep.subr.mxu0 0.0
    %6758 = vmatpush2.msra.mxu0 0.0
    %6759 = vmatprep.subr.mxu0 0.0
    %6760 = vmatpush2.msra.mxu0 0.0
    %6761 = vmatprep.subr.mxu0 0.0
    %6762 = vmatpush2.msra.mxu0 0.0
    %6763 = vmatprep.subr.mxu0 0.0
    %6764 = vmatpush2.msra.mxu0 0.0
    %6765 = vmatprep.subr.mxu0 0.0
    %6766 = vmatpush2.msra.mxu0 0.0
    %6767 = vmatprep.mubr.f32.mxu0 0.0
    %6768 = vmatmul.mubr.f32.gmra.mxu0 %v6701
    %v6769 = vpop.f32.mrf.mxu0
    %v6770 = vadd.f32 0.0, %v6769
    %v6771 = vpop.f32.mrf.mxu0
    %6772 = vdwg.mxu0
    %v6773 = vadd.f32 %v6693, %v6770
    %v6774 = vld [vmem:[#allocation6 + $0xa] sm:$0x3]
    %s6775 = scalar_lea.vmem %s5, 160
    %v6776 = vld [vmem:[%s6775] sm:$0xff]
    %v6777 = vld [vmem:[%s6775 + $0x8] sm:$0xff]
    %v6778 = vld [vmem:[%s6775 + $0x10] sm:$0xff]
    %v6779 = vld [vmem:[%s6775 + $0x18] sm:$0xff]
    %v6781 = vsel %vm6317, %v6774, 0
    %6783 = vmatprep.subr.mxu0 0.0
    %6784 = vmatpush1.msra.mxu0 0.0
    %6785 = vmatprep.subr.mxu0 0.0
    %6786 = vmatpush1.msra.mxu0 0.0
    %6787 = vmatprep.subr.mxu0 0.0
    %6788 = vmatpush1.msra.mxu0 0.0
    %6789 = vmatprep.subr.mxu0 0.0
    %6790 = vmatpush1.msra.mxu0 0.0
    %6791 = vmatprep.subr.mxu0 0.0
    %6792 = vmatpush1.msra.mxu0 0.0
    %6793 = vmatprep.subr.mxu0 0.0
    %6794 = vmatpush1.msra.mxu0 0.0
    %6795 = vmatprep.subr.mxu0 0.0
    %6796 = vmatpush1.msra.mxu0 0.0
    %6797 = vmatprep.subr.mxu0 0.0
    %6798 = vmatpush1.msra.mxu0 0.0
    %6799 = vmatprep.subr.mxu0 0.0
    %6800 = vmatpush1.msra.mxu0 0.0
    %6801 = vmatprep.subr.mxu0 0.0
    %6802 = vmatpush1.msra.mxu0 0.0
    %6803 = vmatprep.subr.mxu0 0.0
    %6804 = vmatpush1.msra.mxu0 0.0
    %6805 = vmatprep.subr.mxu0 0.0
    %6806 = vmatpush1.msra.mxu0 0.0
    %6807 = vmatprep.subr.mxu0 0.0
    %6808 = vmatpush1.msra.mxu0 %v6779
    %6809 = vmatprep.subr.mxu0 0.0
    %6810 = vmatpush1.msra.mxu0 %v6778
    %6811 = vmatprep.subr.mxu0 0.0
    %6812 = vmatpush1.msra.mxu0 %v6777
    %6813 = vmatprep.subr.mxu0 0.0
    %6814 = vmatpush1.msra.mxu0 %v6776
    %6815 = vmatprep.subr.mxu0 0.0
    %6816 = vmatpush2.msra.mxu0 0.0
    %6817 = vmatprep.subr.mxu0 0.0
    %6818 = vmatpush2.msra.mxu0 0.0
    %6819 = vmatprep.subr.mxu0 0.0
    %6820 = vmatpush2.msra.mxu0 0.0
    %6821 = vmatprep.subr.mxu0 0.0
    %6822 = vmatpush2.msra.mxu0 0.0
    %6823 = vmatprep.subr.mxu0 0.0
    %6824 = vmatpush2.msra.mxu0 0.0
    %6825 = vmatprep.subr.mxu0 0.0
    %6826 = vmatpush2.msra.mxu0 0.0
    %6827 = vmatprep.subr.mxu0 0.0
    %6828 = vmatpush2.msra.mxu0 0.0
    %6829 = vmatprep.subr.mxu0 0.0
    %6830 = vmatpush2.msra.mxu0 0.0
    %6831 = vmatprep.subr.mxu0 0.0
    %6832 = vmatpush2.msra.mxu0 0.0
    %6833 = vmatprep.subr.mxu0 0.0
    %6834 = vmatpush2.msra.mxu0 0.0
    %6835 = vmatprep.subr.mxu0 0.0
    %6836 = vmatpush2.msra.mxu0 0.0
    %6837 = vmatprep.subr.mxu0 0.0
    %6838 = vmatpush2.msra.mxu0 0.0
    %6839 = vmatprep.subr.mxu0 0.0
    %6840 = vmatpush2.msra.mxu0 0.0
    %6841 = vmatprep.subr.mxu0 0.0
    %6842 = vmatpush2.msra.mxu0 0.0
    %6843 = vmatprep.subr.mxu0 0.0
    %6844 = vmatpush2.msra.mxu0 0.0
    %6845 = vmatprep.subr.mxu0 0.0
    %6846 = vmatpush2.msra.mxu0 0.0
    %6847 = vmatprep.mubr.f32.mxu0 0.0
    %6848 = vmatmul.mubr.f32.gmra.mxu0 %v6781
    %v6849 = vpop.f32.mrf.mxu0
    %v6850 = vadd.f32 0.0, %v6849
    %v6851 = vpop.f32.mrf.mxu0
    %6852 = vdwg.mxu0
    %v6853 = vadd.f32 %v6773, %v6850
    %v6854 = vld [vmem:[#allocation6 + $0xc] sm:$0x3]
    %s6855 = scalar_lea.vmem %s5, 192
    %v6856 = vld [vmem:[%s6855] sm:$0xff]
    %v6857 = vld [vmem:[%s6855 + $0x8] sm:$0xff]
    %v6858 = vld [vmem:[%s6855 + $0x10] sm:$0xff]
    %v6859 = vld [vmem:[%s6855 + $0x18] sm:$0xff]
    %v6861 = vsel %vm6317, %v6854, 0
    %6863 = vmatprep.subr.mxu0 0.0
    %6864 = vmatpush1.msra.mxu0 0.0
    %6865 = vmatprep.subr.mxu0 0.0
    %6866 = vmatpush1.msra.mxu0 0.0
    %6867 = vmatprep.subr.mxu0 0.0
    %6868 = vmatpush1.msra.mxu0 0.0
    %6869 = vmatprep.subr.mxu0 0.0
    %6870 = vmatpush1.msra.mxu0 0.0
    %6871 = vmatprep.subr.mxu0 0.0
    %6872 = vmatpush1.msra.mxu0 0.0
    %6873 = vmatprep.subr.mxu0 0.0
    %6874 = vmatpush1.msra.mxu0 0.0
    %6875 = vmatprep.subr.mxu0 0.0
    %6876 = vmatpush1.msra.mxu0 0.0
    %6877 = vmatprep.subr.mxu0 0.0
    %6878 = vmatpush1.msra.mxu0 0.0
    %6879 = vmatprep.subr.mxu0 0.0
    %6880 = vmatpush1.msra.mxu0 0.0
    %6881 = vmatprep.subr.mxu0 0.0
    %6882 = vmatpush1.msra.mxu0 0.0
    %6883 = vmatprep.subr.mxu0 0.0
    %6884 = vmatpush1.msra.mxu0 0.0
    %6885 = vmatprep.subr.mxu0 0.0
    %6886 = vmatpush1.msra.mxu0 0.0
    %6887 = vmatprep.subr.mxu0 0.0
    %6888 = vmatpush1.msra.mxu0 %v6859
    %6889 = vmatprep.subr.mxu0 0.0
    %6890 = vmatpush1.msra.mxu0 %v6858
    %6891 = vmatprep.subr.mxu0 0.0
    %6892 = vmatpush1.msra.mxu0 %v6857
    %6893 = vmatprep.subr.mxu0 0.0
    %6894 = vmatpush1.msra.mxu0 %v6856
    %6895 = vmatprep.subr.mxu0 0.0
    %6896 = vmatpush2.msra.mxu0 0.0
    %6897 = vmatprep.subr.mxu0 0.0
    %6898 = vmatpush2.msra.mxu0 0.0
    %6899 = vmatprep.subr.mxu0 0.0
    %6900 = vmatpush2.msra.mxu0 0.0
    %6901 = vmatprep.subr.mxu0 0.0
    %6902 = vmatpush2.msra.mxu0 0.0
    %6903 = vmatprep.subr.mxu0 0.0
    %6904 = vmatpush2.msra.mxu0 0.0
    %6905 = vmatprep.subr.mxu0 0.0
    %6906 = vmatpush2.msra.mxu0 0.0
    %6907 = vmatprep.subr.mxu0 0.0
    %6908 = vmatpush2.msra.mxu0 0.0
    %6909 = vmatprep.subr.mxu0 0.0
    %6910 = vmatpush2.msra.mxu0 0.0
    %6911 = vmatprep.subr.mxu0 0.0
    %6912 = vmatpush2.msra.mxu0 0.0
    %6913 = vmatprep.subr.mxu0 0.0
    %6914 = vmatpush2.msra.mxu0 0.0
    %6915 = vmatprep.subr.mxu0 0.0
    %6916 = vmatpush2.msra.mxu0 0.0
    %6917 = vmatprep.subr.mxu0 0.0
    %6918 = vmatpush2.msra.mxu0 0.0
    %6919 = vmatprep.subr.mxu0 0.0
    %6920 = vmatpush2.msra.mxu0 0.0
    %6921 = vmatprep.subr.mxu0 0.0
    %6922 = vmatpush2.msra.mxu0 0.0
    %6923 = vmatprep.subr.mxu0 0.0
    %6924 = vmatpush2.msra.mxu0 0.0
    %6925 = vmatprep.subr.mxu0 0.0
    %6926 = vmatpush2.msra.mxu0 0.0
    %6927 = vmatprep.mubr.f32.mxu0 0.0
    %6928 = vmatmul.mubr.f32.gmra.mxu0 %v6861
    %v6929 = vpop.f32.mrf.mxu0
    %v6930 = vadd.f32 0.0, %v6929
    %v6931 = vpop.f32.mrf.mxu0
    %6932 = vdwg.mxu0
    %v6933 = vadd.f32 %v6853, %v6930
    %v6934 = vld [vmem:[#allocation6 + $0xe] sm:$0x3]
    %s6935 = scalar_lea.vmem %s5, 224
    %v6936 = vld [vmem:[%s6935] sm:$0xff]
    %v6937 = vld [vmem:[%s6935 + $0x8] sm:$0xff]
    %v6938 = vld [vmem:[%s6935 + $0x10] sm:$0xff]
    %v6939 = vld [vmem:[%s6935 + $0x18] sm:$0xff]
    %v6941 = vsel %vm6317, %v6934, 0
    %6943 = vmatprep.subr.mxu0 0.0
    %6944 = vmatpush1.msra.mxu0 0.0
    %6945 = vmatprep.subr.mxu0 0.0
    %6946 = vmatpush1.msra.mxu0 0.0
    %6947 = vmatprep.subr.mxu0 0.0
    %6948 = vmatpush1.msra.mxu0 0.0
    %6949 = vmatprep.subr.mxu0 0.0
    %6950 = vmatpush1.msra.mxu0 0.0
    %6951 = vmatprep.subr.mxu0 0.0
    %6952 = vmatpush1.msra.mxu0 0.0
    %6953 = vmatprep.subr.mxu0 0.0
    %6954 = vmatpush1.msra.mxu0 0.0
    %6955 = vmatprep.subr.mxu0 0.0
    %6956 = vmatpush1.msra.mxu0 0.0
    %6957 = vmatprep.subr.mxu0 0.0
    %6958 = vmatpush1.msra.mxu0 0.0
    %6959 = vmatprep.subr.mxu0 0.0
    %6960 = vmatpush1.msra.mxu0 0.0
    %6961 = vmatprep.subr.mxu0 0.0
    %6962 = vmatpush1.msra.mxu0 0.0
    %6963 = vmatprep.subr.mxu0 0.0
    %6964 = vmatpush1.msra.mxu0 0.0
    %6965 = vmatprep.subr.mxu0 0.0
    %6966 = vmatpush1.msra.mxu0 0.0
    %6967 = vmatprep.subr.mxu0 0.0
    %6968 = vmatpush1.msra.mxu0 %v6939
    %6969 = vmatprep.subr.mxu0 0.0
    %6970 = vmatpush1.msra.mxu0 %v6938
    %6971 = vmatprep.subr.mxu0 0.0
    %6972 = vmatpush1.msra.mxu0 %v6937
    %6973 = vmatprep.subr.mxu0 0.0
    %6974 = vmatpush1.msra.mxu0 %v6936
    %6975 = vmatprep.subr.mxu0 0.0
    %6976 = vmatpush2.msra.mxu0 0.0
    %6977 = vmatprep.subr.mxu0 0.0
    %6978 = vmatpush2.msra.mxu0 0.0
    %6979 = vmatprep.subr.mxu0 0.0
    %6980 = vmatpush2.msra.mxu0 0.0
    %6981 = vmatprep.subr.mxu0 0.0
    %6982 = vmatpush2.msra.mxu0 0.0
    %6983 = vmatprep.subr.mxu0 0.0
    %6984 = vmatpush2.msra.mxu0 0.0
    %6985 = vmatprep.subr.mxu0 0.0
    %6986 = vmatpush2.msra.mxu0 0.0
    %6987 = vmatprep.subr.mxu0 0.0
    %6988 = vmatpush2.msra.mxu0 0.0
    %6989 = vmatprep.subr.mxu0 0.0
    %6990 = vmatpush2.msra.mxu0 0.0
    %6991 = vmatprep.subr.mxu0 0.0
    %6992 = vmatpush2.msra.mxu0 0.0
    %6993 = vmatprep.subr.mxu0 0.0
    %6994 = vmatpush2.msra.mxu0 0.0
    %6995 = vmatprep.subr.mxu0 0.0
    %6996 = vmatpush2.msra.mxu0 0.0
    %6997 = vmatprep.subr.mxu0 0.0
    %6998 = vmatpush2.msra.mxu0 0.0
    %6999 = vmatprep.subr.mxu0 0.0
    %7000 = vmatpush2.msra.mxu0 0.0
    %7001 = vmatprep.subr.mxu0 0.0
    %7002 = vmatpush2.msra.mxu0 0.0
    %7003 = vmatprep.subr.mxu0 0.0
    %7004 = vmatpush2.msra.mxu0 0.0
    %7005 = vmatprep.subr.mxu0 0.0
    %7006 = vmatpush2.msra.mxu0 0.0
    %7007 = vmatprep.mubr.f32.mxu0 0.0
    %7008 = vmatmul.mubr.f32.gmra.mxu0 %v6941
    %v7009 = vpop.f32.mrf.mxu0
    %v7010 = vadd.f32 0.0, %v7009
    %v7011 = vpop.f32.mrf.mxu0
    %7012 = vdwg.mxu0
    %v7013 = vadd.f32 %v6933, %v7010
    %v7014 = vld [vmem:[#allocation6 + $0x10] sm:$0x3]
    %s7015 = scalar_lea.vmem %s5, 256
    %v7016 = vld [vmem:[%s7015] sm:$0xff]
    %v7017 = vld [vmem:[%s7015 + $0x8] sm:$0xff]
    %v7018 = vld [vmem:[%s7015 + $0x10] sm:$0xff]
    %v7019 = vld [vmem:[%s7015 + $0x18] sm:$0xff]
    %v7021 = vsel %vm6317, %v7014, 0
    %7023 = vmatprep.subr.mxu0 0.0
    %7024 = vmatpush1.msra.mxu0 0.0
    %7025 = vmatprep.subr.mxu0 0.0
    %7026 = vmatpush1.msra.mxu0 0.0
    %7027 = vmatprep.subr.mxu0 0.0
    %7028 = vmatpush1.msra.mxu0 0.0
    %7029 = vmatprep.subr.mxu0 0.0
    %7030 = vmatpush1.msra.mxu0 0.0
    %7031 = vmatprep.subr.mxu0 0.0
    %7032 = vmatpush1.msra.mxu0 0.0
    %7033 = vmatprep.subr.mxu0 0.0
    %7034 = vmatpush1.msra.mxu0 0.0
    %7035 = vmatprep.subr.mxu0 0.0
    %7036 = vmatpush1.msra.mxu0 0.0
    %7037 = vmatprep.subr.mxu0 0.0
    %7038 = vmatpush1.msra.mxu0 0.0
    %7039 = vmatprep.subr.mxu0 0.0
    %7040 = vmatpush1.msra.mxu0 0.0
    %7041 = vmatprep.subr.mxu0 0.0
    %7042 = vmatpush1.msra.mxu0 0.0
    %7043 = vmatprep.subr.mxu0 0.0
    %7044 = vmatpush1.msra.mxu0 0.0
    %7045 = vmatprep.subr.mxu0 0.0
    %7046 = vmatpush1.msra.mxu0 0.0
    %7047 = vmatprep.subr.mxu0 0.0
    %7048 = vmatpush1.msra.mxu0 %v7019
    %7049 = vmatprep.subr.mxu0 0.0
    %7050 = vmatpush1.msra.mxu0 %v7018
    %7051 = vmatprep.subr.mxu0 0.0
    %7052 = vmatpush1.msra.mxu0 %v7017
    %7053 = vmatprep.subr.mxu0 0.0
    %7054 = vmatpush1.msra.mxu0 %v7016
    %7055 = vmatprep.subr.mxu0 0.0
    %7056 = vmatpush2.msra.mxu0 0.0
    %7057 = vmatprep.subr.mxu0 0.0
    %7058 = vmatpush2.msra.mxu0 0.0
    %7059 = vmatprep.subr.mxu0 0.0
    %7060 = vmatpush2.msra.mxu0 0.0
    %7061 = vmatprep.subr.mxu0 0.0
    %7062 = vmatpush2.msra.mxu0 0.0
    %7063 = vmatprep.subr.mxu0 0.0
    %7064 = vmatpush2.msra.mxu0 0.0
    %7065 = vmatprep.subr.mxu0 0.0
    %7066 = vmatpush2.msra.mxu0 0.0
    %7067 = vmatprep.subr.mxu0 0.0
    %7068 = vmatpush2.msra.mxu0 0.0
    %7069 = vmatprep.subr.mxu0 0.0
    %7070 = vmatpush2.msra.mxu0 0.0
    %7071 = vmatprep.subr.mxu0 0.0
    %7072 = vmatpush2.msra.mxu0 0.0
    %7073 = vmatprep.subr.mxu0 0.0
    %7074 = vmatpush2.msra.mxu0 0.0
    %7075 = vmatprep.subr.mxu0 0.0
    %7076 = vmatpush2.msra.mxu0 0.0
    %7077 = vmatprep.subr.mxu0 0.0
    %7078 = vmatpush2.msra.mxu0 0.0
    %7079 = vmatprep.subr.mxu0 0.0
    %7080 = vmatpush2.msra.mxu0 0.0
    %7081 = vmatprep.subr.mxu0 0.0
    %7082 = vmatpush2.msra.mxu0 0.0
    %7083 = vmatprep.subr.mxu0 0.0
    %7084 = vmatpush2.msra.mxu0 0.0
    %7085 = vmatprep.subr.mxu0 0.0
    %7086 = vmatpush2.msra.mxu0 0.0
    %7087 = vmatprep.mubr.f32.mxu0 0.0
    %7088 = vmatmul.mubr.f32.gmra.mxu0 %v7021
    %v7089 = vpop.f32.mrf.mxu0
    %v7090 = vadd.f32 0.0, %v7089
    %v7091 = vpop.f32.mrf.mxu0
    %7092 = vdwg.mxu0
    %v7093 = vadd.f32 %v7013, %v7090
    %s7094 = sld [smem:[#allocation7]]
    %v7095 = vstv %s7094
    %v7096 = vadd.f32 %v7093, %v7095
    %v7097 = vmax.f32 %v7096, 0.0
    %v7098 = vld [vmem:[%s6] sm:$0xf]
    %v7099 = vld [vmem:[%s6 + $0x4] sm:$0x1]
    %v7100 = vlaneseq
    %v7101 = vshrl.u32 %v7100, 7
    %v7102 = vsub.s32 0, %v7101
    %v7103 = vrot.slane %v7099, %v7102
    %vm7104 = vcmask 31744
    %v7106 = vsel %vm7104, %v7097, 0
    %vm7108 = vcmask 1043456
    %v7110 = vsel %vm7108, %v7098, 0
    %7112 = vmatprep.subr.mxu0 0.0
    %7113 = vmatpush1.msra.mxu0 0.0
    %7114 = vmatprep.subr.mxu0 0.0
    %7115 = vmatpush1.msra.mxu0 0.0
    %7116 = vmatprep.subr.mxu0 0.0
    %7117 = vmatpush1.msra.mxu0 0.0
    %7118 = vmatprep.subr.mxu0 0.0
    %7119 = vmatpush1.msra.mxu0 0.0
    %7120 = vmatprep.subr.mxu0 0.0
    %7121 = vmatpush1.msra.mxu0 0.0
    %7122 = vmatprep.subr.mxu0 0.0
    %7123 = vmatpush1.msra.mxu0 0.0
    %7124 = vmatprep.subr.mxu0 0.0
    %7125 = vmatpush1.msra.mxu0 0.0
    %7126 = vmatprep.subr.mxu0 0.0
    %7127 = vmatpush1.msra.mxu0 0.0
    %7128 = vmatprep.subr.mxu0 0.0
    %7129 = vmatpush1.msra.mxu0 0.0
    %7130 = vmatprep.subr.mxu0 0.0
    %7131 = vmatpush1.msra.mxu0 0.0
    %7132 = vmatprep.subr.mxu0 0.0
    %7133 = vmatpush1.msra.mxu0 0.0
    %7134 = vmatprep.subr.mxu0 0.0
    %7135 = vmatpush1.msra.mxu0 0.0
    %7136 = vmatprep.subr.mxu0 0.0
    %7137 = vmatpush1.msra.mxu0 0.0
    %7138 = vmatprep.subr.mxu0 0.0
    %7139 = vmatpush1.msra.mxu0 0.0
    %7140 = vmatprep.subr.mxu0 0.0
    %7141 = vmatpush1.msra.mxu0 0.0
    %7142 = vmatprep.subr.mxu0 0.0
    %7143 = vmatpush1.msra.mxu0 %v7110
    %7144 = vmatprep.subr.mxu0 0.0
    %7145 = vmatpush2.msra.mxu0 0.0
    %7146 = vmatprep.subr.mxu0 0.0
    %7147 = vmatpush2.msra.mxu0 0.0
    %7148 = vmatprep.subr.mxu0 0.0
    %7149 = vmatpush2.msra.mxu0 0.0
    %7150 = vmatprep.subr.mxu0 0.0
    %7151 = vmatpush2.msra.mxu0 0.0
    %7152 = vmatprep.subr.mxu0 0.0
    %7153 = vmatpush2.msra.mxu0 0.0
    %7154 = vmatprep.subr.mxu0 0.0
    %7155 = vmatpush2.msra.mxu0 0.0
    %7156 = vmatprep.subr.mxu0 0.0
    %7157 = vmatpush2.msra.mxu0 0.0
    %7158 = vmatprep.subr.mxu0 0.0
    %7159 = vmatpush2.msra.mxu0 0.0
    %7160 = vmatprep.subr.mxu0 0.0
    %7161 = vmatpush2.msra.mxu0 0.0
    %7162 = vmatprep.subr.mxu0 0.0
    %7163 = vmatpush2.msra.mxu0 0.0
    %7164 = vmatprep.subr.mxu0 0.0
    %7165 = vmatpush2.msra.mxu0 0.0
    %7166 = vmatprep.subr.mxu0 0.0
    %7167 = vmatpush2.msra.mxu0 0.0
    %7168 = vmatprep.subr.mxu0 0.0
    %7169 = vmatpush2.msra.mxu0 0.0
    %7170 = vmatprep.subr.mxu0 0.0
    %7171 = vmatpush2.msra.mxu0 0.0
    %7172 = vmatprep.subr.mxu0 0.0
    %7173 = vmatpush2.msra.mxu0 0.0
    %7174 = vmatprep.subr.mxu0 0.0
    %7175 = vmatpush2.msra.mxu0 0.0
    %7176 = vmatprep.mubr.f32.mxu0 0.0
    %7177 = vmatmul.mubr.f32.gmra.mxu0 %v7106
    %v7178 = vpop.f32.mrf.mxu0
    %v7179 = vadd.f32 %v7103, %v7178
    %v7180 = vpop.f32.mrf.mxu0
    %7181 = vdwg.mxu0
    %v7182 = vmax.f32 %v7179, 0.0
    %v7183 = vld [vmem:[%s1] sm:$0x3]
    %v7184 = vmul.f32 %v7182, %v7183
    %v7185 = vsub.f32 0.0, %v7179
    %v7186 = vmul.f32 %v7185, 1.442695
    %v7187 = vpow.pop %v7186
    %v7188 = vadd.f32 %v7187, 1.0
    %v7189 = vrcp.pop %v7188
    %v7190 = vmul.f32 1.0, %v7189
    %s7191 = sld [smem:[#allocation7 + $0x1]]
    %v7192 = vstv %s7191
    %v7193 = vmul.f32 %v7184, %v7192
    %s7194 = sld [smem:[#allocation7 + $0xa]]
    %v7195 = vstv %s7194
    %v7196 = vadd.f32 %v7193, %v7195
    %v7197 = vmax.f32 %v7196, 0.0
    %s7198 = sld [smem:[#allocation7 + $0x2]]
    %v7199 = vstv %s7198
    %v7200 = vmul.f32 %v7184, %v7199
    %s7201 = sld [smem:[#allocation7 + $0xb]]
    %v7202 = vstv %s7201
    %v7203 = vadd.f32 %v7200, %v7202
    %v7204 = vmax.f32 %v7203, 0.0
    %s7205 = sld [smem:[#allocation7 + $0x3]]
    %v7206 = vstv %s7205
    %v7207 = vmul.f32 %v7184, %v7206
    %s7208 = sld [smem:[#allocation7 + $0xc]]
    %v7209 = vstv %s7208
    %v7210 = vadd.f32 %v7207, %v7209
    %v7211 = vmax.f32 %v7210, 0.0
    %s7212 = sld [smem:[#allocation7 + $0x4]]
    %v7213 = vstv %s7212
    %v7214 = vmul.f32 %v7184, %v7213
    %s7215 = sld [smem:[#allocation7 + $0xd]]
    %v7216 = vstv %s7215
    %v7217 = vadd.f32 %v7214, %v7216
    %v7218 = vmax.f32 %v7217, 0.0
    %s7219 = sld [smem:[#allocation7 + $0x5]]
    %v7220 = vstv %s7219
    %v7221 = vmul.f32 %v7184, %v7220
    %s7222 = sld [smem:[#allocation7 + $0xe]]
    %v7223 = vstv %s7222
    %v7224 = vadd.f32 %v7221, %v7223
    %v7225 = vmax.f32 %v7224, 0.0
    %s7226 = sld [smem:[#allocation7 + $0x6]]
    %v7227 = vstv %s7226
    %v7228 = vmul.f32 %v7184, %v7227
    %s7229 = sld [smem:[#allocation7 + $0xf]]
    %v7230 = vstv %s7229
    %v7231 = vadd.f32 %v7228, %v7230
    %v7232 = vmax.f32 %v7231, 0.0
    %s7233 = sld [smem:[#allocation7 + $0x7]]
    %v7234 = vstv %s7233
    %v7235 = vmul.f32 %v7184, %v7234
    %s7236 = sld [smem:[#allocation7 + $0x10]]
    %v7237 = vstv %s7236
    %v7238 = vadd.f32 %v7235, %v7237
    %v7239 = vmax.f32 %v7238, 0.0
    %s7240 = sld [smem:[#allocation7 + $0x8]]
    %v7241 = vstv %s7240
    %v7242 = vmul.f32 %v7184, %v7241
    %s7243 = sld [smem:[#allocation7 + $0x11]]
    %v7244 = vstv %s7243
    %v7245 = vadd.f32 %v7242, %v7244
    %v7246 = vmax.f32 %v7245, 0.0
    %s7247 = sld [smem:[#allocation7 + $0x9]]
    %v7248 = vstv %s7247
    %v7249 = vmul.f32 %v7184, %v7248
    %s7250 = sld [smem:[#allocation7 + $0x12]]
    %v7251 = vstv %s7250
    %v7252 = vadd.f32 %v7249, %v7251
    %v7253 = vmax.f32 %v7252, 0.0
    %v7254 = vmax.f32 %v7197, %v7204
    %v7255 = vmax.f32 %v7254, %v7211
    %v7256 = vmax.f32 %v7255, %v7218
    %v7257 = vmax.f32 %v7256, %v7225
    %v7258 = vmax.f32 %v7257, %v7232
    %v7259 = vmax.f32 %v7258, %v7239
    %v7260 = vmax.f32 %v7259, %v7246
    %v7261 = vmax.f32 %v7260, %v7253
    %v7262 = vsub.f32 %v7197, %v7261
    %v7263 = vmul.f32 %v7262, 1.442695
    %v7264 = vpow.pop %v7263
    %v7265 = vadd.f32 %v7264, 0.0
    %v7266 = vsub.f32 %v7204, %v7261
    %v7267 = vmul.f32 %v7266, 1.442695
    %v7268 = vpow.pop %v7267
    %v7269 = vadd.f32 %v7265, %v7268
    %v7270 = vsub.f32 %v7211, %v7261
    %v7271 = vmul.f32 %v7270, 1.442695
    %v7272 = vpow.pop %v7271
    %v7273 = vadd.f32 %v7269, %v7272
    %v7274 = vsub.f32 %v7218, %v7261
    %v7275 = vmul.f32 %v7274, 1.442695
    %v7276 = vpow.pop %v7275
    %v7277 = vadd.f32 %v7273, %v7276
    %v7278 = vsub.f32 %v7225, %v7261
    %v7279 = vmul.f32 %v7278, 1.442695
    %v7280 = vpow.pop %v7279
    %v7281 = vadd.f32 %v7277, %v7280
    %v7282 = vsub.f32 %v7232, %v7261
    %v7283 = vmul.f32 %v7282, 1.442695
    %v7284 = vpow.pop %v7283
    %v7285 = vadd.f32 %v7281, %v7284
    %v7286 = vsub.f32 %v7239, %v7261
    %v7287 = vmul.f32 %v7286, 1.442695
    %v7288 = vpow.pop %v7287
    %v7289 = vadd.f32 %v7285, %v7288
    %v7290 = vsub.f32 %v7246, %v7261
    %v7291 = vmul.f32 %v7290, 1.442695
    %v7292 = vpow.pop %v7291
    %v7293 = vadd.f32 %v7289, %v7292
    %v7294 = vsub.f32 %v7253, %v7261
    %v7295 = vmul.f32 %v7294, 1.442695
    %v7296 = vpow.pop %v7295
    %v7297 = vadd.f32 %v7293, %v7296
    %v7298 = vlog2.pop %v7297
    %v7299 = vmul.f32 %v7298, 0.6931472
    %v7300 = vsub.f32 %v7262, %v7299
    %vm7301 = vcmask 656384
    %7302 = vst.msk [vmem:[%s8] sm:$0x3] %vm7301, %v7300
    %v7303 = vsub.f32 %v7266, %v7299
    %7304 = vst.msk [vmem:[%s8 + $0x2] sm:$0x3] %vm7301, %v7303
    %v7305 = vsub.f32 %v7270, %v7299
    %7306 = vst.msk [vmem:[%s8 + $0x4] sm:$0x3] %vm7301, %v7305
    %v7307 = vsub.f32 %v7274, %v7299
    %7308 = vst.msk [vmem:[%s8 + $0x6] sm:$0x3] %vm7301, %v7307
    %v7309 = vsub.f32 %v7278, %v7299
    %7310 = vst.msk [vmem:[%s8 + $0x8] sm:$0x3] %vm7301, %v7309
    %v7311 = vsub.f32 %v7282, %v7299
    %7312 = vst.msk [vmem:[%s8 + $0xa] sm:$0x3] %vm7301, %v7311
    %v7313 = vsub.f32 %v7286, %v7299
    %7314 = vst.msk [vmem:[%s8 + $0xc] sm:$0x3] %vm7301, %v7313
    %v7315 = vsub.f32 %v7290, %v7299
    %7316 = vst.msk [vmem:[%s8 + $0xe] sm:$0x3] %vm7301, %v7315
    %v7317 = vsub.f32 %v7294, %v7299
    %7318 = vst.msk [vmem:[%s8 + $0x10] sm:$0x3] %vm7301, %v7317
    %v7321 = vunpack.c.l.s4 1983009808
    %v7322 = vunpack.c.0.s8 %v7321
    %v7323 = vlaneseq
    %v7324 = vshrl.u32 %v7323, 7
    %v7325 = vsub.s32 %v7322, %v7324
    %v7326 = vrot.slane %v7190, %v7325
    %7327 = vrot.lane.b32.xlu0 %v7326, 47
    %v7328 = vpop.permute.xlu0 %7327
    %7330 = vst.msk [vmem:[%s8 + $0x12] sm:$0x3] %vm572, %v7328
    // Predicated region
    $region38: #{sudoku_nn_forward.1} parent=1 // pred_check
      _
    $region39: #{sudoku_nn_forward.1} parent=1 // pred_check_branch
      %7332 = sbr.rel (0) target = $region41
    $region40: #{sudoku_nn_forward.1} parent=1 // pred_region
      _
    $region41: #{sudoku_nn_forward.1} parent=1 // pred_fallthru
      _
    // Predicated region
    $region42: #{sudoku_nn_forward.1} parent=1 // pred_check
      _
    $region43: #{sudoku_nn_forward.1} parent=1 // pred_check_branch
      %7334 = sbr.rel (0) target = $region45
    $region44: #{sudoku_nn_forward.1} parent=1 // pred_region
      _
    $region45: #{sudoku_nn_forward.1} parent=1 // pred_fallthru
      _
    %7335 = vsyncpa [#allocation8], 1

</llo_original>
